<compile_context>
chip_gen: v5e
topology: v5e:2x2
jax: 0.10.0
libtpu: 0.0.40
codegen_flags: <defaults>
</compile_context>

<pallas_src>
import functools

import jax
import jax.numpy as jnp
import numpy as np
from jax.experimental import pallas as pl
from jax.experimental.pallas import tpu as pltpu

EPS = 1e-5


def _vmem_budget_bytes():
    """Scoped-VMEM request ceiling with headroom (≈48 MiB on v7x's 64 MiB,
    ≈96-100 MiB on v5e/v6e's 128 MiB)."""
    try:
        cap = pltpu.get_tpu_info().vmem_capacity_bytes
    except Exception:                      # conservative fallback
        cap = 128 * 1024 * 1024
    return min(int(cap * 3 // 4), 100 * 1024 * 1024)


# ---------------------------------------------------------------------------
# Kernels 1/2: 3x3 conv (stride 1, pad 1, no bias) with bf16 MXU operands and
# f32 accumulation, per-image BN (sum, sumsq) partial statistics, and an
# optional fused per-channel affine + ReLU on the *input* (folds BN1+ReLU into
# conv2's load).
# ---------------------------------------------------------------------------
def conv_bn_stats_kernel(x_ref, scale_ref, shift_ref, w_ref,
                         y_ref, sum_ref, ssq_ref, pad_ref,
                         *, fuse_input_bn_relu):
    H, W, Cin = x_ref.shape
    Cout = y_ref.shape[-1]
    zdt = pad_ref.dtype

    # Zero only the 1-pixel halo ring each step (cheap, O(H+W)); the interior
    # is fully rewritten below, so there is NO cross-grid-step scratch state
    # and the batch axis can be "parallel" (v7x megacore sharding).
    pad_ref[0:1, :, :] = jnp.zeros((1, W + 2, Cin), zdt)
    pad_ref[H + 1:H + 2, :, :] = jnp.zeros((1, W + 2, Cin), zdt)
    pad_ref[:, 0:1, :] = jnp.zeros((H + 2, 1, Cin), zdt)
    pad_ref[:, W + 1:W + 2, :] = jnp.zeros((H + 2, 1, Cin), zdt)

    xin = x_ref[...]
    if fuse_input_bn_relu:
        # BN1 affine + ReLU fused into conv2's input load (f32 math).
        xin = jnp.maximum(xin.astype(jnp.float32) * scale_ref[...]
                          + shift_ref[...], 0.0)
    pad_ref[1:H + 1, 1:W + 1, :] = xin.astype(zdt)

    acc = jnp.zeros((H * W, Cout), jnp.float32)
    if Cin % 128 == 0:
        # Fold the three dx taps into the matmul K dimension (K = 3*Cin):
        # 3 bf16 MXU matmuls instead of 9 (lane-aligned concat).
        for dy in range(3):
            patch = jnp.concatenate(
                [pad_ref[dy:dy + H, dx:dx + W, :].reshape(H * W, Cin)
                 for dx in range(3)], axis=-1)
            acc = acc + jnp.dot(patch, w_ref[dy],
                                preferred_element_type=jnp.float32)
    else:
        # Small-channel fallback: per-tap matmuls (avoids an unaligned
        # lane-axis concat; these layers are tiny anyway).
        for dy in range(3):
            for dx in range(3):
                patch = pad_ref[dy:dy + H, dx:dx + W, :].reshape(H * W, Cin)
                acc = acc + jnp.dot(patch,
                                    w_ref[dy, dx * Cin:(dx + 1) * Cin, :],
                                    preferred_element_type=jnp.float32)

    y_ref[...] = acc.reshape(H, W, Cout).astype(y_ref.dtype)
    # Per-grid-step partial BN statistics (reduced over the batch in the
    # wrapper): shorter f32 accumulation chains, no serially-carried state.
    sum_ref[...] = jnp.sum(acc, axis=0, keepdims=True)
    ssq_ref[...] = jnp.sum(acc * acc, axis=0, keepdims=True)


def _conv_bn_stats(x_nhwc, scale, shift, w_folded, *, fuse_input_bn_relu):
    """y = conv3x3(affine_relu?(x)), bf16 out, plus per-image (sum, sumsq)."""
    N, H, W, Cin = x_nhwc.shape
    Cout = w_folded.shape[-1]

    kernel = functools.partial(conv_bn_stats_kernel,
                               fuse_input_bn_relu=fuse_input_bn_relu)

    # Rough per-step VMEM footprint (bf16 operands, f32 accumulator).
    block_bytes = (2 * 2 * H * W * Cin            # x block (double-buffered)
                   + 2 * 2 * H * W * Cout         # y block (double-buffered)
                   + 2 * (H + 2) * (W + 2) * Cin  # halo scratch
                   + 2 * 2 * 9 * Cin * Cout       # weights (double-buffered)
                   + 2 * H * W * 3 * Cin          # one im2col patch
                   + 4 * H * W * Cout)            # f32 accumulator
    cp_kwargs = dict(dimension_semantics=("parallel",))
    # Generation-aware raise: v5e's default scoped-VMEM limit is ~16 MiB.
    if block_bytes > 12 * 1024 * 1024:
        cp_kwargs["vmem_limit_bytes"] = int(
            min(max(2 * block_bytes, 32 * 1024 * 1024), _vmem_budget_bytes()))

    flops = 2 * 9 * N * H * W * Cin * Cout
    bytes_accessed = (2 * N * H * W * (Cin + Cout) + 2 * 9 * Cin * Cout
                      + 8 * N * Cout)

    y, s, q = pl.pallas_call(
        kernel,
        grid=(N,),
        in_specs=[
            pl.BlockSpec((None, H, W, Cin), lambda n: (n, 0, 0, 0)),
            pl.BlockSpec((1, Cin), lambda n: (0, 0)),
            pl.BlockSpec((1, Cin), lambda n: (0, 0)),
            pl.BlockSpec((3, 3 * Cin, Cout), lambda n: (0, 0, 0)),
        ],
        out_specs=[
            pl.BlockSpec((None, H, W, Cout), lambda n: (n, 0, 0, 0)),
            pl.BlockSpec((None, 1, Cout), lambda n: (n, 0, 0)),
            pl.BlockSpec((None, 1, Cout), lambda n: (n, 0, 0)),
        ],
        out_shape=[
            jax.ShapeDtypeStruct((N, H, W, Cout), jnp.bfloat16),
            jax.ShapeDtypeStruct((N, 1, Cout), jnp.float32),
            jax.ShapeDtypeStruct((N, 1, Cout), jnp.float32),
        ],
        scratch_shapes=[pltpu.VMEM((H + 2, W + 2, Cin), jnp.bfloat16)],
        compiler_params=pltpu.CompilerParams(**cp_kwargs),
        cost_estimate=pl.CostEstimate(flops=flops, transcendentals=0,
                                      bytes_accessed=bytes_accessed),
    )(x_nhwc, scale, shift, w_folded)
    return y, s, q


# ---------------------------------------------------------------------------
# Kernel 3: out = relu(scale * y2 + shift + x) on a lane-dense 2D view.
# ---------------------------------------------------------------------------
def bn_residual_relu_kernel(y_ref, x_ref, scale_ref, shift_ref, o_ref):
    o_ref[...] = jnp.maximum(
        y_ref[...].astype(jnp.float32) * scale_ref[...] + shift_ref[...]
        + x_ref[...], 0.0)


def _bn_residual_relu(y2, x_nhwc, scale, shift):
    N, H, W, C = x_nhwc.shape
    total = N * H * W * C

    # Lane-dense flattening (last dim a multiple of 128 when possible); the
    # per-channel scale/shift pattern tiles exactly along that lane dim.
    if C % 128 == 0:
        lane = C
    elif (128 % C == 0) and (total % 128 == 0):
        lane = 128
    else:
        lane = W * C
    rows = total // lane
    reps = lane // C

    scale_t = jnp.tile(scale.reshape(1, C), (1, reps))
    shift_t = jnp.tile(shift.reshape(1, C), (1, reps))
    y2f = y2.reshape(rows, lane)
    xf = x_nhwc.reshape(rows, lane)

    # Row tile: ~2 MiB f32 output block, multiple of 8, never the whole array
    # when it is large (stays inside every generation's scoped-VMEM limit).
    max_rows = max(8, ((2 * 1024 * 1024) // (4 * lane)) // 8 * 8)
    tr = min(rows, max_rows, 1024)

    out = pl.pallas_call(
        bn_residual_relu_kernel,
        grid=(pl.cdiv(rows, tr),),
        in_specs=[
            pl.BlockSpec((tr, lane), lambda i: (i, 0)),
            pl.BlockSpec((tr, lane), lambda i: (i, 0)),
            pl.BlockSpec((1, lane), lambda i: (0, 0)),
            pl.BlockSpec((1, lane), lambda i: (0, 0)),
        ],
        out_specs=pl.BlockSpec((tr, lane), lambda i: (i, 0)),
        out_shape=jax.ShapeDtypeStruct((rows, lane), jnp.float32),
        compiler_params=pltpu.CompilerParams(
            dimension_semantics=("parallel",)),
    )(y2f, xf, scale_t, shift_t)
    return out.reshape(N, H, W, C)


# ---------------------------------------------------------------------------
# Glue + forward
# ---------------------------------------------------------------------------
def _bn_scale_shift(sum_rows, ssq_rows, count, gamma, beta):
    """Per-channel affine equivalent of train-mode BatchNorm2d from per-image
    partial (sum, sumsq) rows."""
    s = jnp.sum(sum_rows, axis=0)                  # (1, C)
    q = jnp.sum(ssq_rows, axis=0)                  # (1, C)
    mean = s / count
    var = q / count - mean * mean                  # biased variance (train BN)
    scale = gamma * jax.lax.rsqrt(var + EPS)
    shift = beta - mean * scale
    return scale, shift


def resblock_forward(x_nchw, params):
    """ResBlock forward (stride=1, downsample=None). x: (N, Cin, H, W) f32."""
    N, Cin, H, W = x_nchw.shape
    Cout = params["w1"].shape[-1]
    assert Cin == Cout, "identity residual requires in_channels == out_channels"
    # TODO(synk): stride != 1 / downsample path not implemented (module defaults).

    x_nhwc = jnp.transpose(x_nchw, (0, 2, 3, 1)).astype(jnp.float32)   # NHWC
    x_bf16 = x_nhwc.astype(jnp.bfloat16)
    cnt = float(N * H * W)
    ident = jnp.ones((1, Cin), jnp.float32)
    zero = jnp.zeros((1, Cin), jnp.float32)

    # HWIO (3,3,Cin,Cout) -> (3, 3*Cin, Cout), bf16 MXU-native operands.
    w1 = params["w1"].reshape(3, 3 * Cin, Cout).astype(jnp.bfloat16)
    w2 = params["w2"].reshape(3, 3 * Cout, Cout).astype(jnp.bfloat16)

    # conv1 (+ per-image BN1 partial stats).  Conv biases are dropped:
    # train-mode BN absorbs them exactly.
    y1, s1, q1 = _conv_bn_stats(x_bf16, ident, zero, w1,
                                fuse_input_bn_relu=False)
    scale1, shift1 = _bn_scale_shift(s1, q1, cnt, params["g1"], params["be1"])

    # BN1 affine + ReLU fused into conv2's input; conv2 (+ BN2 stats).
    y2, s2, q2 = _conv_bn_stats(y1, scale1, shift1, w2,
                                fuse_input_bn_relu=True)
    scale2, shift2 = _bn_scale_shift(s2, q2, cnt, params["g2"], params["be2"])

    # BN2 affine + residual add + final ReLU (lane-dense elementwise kernel).
    out = _bn_residual_relu(y2, x_nhwc, scale2, shift2)
    return jnp.transpose(out, (0, 3, 1, 2))


# ---------------------------------------------------------------------------
# Pure-JAX f32 reference matching the PyTorch ResBlock forward (train-mode BN;
# conv biases included — they cancel under BN, which the kernel exploits).
# ---------------------------------------------------------------------------
def resblock_reference(x_nchw, params):
    x = jnp.transpose(x_nchw, (0, 2, 3, 1)).astype(jnp.float32)

    def conv(inp, w, b):
        out = jax.lax.conv_general_dilated(
            inp, w, window_strides=(1, 1), padding=((1, 1), (1, 1)),
            dimension_numbers=("NHWC", "HWIO", "NHWC"))
        return out + b.reshape(1, 1, 1, -1)

    def bn(inp, g, be):
        m = jnp.mean(inp, axis=(0, 1, 2), keepdims=True)
        v = jnp.mean((inp - m) ** 2, axis=(0, 1, 2), keepdims=True)
        return (inp - m) * jax.lax.rsqrt(v + EPS) * g.reshape(1, 1, 1, -1) \
            + be.reshape(1, 1, 1, -1)

    h = jnp.maximum(bn(conv(x, params["w1"], params["b1"]),
                       params["g1"], params["be1"]), 0.0)
    h = bn(conv(h, params["w2"], params["b2"]), params["g2"], params["be2"])
    out = jnp.maximum(h + x, 0.0)
    return jnp.transpose(out, (0, 3, 1, 2))


def init_params(key, cin, cout):
    k1, k2, k3, k4 = jax.random.split(key, 4)
    return {
        "w1": jax.random.normal(k1, (3, 3, cin, cout), jnp.float32) * 0.1,
        "b1": jax.random.normal(k2, (1, cout), jnp.float32) * 0.1,
        "g1": jnp.ones((1, cout), jnp.float32),
        "be1": jnp.zeros((1, cout), jnp.float32),
        "w2": jax.random.normal(k3, (3, 3, cout, cout), jnp.float32) * 0.1,
        "b2": jax.random.normal(k4, (1, cout), jnp.float32) * 0.1,
        "g2": jnp.ones((1, cout), jnp.float32),
        "be2": jnp.zeros((1, cout), jnp.float32),
    }


if __name__ == "__main__":
    key = jax.random.PRNGKey(0)
    kx, kp = jax.random.split(key)

    N, C, H, W = 2, 4, 16, 16          # in_channels == out_channels, stride=1
    x = jax.random.normal(kx, (N, C, H, W), jnp.float32)
    params = init_params(kp, C, C)

    fwd = jax.jit(resblock_forward)
    out = jax.block_until_ready(fwd(x, params))
    ref = jax.block_until_ready(resblock_reference(x, params))

    # Tolerance loosened for bf16 MXU operands / bf16 intermediates
    # (accumulation stays f32).
    np.testing.assert_allclose(np.asarray(out), np.asarray(ref),
                               atol=5e-2, rtol=2e-2)
    print("KERNEL_OK")
</pallas_src>

<mosaic_0001>
module attributes {stable_mosaic.version = 11 : i64} {
  func.func @conv_bn_stats_kernel(%arg0: i32, %arg1: memref<1x16x16x4xbf16, #tpu.memory_space<vmem>>, %arg2: memref<1x4xf32, #tpu.memory_space<vmem>>, %arg3: memref<1x4xf32, #tpu.memory_space<vmem>>, %arg4: memref<3x12x4xbf16, #tpu.memory_space<vmem>>, %arg5: memref<1x16x16x4xbf16, #tpu.memory_space<vmem>>, %arg6: memref<1x1x4xf32, #tpu.memory_space<vmem>>, %arg7: memref<1x1x4xf32, #tpu.memory_space<vmem>>, %arg8: memref<18x18x4xbf16, #tpu.memory_space<vmem>>) attributes {dimension_semantics = [#tpu.dimension_semantics<parallel>], iteration_bounds = array<i64: 2>, scalar_prefetch = 0 : i64, scratch_operands = 1 : i64, tpu.core_type = #tpu.core_type<tc>, window_params = [{transform_indices = @transform_0, window_bounds = array<i64: 1, 16, 16, 4>}, {pipeline_mode = #tpu.pipeline_mode<synchronous>, transform_indices = @transform_1, window_bounds = array<i64: 1, 4>}, {pipeline_mode = #tpu.pipeline_mode<synchronous>, transform_indices = @transform_2, window_bounds = array<i64: 1, 4>}, {pipeline_mode = #tpu.pipeline_mode<synchronous>, transform_indices = @transform_3, window_bounds = array<i64: 3, 12, 4>}, {transform_indices = @transform_4, window_bounds = array<i64: 1, 16, 16, 4>}, {transform_indices = @transform_5, window_bounds = array<i64: 1, 1, 4>}, {transform_indices = @transform_6, window_bounds = array<i64: 1, 1, 4>}]} {
    %cst = arith.constant 0.000000e+00 : bf16
    %0 = vector.broadcast %cst : bf16 to vector<1x18x4xbf16>
    %c0 = arith.constant 0 : index
    %c0_0 = arith.constant 0 : index
    %c0_1 = arith.constant 0 : index
    %1 = vector.load %arg8[%c0, %c0_0, %c0_1] : memref<18x18x4xbf16, #tpu.memory_space<vmem>>, vector<1x18x4xbf16>
    tpu.vector_store %arg8[%c0, %c0_0, %c0_1], %0 {strides = array<i32>} : memref<18x18x4xbf16, #tpu.memory_space<vmem>>, vector<1x18x4xbf16>,
    %cst_2 = arith.constant 0.000000e+00 : bf16
    %2 = vector.broadcast %cst_2 : bf16 to vector<1x18x4xbf16>
    %c17 = arith.constant 17 : index
    %c0_3 = arith.constant 0 : index
    %c0_4 = arith.constant 0 : index
    %3 = vector.load %arg8[%c17, %c0_3, %c0_4] : memref<18x18x4xbf16, #tpu.memory_space<vmem>>, vector<1x18x4xbf16>
    tpu.vector_store %arg8[%c17, %c0_3, %c0_4], %2 {strides = array<i32>} : memref<18x18x4xbf16, #tpu.memory_space<vmem>>, vector<1x18x4xbf16>,
    %cst_5 = arith.constant 0.000000e+00 : bf16
    %4 = vector.broadcast %cst_5 : bf16 to vector<18x1x4xbf16>
    %c0_6 = arith.constant 0 : index
    %c0_7 = arith.constant 0 : index
    %c0_8 = arith.constant 0 : index
    %5 = vector.load %arg8[%c0_6, %c0_7, %c0_8] : memref<18x18x4xbf16, #tpu.memory_space<vmem>>, vector<18x1x4xbf16>
    tpu.vector_store %arg8[%c0_6, %c0_7, %c0_8], %4 {strides = array<i32>} : memref<18x18x4xbf16, #tpu.memory_space<vmem>>, vector<18x1x4xbf16>,
    %cst_9 = arith.constant 0.000000e+00 : bf16
    %6 = vector.broadcast %cst_9 : bf16 to vector<18x1x4xbf16>
    %c0_10 = arith.constant 0 : index
    %c17_11 = arith.constant 17 : index
    %c0_12 = arith.constant 0 : index
    %7 = vector.load %arg8[%c0_10, %c17_11, %c0_12] : memref<18x18x4xbf16, #tpu.memory_space<vmem>>, vector<18x1x4xbf16>
    tpu.vector_store %arg8[%c0_10, %c17_11, %c0_12], %6 {strides = array<i32>} : memref<18x18x4xbf16, #tpu.memory_space<vmem>>, vector<18x1x4xbf16>,
    %c0_13 = arith.constant 0 : index
    %c0_14 = arith.constant 0 : index
    %c0_15 = arith.constant 0 : index
    %c0_16 = arith.constant 0 : index
    %8 = vector.load %arg1[%c0_13, %c0_14, %c0_15, %c0_16] : memref<1x16x16x4xbf16, #tpu.memory_space<vmem>>, vector<1x16x16x4xbf16>
    %9 = vector.shape_cast %8 : vector<1x16x16x4xbf16> to vector<16x16x4xbf16>
    %c1 = arith.constant 1 : index
    %c1_17 = arith.constant 1 : index
    %c0_18 = arith.constant 0 : index
    %10 = vector.load %arg8[%c1, %c1_17, %c0_18] : memref<18x18x4xbf16, #tpu.memory_space<vmem>>, vector<16x16x4xbf16>
    tpu.vector_store %arg8[%c1, %c1_17, %c0_18], %9 {strides = array<i32>} : memref<18x18x4xbf16, #tpu.memory_space<vmem>>, vector<16x16x4xbf16>,
    %cst_19 = arith.constant 0.000000e+00 : f32
    %11 = vector.broadcast %cst_19 : f32 to vector<256x4xf32>
    %c0_20 = arith.constant 0 : index
    %c0_21 = arith.constant 0 : index
    %c0_22 = arith.constant 0 : index
    %12 = vector.load %arg8[%c0_20, %c0_21, %c0_22] : memref<18x18x4xbf16, #tpu.memory_space<vmem>>, vector<16x16x4xbf16>
    %13 = vector.shape_cast %12 : vector<16x16x4xbf16> to vector<256x4xbf16>
    %c0_23 = arith.constant 0 : index
    %c0_24 = arith.constant 0 : index
    %c0_25 = arith.constant 0 : index
    %14 = vector.load %arg4[%c0_23, %c0_24, %c0_25] : memref<3x12x4xbf16, #tpu.memory_space<vmem>>, vector<1x4x4xbf16>
    %15 = vector.shape_cast %14 : vector<1x4x4xbf16> to vector<4x4xbf16>
    %cst_26 = arith.constant dense<0.000000e+00> : vector<256x4xf32>
    %16 = tpu.matmul %13, %15, %cst_26 {dimension_numbers = #tpu.dot_dimension_numbers<[1], [0], [0], [1], [0, 0, 1, 1], [], []>} : vector<256x4xbf16>, vector<4x4xbf16>, vector<256x4xf32> -> vector<256x4xf32>
    %17 = arith.addf %11, %16 : vector<256x4xf32>
    %c0_27 = arith.constant 0 : index
    %c1_28 = arith.constant 1 : index
    %c0_29 = arith.constant 0 : index
    %18 = vector.load %arg8[%c0_27, %c1_28, %c0_29] : memref<18x18x4xbf16, #tpu.memory_space<vmem>>, vector<16x16x4xbf16>
    %19 = vector.shape_cast %18 : vector<16x16x4xbf16> to vector<256x4xbf16>
    %c0_30 = arith.constant 0 : index
    %c4 = arith.constant 4 : index
    %c0_31 = arith.constant 0 : index
    %20 = vector.load %arg4[%c0_30, %c4, %c0_31] : memref<3x12x4xbf16, #tpu.memory_space<vmem>>, vector<1x4x4xbf16>
    %21 = vector.shape_cast %20 : vector<1x4x4xbf16> to vector<4x4xbf16>
    %cst_32 = arith.constant dense<0.000000e+00> : vector<256x4xf32>
    %22 = tpu.matmul %19, %21, %cst_32 {dimension_numbers = #tpu.dot_dimension_numbers<[1], [0], [0], [1], [0, 0, 1, 1], [], []>} : vector<256x4xbf16>, vector<4x4xbf16>, vector<256x4xf32> -> vector<256x4xf32>
    %23 = arith.addf %17, %22 : vector<256x4xf32>
    %c0_33 = arith.constant 0 : index
    %c2 = arith.constant 2 : index
    %c0_34 = arith.constant 0 : index
    %24 = vector.load %arg8[%c0_33, %c2, %c0_34] : memref<18x18x4xbf16, #tpu.memory_space<vmem>>, vector<16x16x4xbf16>
    %25 = vector.shape_cast %24 : vector<16x16x4xbf16> to vector<256x4xbf16>
    %c0_35 = arith.constant 0 : index
    %c8 = arith.constant 8 : index
    %c0_36 = arith.constant 0 : index
    %26 = vector.load %arg4[%c0_35, %c8, %c0_36] : memref<3x12x4xbf16, #tpu.memory_space<vmem>>, vector<1x4x4xbf16>
    %27 = vector.shape_cast %26 : vector<1x4x4xbf16> to vector<4x4xbf16>
    %cst_37 = arith.constant dense<0.000000e+00> : vector<256x4xf32>
    %28 = tpu.matmul %25, %27, %cst_37 {dimension_numbers = #tpu.dot_dimension_numbers<[1], [0], [0], [1], [0, 0, 1, 1], [], []>} : vector<256x4xbf16>, vector<4x4xbf16>, vector<256x4xf32> -> vector<256x4xf32>
    %29 = arith.addf %23, %28 : vector<256x4xf32>
    %c1_38 = arith.constant 1 : index
    %c0_39 = arith.constant 0 : index
    %c0_40 = arith.constant 0 : index
    %30 = vector.load %arg8[%c1_38, %c0_39, %c0_40] : memref<18x18x4xbf16, #tpu.memory_space<vmem>>, vector<16x16x4xbf16>
    %31 = vector.shape_cast %30 : vector<16x16x4xbf16> to vector<256x4xbf16>
    %c1_41 = arith.constant 1 : index
    %c0_42 = arith.constant 0 : index
    %c0_43 = arith.constant 0 : index
    %32 = vector.load %arg4[%c1_41, %c0_42, %c0_43] : memref<3x12x4xbf16, #tpu.memory_space<vmem>>, vector<1x4x4xbf16>
    %33 = vector.shape_cast %32 : vector<1x4x4xbf16> to vector<4x4xbf16>
    %cst_44 = arith.constant dense<0.000000e+00> : vector<256x4xf32>
    %34 = tpu.matmul %31, %33, %cst_44 {dimension_numbers = #tpu.dot_dimension_numbers<[1], [0], [0], [1], [0, 0, 1, 1], [], []>} : vector<256x4xbf16>, vector<4x4xbf16>, vector<256x4xf32> -> vector<256x4xf32>
    %35 = arith.addf %29, %34 : vector<256x4xf32>
    %c1_45 = arith.constant 1 : index
    %c1_46 = arith.constant 1 : index
    %c0_47 = arith.constant 0 : index
    %36 = vector.load %arg8[%c1_45, %c1_46, %c0_47] : memref<18x18x4xbf16, #tpu.memory_space<vmem>>, vector<16x16x4xbf16>
    %37 = vector.shape_cast %36 : vector<16x16x4xbf16> to vector<256x4xbf16>
    %c1_48 = arith.constant 1 : index
    %c4_49 = arith.constant 4 : index
    %c0_50 = arith.constant 0 : index
    %38 = vector.load %arg4[%c1_48, %c4_49, %c0_50] : memref<3x12x4xbf16, #tpu.memory_space<vmem>>, vector<1x4x4xbf16>
    %39 = vector.shape_cast %38 : vector<1x4x4xbf16> to vector<4x4xbf16>
    %cst_51 = arith.constant dense<0.000000e+00> : vector<256x4xf32>
    %40 = tpu.matmul %37, %39, %cst_51 {dimension_numbers = #tpu.dot_dimension_numbers<[1], [0], [0], [1], [0, 0, 1, 1], [], []>} : vector<256x4xbf16>, vector<4x4xbf16>, vector<256x4xf32> -> vector<256x4xf32>
    %41 = arith.addf %35, %40 : vector<256x4xf32>
    %c1_52 = arith.constant 1 : index
    %c2_53 = arith.constant 2 : index
    %c0_54 = arith.constant 0 : index
    %42 = vector.load %arg8[%c1_52, %c2_53, %c0_54] : memref<18x18x4xbf16, #tpu.memory_space<vmem>>, vector<16x16x4xbf16>
    %43 = vector.shape_cast %42 : vector<16x16x4xbf16> to vector<256x4xbf16>
    %c1_55 = arith.constant 1 : index
    %c8_56 = arith.constant 8 : index
    %c0_57 = arith.constant 0 : index
    %44 = vector.load %arg4[%c1_55, %c8_56, %c0_57] : memref<3x12x4xbf16, #tpu.memory_space<vmem>>, vector<1x4x4xbf16>
    %45 = vector.shape_cast %44 : vector<1x4x4xbf16> to vector<4x4xbf16>
    %cst_58 = arith.constant dense<0.000000e+00> : vector<256x4xf32>
    %46 = tpu.matmul %43, %45, %cst_58 {dimension_numbers = #tpu.dot_dimension_numbers<[1], [0], [0], [1], [0, 0, 1, 1], [], []>} : vector<256x4xbf16>, vector<4x4xbf16>, vector<256x4xf32> -> vector<256x4xf32>
    %47 = arith.addf %41, %46 : vector<256x4xf32>
    %c2_59 = arith.constant 2 : index
    %c0_60 = arith.constant 0 : index
    %c0_61 = arith.constant 0 : index
    %48 = vector.load %arg8[%c2_59, %c0_60, %c0_61] : memref<18x18x4xbf16, #tpu.memory_space<vmem>>, vector<16x16x4xbf16>
    %49 = vector.shape_cast %48 : vector<16x16x4xbf16> to vector<256x4xbf16>
    %c2_62 = arith.constant 2 : index
    %c0_63 = arith.constant 0 : index
    %c0_64 = arith.constant 0 : index
    %50 = vector.load %arg4[%c2_62, %c0_63, %c0_64] : memref<3x12x4xbf16, #tpu.memory_space<vmem>>, vector<1x4x4xbf16>
    %51 = vector.shape_cast %50 : vector<1x4x4xbf16> to vector<4x4xbf16>
    %cst_65 = arith.constant dense<0.000000e+00> : vector<256x4xf32>
    %52 = tpu.matmul %49, %51, %cst_65 {dimension_numbers = #tpu.dot_dimension_numbers<[1], [0], [0], [1], [0, 0, 1, 1], [], []>} : vector<256x4xbf16>, vector<4x4xbf16>, vector<256x4xf32> -> vector<256x4xf32>
    %53 = arith.addf %47, %52 : vector<256x4xf32>
    %c2_66 = arith.constant 2 : index
    %c1_67 = arith.constant 1 : index
    %c0_68 = arith.constant 0 : index
    %54 = vector.load %arg8[%c2_66, %c1_67, %c0_68] : memref<18x18x4xbf16, #tpu.memory_space<vmem>>, vector<16x16x4xbf16>
    %55 = vector.shape_cast %54 : vector<16x16x4xbf16> to vector<256x4xbf16>
    %c2_69 = arith.constant 2 : index
    %c4_70 = arith.constant 4 : index
    %c0_71 = arith.constant 0 : index
    %56 = vector.load %arg4[%c2_69, %c4_70, %c0_71] : memref<3x12x4xbf16, #tpu.memory_space<vmem>>, vector<1x4x4xbf16>
    %57 = vector.shape_cast %56 : vector<1x4x4xbf16> to vector<4x4xbf16>
    %cst_72 = arith.constant dense<0.000000e+00> : vector<256x4xf32>
    %58 = tpu.matmul %55, %57, %cst_72 {dimension_numbers = #tpu.dot_dimension_numbers<[1], [0], [0], [1], [0, 0, 1, 1], [], []>} : vector<256x4xbf16>, vector<4x4xbf16>, vector<256x4xf32> -> vector<256x4xf32>
    %59 = arith.addf %53, %58 : vector<256x4xf32>
    %c2_73 = arith.constant 2 : index
    %c2_74 = arith.constant 2 : index
    %c0_75 = arith.constant 0 : index
    %60 = vector.load %arg8[%c2_73, %c2_74, %c0_75] : memref<18x18x4xbf16, #tpu.memory_space<vmem>>, vector<16x16x4xbf16>
    %61 = vector.shape_cast %60 : vector<16x16x4xbf16> to vector<256x4xbf16>
    %c2_76 = arith.constant 2 : index
    %c8_77 = arith.constant 8 : index
    %c0_78 = arith.constant 0 : index
    %62 = vector.load %arg4[%c2_76, %c8_77, %c0_78] : memref<3x12x4xbf16, #tpu.memory_space<vmem>>, vector<1x4x4xbf16>
    %63 = vector.shape_cast %62 : vector<1x4x4xbf16> to vector<4x4xbf16>
    %cst_79 = arith.constant dense<0.000000e+00> : vector<256x4xf32>
    %64 = tpu.matmul %61, %63, %cst_79 {dimension_numbers = #tpu.dot_dimension_numbers<[1], [0], [0], [1], [0, 0, 1, 1], [], []>} : vector<256x4xbf16>, vector<4x4xbf16>, vector<256x4xf32> -> vector<256x4xf32>
    %65 = arith.addf %59, %64 : vector<256x4xf32>
    %66 = vector.shape_cast %65 : vector<256x4xf32> to vector<16x16x4xf32>
    %67 = arith.truncf %66 : vector<16x16x4xf32> to vector<16x16x4xbf16>
    %c0_80 = arith.constant 0 : index
    %c0_81 = arith.constant 0 : index
    %c0_82 = arith.constant 0 : index
    %c0_83 = arith.constant 0 : index
    %68 = vector.load %arg5[%c0_80, %c0_81, %c0_82, %c0_83] : memref<1x16x16x4xbf16, #tpu.memory_space<vmem>>, vector<1x16x16x4xbf16>
    %69 = vector.shape_cast %68 : vector<1x16x16x4xbf16> to vector<16x16x4xbf16>
    %70 = vector.shape_cast %67 : vector<16x16x4xbf16> to vector<1x16x16x4xbf16>
    tpu.vector_store %arg5[%c0_80, %c0_81, %c0_82, %c0_83], %70 {strides = array<i32>} : memref<1x16x16x4xbf16, #tpu.memory_space<vmem>>, vector<1x16x16x4xbf16>,
    %cst_84 = arith.constant dense<0.000000e+00> : vector<4xf32>
    %71 = vector.multi_reduction <add>, %65, %cst_84 [0] : vector<256x4xf32> to vector<4xf32>
    %72 = vector.shape_cast %71 : vector<4xf32> to vector<1x4xf32>
    %c0_85 = arith.constant 0 : index
    %c0_86 = arith.constant 0 : index
    %c0_87 = arith.constant 0 : index
    %73 = vector.load %arg6[%c0_85, %c0_86, %c0_87] : memref<1x1x4xf32, #tpu.memory_space<vmem>>, vector<1x1x4xf32>
    %74 = vector.shape_cast %73 : vector<1x1x4xf32> to vector<1x4xf32>
    %75 = vector.shape_cast %72 : vector<1x4xf32> to vector<1x1x4xf32>
    tpu.vector_store %arg6[%c0_85, %c0_86, %c0_87], %75 {strides = array<i32>} : memref<1x1x4xf32, #tpu.memory_space<vmem>>, vector<1x1x4xf32>,
    %76 = arith.mulf %65, %65 : vector<256x4xf32>
    %cst_88 = arith.constant dense<0.000000e+00> : vector<4xf32>
    %77 = vector.multi_reduction <add>, %76, %cst_88 [0] : vector<256x4xf32> to vector<4xf32>
    %78 = vector.shape_cast %77 : vector<4xf32> to vector<1x4xf32>
    %c0_89 = arith.constant 0 : index
    %c0_90 = arith.constant 0 : index
    %c0_91 = arith.constant 0 : index
    %79 = vector.load %arg7[%c0_89, %c0_90, %c0_91] : memref<1x1x4xf32, #tpu.memory_space<vmem>>, vector<1x1x4xf32>
    %80 = vector.shape_cast %79 : vector<1x1x4xf32> to vector<1x4xf32>
    %81 = vector.shape_cast %78 : vector<1x4xf32> to vector<1x1x4xf32>
    tpu.vector_store %arg7[%c0_89, %c0_90, %c0_91], %81 {strides = array<i32>} : memref<1x1x4xf32, #tpu.memory_space<vmem>>, vector<1x1x4xf32>,
    return
  }
  func.func @transform_0(%arg0: i32) -> (i32, i32, i32, i32) {
    %c0_i32 = arith.constant 0 : i32
    %c0_i32_0 = arith.constant 0 : i32
    %c0_i32_1 = arith.constant 0 : i32
    %c0_i32_2 = arith.constant 0 : i32
    return %arg0, %c0_i32, %c0_i32_0, %c0_i32_1 : i32, i32, i32, i32
  }
  func.func @transform_1(%arg0: i32) -> (i32, i32) {
    %c0_i32 = arith.constant 0 : i32
    %c0_i32_0 = arith.constant 0 : i32
    %c0_i32_1 = arith.constant 0 : i32
    return %c0_i32, %c0_i32_0 : i32, i32
  }
  func.func @transform_2(%arg0: i32) -> (i32, i32) {
    %c0_i32 = arith.constant 0 : i32
    %c0_i32_0 = arith.constant 0 : i32
    %c0_i32_1 = arith.constant 0 : i32
    return %c0_i32, %c0_i32_0 : i32, i32
  }
  func.func @transform_3(%arg0: i32) -> (i32, i32, i32) {
    %c0_i32 = arith.constant 0 : i32
    %c0_i32_0 = arith.constant 0 : i32
    %c0_i32_1 = arith.constant 0 : i32
    %c0_i32_2 = arith.constant 0 : i32
    return %c0_i32, %c0_i32_0, %c0_i32_1 : i32, i32, i32
  }
  func.func @transform_4(%arg0: i32) -> (i32, i32, i32, i32) {
    %c0_i32 = arith.constant 0 : i32
    %c0_i32_0 = arith.constant 0 : i32
    %c0_i32_1 = arith.constant 0 : i32
    %c0_i32_2 = arith.constant 0 : i32
    return %arg0, %c0_i32, %c0_i32_0, %c0_i32_1 : i32, i32, i32, i32
  }
  func.func @transform_5(%arg0: i32) -> (i32, i32, i32) {
    %c0_i32 = arith.constant 0 : i32
    %c0_i32_0 = arith.constant 0 : i32
    %c0_i32_1 = arith.constant 0 : i32
    return %arg0, %c0_i32, %c0_i32_0 : i32, i32, i32
  }
  func.func @transform_6(%arg0: i32) -> (i32, i32, i32) {
    %c0_i32 = arith.constant 0 : i32
    %c0_i32_0 = arith.constant 0 : i32
    %c0_i32_1 = arith.constant 0 : i32
    return %arg0, %c0_i32, %c0_i32_0 : i32, i32, i32
  }
}

module attributes {stable_mosaic.version = 11 : i64} {
  func.func @conv_bn_stats_kernel(%arg0: i32, %arg1: memref<1x16x16x4xbf16, #tpu.memory_space<vmem>>, %arg2: memref<1x4xf32, #tpu.memory_space<vmem>>, %arg3: memref<1x4xf32, #tpu.memory_space<vmem>>, %arg4: memref<3x12x4xbf16, #tpu.memory_space<vmem>>, %arg5: memref<1x16x16x4xbf16, #tpu.memory_space<vmem>>, %arg6: memref<1x1x4xf32, #tpu.memory_space<vmem>>, %arg7: memref<1x1x4xf32, #tpu.memory_space<vmem>>, %arg8: memref<18x18x4xbf16, #tpu.memory_space<vmem>>) attributes {dimension_semantics = [#tpu.dimension_semantics<parallel>], iteration_bounds = array<i64: 2>, scalar_prefetch = 0 : i64, scratch_operands = 1 : i64, tpu.core_type = #tpu.core_type<tc>, window_params = [{transform_indices = @transform_0, window_bounds = array<i64: 1, 16, 16, 4>}, {pipeline_mode = #tpu.pipeline_mode<synchronous>, transform_indices = @transform_1, window_bounds = array<i64: 1, 4>}, {pipeline_mode = #tpu.pipeline_mode<synchronous>, transform_indices = @transform_2, window_bounds = array<i64: 1, 4>}, {pipeline_mode = #tpu.pipeline_mode<synchronous>, transform_indices = @transform_3, window_bounds = array<i64: 3, 12, 4>}, {transform_indices = @transform_4, window_bounds = array<i64: 1, 16, 16, 4>}, {transform_indices = @transform_5, window_bounds = array<i64: 1, 1, 4>}, {transform_indices = @transform_6, window_bounds = array<i64: 1, 1, 4>}]} {
    %cst = arith.constant 0.000000e+00 : bf16
    %0 = vector.broadcast %cst : bf16 to vector<1x18x4xbf16>
    %c0 = arith.constant 0 : index
    %c0_0 = arith.constant 0 : index
    %c0_1 = arith.constant 0 : index
    %1 = vector.load %arg8[%c0, %c0_0, %c0_1] : memref<18x18x4xbf16, #tpu.memory_space<vmem>>, vector<1x18x4xbf16>
    tpu.vector_store %arg8[%c0, %c0_0, %c0_1], %0 {strides = array<i32>} : memref<18x18x4xbf16, #tpu.memory_space<vmem>>, vector<1x18x4xbf16>,
    %cst_2 = arith.constant 0.000000e+00 : bf16
    %2 = vector.broadcast %cst_2 : bf16 to vector<1x18x4xbf16>
    %c17 = arith.constant 17 : index
    %c0_3 = arith.constant 0 : index
    %c0_4 = arith.constant 0 : index
    %3 = vector.load %arg8[%c17, %c0_3, %c0_4] : memref<18x18x4xbf16, #tpu.memory_space<vmem>>, vector<1x18x4xbf16>
    tpu.vector_store %arg8[%c17, %c0_3, %c0_4], %2 {strides = array<i32>} : memref<18x18x4xbf16, #tpu.memory_space<vmem>>, vector<1x18x4xbf16>,
    %cst_5 = arith.constant 0.000000e+00 : bf16
    %4 = vector.broadcast %cst_5 : bf16 to vector<18x1x4xbf16>
    %c0_6 = arith.constant 0 : index
    %c0_7 = arith.constant 0 : index
    %c0_8 = arith.constant 0 : index
    %5 = vector.load %arg8[%c0_6, %c0_7, %c0_8] : memref<18x18x4xbf16, #tpu.memory_space<vmem>>, vector<18x1x4xbf16>
    tpu.vector_store %arg8[%c0_6, %c0_7, %c0_8], %4 {strides = array<i32>} : memref<18x18x4xbf16, #tpu.memory_space<vmem>>, vector<18x1x4xbf16>,
    %cst_9 = arith.constant 0.000000e+00 : bf16
    %6 = vector.broadcast %cst_9 : bf16 to vector<18x1x4xbf16>
    %c0_10 = arith.constant 0 : index
    %c17_11 = arith.constant 17 : index
    %c0_12 = arith.constant 0 : index
    %7 = vector.load %arg8[%c0_10, %c17_11, %c0_12] : memref<18x18x4xbf16, #tpu.memory_space<vmem>>, vector<18x1x4xbf16>
    tpu.vector_store %arg8[%c0_10, %c17_11, %c0_12], %6 {strides = array<i32>} : memref<18x18x4xbf16, #tpu.memory_space<vmem>>, vector<18x1x4xbf16>,
    %c0_13 = arith.constant 0 : index
    %c0_14 = arith.constant 0 : index
    %c0_15 = arith.constant 0 : index
    %c0_16 = arith.constant 0 : index
    %8 = vector.load %arg1[%c0_13, %c0_14, %c0_15, %c0_16] : memref<1x16x16x4xbf16, #tpu.memory_space<vmem>>, vector<1x16x16x4xbf16>
    %9 = vector.shape_cast %8 : vector<1x16x16x4xbf16> to vector<16x16x4xbf16>
    %10 = arith.extf %9 : vector<16x16x4xbf16> to vector<16x16x4xf32>
    %c0_17 = arith.constant 0 : index
    %c0_18 = arith.constant 0 : index
    %11 = vector.load %arg2[%c0_17, %c0_18] : memref<1x4xf32, #tpu.memory_space<vmem>>, vector<1x4xf32>
    %12 = vector.shape_cast %11 : vector<1x4xf32> to vector<1x1x4xf32>
    %13 = vector.broadcast %12 : vector<1x1x4xf32> to vector<16x16x4xf32>
    %14 = arith.mulf %10, %13 : vector<16x16x4xf32>
    %c0_19 = arith.constant 0 : index
    %c0_20 = arith.constant 0 : index
    %15 = vector.load %arg3[%c0_19, %c0_20] : memref<1x4xf32, #tpu.memory_space<vmem>>, vector<1x4xf32>
    %16 = vector.shape_cast %15 : vector<1x4xf32> to vector<1x1x4xf32>
    %17 = vector.broadcast %16 : vector<1x1x4xf32> to vector<16x16x4xf32>
    %18 = arith.addf %14, %17 : vector<16x16x4xf32>
    %cst_21 = arith.constant 0.000000e+00 : f32
    %19 = vector.broadcast %cst_21 : f32 to vector<16x16x4xf32>
    %20 = arith.maximumf %18, %19 : vector<16x16x4xf32>
    %21 = arith.truncf %20 : vector<16x16x4xf32> to vector<16x16x4xbf16>
    %c1 = arith.constant 1 : index
    %c1_22 = arith.constant 1 : index
    %c0_23 = arith.constant 0 : index
    %22 = vector.load %arg8[%c1, %c1_22, %c0_23] : memref<18x18x4xbf16, #tpu.memory_space<vmem>>, vector<16x16x4xbf16>
    tpu.vector_store %arg8[%c1, %c1_22, %c0_23], %21 {strides = array<i32>} : memref<18x18x4xbf16, #tpu.memory_space<vmem>>, vector<16x16x4xbf16>,
    %cst_24 = arith.constant 0.000000e+00 : f32
    %23 = vector.broadcast %cst_24 : f32 to vector<256x4xf32>
    %c0_25 = arith.constant 0 : index
    %c0_26 = arith.constant 0 : index
    %c0_27 = arith.constant 0 : index
    %24 = vector.load %arg8[%c0_25, %c0_26, %c0_27] : memref<18x18x4xbf16, #tpu.memory_space<vmem>>, vector<16x16x4xbf16>
    %25 = vector.shape_cast %24 : vector<16x16x4xbf16> to vector<256x4xbf16>
    %c0_28 = arith.constant 0 : index
    %c0_29 = arith.constant 0 : index
    %c0_30 = arith.constant 0 : index
    %26 = vector.load %arg4[%c0_28, %c0_29, %c0_30] : memref<3x12x4xbf16, #tpu.memory_space<vmem>>, vector<1x4x4xbf16>
    %27 = vector.shape_cast %26 : vector<1x4x4xbf16> to vector<4x4xbf16>
    %cst_31 = arith.constant dense<0.000000e+00> : vector<256x4xf32>
    %28 = tpu.matmul %25, %27, %cst_31 {dimension_numbers = #tpu.dot_dimension_numbers<[1], [0], [0], [1], [0, 0, 1, 1], [], []>} : vector<256x4xbf16>, vector<4x4xbf16>, vector<256x4xf32> -> vector<256x4xf32>
    %29 = arith.addf %23, %28 : vector<256x4xf32>
    %c0_32 = arith.constant 0 : index
    %c1_33 = arith.constant 1 : index
    %c0_34 = arith.constant 0 : index
    %30 = vector.load %arg8[%c0_32, %c1_33, %c0_34] : memref<18x18x4xbf16, #tpu.memory_space<vmem>>, vector<16x16x4xbf16>
    %31 = vector.shape_cast %30 : vector<16x16x4xbf16> to vector<256x4xbf16>
    %c0_35 = arith.constant 0 : index
    %c4 = arith.constant 4 : index
    %c0_36 = arith.constant 0 : index
    %32 = vector.load %arg4[%c0_35, %c4, %c0_36] : memref<3x12x4xbf16, #tpu.memory_space<vmem>>, vector<1x4x4xbf16>
    %33 = vector.shape_cast %32 : vector<1x4x4xbf16> to vector<4x4xbf16>
    %cst_37 = arith.constant dense<0.000000e+00> : vector<256x4xf32>
    %34 = tpu.matmul %31, %33, %cst_37 {dimension_numbers = #tpu.dot_dimension_numbers<[1], [0], [0], [1], [0, 0, 1, 1], [], []>} : vector<256x4xbf16>, vector<4x4xbf16>, vector<256x4xf32> -> vector<256x4xf32>
    %35 = arith.addf %29, %34 : vector<256x4xf32>
    %c0_38 = arith.constant 0 : index
    %c2 = arith.constant 2 : index
    %c0_39 = arith.constant 0 : index
    %36 = vector.load %arg8[%c0_38, %c2, %c0_39] : memref<18x18x4xbf16, #tpu.memory_space<vmem>>, vector<16x16x4xbf16>
    %37 = vector.shape_cast %36 : vector<16x16x4xbf16> to vector<256x4xbf16>
    %c0_40 = arith.constant 0 : index
    %c8 = arith.constant 8 : index
    %c0_41 = arith.constant 0 : index
    %38 = vector.load %arg4[%c0_40, %c8, %c0_41] : memref<3x12x4xbf16, #tpu.memory_space<vmem>>, vector<1x4x4xbf16>
    %39 = vector.shape_cast %38 : vector<1x4x4xbf16> to vector<4x4xbf16>
    %cst_42 = arith.constant dense<0.000000e+00> : vector<256x4xf32>
    %40 = tpu.matmul %37, %39, %cst_42 {dimension_numbers = #tpu.dot_dimension_numbers<[1], [0], [0], [1], [0, 0, 1, 1], [], []>} : vector<256x4xbf16>, vector<4x4xbf16>, vector<256x4xf32> -> vector<256x4xf32>
    %41 = arith.addf %35, %40 : vector<256x4xf32>
    %c1_43 = arith.constant 1 : index
    %c0_44 = arith.constant 0 : index
    %c0_45 = arith.constant 0 : index
    %42 = vector.load %arg8[%c1_43, %c0_44, %c0_45] : memref<18x18x4xbf16, #tpu.memory_space<vmem>>, vector<16x16x4xbf16>
    %43 = vector.shape_cast %42 : vector<16x16x4xbf16> to vector<256x4xbf16>
    %c1_46 = arith.constant 1 : index
    %c0_47 = arith.constant 0 : index
    %c0_48 = arith.constant 0 : index
    %44 = vector.load %arg4[%c1_46, %c0_47, %c0_48] : memref<3x12x4xbf16, #tpu.memory_space<vmem>>, vector<1x4x4xbf16>
    %45 = vector.shape_cast %44 : vector<1x4x4xbf16> to vector<4x4xbf16>
    %cst_49 = arith.constant dense<0.000000e+00> : vector<256x4xf32>
    %46 = tpu.matmul %43, %45, %cst_49 {dimension_numbers = #tpu.dot_dimension_numbers<[1], [0], [0], [1], [0, 0, 1, 1], [], []>} : vector<256x4xbf16>, vector<4x4xbf16>, vector<256x4xf32> -> vector<256x4xf32>
    %47 = arith.addf %41, %46 : vector<256x4xf32>
    %c1_50 = arith.constant 1 : index
    %c1_51 = arith.constant 1 : index
    %c0_52 = arith.constant 0 : index
    %48 = vector.load %arg8[%c1_50, %c1_51, %c0_52] : memref<18x18x4xbf16, #tpu.memory_space<vmem>>, vector<16x16x4xbf16>
    %49 = vector.shape_cast %48 : vector<16x16x4xbf16> to vector<256x4xbf16>
    %c1_53 = arith.constant 1 : index
    %c4_54 = arith.constant 4 : index
    %c0_55 = arith.constant 0 : index
    %50 = vector.load %arg4[%c1_53, %c4_54, %c0_55] : memref<3x12x4xbf16, #tpu.memory_space<vmem>>, vector<1x4x4xbf16>
    %51 = vector.shape_cast %50 : vector<1x4x4xbf16> to vector<4x4xbf16>
    %cst_56 = arith.constant dense<0.000000e+00> : vector<256x4xf32>
    %52 = tpu.matmul %49, %51, %cst_56 {dimension_numbers = #tpu.dot_dimension_numbers<[1], [0], [0], [1], [0, 0, 1, 1], [], []>} : vector<256x4xbf16>, vector<4x4xbf16>, vector<256x4xf32> -> vector<256x4xf32>
    %53 = arith.addf %47, %52 : vector<256x4xf32>
    %c1_57 = arith.constant 1 : index
    %c2_58 = arith.constant 2 : index
    %c0_59 = arith.constant 0 : index
    %54 = vector.load %arg8[%c1_57, %c2_58, %c0_59] : memref<18x18x4xbf16, #tpu.memory_space<vmem>>, vector<16x16x4xbf16>
    %55 = vector.shape_cast %54 : vector<16x16x4xbf16> to vector<256x4xbf16>
    %c1_60 = arith.constant 1 : index
    %c8_61 = arith.constant 8 : index
    %c0_62 = arith.constant 0 : index
    %56 = vector.load %arg4[%c1_60, %c8_61, %c0_62] : memref<3x12x4xbf16, #tpu.memory_space<vmem>>, vector<1x4x4xbf16>
    %57 = vector.shape_cast %56 : vector<1x4x4xbf16> to vector<4x4xbf16>
    %cst_63 = arith.constant dense<0.000000e+00> : vector<256x4xf32>
    %58 = tpu.matmul %55, %57, %cst_63 {dimension_numbers = #tpu.dot_dimension_numbers<[1], [0], [0], [1], [0, 0, 1, 1], [], []>} : vector<256x4xbf16>, vector<4x4xbf16>, vector<256x4xf32> -> vector<256x4xf32>
    %59 = arith.addf %53, %58 : vector<256x4xf32>
    %c2_64 = arith.constant 2 : index
    %c0_65 = arith.constant 0 : index
    %c0_66 = arith.constant 0 : index
    %60 = vector.load %arg8[%c2_64, %c0_65, %c0_66] : memref<18x18x4xbf16, #tpu.memory_space<vmem>>, vector<16x16x4xbf16>
    %61 = vector.shape_cast %60 : vector<16x16x4xbf16> to vector<256x4xbf16>
    %c2_67 = arith.constant 2 : index
    %c0_68 = arith.constant 0 : index
    %c0_69 = arith.constant 0 : index
    %62 = vector.load %arg4[%c2_67, %c0_68, %c0_69] : memref<3x12x4xbf16, #tpu.memory_space<vmem>>, vector<1x4x4xbf16>
    %63 = vector.shape_cast %62 : vector<1x4x4xbf16> to vector<4x4xbf16>
    %cst_70 = arith.constant dense<0.000000e+00> : vector<256x4xf32>
    %64 = tpu.matmul %61, %63, %cst_70 {dimension_numbers = #tpu.dot_dimension_numbers<[1], [0], [0], [1], [0, 0, 1, 1], [], []>} : vector<256x4xbf16>, vector<4x4xbf16>, vector<256x4xf32> -> vector<256x4xf32>
    %65 = arith.addf %59, %64 : vector<256x4xf32>
    %c2_71 = arith.constant 2 : index
    %c1_72 = arith.constant 1 : index
    %c0_73 = arith.constant 0 : index
    %66 = vector.load %arg8[%c2_71, %c1_72, %c0_73] : memref<18x18x4xbf16, #tpu.memory_space<vmem>>, vector<16x16x4xbf16>
    %67 = vector.shape_cast %66 : vector<16x16x4xbf16> to vector<256x4xbf16>
    %c2_74 = arith.constant 2 : index
    %c4_75 = arith.constant 4 : index
    %c0_76 = arith.constant 0 : index
    %68 = vector.load %arg4[%c2_74, %c4_75, %c0_76] : memref<3x12x4xbf16, #tpu.memory_space<vmem>>, vector<1x4x4xbf16>
    %69 = vector.shape_cast %68 : vector<1x4x4xbf16> to vector<4x4xbf16>
    %cst_77 = arith.constant dense<0.000000e+00> : vector<256x4xf32>
    %70 = tpu.matmul %67, %69, %cst_77 {dimension_numbers = #tpu.dot_dimension_numbers<[1], [0], [0], [1], [0, 0, 1, 1], [], []>} : vector<256x4xbf16>, vector<4x4xbf16>, vector<256x4xf32> -> vector<256x4xf32>
    %71 = arith.addf %65, %70 : vector<256x4xf32>
    %c2_78 = arith.constant 2 : index
    %c2_79 = arith.constant 2 : index
    %c0_80 = arith.constant 0 : index
    %72 = vector.load %arg8[%c2_78, %c2_79, %c0_80] : memref<18x18x4xbf16, #tpu.memory_space<vmem>>, vector<16x16x4xbf16>
    %73 = vector.shape_cast %72 : vector<16x16x4xbf16> to vector<256x4xbf16>
    %c2_81 = arith.constant 2 : index
    %c8_82 = arith.constant 8 : index
    %c0_83 = arith.constant 0 : index
    %74 = vector.load %arg4[%c2_81, %c8_82, %c0_83] : memref<3x12x4xbf16, #tpu.memory_space<vmem>>, vector<1x4x4xbf16>
    %75 = vector.shape_cast %74 : vector<1x4x4xbf16> to vector<4x4xbf16>
    %cst_84 = arith.constant dense<0.000000e+00> : vector<256x4xf32>
    %76 = tpu.matmul %73, %75, %cst_84 {dimension_numbers = #tpu.dot_dimension_numbers<[1], [0], [0], [1], [0, 0, 1, 1], [], []>} : vector<256x4xbf16>, vector<4x4xbf16>, vector<256x4xf32> -> vector<256x4xf32>
    %77 = arith.addf %71, %76 : vector<256x4xf32>
    %78 = vector.shape_cast %77 : vector<256x4xf32> to vector<16x16x4xf32>
    %79 = arith.truncf %78 : vector<16x16x4xf32> to vector<16x16x4xbf16>
    %c0_85 = arith.constant 0 : index
    %c0_86 = arith.constant 0 : index
    %c0_87 = arith.constant 0 : index
    %c0_88 = arith.constant 0 : index
    %80 = vector.load %arg5[%c0_85, %c0_86, %c0_87, %c0_88] : memref<1x16x16x4xbf16, #tpu.memory_space<vmem>>, vector<1x16x16x4xbf16>
    %81 = vector.shape_cast %80 : vector<1x16x16x4xbf16> to vector<16x16x4xbf16>
    %82 = vector.shape_cast %79 : vector<16x16x4xbf16> to vector<1x16x16x4xbf16>
    tpu.vector_store %arg5[%c0_85, %c0_86, %c0_87, %c0_88], %82 {strides = array<i32>} : memref<1x16x16x4xbf16, #tpu.memory_space<vmem>>, vector<1x16x16x4xbf16>,
    %cst_89 = arith.constant dense<0.000000e+00> : vector<4xf32>
    %83 = vector.multi_reduction <add>, %77, %cst_89 [0] : vector<256x4xf32> to vector<4xf32>
    %84 = vector.shape_cast %83 : vector<4xf32> to vector<1x4xf32>
    %c0_90 = arith.constant 0 : index
    %c0_91 = arith.constant 0 : index
    %c0_92 = arith.constant 0 : index
    %85 = vector.load %arg6[%c0_90, %c0_91, %c0_92] : memref<1x1x4xf32, #tpu.memory_space<vmem>>, vector<1x1x4xf32>
    %86 = vector.shape_cast %85 : vector<1x1x4xf32> to vector<1x4xf32>
    %87 = vector.shape_cast %84 : vector<1x4xf32> to vector<1x1x4xf32>
    tpu.vector_store %arg6[%c0_90, %c0_91, %c0_92], %87 {strides = array<i32>} : memref<1x1x4xf32, #tpu.memory_space<vmem>>, vector<1x1x4xf32>,
    %88 = arith.mulf %77, %77 : vector<256x4xf32>
    %cst_93 = arith.constant dense<0.000000e+00> : vector<4xf32>
    %89 = vector.multi_reduction <add>, %88, %cst_93 [0] : vector<256x4xf32> to vector<4xf32>
    %90 = vector.shape_cast %89 : vector<4xf32> to vector<1x4xf32>
    %c0_94 = arith.constant 0 : index
    %c0_95 = arith.constant 0 : index
    %c0_96 = arith.constant 0 : index
    %91 = vector.load %arg7[%c0_94, %c0_95, %c0_96] : memref<1x1x4xf32, #tpu.memory_space<vmem>>, vector<1x1x4xf32>
    %92 = vector.shape_cast %91 : vector<1x1x4xf32> to vector<1x4xf32>
    %93 = vector.shape_cast %90 : vector<1x4xf32> to vector<1x1x4xf32>
    tpu.vector_store %arg7[%c0_94, %c0_95, %c0_96], %93 {strides = array<i32>} : memref<1x1x4xf32, #tpu.memory_space<vmem>>, vector<1x1x4xf32>,
    return
  }
  func.func @transform_0(%arg0: i32) -> (i32, i32, i32, i32) {
    %c0_i32 = arith.constant 0 : i32
    %c0_i32_0 = arith.constant 0 : i32
    %c0_i32_1 = arith.constant 0 : i32
    %c0_i32_2 = arith.constant 0 : i32
    return %arg0, %c0_i32, %c0_i32_0, %c0_i32_1 : i32, i32, i32, i32
  }
  func.func @transform_1(%arg0: i32) -> (i32, i32) {
    %c0_i32 = arith.constant 0 : i32
    %c0_i32_0 = arith.constant 0 : i32
    %c0_i32_1 = arith.constant 0 : i32
    return %c0_i32, %c0_i32_0 : i32, i32
  }
  func.func @transform_2(%arg0: i32) -> (i32, i32) {
    %c0_i32 = arith.constant 0 : i32
    %c0_i32_0 = arith.constant 0 : i32
    %c0_i32_1 = arith.constant 0 : i32
    return %c0_i32, %c0_i32_0 : i32, i32
  }
  func.func @transform_3(%arg0: i32) -> (i32, i32, i32) {
    %c0_i32 = arith.constant 0 : i32
    %c0_i32_0 = arith.constant 0 : i32
    %c0_i32_1 = arith.constant 0 : i32
    %c0_i32_2 = arith.constant 0 : i32
    return %c0_i32, %c0_i32_0, %c0_i32_1 : i32, i32, i32
  }
  func.func @transform_4(%arg0: i32) -> (i32, i32, i32, i32) {
    %c0_i32 = arith.constant 0 : i32
    %c0_i32_0 = arith.constant 0 : i32
    %c0_i32_1 = arith.constant 0 : i32
    %c0_i32_2 = arith.constant 0 : i32
    return %arg0, %c0_i32, %c0_i32_0, %c0_i32_1 : i32, i32, i32, i32
  }
  func.func @transform_5(%arg0: i32) -> (i32, i32, i32) {
    %c0_i32 = arith.constant 0 : i32
    %c0_i32_0 = arith.constant 0 : i32
    %c0_i32_1 = arith.constant 0 : i32
    return %arg0, %c0_i32, %c0_i32_0 : i32, i32, i32
  }
  func.func @transform_6(%arg0: i32) -> (i32, i32, i32) {
    %c0_i32 = arith.constant 0 : i32
    %c0_i32_0 = arith.constant 0 : i32
    %c0_i32_1 = arith.constant 0 : i32
    return %arg0, %c0_i32, %c0_i32_0 : i32, i32, i32
  }
}

module attributes {stable_mosaic.version = 11 : i64} {
  func.func @bn_residual_relu_kernel(%arg0: i32, %arg1: memref<16x128xbf16, #tpu.memory_space<vmem>>, %arg2: memref<16x128xf32, #tpu.memory_space<vmem>>, %arg3: memref<1x128xf32, #tpu.memory_space<vmem>>, %arg4: memref<1x128xf32, #tpu.memory_space<vmem>>, %arg5: memref<16x128xf32, #tpu.memory_space<vmem>>) attributes {dimension_semantics = [#tpu.dimension_semantics<parallel>], iteration_bounds = array<i64: 1>, scalar_prefetch = 0 : i64, scratch_operands = 0 : i64, tpu.core_type = #tpu.core_type<tc>, window_params = [{transform_indices = @transform_0, window_bounds = array<i64: 16, 128>}, {transform_indices = @transform_1, window_bounds = array<i64: 16, 128>}, {pipeline_mode = #tpu.pipeline_mode<synchronous>, transform_indices = @transform_2, window_bounds = array<i64: 1, 128>}, {pipeline_mode = #tpu.pipeline_mode<synchronous>, transform_indices = @transform_3, window_bounds = array<i64: 1, 128>}, {transform_indices = @transform_4, window_bounds = array<i64: 16, 128>}]} {
    %c0 = arith.constant 0 : index
    %c0_0 = arith.constant 0 : index
    %0 = vector.load %arg1[%c0, %c0_0] : memref<16x128xbf16, #tpu.memory_space<vmem>>, vector<16x128xbf16>
    %1 = arith.extf %0 : vector<16x128xbf16> to vector<16x128xf32>
    %c0_1 = arith.constant 0 : index
    %c0_2 = arith.constant 0 : index
    %2 = vector.load %arg3[%c0_1, %c0_2] : memref<1x128xf32, #tpu.memory_space<vmem>>, vector<1x128xf32>
    %3 = vector.broadcast %2 : vector<1x128xf32> to vector<16x128xf32>
    %4 = arith.mulf %1, %3 : vector<16x128xf32>
    %c0_3 = arith.constant 0 : index
    %c0_4 = arith.constant 0 : index
    %5 = vector.load %arg4[%c0_3, %c0_4] : memref<1x128xf32, #tpu.memory_space<vmem>>, vector<1x128xf32>
    %6 = vector.broadcast %5 : vector<1x128xf32> to vector<16x128xf32>
    %7 = arith.addf %4, %6 : vector<16x128xf32>
    %c0_5 = arith.constant 0 : index
    %c0_6 = arith.constant 0 : index
    %8 = vector.load %arg2[%c0_5, %c0_6] : memref<16x128xf32, #tpu.memory_space<vmem>>, vector<16x128xf32>
    %9 = arith.addf %7, %8 : vector<16x128xf32>
    %cst = arith.constant 0.000000e+00 : f32
    %10 = vector.broadcast %cst : f32 to vector<16x128xf32>
    %11 = arith.maximumf %9, %10 : vector<16x128xf32>
    %c0_7 = arith.constant 0 : index
    %c0_8 = arith.constant 0 : index
    %12 = vector.load %arg5[%c0_7, %c0_8] : memref<16x128xf32, #tpu.memory_space<vmem>>, vector<16x128xf32>
    tpu.vector_store %arg5[%c0_7, %c0_8], %11 {strides = array<i32>} : memref<16x128xf32, #tpu.memory_space<vmem>>, vector<16x128xf32>,
    return
  }
  func.func @transform_0(%arg0: i32) -> (i32, i32) {
    %c0_i32 = arith.constant 0 : i32
    %c0_i32_0 = arith.constant 0 : i32
    return %arg0, %c0_i32 : i32, i32
  }
  func.func @transform_1(%arg0: i32) -> (i32, i32) {
    %c0_i32 = arith.constant 0 : i32
    %c0_i32_0 = arith.constant 0 : i32
    return %arg0, %c0_i32 : i32, i32
  }
  func.func @transform_2(%arg0: i32) -> (i32, i32) {
    %c0_i32 = arith.constant 0 : i32
    %c0_i32_0 = arith.constant 0 : i32
    %c0_i32_1 = arith.constant 0 : i32
    return %c0_i32, %c0_i32_0 : i32, i32
  }
  func.func @transform_3(%arg0: i32) -> (i32, i32) {
    %c0_i32 = arith.constant 0 : i32
    %c0_i32_0 = arith.constant 0 : i32
    %c0_i32_1 = arith.constant 0 : i32
    return %c0_i32, %c0_i32_0 : i32, i32
  }
  func.func @transform_4(%arg0: i32) -> (i32, i32) {
    %c0_i32 = arith.constant 0 : i32
    %c0_i32_0 = arith.constant 0 : i32
    return %arg0, %c0_i32 : i32, i32
  }
}

</mosaic_0001>

<llo_original>
// kernel: resblock_forward.5
$region0: #{resblock_forward.5}
  #allocation0 [shape = 'u32[]', space=smem, size = 0x4, offset = 0x4, fixed_abs, tag = 'smem constant byte address 0x4 - core index']
  #allocation1 [shape = 'u32[72,128]{1,0:T(1,128)}', space=vmem, size = 0x9000, scoped, tag = 'internal scratch']
  %s0 = inlined_call_operand.vmem [shape: bf16[16,128], index: 0, kind: input, shape index: {}]
  %s1 = inlined_call_operand.vmem [shape: f32[16,128], index: 1, kind: input, shape index: {}]
  %s2 = inlined_call_operand.vmem [shape: f32[1,128], index: 2, kind: input, shape index: {}]
  %s3 = inlined_call_operand.vmem [shape: f32[1,128], index: 3, kind: input, shape index: {}]
  %s4 = inlined_call_operand.vmem [shape: f32[16,128], index: 4, kind: output, shape index: {}]
  %s5 = sld [smem:[#allocation0]]
  $region26: #{resblock_forward.5} parent=0
    _
  %s7 = ssub.s32 1, %s5
  %s8 = scalar_select 0, %s7, %s5
  // Predicated region
  $region2: #{resblock_forward.5} parent=0 // pred_check
    _
  $region3: #{resblock_forward.5} parent=0 // pred_check_branch
    %10 = sbr.rel (0) target = $region5
  $region4: #{resblock_forward.5} parent=0 // pred_region
    _
  $region5: #{resblock_forward.5} parent=0 // pred_fallthru
    _
  // Predicated region
  $region6: #{resblock_forward.5} parent=0 // pred_check
    _
  $region7: #{resblock_forward.5} parent=0 // pred_check_branch
    %12 = sbr.rel (0) target = $region9
  $region8: #{resblock_forward.5} parent=0 // pred_region
    _
  $region9: #{resblock_forward.5} parent=0 // pred_fallthru
    _
  // Predicated region
  $region10: #{resblock_forward.5} parent=0 // pred_check
    _
  $region11: #{resblock_forward.5} parent=0 // pred_check_branch
    %14 = sbr.rel (0) target = $region13
  $region12: #{resblock_forward.5} parent=0 // pred_region
    _
  $region13: #{resblock_forward.5} parent=0 // pred_fallthru
    _
  // Predicated region
  $region14: #{resblock_forward.5} parent=0 // pred_check
    _
  $region15: #{resblock_forward.5} parent=0 // pred_check_branch
    %16 = sbr.rel (0) target = $region17
  $region16: #{resblock_forward.5} parent=0 // pred_region
    _
  $region17: #{resblock_forward.5} parent=0 // pred_fallthru
    _
  %v17 = vld [vmem:[%s0] sm:$0xf]
  %v18 = vld [vmem:[%s0 + $0x4] sm:$0xf]
  %v19 = vunpack.c.l.bf16 %v17
  %v20 = vunpack.c.l.bf16 %v18
  %v21 = vld [vmem:[%s2] sm:$0x1]
  %v23 = vperm.slane %v21, 0
  %v25 = vmul.f32 %v19, %v23
  %v26 = vmul.f32 %v20, %v23
  %v27 = vld [vmem:[%s3] sm:$0x1]
  %v29 = vperm.slane %v27, 0
  %v31 = vadd.f32 %v25, %v29
  %v32 = vadd.f32 %v26, %v29
  %v33 = vld [vmem:[%s1] sm:$0xff]
  %v34 = vld [vmem:[%s1 + $0x8] sm:$0xff]
  %v35 = vadd.f32 %v31, %v33
  %v36 = vadd.f32 %v32, %v34
  %v37 = vmax.f32 %v35, 0.0
  %v38 = vmax.f32 %v36, 0.0
  %39 = vst [vmem:[%s4] sm:$0xff] %v37
  %40 = vst [vmem:[%s4 + $0x8] sm:$0xff] %v38
  // Predicated region
  $region18: #{resblock_forward.5} parent=0 // pred_check
    _
  $region19: #{resblock_forward.5} parent=0 // pred_check_branch
    %42 = sbr.rel (0) target = $region21
  $region20: #{resblock_forward.5} parent=0 // pred_region
    _
  $region21: #{resblock_forward.5} parent=0 // pred_fallthru
    _
  // Predicated region
  $region22: #{resblock_forward.5} parent=0 // pred_check
    _
  $region23: #{resblock_forward.5} parent=0 // pred_check_branch
    %44 = sbr.rel (0) target = $region25
  $region24: #{resblock_forward.5} parent=0 // pred_region
    _
  $region25: #{resblock_forward.5} parent=0 // pred_fallthru
    _

// kernel: resblock_forward.4
$region0: #{resblock_forward.4}
  #allocation0 [shape = 'u32[]', space=smem, size = 0x4, offset = 0x4, fixed_abs, tag = 'smem constant byte address 0x4 - core index']
  #allocation1 [shape = 'u32[72,128]{1,0:T(1,128)}', space=vmem, size = 0x9000, scoped, tag = 'internal scratch']
  #allocation2 [shape = 'bf16[18,18,4]{2,1,0:T(8,128)(2,1)}', space=vmem, size = 0x1b000, scoped, tag = 'scratch operand']
  %s0 = inlined_call_operand.vmem [shape: bf16[2,16,16,4], index: 0, kind: input, shape index: {}]
  %s1 = inlined_call_operand.vmem [shape: f32[1,4], index: 1, kind: input, shape index: {}]
  %s2 = inlined_call_operand.vmem [shape: f32[1,4], index: 2, kind: input, shape index: {}]
  %s3 = inlined_call_operand.vmem [shape: bf16[3,12,4], index: 3, kind: input, shape index: {}]
  %s4 = inlined_call_operand.vmem [shape: bf16[2,16,16,4], index: 4, kind: output, shape index: {0}]
  %s5 = inlined_call_operand.vmem [shape: f32[2,1,4], index: 5, kind: output, shape index: {1}]
  %s6 = inlined_call_operand.vmem [shape: f32[2,1,4], index: 6, kind: output, shape index: {2}]
  %7 = xla_tuple %s4, %s5, %s6
  %s8 = sld [smem:[#allocation0]]
  $region65: #{resblock_forward.4} parent=0
    _
  %s10 = ssub.s32 1, %s8
  %s11 = scalar_select 0, %s10, %s8
  loop: start=0, step=1, limit=4
  $region2: #{resblock_forward.4} parent=0 // loop_pre_header
    _
  $region3: #{resblock_forward.4} parent=0 // loop_header
    %s13 = sphi 0, %s17
    %p14 = scmp.ge.s32.totalorder %s13, 4
    %s23 = sphi 0, %s25
    %s26 = sphi 0, %s23
    %s27 = sphi 0, %s26
    %s43 = sphi 0, %s27
    %s47 = sphi 0, %s47
    %s49 = sphi 0, %s47
    %s50 = sphi 0, %s49
    %s64 = sphi 0, %s50
    %s68 = sphi 0, %s68
    %s70 = sphi 0, %s68
    %s71 = sphi 0, %s70
    %s85 = sphi 0, %s71
    %s89 = sphi 0, %s89
    %s91 = sphi 0, %s89
    %s92 = sphi 0, %s91
    %s106 = sphi 0, %s92
    %s112 = sphi 0, %s114
    %s115 = sphi 0, %s112
    %s116 = sphi 0, %s115
    %s132 = sphi 0, %s116
    %s138 = sphi 0, %s140
    %s141 = sphi 0, %s138
    %s142 = sphi 0, %s141
    %s158 = sphi 0, %s142
    %s164 = sphi 0, %s166
    %s167 = sphi 0, %s164
    %s168 = sphi 0, %s167
    %s184 = sphi 0, %s168
  $region4: #{resblock_forward.4} parent=0 // loop_header_branch
    %16 = sbr.rel (%p14) target = $region8
  $region5: #{resblock_forward.4} parent=0 // loop_body
    %s18 = ssub.s32 %s13, 1
    %s19 = ssub.s32 %s13, 2
    %s20 = sadd.s32 %s13, 1
    %s21 = ssub.s32 %s13, %s20
    %p22 = scmp.eq.s32.totalorder %s21, 0
    %s24 = sadd.s32 %s23, 1
    %s25 = scalar_select %p22, %s23, %s24
    %p28 = pneg %p22
    %p29 = scmp.eq.s32.totalorder %s13, 1
    %p30 = por %p28, %p29
    %p31 = scmp.ne.s32.totalorder %s23, %s26
    %p32 = scmp.eq.s32.totalorder %s13, 0
    %p33 = por %p31, %p32
    %p34 = scmp.ne.s32.totalorder %s23, %s26
    %p35 = scmp.eq.s32.totalorder %s18, 1
    %p36 = por %p34, %p35
    %p37 = scmp.ne.s32.totalorder %s26, %s27
    %p38 = scmp.eq.s32.totalorder %s18, 0
    %p39 = por %p37, %p38
    %p40 = scmp.ne.s32.totalorder %s26, %s27
    %p41 = scmp.eq.s32.totalorder %s19, 1
    %p42 = por %p40, %p41
    %p44 = scmp.ne.s32.totalorder %s27, %s43
    %p45 = scmp.eq.s32.totalorder %s19, 0
    %p46 = por %p44, %p45
    %s48 = sadd.s32 %s47, 1
    %p51 = scmp.eq.s32.totalorder %s13, 1
    %p52 = scmp.ne.s32.totalorder %s47, %s49
    %p53 = scmp.eq.s32.totalorder %s13, 0
    %p54 = por %p52, %p53
    %p55 = scmp.ne.s32.totalorder %s47, %s49
    %p56 = scmp.eq.s32.totalorder %s18, 1
    %p57 = por %p55, %p56
    %p58 = scmp.ne.s32.totalorder %s49, %s50
    %p59 = scmp.eq.s32.totalorder %s18, 0
    %p60 = por %p58, %p59
    %p61 = scmp.ne.s32.totalorder %s49, %s50
    %p62 = scmp.eq.s32.totalorder %s19, 1
    %p63 = por %p61, %p62
    %p65 = scmp.ne.s32.totalorder %s50, %s64
    %p66 = scmp.eq.s32.totalorder %s19, 0
    %p67 = por %p65, %p66
    %s69 = sadd.s32 %s68, 1
    %p72 = scmp.eq.s32.totalorder %s13, 1
    %p73 = scmp.ne.s32.totalorder %s68, %s70
    %p74 = scmp.eq.s32.totalorder %s13, 0
    %p75 = por %p73, %p74
    %p76 = scmp.ne.s32.totalorder %s68, %s70
    %p77 = scmp.eq.s32.totalorder %s18, 1
    %p78 = por %p76, %p77
    %p79 = scmp.ne.s32.totalorder %s70, %s71
    %p80 = scmp.eq.s32.totalorder %s18, 0
    %p81 = por %p79, %p80
    %p82 = scmp.ne.s32.totalorder %s70, %s71
    %p83 = scmp.eq.s32.totalorder %s19, 1
    %p84 = por %p82, %p83
    %p86 = scmp.ne.s32.totalorder %s71, %s85
    %p87 = scmp.eq.s32.totalorder %s19, 0
    %p88 = por %p86, %p87
    %s90 = sadd.s32 %s89, 1
    %p93 = scmp.eq.s32.totalorder %s13, 1
    %p94 = scmp.ne.s32.totalorder %s89, %s91
    %p95 = scmp.eq.s32.totalorder %s13, 0
    %p96 = por %p94, %p95
    %p97 = scmp.ne.s32.totalorder %s89, %s91
    %p98 = scmp.eq.s32.totalorder %s18, 1
    %p99 = por %p97, %p98
    %p100 = scmp.ne.s32.totalorder %s91, %s92
    %p101 = scmp.eq.s32.totalorder %s18, 0
    %p102 = por %p100, %p101
    %p103 = scmp.ne.s32.totalorder %s91, %s92
    %p104 = scmp.eq.s32.totalorder %s19, 1
    %p105 = por %p103, %p104
    %p107 = scmp.ne.s32.totalorder %s92, %s106
    %p108 = scmp.eq.s32.totalorder %s19, 0
    %p109 = por %p107, %p108
    %s110 = ssub.s32 %s13, %s20
    %p111 = scmp.eq.s32.totalorder %s110, 0
    %s113 = sadd.s32 %s112, 1
    %s114 = scalar_select %p111, %s112, %s113
    %p117 = pneg %p111
    %p118 = scmp.eq.s32.totalorder %s13, 1
    %p119 = por %p117, %p118
    %p120 = scmp.ne.s32.totalorder %s112, %s115
    %p121 = scmp.eq.s32.totalorder %s13, 0
    %p122 = por %p120, %p121
    %p123 = scmp.ne.s32.totalorder %s112, %s115
    %p124 = scmp.eq.s32.totalorder %s18, 1
    %p125 = por %p123, %p124
    %p126 = scmp.ne.s32.totalorder %s115, %s116
    %p127 = scmp.eq.s32.totalorder %s18, 0
    %p128 = por %p126, %p127
    %p129 = scmp.ne.s32.totalorder %s115, %s116
    %p130 = scmp.eq.s32.totalorder %s19, 1
    %p131 = por %p129, %p130
    %p133 = scmp.ne.s32.totalorder %s116, %s132
    %p134 = scmp.eq.s32.totalorder %s19, 0
    %p135 = por %p133, %p134
    %s136 = ssub.s32 %s13, %s20
    %p137 = scmp.eq.s32.totalorder %s136, 0
    %s139 = sadd.s32 %s138, 1
    %s140 = scalar_select %p137, %s138, %s139
    %p143 = pneg %p137
    %p144 = scmp.eq.s32.totalorder %s13, 1
    %p145 = por %p143, %p144
    %p146 = scmp.ne.s32.totalorder %s138, %s141
    %p147 = scmp.eq.s32.totalorder %s13, 0
    %p148 = por %p146, %p147
    %p149 = scmp.ne.s32.totalorder %s138, %s141
    %p150 = scmp.eq.s32.totalorder %s18, 1
    %p151 = por %p149, %p150
    %p152 = scmp.ne.s32.totalorder %s141, %s142
    %p153 = scmp.eq.s32.totalorder %s18, 0
    %p154 = por %p152, %p153
    %p155 = scmp.ne.s32.totalorder %s141, %s142
    %p156 = scmp.eq.s32.totalorder %s19, 1
    %p157 = por %p155, %p156
    %p159 = scmp.ne.s32.totalorder %s142, %s158
    %p160 = scmp.eq.s32.totalorder %s19, 0
    %p161 = por %p159, %p160
    %s162 = ssub.s32 %s13, %s20
    %p163 = scmp.eq.s32.totalorder %s162, 0
    %s165 = sadd.s32 %s164, 1
    %s166 = scalar_select %p163, %s164, %s165
    %p169 = pneg %p163
    %p170 = scmp.eq.s32.totalorder %s13, 1
    %p171 = por %p169, %p170
    %p172 = scmp.ne.s32.totalorder %s164, %s167
    %p173 = scmp.eq.s32.totalorder %s13, 0
    %p174 = por %p172, %p173
    %p175 = scmp.ne.s32.totalorder %s164, %s167
    %p176 = scmp.eq.s32.totalorder %s18, 1
    %p177 = por %p175, %p176
    %p178 = scmp.ne.s32.totalorder %s167, %s168
    %p179 = scmp.eq.s32.totalorder %s18, 0
    %p180 = por %p178, %p179
    %p181 = scmp.ne.s32.totalorder %s167, %s168
    %p182 = scmp.eq.s32.totalorder %s19, 1
    %p183 = por %p181, %p182
    %p185 = scmp.ne.s32.totalorder %s168, %s184
    %p186 = scmp.eq.s32.totalorder %s19, 0
    %p187 = por %p185, %p186
    %p188 = scmp.le.s32.totalorder 1, %s13
    %p189 = scmp.lt.s32.totalorder %s13, 3
    %p190 = pnand %p188, %p189
    %p191 = pneg %p190
    // Predicated region
    $region9: #{resblock_forward.4} parent=5 // pred_check
      _
    $region10: #{resblock_forward.4} parent=5 // pred_check_branch
      %193 = sbr.rel (%p190) target = $region12
    $region11: #{resblock_forward.4} parent=5 // pred_region
      %s194 = ssub.s32 %s13, 1
      // Predicated region
      $region13: #{resblock_forward.4} parent=11 // pred_check
        %p195 = pneg %p60
      $region14: #{resblock_forward.4} parent=11 // pred_check_branch
        %197 = sbr.rel (%p195) target = $region16
      $region15: #{resblock_forward.4} parent=11 // pred_region
        _
      $region16: #{resblock_forward.4} parent=11 // pred_fallthru
        _
      // Predicated region
      $region17: #{resblock_forward.4} parent=11 // pred_check
        %p198 = pneg %p81
      $region18: #{resblock_forward.4} parent=11 // pred_check_branch
        %200 = sbr.rel (%p198) target = $region20
      $region19: #{resblock_forward.4} parent=11 // pred_region
        _
      $region20: #{resblock_forward.4} parent=11 // pred_fallthru
        _
      // Predicated region
      $region21: #{resblock_forward.4} parent=11 // pred_check
        %p201 = pneg %p102
      $region22: #{resblock_forward.4} parent=11 // pred_check_branch
        %203 = sbr.rel (%p201) target = $region24
      $region23: #{resblock_forward.4} parent=11 // pred_region
        _
      $region24: #{resblock_forward.4} parent=11 // pred_fallthru
        _
    $region12: #{resblock_forward.4} parent=5 // pred_fallthru
      _
    %p204 = scmp.lt.s32.totalorder %s13, 2
    // Predicated region
    $region25: #{resblock_forward.4} parent=5 // pred_check
      %p205 = pneg %p204
    $region26: #{resblock_forward.4} parent=5 // pred_check_branch
      %207 = sbr.rel (%p205) target = $region28
    $region27: #{resblock_forward.4} parent=5 // pred_region
      // Predicated region
      $region29: #{resblock_forward.4} parent=27 // pred_check
        %p208 = pneg %p33
      $region30: #{resblock_forward.4} parent=27 // pred_check_branch
        %210 = sbr.rel (%p208) target = $region32
      $region31: #{resblock_forward.4} parent=27 // pred_region
        %p211 = scmp.lt.s32.totalorder %s13, 1
        %s212 = scalar_select %p211, %s13, 1
        %s213 = smul.addr %s212, 32
        %s214 = smul.addr %s213, 4
        %s215 = scalar_lea.vmem %s0, %s214
      $region32: #{resblock_forward.4} parent=27 // pred_fallthru
        _
    $region28: #{resblock_forward.4} parent=5 // pred_fallthru
      _
    %p216 = scmp.le.s32.totalorder 1, %s13
    %p217 = scmp.lt.s32.totalorder %s13, 3
    %p218 = pnand %p216, %p217
    %p219 = pneg %p218
    // Predicated region
    $region33: #{resblock_forward.4} parent=5 // pred_check
      _
    $region34: #{resblock_forward.4} parent=5 // pred_check_branch
      %221 = sbr.rel (%p218) target = $region36
    $region35: #{resblock_forward.4} parent=5 // pred_region
      %s222 = ssub.s32 %s13, 1
      %p223 = scmp.lt.s32.totalorder %s18, 1
      %s224 = scalar_select %p223, %s18, 1
      %s225 = smul.addr %s224, 32
      %s226 = smul.addr %s225, 4
      %s227 = scalar_lea.vmem %s0, %s226
      %p228 = pneg %p39
      %p229 = pneg %p36
      %p230 = pneg %p60
      %p231 = pneg %p57
      %p232 = pneg %p81
      %p233 = pneg %p78
      %p234 = pneg %p102
      %p235 = pneg %p99
      %p236 = pneg %p128
      %p237 = pneg %p125
      %p238 = scmp.lt.s32.totalorder %s18, 1
      %s239 = scalar_select %p238, %s18, 1
      %s240 = smul.addr %s239, 32
      %s241 = smul.addr %s240, 4
      %s242 = scalar_lea.vmem %s4, %s241
      %p243 = pneg %p154
      %p244 = pneg %p151
      %p245 = scmp.lt.s32.totalorder %s18, 1
      %s246 = scalar_select %p245, %s18, 1
      %s247 = scalar_lea.vmem %s5, %s246
      %p248 = pneg %p180
      %p249 = pneg %p177
      %p250 = scmp.lt.s32.totalorder %s18, 1
      %s251 = scalar_select %p250, %s18, 1
      %s252 = scalar_lea.vmem %s6, %s251
      %p253 = scmp.lt.s32.totalorder %s18, 1
      %s254 = scalar_select %p253, %s18, 1
      %s255 = smul.addr %s254, 32
      %s256 = smul.addr %s255, 4
      %s257 = scalar_lea.vmem %s0, %s256
      %p258 = scmp.lt.s32.totalorder %s18, 1
      %s259 = scalar_select %p258, %s18, 1
      %s260 = smul.addr %s259, 32
      %s261 = smul.addr %s260, 4
      %s262 = scalar_lea.vmem %s4, %s261
      %p263 = scmp.lt.s32.totalorder %s18, 1
      %s264 = scalar_select %p263, %s18, 1
      %s265 = scalar_lea.vmem %s5, %s264
      %p266 = scmp.lt.s32.totalorder %s18, 1
      %s267 = scalar_select %p266, %s18, 1
      %s268 = scalar_lea.vmem %s6, %s267
      %vm270 = vcmask 27648
      %271 = vst.msk [vmem:[#allocation2] sm:$0xf] %vm270, 0
      %272 = vst.msk [vmem:[#allocation2 + $0x4] sm:$0xf] %vm270, 0
      %vm273 = vcmask 24576
      %274 = vst.msk [vmem:[#allocation2 + $0x8] sm:$0x1] %vm273, 0
      %s275 = scalar_lea.vmem [#allocation2], 204
      %276 = vst.msk [vmem:[%s275] sm:$0xf] %vm270, 0
      %277 = vst.msk [vmem:[%s275 + $0x4] sm:$0xf] %vm270, 0
      %278 = vst.msk [vmem:[%s275 + $0x8] sm:$0x1] %vm273, 0
      %vm279 = vcmask 24576
      %vm280 = vsmask.f32 256
      %vm281 = vmand %vm279, %vm280
      %v282 = vld [vmem:[#allocation2] sm:$0x1]
      %v283 = vsel %vm281, 0, %v282
      %284 = vst [vmem:[#allocation2] sm:$0x1] %v283
      %v285 = vld [vmem:[#allocation2 + $0xc] sm:$0x1]
      %v286 = vsel %vm281, 0, %v285
      %287 = vst [vmem:[#allocation2 + $0xc] sm:$0x1] %v286
      %v288 = vld [vmem:[#allocation2 + $0x18] sm:$0x1]
      %v289 = vsel %vm281, 0, %v288
      %290 = vst [vmem:[#allocation2 + $0x18] sm:$0x1] %v289
      %v291 = vld [vmem:[#allocation2 + $0x24] sm:$0x1]
      %v292 = vsel %vm281, 0, %v291
      %293 = vst [vmem:[#allocation2 + $0x24] sm:$0x1] %v292
      %v294 = vld [vmem:[#allocation2 + $0x30] sm:$0x1]
      %v295 = vsel %vm281, 0, %v294
      %296 = vst [vmem:[#allocation2 + $0x30] sm:$0x1] %v295
      %v297 = vld [vmem:[#allocation2 + $0x3c] sm:$0x1]
      %v298 = vsel %vm281, 0, %v297
      %299 = vst [vmem:[#allocation2 + $0x3c] sm:$0x1] %v298
      %v300 = vld [vmem:[#allocation2 + $0x48] sm:$0x1]
      %v301 = vsel %vm281, 0, %v300
      %302 = vst [vmem:[#allocation2 + $0x48] sm:$0x1] %v301
      %v303 = vld [vmem:[#allocation2 + $0x54] sm:$0x1]
      %v304 = vsel %vm281, 0, %v303
      %305 = vst [vmem:[#allocation2 + $0x54] sm:$0x1] %v304
      %v306 = vld [vmem:[#allocation2 + $0x60] sm:$0x1]
      %v307 = vsel %vm281, 0, %v306
      %308 = vst [vmem:[#allocation2 + $0x60] sm:$0x1] %v307
      %v309 = vld [vmem:[#allocation2 + $0x6c] sm:$0x1]
      %v310 = vsel %vm281, 0, %v309
      %311 = vst [vmem:[#allocation2 + $0x6c] sm:$0x1] %v310
      %v312 = vld [vmem:[#allocation2 + $0x78] sm:$0x1]
      %v313 = vsel %vm281, 0, %v312
      %314 = vst [vmem:[#allocation2 + $0x78] sm:$0x1] %v313
      %v315 = vld [vmem:[#allocation2 + $0x84] sm:$0x1]
      %v316 = vsel %vm281, 0, %v315
      %317 = vst [vmem:[#allocation2 + $0x84] sm:$0x1] %v316
      %v318 = vld [vmem:[#allocation2 + $0x90] sm:$0x1]
      %v319 = vsel %vm281, 0, %v318
      %320 = vst [vmem:[#allocation2 + $0x90] sm:$0x1] %v319
      %v321 = vld [vmem:[#allocation2 + $0x9c] sm:$0x1]
      %v322 = vsel %vm281, 0, %v321
      %323 = vst [vmem:[#allocation2 + $0x9c] sm:$0x1] %v322
      %v324 = vld [vmem:[#allocation2 + $0xa8] sm:$0x1]
      %v325 = vsel %vm281, 0, %v324
      %326 = vst [vmem:[#allocation2 + $0xa8] sm:$0x1] %v325
      %v327 = vld [vmem:[#allocation2 + $0xb4] sm:$0x1]
      %v328 = vsel %vm281, 0, %v327
      %329 = vst [vmem:[#allocation2 + $0xb4] sm:$0x1] %v328
      %v330 = vld [vmem:[#allocation2 + $0xc0] sm:$0x1]
      %v331 = vsel %vm281, 0, %v330
      %332 = vst [vmem:[#allocation2 + $0xc0] sm:$0x1] %v331
      %v333 = vld [vmem:[#allocation2 + $0xcc] sm:$0x1]
      %v334 = vsel %vm281, 0, %v333
      %335 = vst [vmem:[#allocation2 + $0xcc] sm:$0x1] %v334
      %vm336 = vsmask.f32 7938
      %vm337 = vmand %vm279, %vm336
      %v338 = vld [vmem:[#allocation2 + $0x8] sm:$0x1]
      %v339 = vsel %vm337, 0, %v338
      %340 = vst [vmem:[#allocation2 + $0x8] sm:$0x1] %v339
      %v341 = vld [vmem:[#allocation2 + $0x14] sm:$0x1]
      %v342 = vsel %vm337, 0, %v341
      %343 = vst [vmem:[#allocation2 + $0x14] sm:$0x1] %v342
      %v344 = vld [vmem:[#allocation2 + $0x20] sm:$0x1]
      %v345 = vsel %vm337, 0, %v344
      %346 = vst [vmem:[#allocation2 + $0x20] sm:$0x1] %v345
      %v347 = vld [vmem:[#allocation2 + $0x2c] sm:$0x1]
      %v348 = vsel %vm337, 0, %v347
      %349 = vst [vmem:[#allocation2 + $0x2c] sm:$0x1] %v348
      %v350 = vld [vmem:[#allocation2 + $0x38] sm:$0x1]
      %v351 = vsel %vm337, 0, %v350
      %352 = vst [vmem:[#allocation2 + $0x38] sm:$0x1] %v351
      %v353 = vld [vmem:[#allocation2 + $0x44] sm:$0x1]
      %v354 = vsel %vm337, 0, %v353
      %355 = vst [vmem:[#allocation2 + $0x44] sm:$0x1] %v354
      %v356 = vld [vmem:[#allocation2 + $0x50] sm:$0x1]
      %v357 = vsel %vm337, 0, %v356
      %358 = vst [vmem:[#allocation2 + $0x50] sm:$0x1] %v357
      %v359 = vld [vmem:[#allocation2 + $0x5c] sm:$0x1]
      %v360 = vsel %vm337, 0, %v359
      %361 = vst [vmem:[#allocation2 + $0x5c] sm:$0x1] %v360
      %v362 = vld [vmem:[#allocation2 + $0x68] sm:$0x1]
      %v363 = vsel %vm337, 0, %v362
      %364 = vst [vmem:[#allocation2 + $0x68] sm:$0x1] %v363
      %v365 = vld [vmem:[#allocation2 + $0x74] sm:$0x1]
      %v366 = vsel %vm337, 0, %v365
      %367 = vst [vmem:[#allocation2 + $0x74] sm:$0x1] %v366
      %v368 = vld [vmem:[#allocation2 + $0x80] sm:$0x1]
      %v369 = vsel %vm337, 0, %v368
      %370 = vst [vmem:[#allocation2 + $0x80] sm:$0x1] %v369
      %v371 = vld [vmem:[#allocation2 + $0x8c] sm:$0x1]
      %v372 = vsel %vm337, 0, %v371
      %373 = vst [vmem:[#allocation2 + $0x8c] sm:$0x1] %v372
      %v374 = vld [vmem:[#allocation2 + $0x98] sm:$0x1]
      %v375 = vsel %vm337, 0, %v374
      %376 = vst [vmem:[#allocation2 + $0x98] sm:$0x1] %v375
      %v377 = vld [vmem:[#allocation2 + $0xa4] sm:$0x1]
      %v378 = vsel %vm337, 0, %v377
      %379 = vst [vmem:[#allocation2 + $0xa4] sm:$0x1] %v378
      %v380 = vld [vmem:[#allocation2 + $0xb0] sm:$0x1]
      %v381 = vsel %vm337, 0, %v380
      %382 = vst [vmem:[#allocation2 + $0xb0] sm:$0x1] %v381
      %v383 = vld [vmem:[#allocation2 + $0xbc] sm:$0x1]
      %v384 = vsel %vm337, 0, %v383
      %385 = vst [vmem:[#allocation2 + $0xbc] sm:$0x1] %v384
      %v386 = vld [vmem:[#allocation2 + $0xc8] sm:$0x1]
      %v387 = vsel %vm337, 0, %v386
      %388 = vst [vmem:[#allocation2 + $0xc8] sm:$0x1] %v387
      %v389 = vld [vmem:[#allocation2 + $0xd4] sm:$0x1]
      %v390 = vsel %vm337, 0, %v389
      %391 = vst [vmem:[#allocation2 + $0xd4] sm:$0x1] %v390
      %v392 = vld [vmem:[%s257] sm:$0xf]
      %v393 = vld [vmem:[%s257 + $0x4] sm:$0xf]
      %v394 = vld [vmem:[%s257 + $0x8] sm:$0xf]
      %v395 = vld [vmem:[%s257 + $0xc] sm:$0xf]
      %v396 = vld [vmem:[%s257 + $0x10] sm:$0xf]
      %v397 = vld [vmem:[%s257 + $0x14] sm:$0xf]
      %v398 = vld [vmem:[%s257 + $0x18] sm:$0xf]
      %v399 = vld [vmem:[%s257 + $0x1c] sm:$0xf]
      %v400 = vld [vmem:[%s257 + $0x20] sm:$0xf]
      %v401 = vld [vmem:[%s257 + $0x24] sm:$0xf]
      %v402 = vld [vmem:[%s257 + $0x28] sm:$0xf]
      %v403 = vld [vmem:[%s257 + $0x2c] sm:$0xf]
      %v404 = vld [vmem:[%s257 + $0x30] sm:$0xf]
      %v405 = vld [vmem:[%s257 + $0x34] sm:$0xf]
      %v406 = vld [vmem:[%s257 + $0x38] sm:$0xf]
      %v407 = vld [vmem:[%s257 + $0x3c] sm:$0xf]
      %v408 = vld [vmem:[%s257 + $0x40] sm:$0xf]
      %v409 = vld [vmem:[%s257 + $0x44] sm:$0xf]
      %v410 = vld [vmem:[%s257 + $0x48] sm:$0xf]
      %v411 = vld [vmem:[%s257 + $0x4c] sm:$0xf]
      %v412 = vld [vmem:[%s257 + $0x50] sm:$0xf]
      %v413 = vld [vmem:[%s257 + $0x54] sm:$0xf]
      %v414 = vld [vmem:[%s257 + $0x58] sm:$0xf]
      %v415 = vld [vmem:[%s257 + $0x5c] sm:$0xf]
      %v416 = vld [vmem:[%s257 + $0x60] sm:$0xf]
      %v417 = vld [vmem:[%s257 + $0x64] sm:$0xf]
      %v418 = vld [vmem:[%s257 + $0x68] sm:$0xf]
      %v419 = vld [vmem:[%s257 + $0x6c] sm:$0xf]
      %v420 = vld [vmem:[%s257 + $0x70] sm:$0xf]
      %v421 = vld [vmem:[%s257 + $0x74] sm:$0xf]
      %v422 = vld [vmem:[%s257 + $0x78] sm:$0xf]
      %v423 = vld [vmem:[%s257 + $0x7c] sm:$0xf]
      %v424 = vunpack.c.l.bf16 %v392
      %v425 = vunpack.c.l.bf16 %v393
      %v426 = vunpack.c.l.bf16 %v394
      %v427 = vunpack.c.l.bf16 %v395
      %v428 = vunpack.c.l.bf16 %v396
      %v429 = vunpack.c.l.bf16 %v397
      %v430 = vunpack.c.l.bf16 %v398
      %v431 = vunpack.c.l.bf16 %v399
      %v432 = vunpack.c.l.bf16 %v400
      %v433 = vunpack.c.l.bf16 %v401
      %v434 = vunpack.c.l.bf16 %v402
      %v435 = vunpack.c.l.bf16 %v403
      %v436 = vunpack.c.l.bf16 %v404
      %v437 = vunpack.c.l.bf16 %v405
      %v438 = vunpack.c.l.bf16 %v406
      %v439 = vunpack.c.l.bf16 %v407
      %v440 = vunpack.c.l.bf16 %v408
      %v441 = vunpack.c.l.bf16 %v409
      %v442 = vunpack.c.l.bf16 %v410
      %v443 = vunpack.c.l.bf16 %v411
      %v444 = vunpack.c.l.bf16 %v412
      %v445 = vunpack.c.l.bf16 %v413
      %v446 = vunpack.c.l.bf16 %v414
      %v447 = vunpack.c.l.bf16 %v415
      %v448 = vunpack.c.l.bf16 %v416
      %v449 = vunpack.c.l.bf16 %v417
      %v450 = vunpack.c.l.bf16 %v418
      %v451 = vunpack.c.l.bf16 %v419
      %v452 = vunpack.c.l.bf16 %v420
      %v453 = vunpack.c.l.bf16 %v421
      %v454 = vunpack.c.l.bf16 %v422
      %v455 = vunpack.c.l.bf16 %v423
      %v456 = vld [vmem:[%s1] sm:$0x1]
      %v458 = vperm.slane %v456, 0
      %v460 = vmul.f32 %v424, %v458
      %v461 = vmul.f32 %v425, %v458
      %v462 = vmul.f32 %v426, %v458
      %v463 = vmul.f32 %v427, %v458
      %v464 = vmul.f32 %v428, %v458
      %v465 = vmul.f32 %v429, %v458
      %v466 = vmul.f32 %v430, %v458
      %v467 = vmul.f32 %v431, %v458
      %v468 = vmul.f32 %v432, %v458
      %v469 = vmul.f32 %v433, %v458
      %v470 = vmul.f32 %v434, %v458
      %v471 = vmul.f32 %v435, %v458
      %v472 = vmul.f32 %v436, %v458
      %v473 = vmul.f32 %v437, %v458
      %v474 = vmul.f32 %v438, %v458
      %v475 = vmul.f32 %v439, %v458
      %v476 = vmul.f32 %v440, %v458
      %v477 = vmul.f32 %v441, %v458
      %v478 = vmul.f32 %v442, %v458
      %v479 = vmul.f32 %v443, %v458
      %v480 = vmul.f32 %v444, %v458
      %v481 = vmul.f32 %v445, %v458
      %v482 = vmul.f32 %v446, %v458
      %v483 = vmul.f32 %v447, %v458
      %v484 = vmul.f32 %v448, %v458
      %v485 = vmul.f32 %v449, %v458
      %v486 = vmul.f32 %v450, %v458
      %v487 = vmul.f32 %v451, %v458
      %v488 = vmul.f32 %v452, %v458
      %v489 = vmul.f32 %v453, %v458
      %v490 = vmul.f32 %v454, %v458
      %v491 = vmul.f32 %v455, %v458
      %v492 = vld [vmem:[%s2] sm:$0x1]
      %v494 = vperm.slane %v492, 0
      %v496 = vadd.f32 %v460, %v494
      %v497 = vadd.f32 %v461, %v494
      %v498 = vadd.f32 %v462, %v494
      %v499 = vadd.f32 %v463, %v494
      %v500 = vadd.f32 %v464, %v494
      %v501 = vadd.f32 %v465, %v494
      %v502 = vadd.f32 %v466, %v494
      %v503 = vadd.f32 %v467, %v494
      %v504 = vadd.f32 %v468, %v494
      %v505 = vadd.f32 %v469, %v494
      %v506 = vadd.f32 %v470, %v494
      %v507 = vadd.f32 %v471, %v494
      %v508 = vadd.f32 %v472, %v494
      %v509 = vadd.f32 %v473, %v494
      %v510 = vadd.f32 %v474, %v494
      %v511 = vadd.f32 %v475, %v494
      %v512 = vadd.f32 %v476, %v494
      %v513 = vadd.f32 %v477, %v494
      %v514 = vadd.f32 %v478, %v494
      %v515 = vadd.f32 %v479, %v494
      %v516 = vadd.f32 %v480, %v494
      %v517 = vadd.f32 %v481, %v494
      %v518 = vadd.f32 %v482, %v494
      %v519 = vadd.f32 %v483, %v494
      %v520 = vadd.f32 %v484, %v494
      %v521 = vadd.f32 %v485, %v494
      %v522 = vadd.f32 %v486, %v494
      %v523 = vadd.f32 %v487, %v494
      %v524 = vadd.f32 %v488, %v494
      %v525 = vadd.f32 %v489, %v494
      %v526 = vadd.f32 %v490, %v494
      %v527 = vadd.f32 %v491, %v494
      %v528 = vmax.f32 %v496, 0.0
      %v529 = vmax.f32 %v497, 0.0
      %v530 = vmax.f32 %v498, 0.0
      %v531 = vmax.f32 %v499, 0.0
      %v532 = vmax.f32 %v500, 0.0
      %v533 = vmax.f32 %v501, 0.0
      %v534 = vmax.f32 %v502, 0.0
      %v535 = vmax.f32 %v503, 0.0
      %v536 = vmax.f32 %v504, 0.0
      %v537 = vmax.f32 %v505, 0.0
      %v538 = vmax.f32 %v506, 0.0
      %v539 = vmax.f32 %v507, 0.0
      %v540 = vmax.f32 %v508, 0.0
      %v541 = vmax.f32 %v509, 0.0
      %v542 = vmax.f32 %v510, 0.0
      %v543 = vmax.f32 %v511, 0.0
      %v544 = vmax.f32 %v512, 0.0
      %v545 = vmax.f32 %v513, 0.0
      %v546 = vmax.f32 %v514, 0.0
      %v547 = vmax.f32 %v515, 0.0
      %v548 = vmax.f32 %v516, 0.0
      %v549 = vmax.f32 %v517, 0.0
      %v550 = vmax.f32 %v518, 0.0
      %v551 = vmax.f32 %v519, 0.0
      %v552 = vmax.f32 %v520, 0.0
      %v553 = vmax.f32 %v521, 0.0
      %v554 = vmax.f32 %v522, 0.0
      %v555 = vmax.f32 %v523, 0.0
      %v556 = vmax.f32 %v524, 0.0
      %v557 = vmax.f32 %v525, 0.0
      %v558 = vmax.f32 %v526, 0.0
      %v559 = vmax.f32 %v527, 0.0
      %v560 = vpack.c.bf16 %v528, %v528
      %v561 = vpack.c.bf16 %v529, %v529
      %v562 = vpack.c.bf16 %v530, %v530
      %v563 = vpack.c.bf16 %v531, %v531
      %v564 = vpack.c.bf16 %v532, %v532
      %v565 = vpack.c.bf16 %v533, %v533
      %v566 = vpack.c.bf16 %v534, %v534
      %v567 = vpack.c.bf16 %v535, %v535
      %v568 = vpack.c.bf16 %v536, %v536
      %v569 = vpack.c.bf16 %v537, %v537
      %v570 = vpack.c.bf16 %v538, %v538
      %v571 = vpack.c.bf16 %v539, %v539
      %v572 = vpack.c.bf16 %v540, %v540
      %v573 = vpack.c.bf16 %v541, %v541
      %v574 = vpack.c.bf16 %v542, %v542
      %v575 = vpack.c.bf16 %v543, %v543
      %v576 = vpack.c.bf16 %v544, %v544
      %v577 = vpack.c.bf16 %v545, %v545
      %v578 = vpack.c.bf16 %v546, %v546
      %v579 = vpack.c.bf16 %v547, %v547
      %v580 = vpack.c.bf16 %v548, %v548
      %v581 = vpack.c.bf16 %v549, %v549
      %v582 = vpack.c.bf16 %v550, %v550
      %v583 = vpack.c.bf16 %v551, %v551
      %v584 = vpack.c.bf16 %v552, %v552
      %v585 = vpack.c.bf16 %v553, %v553
      %v586 = vpack.c.bf16 %v554, %v554
      %v587 = vpack.c.bf16 %v555, %v555
      %v588 = vpack.c.bf16 %v556, %v556
      %v589 = vpack.c.bf16 %v557, %v557
      %v590 = vpack.c.bf16 %v558, %v558
      %v591 = vpack.c.bf16 %v559, %v559
      %vm592 = vsmask.f32 4368
      %vm593 = vmor %vm280, %vm592
      %v595 = vshrl.u32 %v560, 16
      %v597 = vrot.slane %v595, 7
      %v598 = vshll.u32 %v560, 16
      %v600 = vor.u32 %v597, %v598
      %v601 = vrot.slane %v597, 4
      %v603 = vshrl.u32 %v561, 16
      %v605 = vrot.slane %v603, 7
      %v606 = vshll.u32 %v561, 16
      %v608 = vor.u32 %v605, %v606
      %v609 = vsel %vm593, %v601, %v608
      %v610 = vrot.slane %v605, 4
      %v612 = vshrl.u32 %v562, 16
      %v614 = vrot.slane %v612, 7
      %v615 = vshll.u32 %v562, 16
      %v617 = vor.u32 %v614, %v615
      %v618 = vrot.slane %v614, 4
      %v620 = vshrl.u32 %v563, 16
      %v622 = vrot.slane %v620, 7
      %v623 = vshll.u32 %v563, 16
      %v625 = vor.u32 %v622, %v623
      %v626 = vsel %vm593, %v618, %v625
      %v627 = vrot.slane %v622, 4
      %v629 = vshrl.u32 %v564, 16
      %v631 = vrot.slane %v629, 7
      %v632 = vshll.u32 %v564, 16
      %v634 = vor.u32 %v631, %v632
      %v635 = vrot.slane %v631, 4
      %v637 = vshrl.u32 %v565, 16
      %v639 = vrot.slane %v637, 7
      %v640 = vshll.u32 %v565, 16
      %v642 = vor.u32 %v639, %v640
      %v643 = vsel %vm593, %v635, %v642
      %v644 = vrot.slane %v639, 4
      %v646 = vshrl.u32 %v566, 16
      %v648 = vrot.slane %v646, 7
      %v649 = vshll.u32 %v566, 16
      %v651 = vor.u32 %v648, %v649
      %v652 = vrot.slane %v648, 4
      %v654 = vshrl.u32 %v567, 16
      %v656 = vrot.slane %v654, 7
      %v657 = vshll.u32 %v567, 16
      %v659 = vor.u32 %v656, %v657
      %v660 = vsel %vm593, %v652, %v659
      %v661 = vrot.slane %v656, 4
      %v663 = vshrl.u32 %v568, 16
      %v665 = vrot.slane %v663, 7
      %v666 = vshll.u32 %v568, 16
      %v668 = vor.u32 %v665, %v666
      %v669 = vrot.slane %v665, 4
      %v671 = vshrl.u32 %v569, 16
      %v673 = vrot.slane %v671, 7
      %v674 = vshll.u32 %v569, 16
      %v676 = vor.u32 %v673, %v674
      %v677 = vsel %vm593, %v669, %v676
      %v678 = vrot.slane %v673, 4
      %v680 = vshrl.u32 %v570, 16
      %v682 = vrot.slane %v680, 7
      %v683 = vshll.u32 %v570, 16
      %v685 = vor.u32 %v682, %v683
      %v686 = vrot.slane %v682, 4
      %v688 = vshrl.u32 %v571, 16
      %v690 = vrot.slane %v688, 7
      %v691 = vshll.u32 %v571, 16
      %v693 = vor.u32 %v690, %v691
      %v694 = vsel %vm593, %v686, %v693
      %v695 = vrot.slane %v690, 4
      %v697 = vshrl.u32 %v572, 16
      %v699 = vrot.slane %v697, 7
      %v700 = vshll.u32 %v572, 16
      %v702 = vor.u32 %v699, %v700
      %v703 = vrot.slane %v699, 4
      %v705 = vshrl.u32 %v573, 16
      %v707 = vrot.slane %v705, 7
      %v708 = vshll.u32 %v573, 16
      %v710 = vor.u32 %v707, %v708
      %v711 = vsel %vm593, %v703, %v710
      %v712 = vrot.slane %v707, 4
      %v714 = vshrl.u32 %v574, 16
      %v716 = vrot.slane %v714, 7
      %v717 = vshll.u32 %v574, 16
      %v719 = vor.u32 %v716, %v717
      %v720 = vrot.slane %v716, 4
      %v722 = vshrl.u32 %v575, 16
      %v724 = vrot.slane %v722, 7
      %v725 = vshll.u32 %v575, 16
      %v727 = vor.u32 %v724, %v725
      %v728 = vsel %vm593, %v720, %v727
      %v729 = vrot.slane %v724, 4
      %v731 = vshrl.u32 %v576, 16
      %v733 = vrot.slane %v731, 7
      %v734 = vshll.u32 %v576, 16
      %v736 = vor.u32 %v733, %v734
      %v737 = vrot.slane %v733, 4
      %v739 = vshrl.u32 %v577, 16
      %v741 = vrot.slane %v739, 7
      %v742 = vshll.u32 %v577, 16
      %v744 = vor.u32 %v741, %v742
      %v745 = vsel %vm593, %v737, %v744
      %v746 = vrot.slane %v741, 4
      %v748 = vshrl.u32 %v578, 16
      %v750 = vrot.slane %v748, 7
      %v751 = vshll.u32 %v578, 16
      %v753 = vor.u32 %v750, %v751
      %v754 = vrot.slane %v750, 4
      %v756 = vshrl.u32 %v579, 16
      %v758 = vrot.slane %v756, 7
      %v759 = vshll.u32 %v579, 16
      %v761 = vor.u32 %v758, %v759
      %v762 = vsel %vm593, %v754, %v761
      %v763 = vrot.slane %v758, 4
      %v765 = vshrl.u32 %v580, 16
      %v767 = vrot.slane %v765, 7
      %v768 = vshll.u32 %v580, 16
      %v770 = vor.u32 %v767, %v768
      %v771 = vrot.slane %v767, 4
      %v773 = vshrl.u32 %v581, 16
      %v775 = vrot.slane %v773, 7
      %v776 = vshll.u32 %v581, 16
      %v778 = vor.u32 %v775, %v776
      %v779 = vsel %vm593, %v771, %v778
      %v780 = vrot.slane %v775, 4
      %v782 = vshrl.u32 %v582, 16
      %v784 = vrot.slane %v782, 7
      %v785 = vshll.u32 %v582, 16
      %v787 = vor.u32 %v784, %v785
      %v788 = vrot.slane %v784, 4
      %v790 = vshrl.u32 %v583, 16
      %v792 = vrot.slane %v790, 7
      %v793 = vshll.u32 %v583, 16
      %v795 = vor.u32 %v792, %v793
      %v796 = vsel %vm593, %v788, %v795
      %v797 = vrot.slane %v792, 4
      %v799 = vshrl.u32 %v584, 16
      %v801 = vrot.slane %v799, 7
      %v802 = vshll.u32 %v584, 16
      %v804 = vor.u32 %v801, %v802
      %v805 = vrot.slane %v801, 4
      %v807 = vshrl.u32 %v585, 16
      %v809 = vrot.slane %v807, 7
      %v810 = vshll.u32 %v585, 16
      %v812 = vor.u32 %v809, %v810
      %v813 = vsel %vm593, %v805, %v812
      %v814 = vrot.slane %v809, 4
      %v816 = vshrl.u32 %v586, 16
      %v818 = vrot.slane %v816, 7
      %v819 = vshll.u32 %v586, 16
      %v821 = vor.u32 %v818, %v819
      %v822 = vrot.slane %v818, 4
      %v824 = vshrl.u32 %v587, 16
      %v826 = vrot.slane %v824, 7
      %v827 = vshll.u32 %v587, 16
      %v829 = vor.u32 %v826, %v827
      %v830 = vsel %vm593, %v822, %v829
      %v831 = vrot.slane %v826, 4
      %v833 = vshrl.u32 %v588, 16
      %v835 = vrot.slane %v833, 7
      %v836 = vshll.u32 %v588, 16
      %v838 = vor.u32 %v835, %v836
      %v839 = vrot.slane %v835, 4
      %v841 = vshrl.u32 %v589, 16
      %v843 = vrot.slane %v841, 7
      %v844 = vshll.u32 %v589, 16
      %v846 = vor.u32 %v843, %v844
      %v847 = vsel %vm593, %v839, %v846
      %v848 = vrot.slane %v843, 4
      %v850 = vshrl.u32 %v590, 16
      %v852 = vrot.slane %v850, 7
      %v853 = vshll.u32 %v590, 16
      %v855 = vor.u32 %v852, %v853
      %v856 = vrot.slane %v852, 4
      %v858 = vshrl.u32 %v591, 16
      %v860 = vrot.slane %v858, 7
      %v861 = vshll.u32 %v591, 16
      %v863 = vor.u32 %v860, %v861
      %v864 = vsel %vm593, %v856, %v863
      %v865 = vrot.slane %v860, 4
      %s914 = scalar_lea.vmem [#allocation2], 12
      %vm915 = vcmask 27648
      %vm916 = vmand %vm915, %vm336
      %v917 = vld [vmem:[%s914] sm:$0xf]
      %v918 = vsel %vm916, %v600, %v917
      %919 = vst [vmem:[%s914] sm:$0xf] %v918
      %920 = vst.msk [vmem:[%s914 + $0x4] sm:$0xf] %vm270, %v609
      %v921 = vld [vmem:[%s914 + $0x8] sm:$0x1]
      %v922 = vsel %vm281, %v610, %v921
      %923 = vst [vmem:[%s914 + $0x8] sm:$0x1] %v922
      %v924 = vld [vmem:[%s914 + $0xc] sm:$0xf]
      %v925 = vsel %vm916, %v617, %v924
      %926 = vst [vmem:[%s914 + $0xc] sm:$0xf] %v925
      %927 = vst.msk [vmem:[%s914 + $0x10] sm:$0xf] %vm270, %v626
      %v928 = vld [vmem:[%s914 + $0x14] sm:$0x1]
      %v929 = vsel %vm281, %v627, %v928
      %930 = vst [vmem:[%s914 + $0x14] sm:$0x1] %v929
      %v931 = vld [vmem:[%s914 + $0x18] sm:$0xf]
      %v932 = vsel %vm916, %v634, %v931
      %933 = vst [vmem:[%s914 + $0x18] sm:$0xf] %v932
      %934 = vst.msk [vmem:[%s914 + $0x1c] sm:$0xf] %vm270, %v643
      %v935 = vld [vmem:[%s914 + $0x20] sm:$0x1]
      %v936 = vsel %vm281, %v644, %v935
      %937 = vst [vmem:[%s914 + $0x20] sm:$0x1] %v936
      %v938 = vld [vmem:[%s914 + $0x24] sm:$0xf]
      %v939 = vsel %vm916, %v651, %v938
      %940 = vst [vmem:[%s914 + $0x24] sm:$0xf] %v939
      %941 = vst.msk [vmem:[%s914 + $0x28] sm:$0xf] %vm270, %v660
      %v942 = vld [vmem:[%s914 + $0x2c] sm:$0x1]
      %v943 = vsel %vm281, %v661, %v942
      %944 = vst [vmem:[%s914 + $0x2c] sm:$0x1] %v943
      %v945 = vld [vmem:[%s914 + $0x30] sm:$0xf]
      %v946 = vsel %vm916, %v668, %v945
      %947 = vst [vmem:[%s914 + $0x30] sm:$0xf] %v946
      %948 = vst.msk [vmem:[%s914 + $0x34] sm:$0xf] %vm270, %v677
      %v949 = vld [vmem:[%s914 + $0x38] sm:$0x1]
      %v950 = vsel %vm281, %v678, %v949
      %951 = vst [vmem:[%s914 + $0x38] sm:$0x1] %v950
      %v952 = vld [vmem:[%s914 + $0x3c] sm:$0xf]
      %v953 = vsel %vm916, %v685, %v952
      %954 = vst [vmem:[%s914 + $0x3c] sm:$0xf] %v953
      %955 = vst.msk [vmem:[%s914 + $0x40] sm:$0xf] %vm270, %v694
      %v956 = vld [vmem:[%s914 + $0x44] sm:$0x1]
      %v957 = vsel %vm281, %v695, %v956
      %958 = vst [vmem:[%s914 + $0x44] sm:$0x1] %v957
      %v959 = vld [vmem:[%s914 + $0x48] sm:$0xf]
      %v960 = vsel %vm916, %v702, %v959
      %961 = vst [vmem:[%s914 + $0x48] sm:$0xf] %v960
      %962 = vst.msk [vmem:[%s914 + $0x4c] sm:$0xf] %vm270, %v711
      %v963 = vld [vmem:[%s914 + $0x50] sm:$0x1]
      %v964 = vsel %vm281, %v712, %v963
      %965 = vst [vmem:[%s914 + $0x50] sm:$0x1] %v964
      %v966 = vld [vmem:[%s914 + $0x54] sm:$0xf]
      %v967 = vsel %vm916, %v719, %v966
      %968 = vst [vmem:[%s914 + $0x54] sm:$0xf] %v967
      %969 = vst.msk [vmem:[%s914 + $0x58] sm:$0xf] %vm270, %v728
      %v970 = vld [vmem:[%s914 + $0x5c] sm:$0x1]
      %v971 = vsel %vm281, %v729, %v970
      %972 = vst [vmem:[%s914 + $0x5c] sm:$0x1] %v971
      %v973 = vld [vmem:[%s914 + $0x60] sm:$0xf]
      %v974 = vsel %vm916, %v736, %v973
      %975 = vst [vmem:[%s914 + $0x60] sm:$0xf] %v974
      %976 = vst.msk [vmem:[%s914 + $0x64] sm:$0xf] %vm270, %v745
      %v977 = vld [vmem:[%s914 + $0x68] sm:$0x1]
      %v978 = vsel %vm281, %v746, %v977
      %979 = vst [vmem:[%s914 + $0x68] sm:$0x1] %v978
      %v980 = vld [vmem:[%s914 + $0x6c] sm:$0xf]
      %v981 = vsel %vm916, %v753, %v980
      %982 = vst [vmem:[%s914 + $0x6c] sm:$0xf] %v981
      %983 = vst.msk [vmem:[%s914 + $0x70] sm:$0xf] %vm270, %v762
      %v984 = vld [vmem:[%s914 + $0x74] sm:$0x1]
      %v985 = vsel %vm281, %v763, %v984
      %986 = vst [vmem:[%s914 + $0x74] sm:$0x1] %v985
      %v987 = vld [vmem:[%s914 + $0x78] sm:$0xf]
      %v988 = vsel %vm916, %v770, %v987
      %989 = vst [vmem:[%s914 + $0x78] sm:$0xf] %v988
      %990 = vst.msk [vmem:[%s914 + $0x7c] sm:$0xf] %vm270, %v779
      %v991 = vld [vmem:[%s914 + $0x80] sm:$0x1]
      %v992 = vsel %vm281, %v780, %v991
      %993 = vst [vmem:[%s914 + $0x80] sm:$0x1] %v992
      %v994 = vld [vmem:[%s914 + $0x84] sm:$0xf]
      %v995 = vsel %vm916, %v787, %v994
      %996 = vst [vmem:[%s914 + $0x84] sm:$0xf] %v995
      %997 = vst.msk [vmem:[%s914 + $0x88] sm:$0xf] %vm270, %v796
      %v998 = vld [vmem:[%s914 + $0x8c] sm:$0x1]
      %v999 = vsel %vm281, %v797, %v998
      %1000 = vst [vmem:[%s914 + $0x8c] sm:$0x1] %v999
      %v1001 = vld [vmem:[%s914 + $0x90] sm:$0xf]
      %v1002 = vsel %vm916, %v804, %v1001
      %1003 = vst [vmem:[%s914 + $0x90] sm:$0xf] %v1002
      %1004 = vst.msk [vmem:[%s914 + $0x94] sm:$0xf] %vm270, %v813
      %v1005 = vld [vmem:[%s914 + $0x98] sm:$0x1]
      %v1006 = vsel %vm281, %v814, %v1005
      %1007 = vst [vmem:[%s914 + $0x98] sm:$0x1] %v1006
      %v1008 = vld [vmem:[%s914 + $0x9c] sm:$0xf]
      %v1009 = vsel %vm916, %v821, %v1008
      %1010 = vst [vmem:[%s914 + $0x9c] sm:$0xf] %v1009
      %1011 = vst.msk [vmem:[%s914 + $0xa0] sm:$0xf] %vm270, %v830
      %v1012 = vld [vmem:[%s914 + $0xa4] sm:$0x1]
      %v1013 = vsel %vm281, %v831, %v1012
      %1014 = vst [vmem:[%s914 + $0xa4] sm:$0x1] %v1013
      %v1015 = vld [vmem:[%s914 + $0xa8] sm:$0xf]
      %v1016 = vsel %vm916, %v838, %v1015
      %1017 = vst [vmem:[%s914 + $0xa8] sm:$0xf] %v1016
      %1018 = vst.msk [vmem:[%s914 + $0xac] sm:$0xf] %vm270, %v847
      %v1019 = vld [vmem:[%s914 + $0xb0] sm:$0x1]
      %v1020 = vsel %vm281, %v848, %v1019
      %1021 = vst [vmem:[%s914 + $0xb0] sm:$0x1] %v1020
      %v1022 = vld [vmem:[%s914 + $0xb4] sm:$0xf]
      %v1023 = vsel %vm916, %v855, %v1022
      %1024 = vst [vmem:[%s914 + $0xb4] sm:$0xf] %v1023
      %1025 = vst.msk [vmem:[%s914 + $0xb8] sm:$0xf] %vm270, %v864
      %v1026 = vld [vmem:[%s914 + $0xbc] sm:$0x1]
      %v1027 = vsel %vm281, %v865, %v1026
      %1028 = vst [vmem:[%s914 + $0xbc] sm:$0x1] %v1027
      %v1029 = vld [vmem:[#allocation2] sm:$0xf]
      %v1030 = vld [vmem:[#allocation2 + $0x4] sm:$0xf]
      %v1031 = vld [vmem:[#allocation2 + $0xc] sm:$0xf]
      %v1032 = vld [vmem:[#allocation2 + $0x10] sm:$0xf]
      %v1033 = vld [vmem:[#allocation2 + $0x18] sm:$0xf]
      %v1034 = vld [vmem:[#allocation2 + $0x1c] sm:$0xf]
      %v1035 = vld [vmem:[#allocation2 + $0x24] sm:$0xf]
      %v1036 = vld [vmem:[#allocation2 + $0x28] sm:$0xf]
      %v1037 = vld [vmem:[#allocation2 + $0x30] sm:$0xf]
      %v1038 = vld [vmem:[#allocation2 + $0x34] sm:$0xf]
      %v1039 = vld [vmem:[#allocation2 + $0x3c] sm:$0xf]
      %v1040 = vld [vmem:[#allocation2 + $0x40] sm:$0xf]
      %v1041 = vld [vmem:[#allocation2 + $0x48] sm:$0xf]
      %v1042 = vld [vmem:[#allocation2 + $0x4c] sm:$0xf]
      %v1043 = vld [vmem:[#allocation2 + $0x54] sm:$0xf]
      %v1044 = vld [vmem:[#allocation2 + $0x58] sm:$0xf]
      %v1045 = vld [vmem:[#allocation2 + $0x60] sm:$0xf]
      %v1046 = vld [vmem:[#allocation2 + $0x64] sm:$0xf]
      %v1047 = vld [vmem:[#allocation2 + $0x6c] sm:$0xf]
      %v1048 = vld [vmem:[#allocation2 + $0x70] sm:$0xf]
      %v1049 = vld [vmem:[#allocation2 + $0x78] sm:$0xf]
      %v1050 = vld [vmem:[#allocation2 + $0x7c] sm:$0xf]
      %v1051 = vld [vmem:[#allocation2 + $0x84] sm:$0xf]
      %v1052 = vld [vmem:[#allocation2 + $0x88] sm:$0xf]
      %v1053 = vld [vmem:[#allocation2 + $0x90] sm:$0xf]
      %v1054 = vld [vmem:[#allocation2 + $0x94] sm:$0xf]
      %v1055 = vld [vmem:[#allocation2 + $0x9c] sm:$0xf]
      %v1056 = vld [vmem:[#allocation2 + $0xa0] sm:$0xf]
      %v1057 = vld [vmem:[#allocation2 + $0xa8] sm:$0xf]
      %v1058 = vld [vmem:[#allocation2 + $0xac] sm:$0xf]
      %v1059 = vld [vmem:[#allocation2 + $0xb4] sm:$0xf]
      %v1060 = vld [vmem:[#allocation2 + $0xb8] sm:$0xf]
      %v1061 = vld [vmem:[%s3] sm:$0x3]
      %v1062 = vld [vmem:[#allocation2 + $0x8] sm:$0x1]
      %v1063 = vld [vmem:[#allocation2 + $0x14] sm:$0x1]
      %v1064 = vld [vmem:[#allocation2 + $0x20] sm:$0x1]
      %v1065 = vld [vmem:[#allocation2 + $0x2c] sm:$0x1]
      %v1066 = vld [vmem:[#allocation2 + $0x38] sm:$0x1]
      %v1067 = vld [vmem:[#allocation2 + $0x44] sm:$0x1]
      %v1068 = vld [vmem:[#allocation2 + $0x50] sm:$0x1]
      %v1069 = vld [vmem:[#allocation2 + $0x5c] sm:$0x1]
      %v1070 = vld [vmem:[#allocation2 + $0x68] sm:$0x1]
      %v1071 = vld [vmem:[#allocation2 + $0x74] sm:$0x1]
      %v1072 = vld [vmem:[#allocation2 + $0x80] sm:$0x1]
      %v1073 = vld [vmem:[#allocation2 + $0x8c] sm:$0x1]
      %v1074 = vld [vmem:[#allocation2 + $0x98] sm:$0x1]
      %v1075 = vld [vmem:[#allocation2 + $0xa4] sm:$0x1]
      %v1076 = vld [vmem:[#allocation2 + $0xb0] sm:$0x1]
      %v1077 = vld [vmem:[#allocation2 + $0xbc] sm:$0x1]
      %vm1078 = vsmask.f32 3328
      %vm1079 = vsmask.f32 7440
      %vm1080 = vmor %vm1078, %vm1079
      %v1082 = vshrl.u32 %v1029, 16
      %v1084 = vrot.slane %v1082, 4
      %v1085 = vshll.u32 %v1029, 16
      %v1087 = vrot.slane %v1085, 5
      %v1088 = vor.u32 %v1084, %v1087
      %v1089 = vrot.slane %v1088, 4
      %v1091 = vshll.u32 %v1030, 16
      %v1093 = vrot.slane %v1091, 5
      %v1094 = vsel %vm1080, %v1089, %v1093
      %v1095 = vshrl.u32 %v1030, 16
      %v1097 = vrot.slane %v1095, 4
      %v1098 = vor.u32 %v1097, %v1093
      %v1099 = vrot.slane %v1098, 4
      %v1101 = vshll.u32 %v1062, 16
      %v1103 = vrot.slane %v1101, 5
      %v1104 = vsel %vm1080, %v1099, %v1103
      %v1106 = vshrl.u32 %v1031, 16
      %v1108 = vrot.slane %v1106, 4
      %v1109 = vshll.u32 %v1031, 16
      %v1111 = vrot.slane %v1109, 5
      %v1112 = vor.u32 %v1108, %v1111
      %v1113 = vrot.slane %v1112, 4
      %v1115 = vshll.u32 %v1032, 16
      %v1117 = vrot.slane %v1115, 5
      %v1118 = vsel %vm1080, %v1113, %v1117
      %v1119 = vshrl.u32 %v1032, 16
      %v1121 = vrot.slane %v1119, 4
      %v1122 = vor.u32 %v1121, %v1117
      %v1123 = vrot.slane %v1122, 4
      %v1125 = vshll.u32 %v1063, 16
      %v1127 = vrot.slane %v1125, 5
      %v1128 = vsel %vm1080, %v1123, %v1127
      %v1130 = vshrl.u32 %v1033, 16
      %v1132 = vrot.slane %v1130, 4
      %v1133 = vshll.u32 %v1033, 16
      %v1135 = vrot.slane %v1133, 5
      %v1136 = vor.u32 %v1132, %v1135
      %v1137 = vrot.slane %v1136, 4
      %v1139 = vshll.u32 %v1034, 16
      %v1141 = vrot.slane %v1139, 5
      %v1142 = vsel %vm1080, %v1137, %v1141
      %v1143 = vshrl.u32 %v1034, 16
      %v1145 = vrot.slane %v1143, 4
      %v1146 = vor.u32 %v1145, %v1141
      %v1147 = vrot.slane %v1146, 4
      %v1149 = vshll.u32 %v1064, 16
      %v1151 = vrot.slane %v1149, 5
      %v1152 = vsel %vm1080, %v1147, %v1151
      %v1154 = vshrl.u32 %v1035, 16
      %v1156 = vrot.slane %v1154, 4
      %v1157 = vshll.u32 %v1035, 16
      %v1159 = vrot.slane %v1157, 5
      %v1160 = vor.u32 %v1156, %v1159
      %v1161 = vrot.slane %v1160, 4
      %v1163 = vshll.u32 %v1036, 16
      %v1165 = vrot.slane %v1163, 5
      %v1166 = vsel %vm1080, %v1161, %v1165
      %v1167 = vshrl.u32 %v1036, 16
      %v1169 = vrot.slane %v1167, 4
      %v1170 = vor.u32 %v1169, %v1165
      %v1171 = vrot.slane %v1170, 4
      %v1173 = vshll.u32 %v1065, 16
      %v1175 = vrot.slane %v1173, 5
      %v1176 = vsel %vm1080, %v1171, %v1175
      %v1178 = vshrl.u32 %v1037, 16
      %v1180 = vrot.slane %v1178, 4
      %v1181 = vshll.u32 %v1037, 16
      %v1183 = vrot.slane %v1181, 5
      %v1184 = vor.u32 %v1180, %v1183
      %v1185 = vrot.slane %v1184, 4
      %v1187 = vshll.u32 %v1038, 16
      %v1189 = vrot.slane %v1187, 5
      %v1190 = vsel %vm1080, %v1185, %v1189
      %v1191 = vshrl.u32 %v1038, 16
      %v1193 = vrot.slane %v1191, 4
      %v1194 = vor.u32 %v1193, %v1189
      %v1195 = vrot.slane %v1194, 4
      %v1197 = vshll.u32 %v1066, 16
      %v1199 = vrot.slane %v1197, 5
      %v1200 = vsel %vm1080, %v1195, %v1199
      %v1202 = vshrl.u32 %v1039, 16
      %v1204 = vrot.slane %v1202, 4
      %v1205 = vshll.u32 %v1039, 16
      %v1207 = vrot.slane %v1205, 5
      %v1208 = vor.u32 %v1204, %v1207
      %v1209 = vrot.slane %v1208, 4
      %v1211 = vshll.u32 %v1040, 16
      %v1213 = vrot.slane %v1211, 5
      %v1214 = vsel %vm1080, %v1209, %v1213
      %v1215 = vshrl.u32 %v1040, 16
      %v1217 = vrot.slane %v1215, 4
      %v1218 = vor.u32 %v1217, %v1213
      %v1219 = vrot.slane %v1218, 4
      %v1221 = vshll.u32 %v1067, 16
      %v1223 = vrot.slane %v1221, 5
      %v1224 = vsel %vm1080, %v1219, %v1223
      %v1226 = vshrl.u32 %v1041, 16
      %v1228 = vrot.slane %v1226, 4
      %v1229 = vshll.u32 %v1041, 16
      %v1231 = vrot.slane %v1229, 5
      %v1232 = vor.u32 %v1228, %v1231
      %v1233 = vrot.slane %v1232, 4
      %v1235 = vshll.u32 %v1042, 16
      %v1237 = vrot.slane %v1235, 5
      %v1238 = vsel %vm1080, %v1233, %v1237
      %v1239 = vshrl.u32 %v1042, 16
      %v1241 = vrot.slane %v1239, 4
      %v1242 = vor.u32 %v1241, %v1237
      %v1243 = vrot.slane %v1242, 4
      %v1245 = vshll.u32 %v1068, 16
      %v1247 = vrot.slane %v1245, 5
      %v1248 = vsel %vm1080, %v1243, %v1247
      %v1250 = vshrl.u32 %v1043, 16
      %v1252 = vrot.slane %v1250, 4
      %v1253 = vshll.u32 %v1043, 16
      %v1255 = vrot.slane %v1253, 5
      %v1256 = vor.u32 %v1252, %v1255
      %v1257 = vrot.slane %v1256, 4
      %v1259 = vshll.u32 %v1044, 16
      %v1261 = vrot.slane %v1259, 5
      %v1262 = vsel %vm1080, %v1257, %v1261
      %v1263 = vshrl.u32 %v1044, 16
      %v1265 = vrot.slane %v1263, 4
      %v1266 = vor.u32 %v1265, %v1261
      %v1267 = vrot.slane %v1266, 4
      %v1269 = vshll.u32 %v1069, 16
      %v1271 = vrot.slane %v1269, 5
      %v1272 = vsel %vm1080, %v1267, %v1271
      %v1274 = vshrl.u32 %v1045, 16
      %v1276 = vrot.slane %v1274, 4
      %v1277 = vshll.u32 %v1045, 16
      %v1279 = vrot.slane %v1277, 5
      %v1280 = vor.u32 %v1276, %v1279
      %v1281 = vrot.slane %v1280, 4
      %v1283 = vshll.u32 %v1046, 16
      %v1285 = vrot.slane %v1283, 5
      %v1286 = vsel %vm1080, %v1281, %v1285
      %v1287 = vshrl.u32 %v1046, 16
      %v1289 = vrot.slane %v1287, 4
      %v1290 = vor.u32 %v1289, %v1285
      %v1291 = vrot.slane %v1290, 4
      %v1293 = vshll.u32 %v1070, 16
      %v1295 = vrot.slane %v1293, 5
      %v1296 = vsel %vm1080, %v1291, %v1295
      %v1298 = vshrl.u32 %v1047, 16
      %v1300 = vrot.slane %v1298, 4
      %v1301 = vshll.u32 %v1047, 16
      %v1303 = vrot.slane %v1301, 5
      %v1304 = vor.u32 %v1300, %v1303
      %v1305 = vrot.slane %v1304, 4
      %v1307 = vshll.u32 %v1048, 16
      %v1309 = vrot.slane %v1307, 5
      %v1310 = vsel %vm1080, %v1305, %v1309
      %v1311 = vshrl.u32 %v1048, 16
      %v1313 = vrot.slane %v1311, 4
      %v1314 = vor.u32 %v1313, %v1309
      %v1315 = vrot.slane %v1314, 4
      %v1317 = vshll.u32 %v1071, 16
      %v1319 = vrot.slane %v1317, 5
      %v1320 = vsel %vm1080, %v1315, %v1319
      %v1322 = vshrl.u32 %v1049, 16
      %v1324 = vrot.slane %v1322, 4
      %v1325 = vshll.u32 %v1049, 16
      %v1327 = vrot.slane %v1325, 5
      %v1328 = vor.u32 %v1324, %v1327
      %v1329 = vrot.slane %v1328, 4
      %v1331 = vshll.u32 %v1050, 16
      %v1333 = vrot.slane %v1331, 5
      %v1334 = vsel %vm1080, %v1329, %v1333
      %v1335 = vshrl.u32 %v1050, 16
      %v1337 = vrot.slane %v1335, 4
      %v1338 = vor.u32 %v1337, %v1333
      %v1339 = vrot.slane %v1338, 4
      %v1341 = vshll.u32 %v1072, 16
      %v1343 = vrot.slane %v1341, 5
      %v1344 = vsel %vm1080, %v1339, %v1343
      %v1346 = vshrl.u32 %v1051, 16
      %v1348 = vrot.slane %v1346, 4
      %v1349 = vshll.u32 %v1051, 16
      %v1351 = vrot.slane %v1349, 5
      %v1352 = vor.u32 %v1348, %v1351
      %v1353 = vrot.slane %v1352, 4
      %v1355 = vshll.u32 %v1052, 16
      %v1357 = vrot.slane %v1355, 5
      %v1358 = vsel %vm1080, %v1353, %v1357
      %v1359 = vshrl.u32 %v1052, 16
      %v1361 = vrot.slane %v1359, 4
      %v1362 = vor.u32 %v1361, %v1357
      %v1363 = vrot.slane %v1362, 4
      %v1365 = vshll.u32 %v1073, 16
      %v1367 = vrot.slane %v1365, 5
      %v1368 = vsel %vm1080, %v1363, %v1367
      %v1370 = vshrl.u32 %v1053, 16
      %v1372 = vrot.slane %v1370, 4
      %v1373 = vshll.u32 %v1053, 16
      %v1375 = vrot.slane %v1373, 5
      %v1376 = vor.u32 %v1372, %v1375
      %v1377 = vrot.slane %v1376, 4
      %v1379 = vshll.u32 %v1054, 16
      %v1381 = vrot.slane %v1379, 5
      %v1382 = vsel %vm1080, %v1377, %v1381
      %v1383 = vshrl.u32 %v1054, 16
      %v1385 = vrot.slane %v1383, 4
      %v1386 = vor.u32 %v1385, %v1381
      %v1387 = vrot.slane %v1386, 4
      %v1389 = vshll.u32 %v1074, 16
      %v1391 = vrot.slane %v1389, 5
      %v1392 = vsel %vm1080, %v1387, %v1391
      %v1394 = vshrl.u32 %v1055, 16
      %v1396 = vrot.slane %v1394, 4
      %v1397 = vshll.u32 %v1055, 16
      %v1399 = vrot.slane %v1397, 5
      %v1400 = vor.u32 %v1396, %v1399
      %v1401 = vrot.slane %v1400, 4
      %v1403 = vshll.u32 %v1056, 16
      %v1405 = vrot.slane %v1403, 5
      %v1406 = vsel %vm1080, %v1401, %v1405
      %v1407 = vshrl.u32 %v1056, 16
      %v1409 = vrot.slane %v1407, 4
      %v1410 = vor.u32 %v1409, %v1405
      %v1411 = vrot.slane %v1410, 4
      %v1413 = vshll.u32 %v1075, 16
      %v1415 = vrot.slane %v1413, 5
      %v1416 = vsel %vm1080, %v1411, %v1415
      %v1418 = vshrl.u32 %v1057, 16
      %v1420 = vrot.slane %v1418, 4
      %v1421 = vshll.u32 %v1057, 16
      %v1423 = vrot.slane %v1421, 5
      %v1424 = vor.u32 %v1420, %v1423
      %v1425 = vrot.slane %v1424, 4
      %v1427 = vshll.u32 %v1058, 16
      %v1429 = vrot.slane %v1427, 5
      %v1430 = vsel %vm1080, %v1425, %v1429
      %v1431 = vshrl.u32 %v1058, 16
      %v1433 = vrot.slane %v1431, 4
      %v1434 = vor.u32 %v1433, %v1429
      %v1435 = vrot.slane %v1434, 4
      %v1437 = vshll.u32 %v1076, 16
      %v1439 = vrot.slane %v1437, 5
      %v1440 = vsel %vm1080, %v1435, %v1439
      %v1442 = vshrl.u32 %v1059, 16
      %v1444 = vrot.slane %v1442, 4
      %v1445 = vshll.u32 %v1059, 16
      %v1447 = vrot.slane %v1445, 5
      %v1448 = vor.u32 %v1444, %v1447
      %v1449 = vrot.slane %v1448, 4
      %v1451 = vshll.u32 %v1060, 16
      %v1453 = vrot.slane %v1451, 5
      %v1454 = vsel %vm1080, %v1449, %v1453
      %v1455 = vshrl.u32 %v1060, 16
      %v1457 = vrot.slane %v1455, 4
      %v1458 = vor.u32 %v1457, %v1453
      %v1459 = vrot.slane %v1458, 4
      %v1461 = vshll.u32 %v1077, 16
      %v1463 = vrot.slane %v1461, 5
      %v1464 = vsel %vm1080, %v1459, %v1463
      %v1465 = vld [vmem:[%s3] sm:$0xc]
      %v1466 = vunpack.c.l.b16 %v1094
      %v1467 = vunpack.c.l.b16 %v1104
      %v1468 = vunpack.c.l.b16 %v1118
      %v1469 = vunpack.c.l.b16 %v1128
      %v1470 = vunpack.c.l.b16 %v1142
      %v1471 = vunpack.c.l.b16 %v1152
      %v1472 = vunpack.c.l.b16 %v1166
      %v1473 = vunpack.c.l.b16 %v1176
      %v1474 = vunpack.c.l.b16 %v1190
      %v1475 = vunpack.c.l.b16 %v1200
      %v1476 = vunpack.c.l.b16 %v1214
      %v1477 = vunpack.c.l.b16 %v1224
      %v1478 = vunpack.c.l.b16 %v1238
      %v1479 = vunpack.c.l.b16 %v1248
      %v1480 = vunpack.c.l.b16 %v1262
      %v1481 = vunpack.c.l.b16 %v1272
      %v1482 = vunpack.c.l.b16 %v1286
      %v1483 = vunpack.c.l.b16 %v1296
      %v1484 = vunpack.c.l.b16 %v1310
      %v1485 = vunpack.c.l.b16 %v1320
      %v1486 = vunpack.c.l.b16 %v1334
      %v1487 = vunpack.c.l.b16 %v1344
      %v1488 = vunpack.c.l.b16 %v1358
      %v1489 = vunpack.c.l.b16 %v1368
      %v1490 = vunpack.c.l.b16 %v1382
      %v1491 = vunpack.c.l.b16 %v1392
      %v1492 = vunpack.c.l.b16 %v1406
      %v1493 = vunpack.c.l.b16 %v1416
      %v1494 = vunpack.c.l.b16 %v1430
      %v1495 = vunpack.c.l.b16 %v1440
      %v1496 = vunpack.c.l.b16 %v1454
      %v1497 = vunpack.c.l.b16 %v1464
      %v1498 = vpack.c.b16 %v1467, %v1466
      %v1499 = vpack.c.b16 %v1469, %v1468
      %v1500 = vpack.c.b16 %v1471, %v1470
      %v1501 = vpack.c.b16 %v1473, %v1472
      %v1502 = vpack.c.b16 %v1475, %v1474
      %v1503 = vpack.c.b16 %v1477, %v1476
      %v1504 = vpack.c.b16 %v1479, %v1478
      %v1505 = vpack.c.b16 %v1481, %v1480
      %v1506 = vpack.c.b16 %v1483, %v1482
      %v1507 = vpack.c.b16 %v1485, %v1484
      %v1508 = vpack.c.b16 %v1487, %v1486
      %v1509 = vpack.c.b16 %v1489, %v1488
      %v1510 = vpack.c.b16 %v1491, %v1490
      %v1511 = vpack.c.b16 %v1493, %v1492
      %v1512 = vpack.c.b16 %v1495, %v1494
      %v1513 = vpack.c.b16 %v1497, %v1496
      %v1515 = vunpack.c.l.b16 %v1465
      %v1516 = vpack.c.b16 %v1515, %v1515
      %v1517 = vrot.slane %v1516, 2
      %vm1518 = vcmask 31744
      %v1520 = vsel %vm1518, %v1498, 0
      %v1523 = vsel %vm1518, %v1499, 0
      %v1526 = vsel %vm1518, %v1500, 0
      %v1529 = vsel %vm1518, %v1501, 0
      %v1532 = vsel %vm1518, %v1502, 0
      %v1535 = vsel %vm1518, %v1503, 0
      %v1538 = vsel %vm1518, %v1504, 0
      %v1541 = vsel %vm1518, %v1505, 0
      %v1544 = vsel %vm1518, %v1506, 0
      %v1547 = vsel %vm1518, %v1507, 0
      %v1550 = vsel %vm1518, %v1508, 0
      %v1553 = vsel %vm1518, %v1509, 0
      %v1556 = vsel %vm1518, %v1510, 0
      %v1559 = vsel %vm1518, %v1511, 0
      %v1562 = vsel %vm1518, %v1512, 0
      %v1565 = vsel %vm1518, %v1513, 0
      %vm1567 = vcmask 1041408
      %v1569 = vsel %vm1567, %v1517, 0
      %1571 = vmatpush.bf16.msra.mxu0 0
      %1572 = vmatpush.bf16.msra.mxu0 0
      %1573 = vmatpush.bf16.msra.mxu0 0
      %1574 = vmatpush.bf16.msra.mxu0 0
      %1575 = vmatpush.bf16.msra.mxu0 0
      %1576 = vmatpush.bf16.msra.mxu0 0
      %1577 = vmatpush.bf16.msra.mxu0 0
      %1578 = vmatpush.bf16.msra.mxu0 %v1569
      %1579 = vmatmul.bf16.gmra.mxu0 %v1520
      %v1580 = vpop.f32.mrf.mxu0
      %v1581 = vadd.f32 0.0, %v1580
      %v1582 = vpop.f32.mrf.mxu0
      %v1583 = vadd.f32 0.0, %v1582
      %1584 = vmatmul.bf16.gmra.mxu0 %v1523
      %v1585 = vpop.f32.mrf.mxu0
      %v1586 = vadd.f32 0.0, %v1585
      %v1587 = vpop.f32.mrf.mxu0
      %v1588 = vadd.f32 0.0, %v1587
      %1589 = vmatmul.bf16.gmra.mxu0 %v1526
      %v1590 = vpop.f32.mrf.mxu0
      %v1591 = vadd.f32 0.0, %v1590
      %v1592 = vpop.f32.mrf.mxu0
      %v1593 = vadd.f32 0.0, %v1592
      %1594 = vmatmul.bf16.gmra.mxu0 %v1529
      %v1595 = vpop.f32.mrf.mxu0
      %v1596 = vadd.f32 0.0, %v1595
      %v1597 = vpop.f32.mrf.mxu0
      %v1598 = vadd.f32 0.0, %v1597
      %1599 = vmatmul.bf16.gmra.mxu0 %v1532
      %v1600 = vpop.f32.mrf.mxu0
      %v1601 = vadd.f32 0.0, %v1600
      %v1602 = vpop.f32.mrf.mxu0
      %v1603 = vadd.f32 0.0, %v1602
      %1604 = vmatmul.bf16.gmra.mxu0 %v1535
      %v1605 = vpop.f32.mrf.mxu0
      %v1606 = vadd.f32 0.0, %v1605
      %v1607 = vpop.f32.mrf.mxu0
      %v1608 = vadd.f32 0.0, %v1607
      %1609 = vmatmul.bf16.gmra.mxu0 %v1538
      %v1610 = vpop.f32.mrf.mxu0
      %v1611 = vadd.f32 0.0, %v1610
      %v1612 = vpop.f32.mrf.mxu0
      %v1613 = vadd.f32 0.0, %v1612
      %1614 = vmatmul.bf16.gmra.mxu0 %v1541
      %v1615 = vpop.f32.mrf.mxu0
      %v1616 = vadd.f32 0.0, %v1615
      %v1617 = vpop.f32.mrf.mxu0
      %v1618 = vadd.f32 0.0, %v1617
      %1619 = vmatmul.bf16.gmra.mxu0 %v1544
      %v1620 = vpop.f32.mrf.mxu0
      %v1621 = vadd.f32 0.0, %v1620
      %v1622 = vpop.f32.mrf.mxu0
      %v1623 = vadd.f32 0.0, %v1622
      %1624 = vmatmul.bf16.gmra.mxu0 %v1547
      %v1625 = vpop.f32.mrf.mxu0
      %v1626 = vadd.f32 0.0, %v1625
      %v1627 = vpop.f32.mrf.mxu0
      %v1628 = vadd.f32 0.0, %v1627
      %1629 = vmatmul.bf16.gmra.mxu0 %v1550
      %v1630 = vpop.f32.mrf.mxu0
      %v1631 = vadd.f32 0.0, %v1630
      %v1632 = vpop.f32.mrf.mxu0
      %v1633 = vadd.f32 0.0, %v1632
      %1634 = vmatmul.bf16.gmra.mxu0 %v1553
      %v1635 = vpop.f32.mrf.mxu0
      %v1636 = vadd.f32 0.0, %v1635
      %v1637 = vpop.f32.mrf.mxu0
      %v1638 = vadd.f32 0.0, %v1637
      %1639 = vmatmul.bf16.gmra.mxu0 %v1556
      %v1640 = vpop.f32.mrf.mxu0
      %v1641 = vadd.f32 0.0, %v1640
      %v1642 = vpop.f32.mrf.mxu0
      %v1643 = vadd.f32 0.0, %v1642
      %1644 = vmatmul.bf16.gmra.mxu0 %v1559
      %v1645 = vpop.f32.mrf.mxu0
      %v1646 = vadd.f32 0.0, %v1645
      %v1647 = vpop.f32.mrf.mxu0
      %v1648 = vadd.f32 0.0, %v1647
      %1649 = vmatmul.bf16.gmra.mxu0 %v1562
      %v1650 = vpop.f32.mrf.mxu0
      %v1651 = vadd.f32 0.0, %v1650
      %v1652 = vpop.f32.mrf.mxu0
      %v1653 = vadd.f32 0.0, %v1652
      %1654 = vmatmul.bf16.gmra.mxu0 %v1565
      %v1655 = vpop.f32.mrf.mxu0
      %v1656 = vadd.f32 0.0, %v1655
      %v1657 = vpop.f32.mrf.mxu0
      %v1658 = vadd.f32 0.0, %v1657
      %1659 = vdwg.mxu0
      %v1692 = vunpack.c.l.b16 %v1029
      %v1693 = vunpack.c.l.b16 %v1030
      %v1694 = vunpack.c.l.b16 %v1031
      %v1695 = vunpack.c.l.b16 %v1032
      %v1696 = vunpack.c.l.b16 %v1033
      %v1697 = vunpack.c.l.b16 %v1034
      %v1698 = vunpack.c.l.b16 %v1035
      %v1699 = vunpack.c.l.b16 %v1036
      %v1700 = vunpack.c.l.b16 %v1037
      %v1701 = vunpack.c.l.b16 %v1038
      %v1702 = vunpack.c.l.b16 %v1039
      %v1703 = vunpack.c.l.b16 %v1040
      %v1704 = vunpack.c.l.b16 %v1041
      %v1705 = vunpack.c.l.b16 %v1042
      %v1706 = vunpack.c.l.b16 %v1043
      %v1707 = vunpack.c.l.b16 %v1044
      %v1708 = vunpack.c.l.b16 %v1045
      %v1709 = vunpack.c.l.b16 %v1046
      %v1710 = vunpack.c.l.b16 %v1047
      %v1711 = vunpack.c.l.b16 %v1048
      %v1712 = vunpack.c.l.b16 %v1049
      %v1713 = vunpack.c.l.b16 %v1050
      %v1714 = vunpack.c.l.b16 %v1051
      %v1715 = vunpack.c.l.b16 %v1052
      %v1716 = vunpack.c.l.b16 %v1053
      %v1717 = vunpack.c.l.b16 %v1054
      %v1718 = vunpack.c.l.b16 %v1055
      %v1719 = vunpack.c.l.b16 %v1056
      %v1720 = vunpack.c.l.b16 %v1057
      %v1721 = vunpack.c.l.b16 %v1058
      %v1722 = vunpack.c.l.b16 %v1059
      %v1723 = vunpack.c.l.b16 %v1060
      %v1724 = vpack.c.b16 %v1693, %v1692
      %v1725 = vpack.c.b16 %v1695, %v1694
      %v1726 = vpack.c.b16 %v1697, %v1696
      %v1727 = vpack.c.b16 %v1699, %v1698
      %v1728 = vpack.c.b16 %v1701, %v1700
      %v1729 = vpack.c.b16 %v1703, %v1702
      %v1730 = vpack.c.b16 %v1705, %v1704
      %v1731 = vpack.c.b16 %v1707, %v1706
      %v1732 = vpack.c.b16 %v1709, %v1708
      %v1733 = vpack.c.b16 %v1711, %v1710
      %v1734 = vpack.c.b16 %v1713, %v1712
      %v1735 = vpack.c.b16 %v1715, %v1714
      %v1736 = vpack.c.b16 %v1717, %v1716
      %v1737 = vpack.c.b16 %v1719, %v1718
      %v1738 = vpack.c.b16 %v1721, %v1720
      %v1739 = vpack.c.b16 %v1723, %v1722
      %v1741 = vsel %vm1518, %v1724, 0
      %v1744 = vsel %vm1518, %v1725, 0
      %v1747 = vsel %vm1518, %v1726, 0
      %v1750 = vsel %vm1518, %v1727, 0
      %v1753 = vsel %vm1518, %v1728, 0
      %v1756 = vsel %vm1518, %v1729, 0
      %v1759 = vsel %vm1518, %v1730, 0
      %v1762 = vsel %vm1518, %v1731, 0
      %v1765 = vsel %vm1518, %v1732, 0
      %v1768 = vsel %vm1518, %v1733, 0
      %v1771 = vsel %vm1518, %v1734, 0
      %v1774 = vsel %vm1518, %v1735, 0
      %v1777 = vsel %vm1518, %v1736, 0
      %v1780 = vsel %vm1518, %v1737, 0
      %v1783 = vsel %vm1518, %v1738, 0
      %v1786 = vsel %vm1518, %v1739, 0
      %v1789 = vsel %vm1567, %v1061, 0
      %1791 = vmatpush.bf16.msra.mxu0 0
      %1792 = vmatpush.bf16.msra.mxu0 0
      %1793 = vmatpush.bf16.msra.mxu0 0
      %1794 = vmatpush.bf16.msra.mxu0 0
      %1795 = vmatpush.bf16.msra.mxu0 0
      %1796 = vmatpush.bf16.msra.mxu0 0
      %1797 = vmatpush.bf16.msra.mxu0 0
      %1798 = vmatpush.bf16.msra.mxu0 %v1789
      %1799 = vmatmul.bf16.gmra.mxu0 %v1741
      %v1800 = vpop.f32.mrf.mxu0
      %v1801 = vadd.f32 %v1581, %v1800
      %v1802 = vpop.f32.mrf.mxu0
      %v1803 = vadd.f32 %v1583, %v1802
      %1804 = vmatmul.bf16.gmra.mxu0 %v1744
      %v1805 = vpop.f32.mrf.mxu0
      %v1806 = vadd.f32 %v1586, %v1805
      %v1807 = vpop.f32.mrf.mxu0
      %v1808 = vadd.f32 %v1588, %v1807
      %1809 = vmatmul.bf16.gmra.mxu0 %v1747
      %v1810 = vpop.f32.mrf.mxu0
      %v1811 = vadd.f32 %v1591, %v1810
      %v1812 = vpop.f32.mrf.mxu0
      %v1813 = vadd.f32 %v1593, %v1812
      %1814 = vmatmul.bf16.gmra.mxu0 %v1750
      %v1815 = vpop.f32.mrf.mxu0
      %v1816 = vadd.f32 %v1596, %v1815
      %v1817 = vpop.f32.mrf.mxu0
      %v1818 = vadd.f32 %v1598, %v1817
      %1819 = vmatmul.bf16.gmra.mxu0 %v1753
      %v1820 = vpop.f32.mrf.mxu0
      %v1821 = vadd.f32 %v1601, %v1820
      %v1822 = vpop.f32.mrf.mxu0
      %v1823 = vadd.f32 %v1603, %v1822
      %1824 = vmatmul.bf16.gmra.mxu0 %v1756
      %v1825 = vpop.f32.mrf.mxu0
      %v1826 = vadd.f32 %v1606, %v1825
      %v1827 = vpop.f32.mrf.mxu0
      %v1828 = vadd.f32 %v1608, %v1827
      %1829 = vmatmul.bf16.gmra.mxu0 %v1759
      %v1830 = vpop.f32.mrf.mxu0
      %v1831 = vadd.f32 %v1611, %v1830
      %v1832 = vpop.f32.mrf.mxu0
      %v1833 = vadd.f32 %v1613, %v1832
      %1834 = vmatmul.bf16.gmra.mxu0 %v1762
      %v1835 = vpop.f32.mrf.mxu0
      %v1836 = vadd.f32 %v1616, %v1835
      %v1837 = vpop.f32.mrf.mxu0
      %v1838 = vadd.f32 %v1618, %v1837
      %1839 = vmatmul.bf16.gmra.mxu0 %v1765
      %v1840 = vpop.f32.mrf.mxu0
      %v1841 = vadd.f32 %v1621, %v1840
      %v1842 = vpop.f32.mrf.mxu0
      %v1843 = vadd.f32 %v1623, %v1842
      %1844 = vmatmul.bf16.gmra.mxu0 %v1768
      %v1845 = vpop.f32.mrf.mxu0
      %v1846 = vadd.f32 %v1626, %v1845
      %v1847 = vpop.f32.mrf.mxu0
      %v1848 = vadd.f32 %v1628, %v1847
      %1849 = vmatmul.bf16.gmra.mxu0 %v1771
      %v1850 = vpop.f32.mrf.mxu0
      %v1851 = vadd.f32 %v1631, %v1850
      %v1852 = vpop.f32.mrf.mxu0
      %v1853 = vadd.f32 %v1633, %v1852
      %1854 = vmatmul.bf16.gmra.mxu0 %v1774
      %v1855 = vpop.f32.mrf.mxu0
      %v1856 = vadd.f32 %v1636, %v1855
      %v1857 = vpop.f32.mrf.mxu0
      %v1858 = vadd.f32 %v1638, %v1857
      %1859 = vmatmul.bf16.gmra.mxu0 %v1777
      %v1860 = vpop.f32.mrf.mxu0
      %v1861 = vadd.f32 %v1641, %v1860
      %v1862 = vpop.f32.mrf.mxu0
      %v1863 = vadd.f32 %v1643, %v1862
      %1864 = vmatmul.bf16.gmra.mxu0 %v1780
      %v1865 = vpop.f32.mrf.mxu0
      %v1866 = vadd.f32 %v1646, %v1865
      %v1867 = vpop.f32.mrf.mxu0
      %v1868 = vadd.f32 %v1648, %v1867
      %1869 = vmatmul.bf16.gmra.mxu0 %v1783
      %v1870 = vpop.f32.mrf.mxu0
      %v1871 = vadd.f32 %v1651, %v1870
      %v1872 = vpop.f32.mrf.mxu0
      %v1873 = vadd.f32 %v1653, %v1872
      %1874 = vmatmul.bf16.gmra.mxu0 %v1786
      %v1875 = vpop.f32.mrf.mxu0
      %v1876 = vadd.f32 %v1656, %v1875
      %v1877 = vpop.f32.mrf.mxu0
      %v1878 = vadd.f32 %v1658, %v1877
      %1879 = vdwg.mxu0
      %v1880 = vld [vmem:[#allocation2] sm:$0xe]
      %v1881 = vld [vmem:[#allocation2 + $0xc] sm:$0xe]
      %v1882 = vld [vmem:[#allocation2 + $0x18] sm:$0xe]
      %v1883 = vld [vmem:[#allocation2 + $0x24] sm:$0xe]
      %v1884 = vld [vmem:[#allocation2 + $0x30] sm:$0xe]
      %v1885 = vld [vmem:[#allocation2 + $0x3c] sm:$0xe]
      %v1886 = vld [vmem:[#allocation2 + $0x48] sm:$0xe]
      %v1887 = vld [vmem:[#allocation2 + $0x54] sm:$0xe]
      %v1888 = vld [vmem:[#allocation2 + $0x60] sm:$0xe]
      %v1889 = vld [vmem:[#allocation2 + $0x6c] sm:$0xe]
      %v1890 = vld [vmem:[#allocation2 + $0x78] sm:$0xe]
      %v1891 = vld [vmem:[#allocation2 + $0x84] sm:$0xe]
      %v1892 = vld [vmem:[#allocation2 + $0x90] sm:$0xe]
      %v1893 = vld [vmem:[#allocation2 + $0x9c] sm:$0xe]
      %v1894 = vld [vmem:[#allocation2 + $0xa8] sm:$0xe]
      %v1895 = vld [vmem:[#allocation2 + $0xb4] sm:$0xe]
      %vm1928 = vcmask 1042432
      %vm1929 = vcmask 1046532
      %vm1930 = vmor %vm1928, %vm1929
      %v1931 = vrot.slane %v1880, 5
      %v1932 = vrot.slane %v1931, 4
      %v1933 = vrot.slane %v1030, 5
      %v1934 = vsel %vm1930, %v1932, %v1933
      %v1935 = vrot.slane %v1933, 4
      %v1936 = vrot.slane %v1062, 5
      %v1937 = vsel %vm1930, %v1935, %v1936
      %v1938 = vrot.slane %v1881, 5
      %v1939 = vrot.slane %v1938, 4
      %v1940 = vrot.slane %v1032, 5
      %v1941 = vsel %vm1930, %v1939, %v1940
      %v1942 = vrot.slane %v1940, 4
      %v1943 = vrot.slane %v1063, 5
      %v1944 = vsel %vm1930, %v1942, %v1943
      %v1945 = vrot.slane %v1882, 5
      %v1946 = vrot.slane %v1945, 4
      %v1947 = vrot.slane %v1034, 5
      %v1948 = vsel %vm1930, %v1946, %v1947
      %v1949 = vrot.slane %v1947, 4
      %v1950 = vrot.slane %v1064, 5
      %v1951 = vsel %vm1930, %v1949, %v1950
      %v1952 = vrot.slane %v1883, 5
      %v1953 = vrot.slane %v1952, 4
      %v1954 = vrot.slane %v1036, 5
      %v1955 = vsel %vm1930, %v1953, %v1954
      %v1956 = vrot.slane %v1954, 4
      %v1957 = vrot.slane %v1065, 5
      %v1958 = vsel %vm1930, %v1956, %v1957
      %v1959 = vrot.slane %v1884, 5
      %v1960 = vrot.slane %v1959, 4
      %v1961 = vrot.slane %v1038, 5
      %v1962 = vsel %vm1930, %v1960, %v1961
      %v1963 = vrot.slane %v1961, 4
      %v1964 = vrot.slane %v1066, 5
      %v1965 = vsel %vm1930, %v1963, %v1964
      %v1966 = vrot.slane %v1885, 5
      %v1967 = vrot.slane %v1966, 4
      %v1968 = vrot.slane %v1040, 5
      %v1969 = vsel %vm1930, %v1967, %v1968
      %v1970 = vrot.slane %v1968, 4
      %v1971 = vrot.slane %v1067, 5
      %v1972 = vsel %vm1930, %v1970, %v1971
      %v1973 = vrot.slane %v1886, 5
      %v1974 = vrot.slane %v1973, 4
      %v1975 = vrot.slane %v1042, 5
      %v1976 = vsel %vm1930, %v1974, %v1975
      %v1977 = vrot.slane %v1975, 4
      %v1978 = vrot.slane %v1068, 5
      %v1979 = vsel %vm1930, %v1977, %v1978
      %v1980 = vrot.slane %v1887, 5
      %v1981 = vrot.slane %v1980, 4
      %v1982 = vrot.slane %v1044, 5
      %v1983 = vsel %vm1930, %v1981, %v1982
      %v1984 = vrot.slane %v1982, 4
      %v1985 = vrot.slane %v1069, 5
      %v1986 = vsel %vm1930, %v1984, %v1985
      %v1987 = vrot.slane %v1888, 5
      %v1988 = vrot.slane %v1987, 4
      %v1989 = vrot.slane %v1046, 5
      %v1990 = vsel %vm1930, %v1988, %v1989
      %v1991 = vrot.slane %v1989, 4
      %v1992 = vrot.slane %v1070, 5
      %v1993 = vsel %vm1930, %v1991, %v1992
      %v1994 = vrot.slane %v1889, 5
      %v1995 = vrot.slane %v1994, 4
      %v1996 = vrot.slane %v1048, 5
      %v1997 = vsel %vm1930, %v1995, %v1996
      %v1998 = vrot.slane %v1996, 4
      %v1999 = vrot.slane %v1071, 5
      %v2000 = vsel %vm1930, %v1998, %v1999
      %v2001 = vrot.slane %v1890, 5
      %v2002 = vrot.slane %v2001, 4
      %v2003 = vrot.slane %v1050, 5
      %v2004 = vsel %vm1930, %v2002, %v2003
      %v2005 = vrot.slane %v2003, 4
      %v2006 = vrot.slane %v1072, 5
      %v2007 = vsel %vm1930, %v2005, %v2006
      %v2008 = vrot.slane %v1891, 5
      %v2009 = vrot.slane %v2008, 4
      %v2010 = vrot.slane %v1052, 5
      %v2011 = vsel %vm1930, %v2009, %v2010
      %v2012 = vrot.slane %v2010, 4
      %v2013 = vrot.slane %v1073, 5
      %v2014 = vsel %vm1930, %v2012, %v2013
      %v2015 = vrot.slane %v1892, 5
      %v2016 = vrot.slane %v2015, 4
      %v2017 = vrot.slane %v1054, 5
      %v2018 = vsel %vm1930, %v2016, %v2017
      %v2019 = vrot.slane %v2017, 4
      %v2020 = vrot.slane %v1074, 5
      %v2021 = vsel %vm1930, %v2019, %v2020
      %v2022 = vrot.slane %v1893, 5
      %v2023 = vrot.slane %v2022, 4
      %v2024 = vrot.slane %v1056, 5
      %v2025 = vsel %vm1930, %v2023, %v2024
      %v2026 = vrot.slane %v2024, 4
      %v2027 = vrot.slane %v1075, 5
      %v2028 = vsel %vm1930, %v2026, %v2027
      %v2029 = vrot.slane %v1894, 5
      %v2030 = vrot.slane %v2029, 4
      %v2031 = vrot.slane %v1058, 5
      %v2032 = vsel %vm1930, %v2030, %v2031
      %v2033 = vrot.slane %v2031, 4
      %v2034 = vrot.slane %v1076, 5
      %v2035 = vsel %vm1930, %v2033, %v2034
      %v2036 = vrot.slane %v1895, 5
      %v2037 = vrot.slane %v2036, 4
      %v2038 = vrot.slane %v1060, 5
      %v2039 = vsel %vm1930, %v2037, %v2038
      %v2040 = vrot.slane %v2038, 4
      %v2041 = vrot.slane %v1077, 5
      %v2042 = vsel %vm1930, %v2040, %v2041
      %v2043 = vld [vmem:[%s3 + $0x4] sm:$0x3]
      %v2044 = vunpack.c.l.b16 %v1934
      %v2045 = vunpack.c.l.b16 %v1937
      %v2046 = vunpack.c.l.b16 %v1941
      %v2047 = vunpack.c.l.b16 %v1944
      %v2048 = vunpack.c.l.b16 %v1948
      %v2049 = vunpack.c.l.b16 %v1951
      %v2050 = vunpack.c.l.b16 %v1955
      %v2051 = vunpack.c.l.b16 %v1958
      %v2052 = vunpack.c.l.b16 %v1962
      %v2053 = vunpack.c.l.b16 %v1965
      %v2054 = vunpack.c.l.b16 %v1969
      %v2055 = vunpack.c.l.b16 %v1972
      %v2056 = vunpack.c.l.b16 %v1976
      %v2057 = vunpack.c.l.b16 %v1979
      %v2058 = vunpack.c.l.b16 %v1983
      %v2059 = vunpack.c.l.b16 %v1986
      %v2060 = vunpack.c.l.b16 %v1990
      %v2061 = vunpack.c.l.b16 %v1993
      %v2062 = vunpack.c.l.b16 %v1997
      %v2063 = vunpack.c.l.b16 %v2000
      %v2064 = vunpack.c.l.b16 %v2004
      %v2065 = vunpack.c.l.b16 %v2007
      %v2066 = vunpack.c.l.b16 %v2011
      %v2067 = vunpack.c.l.b16 %v2014
      %v2068 = vunpack.c.l.b16 %v2018
      %v2069 = vunpack.c.l.b16 %v2021
      %v2070 = vunpack.c.l.b16 %v2025
      %v2071 = vunpack.c.l.b16 %v2028
      %v2072 = vunpack.c.l.b16 %v2032
      %v2073 = vunpack.c.l.b16 %v2035
      %v2074 = vunpack.c.l.b16 %v2039
      %v2075 = vunpack.c.l.b16 %v2042
      %v2076 = vpack.c.b16 %v2045, %v2044
      %v2077 = vpack.c.b16 %v2047, %v2046
      %v2078 = vpack.c.b16 %v2049, %v2048
      %v2079 = vpack.c.b16 %v2051, %v2050
      %v2080 = vpack.c.b16 %v2053, %v2052
      %v2081 = vpack.c.b16 %v2055, %v2054
      %v2082 = vpack.c.b16 %v2057, %v2056
      %v2083 = vpack.c.b16 %v2059, %v2058
      %v2084 = vpack.c.b16 %v2061, %v2060
      %v2085 = vpack.c.b16 %v2063, %v2062
      %v2086 = vpack.c.b16 %v2065, %v2064
      %v2087 = vpack.c.b16 %v2067, %v2066
      %v2088 = vpack.c.b16 %v2069, %v2068
      %v2089 = vpack.c.b16 %v2071, %v2070
      %v2090 = vpack.c.b16 %v2073, %v2072
      %v2091 = vpack.c.b16 %v2075, %v2074
      %v2093 = vsel %vm1518, %v2076, 0
      %v2096 = vsel %vm1518, %v2077, 0
      %v2099 = vsel %vm1518, %v2078, 0
      %v2102 = vsel %vm1518, %v2079, 0
      %v2105 = vsel %vm1518, %v2080, 0
      %v2108 = vsel %vm1518, %v2081, 0
      %v2111 = vsel %vm1518, %v2082, 0
      %v2114 = vsel %vm1518, %v2083, 0
      %v2117 = vsel %vm1518, %v2084, 0
      %v2120 = vsel %vm1518, %v2085, 0
      %v2123 = vsel %vm1518, %v2086, 0
      %v2126 = vsel %vm1518, %v2087, 0
      %v2129 = vsel %vm1518, %v2088, 0
      %v2132 = vsel %vm1518, %v2089, 0
      %v2135 = vsel %vm1518, %v2090, 0
      %v2138 = vsel %vm1518, %v2091, 0
      %v2141 = vsel %vm1567, %v2043, 0
      %2143 = vmatpush.bf16.msra.mxu0 0
      %2144 = vmatpush.bf16.msra.mxu0 0
      %2145 = vmatpush.bf16.msra.mxu0 0
      %2146 = vmatpush.bf16.msra.mxu0 0
      %2147 = vmatpush.bf16.msra.mxu0 0
      %2148 = vmatpush.bf16.msra.mxu0 0
      %2149 = vmatpush.bf16.msra.mxu0 0
      %2150 = vmatpush.bf16.msra.mxu0 %v2141
      %2151 = vmatmul.bf16.gmra.mxu0 %v2093
      %v2152 = vpop.f32.mrf.mxu0
      %v2153 = vadd.f32 0.0, %v2152
      %v2154 = vpop.f32.mrf.mxu0
      %v2155 = vadd.f32 0.0, %v2154
      %2156 = vmatmul.bf16.gmra.mxu0 %v2096
      %v2157 = vpop.f32.mrf.mxu0
      %v2158 = vadd.f32 0.0, %v2157
      %v2159 = vpop.f32.mrf.mxu0
      %v2160 = vadd.f32 0.0, %v2159
      %2161 = vmatmul.bf16.gmra.mxu0 %v2099
      %v2162 = vpop.f32.mrf.mxu0
      %v2163 = vadd.f32 0.0, %v2162
      %v2164 = vpop.f32.mrf.mxu0
      %v2165 = vadd.f32 0.0, %v2164
      %2166 = vmatmul.bf16.gmra.mxu0 %v2102
      %v2167 = vpop.f32.mrf.mxu0
      %v2168 = vadd.f32 0.0, %v2167
      %v2169 = vpop.f32.mrf.mxu0
      %v2170 = vadd.f32 0.0, %v2169
      %2171 = vmatmul.bf16.gmra.mxu0 %v2105
      %v2172 = vpop.f32.mrf.mxu0
      %v2173 = vadd.f32 0.0, %v2172
      %v2174 = vpop.f32.mrf.mxu0
      %v2175 = vadd.f32 0.0, %v2174
      %2176 = vmatmul.bf16.gmra.mxu0 %v2108
      %v2177 = vpop.f32.mrf.mxu0
      %v2178 = vadd.f32 0.0, %v2177
      %v2179 = vpop.f32.mrf.mxu0
      %v2180 = vadd.f32 0.0, %v2179
      %2181 = vmatmul.bf16.gmra.mxu0 %v2111
      %v2182 = vpop.f32.mrf.mxu0
      %v2183 = vadd.f32 0.0, %v2182
      %v2184 = vpop.f32.mrf.mxu0
      %v2185 = vadd.f32 0.0, %v2184
      %2186 = vmatmul.bf16.gmra.mxu0 %v2114
      %v2187 = vpop.f32.mrf.mxu0
      %v2188 = vadd.f32 0.0, %v2187
      %v2189 = vpop.f32.mrf.mxu0
      %v2190 = vadd.f32 0.0, %v2189
      %2191 = vmatmul.bf16.gmra.mxu0 %v2117
      %v2192 = vpop.f32.mrf.mxu0
      %v2193 = vadd.f32 0.0, %v2192
      %v2194 = vpop.f32.mrf.mxu0
      %v2195 = vadd.f32 0.0, %v2194
      %2196 = vmatmul.bf16.gmra.mxu0 %v2120
      %v2197 = vpop.f32.mrf.mxu0
      %v2198 = vadd.f32 0.0, %v2197
      %v2199 = vpop.f32.mrf.mxu0
      %v2200 = vadd.f32 0.0, %v2199
      %2201 = vmatmul.bf16.gmra.mxu0 %v2123
      %v2202 = vpop.f32.mrf.mxu0
      %v2203 = vadd.f32 0.0, %v2202
      %v2204 = vpop.f32.mrf.mxu0
      %v2205 = vadd.f32 0.0, %v2204
      %2206 = vmatmul.bf16.gmra.mxu0 %v2126
      %v2207 = vpop.f32.mrf.mxu0
      %v2208 = vadd.f32 0.0, %v2207
      %v2209 = vpop.f32.mrf.mxu0
      %v2210 = vadd.f32 0.0, %v2209
      %2211 = vmatmul.bf16.gmra.mxu0 %v2129
      %v2212 = vpop.f32.mrf.mxu0
      %v2213 = vadd.f32 0.0, %v2212
      %v2214 = vpop.f32.mrf.mxu0
      %v2215 = vadd.f32 0.0, %v2214
      %2216 = vmatmul.bf16.gmra.mxu0 %v2132
      %v2217 = vpop.f32.mrf.mxu0
      %v2218 = vadd.f32 0.0, %v2217
      %v2219 = vpop.f32.mrf.mxu0
      %v2220 = vadd.f32 0.0, %v2219
      %2221 = vmatmul.bf16.gmra.mxu0 %v2135
      %v2222 = vpop.f32.mrf.mxu0
      %v2223 = vadd.f32 0.0, %v2222
      %v2224 = vpop.f32.mrf.mxu0
      %v2225 = vadd.f32 0.0, %v2224
      %2226 = vmatmul.bf16.gmra.mxu0 %v2138
      %v2227 = vpop.f32.mrf.mxu0
      %v2228 = vadd.f32 0.0, %v2227
      %v2229 = vpop.f32.mrf.mxu0
      %v2230 = vadd.f32 0.0, %v2229
      %2231 = vdwg.mxu0
      %v2232 = vadd.f32 %v1801, %v2153
      %v2233 = vadd.f32 %v1803, %v2155
      %v2234 = vadd.f32 %v1806, %v2158
      %v2235 = vadd.f32 %v1808, %v2160
      %v2236 = vadd.f32 %v1811, %v2163
      %v2237 = vadd.f32 %v1813, %v2165
      %v2238 = vadd.f32 %v1816, %v2168
      %v2239 = vadd.f32 %v1818, %v2170
      %v2240 = vadd.f32 %v1821, %v2173
      %v2241 = vadd.f32 %v1823, %v2175
      %v2242 = vadd.f32 %v1826, %v2178
      %v2243 = vadd.f32 %v1828, %v2180
      %v2244 = vadd.f32 %v1831, %v2183
      %v2245 = vadd.f32 %v1833, %v2185
      %v2246 = vadd.f32 %v1836, %v2188
      %v2247 = vadd.f32 %v1838, %v2190
      %v2248 = vadd.f32 %v1841, %v2193
      %v2249 = vadd.f32 %v1843, %v2195
      %v2250 = vadd.f32 %v1846, %v2198
      %v2251 = vadd.f32 %v1848, %v2200
      %v2252 = vadd.f32 %v1851, %v2203
      %v2253 = vadd.f32 %v1853, %v2205
      %v2254 = vadd.f32 %v1856, %v2208
      %v2255 = vadd.f32 %v1858, %v2210
      %v2256 = vadd.f32 %v1861, %v2213
      %v2257 = vadd.f32 %v1863, %v2215
      %v2258 = vadd.f32 %v1866, %v2218
      %v2259 = vadd.f32 %v1868, %v2220
      %v2260 = vadd.f32 %v1871, %v2223
      %v2261 = vadd.f32 %v1873, %v2225
      %v2262 = vadd.f32 %v1876, %v2228
      %v2263 = vadd.f32 %v1878, %v2230
      %v2264 = vld [vmem:[%s914] sm:$0xf]
      %v2265 = vld [vmem:[%s914 + $0x4] sm:$0xf]
      %v2266 = vld [vmem:[%s914 + $0xc] sm:$0xf]
      %v2267 = vld [vmem:[%s914 + $0x10] sm:$0xf]
      %v2268 = vld [vmem:[%s914 + $0x18] sm:$0xf]
      %v2269 = vld [vmem:[%s914 + $0x1c] sm:$0xf]
      %v2270 = vld [vmem:[%s914 + $0x24] sm:$0xf]
      %v2271 = vld [vmem:[%s914 + $0x28] sm:$0xf]
      %v2272 = vld [vmem:[%s914 + $0x30] sm:$0xf]
      %v2273 = vld [vmem:[%s914 + $0x34] sm:$0xf]
      %v2274 = vld [vmem:[%s914 + $0x3c] sm:$0xf]
      %v2275 = vld [vmem:[%s914 + $0x40] sm:$0xf]
      %v2276 = vld [vmem:[%s914 + $0x48] sm:$0xf]
      %v2277 = vld [vmem:[%s914 + $0x4c] sm:$0xf]
      %v2278 = vld [vmem:[%s914 + $0x54] sm:$0xf]
      %v2279 = vld [vmem:[%s914 + $0x58] sm:$0xf]
      %v2280 = vld [vmem:[%s914 + $0x60] sm:$0xf]
      %v2281 = vld [vmem:[%s914 + $0x64] sm:$0xf]
      %v2282 = vld [vmem:[%s914 + $0x6c] sm:$0xf]
      %v2283 = vld [vmem:[%s914 + $0x70] sm:$0xf]
      %v2284 = vld [vmem:[%s914 + $0x78] sm:$0xf]
      %v2285 = vld [vmem:[%s914 + $0x7c] sm:$0xf]
      %v2286 = vld [vmem:[%s914 + $0x84] sm:$0xf]
      %v2287 = vld [vmem:[%s914 + $0x88] sm:$0xf]
      %v2288 = vld [vmem:[%s914 + $0x90] sm:$0xf]
      %v2289 = vld [vmem:[%s914 + $0x94] sm:$0xf]
      %v2290 = vld [vmem:[%s914 + $0x9c] sm:$0xf]
      %v2291 = vld [vmem:[%s914 + $0xa0] sm:$0xf]
      %v2292 = vld [vmem:[%s914 + $0xa8] sm:$0xf]
      %v2293 = vld [vmem:[%s914 + $0xac] sm:$0xf]
      %v2294 = vld [vmem:[%s914 + $0xb4] sm:$0xf]
      %v2295 = vld [vmem:[%s914 + $0xb8] sm:$0xf]
      %s2296 = scalar_lea.vmem %s3, 8
      %v2297 = vld [vmem:[%s2296] sm:$0x3]
      %v2330 = vunpack.c.l.b16 %v2264
      %v2331 = vunpack.c.l.b16 %v2265
      %v2332 = vunpack.c.l.b16 %v2266
      %v2333 = vunpack.c.l.b16 %v2267
      %v2334 = vunpack.c.l.b16 %v2268
      %v2335 = vunpack.c.l.b16 %v2269
      %v2336 = vunpack.c.l.b16 %v2270
      %v2337 = vunpack.c.l.b16 %v2271
      %v2338 = vunpack.c.l.b16 %v2272
      %v2339 = vunpack.c.l.b16 %v2273
      %v2340 = vunpack.c.l.b16 %v2274
      %v2341 = vunpack.c.l.b16 %v2275
      %v2342 = vunpack.c.l.b16 %v2276
      %v2343 = vunpack.c.l.b16 %v2277
      %v2344 = vunpack.c.l.b16 %v2278
      %v2345 = vunpack.c.l.b16 %v2279
      %v2346 = vunpack.c.l.b16 %v2280
      %v2347 = vunpack.c.l.b16 %v2281
      %v2348 = vunpack.c.l.b16 %v2282
      %v2349 = vunpack.c.l.b16 %v2283
      %v2350 = vunpack.c.l.b16 %v2284
      %v2351 = vunpack.c.l.b16 %v2285
      %v2352 = vunpack.c.l.b16 %v2286
      %v2353 = vunpack.c.l.b16 %v2287
      %v2354 = vunpack.c.l.b16 %v2288
      %v2355 = vunpack.c.l.b16 %v2289
      %v2356 = vunpack.c.l.b16 %v2290
      %v2357 = vunpack.c.l.b16 %v2291
      %v2358 = vunpack.c.l.b16 %v2292
      %v2359 = vunpack.c.l.b16 %v2293
      %v2360 = vunpack.c.l.b16 %v2294
      %v2361 = vunpack.c.l.b16 %v2295
      %v2362 = vpack.c.b16 %v2331, %v2330
      %v2363 = vpack.c.b16 %v2333, %v2332
      %v2364 = vpack.c.b16 %v2335, %v2334
      %v2365 = vpack.c.b16 %v2337, %v2336
      %v2366 = vpack.c.b16 %v2339, %v2338
      %v2367 = vpack.c.b16 %v2341, %v2340
      %v2368 = vpack.c.b16 %v2343, %v2342
      %v2369 = vpack.c.b16 %v2345, %v2344
      %v2370 = vpack.c.b16 %v2347, %v2346
      %v2371 = vpack.c.b16 %v2349, %v2348
      %v2372 = vpack.c.b16 %v2351, %v2350
      %v2373 = vpack.c.b16 %v2353, %v2352
      %v2374 = vpack.c.b16 %v2355, %v2354
      %v2375 = vpack.c.b16 %v2357, %v2356
      %v2376 = vpack.c.b16 %v2359, %v2358
      %v2377 = vpack.c.b16 %v2361, %v2360
      %v2379 = vsel %vm1518, %v2362, 0
      %v2382 = vsel %vm1518, %v2363, 0
      %v2385 = vsel %vm1518, %v2364, 0
      %v2388 = vsel %vm1518, %v2365, 0
      %v2391 = vsel %vm1518, %v2366, 0
      %v2394 = vsel %vm1518, %v2367, 0
      %v2397 = vsel %vm1518, %v2368, 0
      %v2400 = vsel %vm1518, %v2369, 0
      %v2403 = vsel %vm1518, %v2370, 0
      %v2406 = vsel %vm1518, %v2371, 0
      %v2409 = vsel %vm1518, %v2372, 0
      %v2412 = vsel %vm1518, %v2373, 0
      %v2415 = vsel %vm1518, %v2374, 0
      %v2418 = vsel %vm1518, %v2375, 0
      %v2421 = vsel %vm1518, %v2376, 0
      %v2424 = vsel %vm1518, %v2377, 0
      %v2427 = vsel %vm1567, %v2297, 0
      %2429 = vmatpush.bf16.msra.mxu0 0
      %2430 = vmatpush.bf16.msra.mxu0 0
      %2431 = vmatpush.bf16.msra.mxu0 0
      %2432 = vmatpush.bf16.msra.mxu0 0
      %2433 = vmatpush.bf16.msra.mxu0 0
      %2434 = vmatpush.bf16.msra.mxu0 0
      %2435 = vmatpush.bf16.msra.mxu0 0
      %2436 = vmatpush.bf16.msra.mxu0 %v2427
      %2437 = vmatmul.bf16.gmra.mxu0 %v2379
      %v2438 = vpop.f32.mrf.mxu0
      %v2439 = vadd.f32 0.0, %v2438
      %v2440 = vpop.f32.mrf.mxu0
      %v2441 = vadd.f32 0.0, %v2440
      %2442 = vmatmul.bf16.gmra.mxu0 %v2382
      %v2443 = vpop.f32.mrf.mxu0
      %v2444 = vadd.f32 0.0, %v2443
      %v2445 = vpop.f32.mrf.mxu0
      %v2446 = vadd.f32 0.0, %v2445
      %2447 = vmatmul.bf16.gmra.mxu0 %v2385
      %v2448 = vpop.f32.mrf.mxu0
      %v2449 = vadd.f32 0.0, %v2448
      %v2450 = vpop.f32.mrf.mxu0
      %v2451 = vadd.f32 0.0, %v2450
      %2452 = vmatmul.bf16.gmra.mxu0 %v2388
      %v2453 = vpop.f32.mrf.mxu0
      %v2454 = vadd.f32 0.0, %v2453
      %v2455 = vpop.f32.mrf.mxu0
      %v2456 = vadd.f32 0.0, %v2455
      %2457 = vmatmul.bf16.gmra.mxu0 %v2391
      %v2458 = vpop.f32.mrf.mxu0
      %v2459 = vadd.f32 0.0, %v2458
      %v2460 = vpop.f32.mrf.mxu0
      %v2461 = vadd.f32 0.0, %v2460
      %2462 = vmatmul.bf16.gmra.mxu0 %v2394
      %v2463 = vpop.f32.mrf.mxu0
      %v2464 = vadd.f32 0.0, %v2463
      %v2465 = vpop.f32.mrf.mxu0
      %v2466 = vadd.f32 0.0, %v2465
      %2467 = vmatmul.bf16.gmra.mxu0 %v2397
      %v2468 = vpop.f32.mrf.mxu0
      %v2469 = vadd.f32 0.0, %v2468
      %v2470 = vpop.f32.mrf.mxu0
      %v2471 = vadd.f32 0.0, %v2470
      %2472 = vmatmul.bf16.gmra.mxu0 %v2400
      %v2473 = vpop.f32.mrf.mxu0
      %v2474 = vadd.f32 0.0, %v2473
      %v2475 = vpop.f32.mrf.mxu0
      %v2476 = vadd.f32 0.0, %v2475
      %2477 = vmatmul.bf16.gmra.mxu0 %v2403
      %v2478 = vpop.f32.mrf.mxu0
      %v2479 = vadd.f32 0.0, %v2478
      %v2480 = vpop.f32.mrf.mxu0
      %v2481 = vadd.f32 0.0, %v2480
      %2482 = vmatmul.bf16.gmra.mxu0 %v2406
      %v2483 = vpop.f32.mrf.mxu0
      %v2484 = vadd.f32 0.0, %v2483
      %v2485 = vpop.f32.mrf.mxu0
      %v2486 = vadd.f32 0.0, %v2485
      %2487 = vmatmul.bf16.gmra.mxu0 %v2409
      %v2488 = vpop.f32.mrf.mxu0
      %v2489 = vadd.f32 0.0, %v2488
      %v2490 = vpop.f32.mrf.mxu0
      %v2491 = vadd.f32 0.0, %v2490
      %2492 = vmatmul.bf16.gmra.mxu0 %v2412
      %v2493 = vpop.f32.mrf.mxu0
      %v2494 = vadd.f32 0.0, %v2493
      %v2495 = vpop.f32.mrf.mxu0
      %v2496 = vadd.f32 0.0, %v2495
      %2497 = vmatmul.bf16.gmra.mxu0 %v2415
      %v2498 = vpop.f32.mrf.mxu0
      %v2499 = vadd.f32 0.0, %v2498
      %v2500 = vpop.f32.mrf.mxu0
      %v2501 = vadd.f32 0.0, %v2500
      %2502 = vmatmul.bf16.gmra.mxu0 %v2418
      %v2503 = vpop.f32.mrf.mxu0
      %v2504 = vadd.f32 0.0, %v2503
      %v2505 = vpop.f32.mrf.mxu0
      %v2506 = vadd.f32 0.0, %v2505
      %2507 = vmatmul.bf16.gmra.mxu0 %v2421
      %v2508 = vpop.f32.mrf.mxu0
      %v2509 = vadd.f32 0.0, %v2508
      %v2510 = vpop.f32.mrf.mxu0
      %v2511 = vadd.f32 0.0, %v2510
      %2512 = vmatmul.bf16.gmra.mxu0 %v2424
      %v2513 = vpop.f32.mrf.mxu0
      %v2514 = vadd.f32 0.0, %v2513
      %v2515 = vpop.f32.mrf.mxu0
      %v2516 = vadd.f32 0.0, %v2515
      %2517 = vdwg.mxu0
      %v2518 = vadd.f32 %v2232, %v2439
      %v2519 = vadd.f32 %v2233, %v2441
      %v2520 = vadd.f32 %v2234, %v2444
      %v2521 = vadd.f32 %v2235, %v2446
      %v2522 = vadd.f32 %v2236, %v2449
      %v2523 = vadd.f32 %v2237, %v2451
      %v2524 = vadd.f32 %v2238, %v2454
      %v2525 = vadd.f32 %v2239, %v2456
      %v2526 = vadd.f32 %v2240, %v2459
      %v2527 = vadd.f32 %v2241, %v2461
      %v2528 = vadd.f32 %v2242, %v2464
      %v2529 = vadd.f32 %v2243, %v2466
      %v2530 = vadd.f32 %v2244, %v2469
      %v2531 = vadd.f32 %v2245, %v2471
      %v2532 = vadd.f32 %v2246, %v2474
      %v2533 = vadd.f32 %v2247, %v2476
      %v2534 = vadd.f32 %v2248, %v2479
      %v2535 = vadd.f32 %v2249, %v2481
      %v2536 = vadd.f32 %v2250, %v2484
      %v2537 = vadd.f32 %v2251, %v2486
      %v2538 = vadd.f32 %v2252, %v2489
      %v2539 = vadd.f32 %v2253, %v2491
      %v2540 = vadd.f32 %v2254, %v2494
      %v2541 = vadd.f32 %v2255, %v2496
      %v2542 = vadd.f32 %v2256, %v2499
      %v2543 = vadd.f32 %v2257, %v2501
      %v2544 = vadd.f32 %v2258, %v2504
      %v2545 = vadd.f32 %v2259, %v2506
      %v2546 = vadd.f32 %v2260, %v2509
      %v2547 = vadd.f32 %v2261, %v2511
      %v2548 = vadd.f32 %v2262, %v2514
      %v2549 = vadd.f32 %v2263, %v2516
      %v2550 = vld [vmem:[%s914] sm:$0xf]
      %v2551 = vld [vmem:[%s914 + $0x4] sm:$0xf]
      %v2552 = vld [vmem:[%s914 + $0x8] sm:$0x1]
      %v2553 = vld [vmem:[%s914 + $0xc] sm:$0xf]
      %v2554 = vld [vmem:[%s914 + $0x10] sm:$0xf]
      %v2555 = vld [vmem:[%s914 + $0x14] sm:$0x1]
      %v2556 = vld [vmem:[%s914 + $0x18] sm:$0xf]
      %v2557 = vld [vmem:[%s914 + $0x1c] sm:$0xf]
      %v2558 = vld [vmem:[%s914 + $0x20] sm:$0x1]
      %v2559 = vld [vmem:[%s914 + $0x24] sm:$0xf]
      %v2560 = vld [vmem:[%s914 + $0x28] sm:$0xf]
      %v2561 = vld [vmem:[%s914 + $0x2c] sm:$0x1]
      %v2562 = vld [vmem:[%s914 + $0x30] sm:$0xf]
      %v2563 = vld [vmem:[%s914 + $0x34] sm:$0xf]
      %v2564 = vld [vmem:[%s914 + $0x38] sm:$0x1]
      %v2565 = vld [vmem:[%s914 + $0x3c] sm:$0xf]
      %v2566 = vld [vmem:[%s914 + $0x40] sm:$0xf]
      %v2567 = vld [vmem:[%s914 + $0x44] sm:$0x1]
      %v2568 = vld [vmem:[%s914 + $0x48] sm:$0xf]
      %v2569 = vld [vmem:[%s914 + $0x4c] sm:$0xf]
      %v2570 = vld [vmem:[%s914 + $0x50] sm:$0x1]
      %v2571 = vld [vmem:[%s914 + $0x54] sm:$0xf]
      %v2572 = vld [vmem:[%s914 + $0x58] sm:$0xf]
      %v2573 = vld [vmem:[%s914 + $0x5c] sm:$0x1]
      %v2574 = vld [vmem:[%s914 + $0x60] sm:$0xf]
      %v2575 = vld [vmem:[%s914 + $0x64] sm:$0xf]
      %v2576 = vld [vmem:[%s914 + $0x68] sm:$0x1]
      %v2577 = vld [vmem:[%s914 + $0x6c] sm:$0xf]
      %v2578 = vld [vmem:[%s914 + $0x70] sm:$0xf]
      %v2579 = vld [vmem:[%s914 + $0x74] sm:$0x1]
      %v2580 = vld [vmem:[%s914 + $0x78] sm:$0xf]
      %v2581 = vld [vmem:[%s914 + $0x7c] sm:$0xf]
      %v2582 = vld [vmem:[%s914 + $0x80] sm:$0x1]
      %v2583 = vld [vmem:[%s914 + $0x84] sm:$0xf]
      %v2584 = vld [vmem:[%s914 + $0x88] sm:$0xf]
      %v2585 = vld [vmem:[%s914 + $0x8c] sm:$0x1]
      %v2586 = vld [vmem:[%s914 + $0x90] sm:$0xf]
      %v2587 = vld [vmem:[%s914 + $0x94] sm:$0xf]
      %v2588 = vld [vmem:[%s914 + $0x98] sm:$0x1]
      %v2589 = vld [vmem:[%s914 + $0x9c] sm:$0xf]
      %v2590 = vld [vmem:[%s914 + $0xa0] sm:$0xf]
      %v2591 = vld [vmem:[%s914 + $0xa4] sm:$0x1]
      %v2592 = vld [vmem:[%s914 + $0xa8] sm:$0xf]
      %v2593 = vld [vmem:[%s914 + $0xac] sm:$0xf]
      %v2594 = vld [vmem:[%s914 + $0xb0] sm:$0x1]
      %v2595 = vld [vmem:[%s914 + $0xb4] sm:$0xf]
      %v2596 = vld [vmem:[%s914 + $0xb8] sm:$0xf]
      %v2597 = vld [vmem:[%s914 + $0xbc] sm:$0x1]
      %v2599 = vshrl.u32 %v2550, 16
      %v2601 = vrot.slane %v2599, 4
      %v2602 = vshll.u32 %v2550, 16
      %v2604 = vrot.slane %v2602, 5
      %v2605 = vor.u32 %v2601, %v2604
      %v2606 = vrot.slane %v2605, 4
      %v2608 = vshll.u32 %v2551, 16
      %v2610 = vrot.slane %v2608, 5
      %v2611 = vsel %vm1080, %v2606, %v2610
      %v2612 = vshrl.u32 %v2551, 16
      %v2614 = vrot.slane %v2612, 4
      %v2615 = vor.u32 %v2614, %v2610
      %v2616 = vrot.slane %v2615, 4
      %v2618 = vshll.u32 %v2552, 16
      %v2620 = vrot.slane %v2618, 5
      %v2621 = vsel %vm1080, %v2616, %v2620
      %v2623 = vshrl.u32 %v2553, 16
      %v2625 = vrot.slane %v2623, 4
      %v2626 = vshll.u32 %v2553, 16
      %v2628 = vrot.slane %v2626, 5
      %v2629 = vor.u32 %v2625, %v2628
      %v2630 = vrot.slane %v2629, 4
      %v2632 = vshll.u32 %v2554, 16
      %v2634 = vrot.slane %v2632, 5
      %v2635 = vsel %vm1080, %v2630, %v2634
      %v2636 = vshrl.u32 %v2554, 16
      %v2638 = vrot.slane %v2636, 4
      %v2639 = vor.u32 %v2638, %v2634
      %v2640 = vrot.slane %v2639, 4
      %v2642 = vshll.u32 %v2555, 16
      %v2644 = vrot.slane %v2642, 5
      %v2645 = vsel %vm1080, %v2640, %v2644
      %v2647 = vshrl.u32 %v2556, 16
      %v2649 = vrot.slane %v2647, 4
      %v2650 = vshll.u32 %v2556, 16
      %v2652 = vrot.slane %v2650, 5
      %v2653 = vor.u32 %v2649, %v2652
      %v2654 = vrot.slane %v2653, 4
      %v2656 = vshll.u32 %v2557, 16
      %v2658 = vrot.slane %v2656, 5
      %v2659 = vsel %vm1080, %v2654, %v2658
      %v2660 = vshrl.u32 %v2557, 16
      %v2662 = vrot.slane %v2660, 4
      %v2663 = vor.u32 %v2662, %v2658
      %v2664 = vrot.slane %v2663, 4
      %v2666 = vshll.u32 %v2558, 16
      %v2668 = vrot.slane %v2666, 5
      %v2669 = vsel %vm1080, %v2664, %v2668
      %v2671 = vshrl.u32 %v2559, 16
      %v2673 = vrot.slane %v2671, 4
      %v2674 = vshll.u32 %v2559, 16
      %v2676 = vrot.slane %v2674, 5
      %v2677 = vor.u32 %v2673, %v2676
      %v2678 = vrot.slane %v2677, 4
      %v2680 = vshll.u32 %v2560, 16
      %v2682 = vrot.slane %v2680, 5
      %v2683 = vsel %vm1080, %v2678, %v2682
      %v2684 = vshrl.u32 %v2560, 16
      %v2686 = vrot.slane %v2684, 4
      %v2687 = vor.u32 %v2686, %v2682
      %v2688 = vrot.slane %v2687, 4
      %v2690 = vshll.u32 %v2561, 16
      %v2692 = vrot.slane %v2690, 5
      %v2693 = vsel %vm1080, %v2688, %v2692
      %v2695 = vshrl.u32 %v2562, 16
      %v2697 = vrot.slane %v2695, 4
      %v2698 = vshll.u32 %v2562, 16
      %v2700 = vrot.slane %v2698, 5
      %v2701 = vor.u32 %v2697, %v2700
      %v2702 = vrot.slane %v2701, 4
      %v2704 = vshll.u32 %v2563, 16
      %v2706 = vrot.slane %v2704, 5
      %v2707 = vsel %vm1080, %v2702, %v2706
      %v2708 = vshrl.u32 %v2563, 16
      %v2710 = vrot.slane %v2708, 4
      %v2711 = vor.u32 %v2710, %v2706
      %v2712 = vrot.slane %v2711, 4
      %v2714 = vshll.u32 %v2564, 16
      %v2716 = vrot.slane %v2714, 5
      %v2717 = vsel %vm1080, %v2712, %v2716
      %v2719 = vshrl.u32 %v2565, 16
      %v2721 = vrot.slane %v2719, 4
      %v2722 = vshll.u32 %v2565, 16
      %v2724 = vrot.slane %v2722, 5
      %v2725 = vor.u32 %v2721, %v2724
      %v2726 = vrot.slane %v2725, 4
      %v2728 = vshll.u32 %v2566, 16
      %v2730 = vrot.slane %v2728, 5
      %v2731 = vsel %vm1080, %v2726, %v2730
      %v2732 = vshrl.u32 %v2566, 16
      %v2734 = vrot.slane %v2732, 4
      %v2735 = vor.u32 %v2734, %v2730
      %v2736 = vrot.slane %v2735, 4
      %v2738 = vshll.u32 %v2567, 16
      %v2740 = vrot.slane %v2738, 5
      %v2741 = vsel %vm1080, %v2736, %v2740
      %v2743 = vshrl.u32 %v2568, 16
      %v2745 = vrot.slane %v2743, 4
      %v2746 = vshll.u32 %v2568, 16
      %v2748 = vrot.slane %v2746, 5
      %v2749 = vor.u32 %v2745, %v2748
      %v2750 = vrot.slane %v2749, 4
      %v2752 = vshll.u32 %v2569, 16
      %v2754 = vrot.slane %v2752, 5
      %v2755 = vsel %vm1080, %v2750, %v2754
      %v2756 = vshrl.u32 %v2569, 16
      %v2758 = vrot.slane %v2756, 4
      %v2759 = vor.u32 %v2758, %v2754
      %v2760 = vrot.slane %v2759, 4
      %v2762 = vshll.u32 %v2570, 16
      %v2764 = vrot.slane %v2762, 5
      %v2765 = vsel %vm1080, %v2760, %v2764
      %v2767 = vshrl.u32 %v2571, 16
      %v2769 = vrot.slane %v2767, 4
      %v2770 = vshll.u32 %v2571, 16
      %v2772 = vrot.slane %v2770, 5
      %v2773 = vor.u32 %v2769, %v2772
      %v2774 = vrot.slane %v2773, 4
      %v2776 = vshll.u32 %v2572, 16
      %v2778 = vrot.slane %v2776, 5
      %v2779 = vsel %vm1080, %v2774, %v2778
      %v2780 = vshrl.u32 %v2572, 16
      %v2782 = vrot.slane %v2780, 4
      %v2783 = vor.u32 %v2782, %v2778
      %v2784 = vrot.slane %v2783, 4
      %v2786 = vshll.u32 %v2573, 16
      %v2788 = vrot.slane %v2786, 5
      %v2789 = vsel %vm1080, %v2784, %v2788
      %v2791 = vshrl.u32 %v2574, 16
      %v2793 = vrot.slane %v2791, 4
      %v2794 = vshll.u32 %v2574, 16
      %v2796 = vrot.slane %v2794, 5
      %v2797 = vor.u32 %v2793, %v2796
      %v2798 = vrot.slane %v2797, 4
      %v2800 = vshll.u32 %v2575, 16
      %v2802 = vrot.slane %v2800, 5
      %v2803 = vsel %vm1080, %v2798, %v2802
      %v2804 = vshrl.u32 %v2575, 16
      %v2806 = vrot.slane %v2804, 4
      %v2807 = vor.u32 %v2806, %v2802
      %v2808 = vrot.slane %v2807, 4
      %v2810 = vshll.u32 %v2576, 16
      %v2812 = vrot.slane %v2810, 5
      %v2813 = vsel %vm1080, %v2808, %v2812
      %v2815 = vshrl.u32 %v2577, 16
      %v2817 = vrot.slane %v2815, 4
      %v2818 = vshll.u32 %v2577, 16
      %v2820 = vrot.slane %v2818, 5
      %v2821 = vor.u32 %v2817, %v2820
      %v2822 = vrot.slane %v2821, 4
      %v2824 = vshll.u32 %v2578, 16
      %v2826 = vrot.slane %v2824, 5
      %v2827 = vsel %vm1080, %v2822, %v2826
      %v2828 = vshrl.u32 %v2578, 16
      %v2830 = vrot.slane %v2828, 4
      %v2831 = vor.u32 %v2830, %v2826
      %v2832 = vrot.slane %v2831, 4
      %v2834 = vshll.u32 %v2579, 16
      %v2836 = vrot.slane %v2834, 5
      %v2837 = vsel %vm1080, %v2832, %v2836
      %v2839 = vshrl.u32 %v2580, 16
      %v2841 = vrot.slane %v2839, 4
      %v2842 = vshll.u32 %v2580, 16
      %v2844 = vrot.slane %v2842, 5
      %v2845 = vor.u32 %v2841, %v2844
      %v2846 = vrot.slane %v2845, 4
      %v2848 = vshll.u32 %v2581, 16
      %v2850 = vrot.slane %v2848, 5
      %v2851 = vsel %vm1080, %v2846, %v2850
      %v2852 = vshrl.u32 %v2581, 16
      %v2854 = vrot.slane %v2852, 4
      %v2855 = vor.u32 %v2854, %v2850
      %v2856 = vrot.slane %v2855, 4
      %v2858 = vshll.u32 %v2582, 16
      %v2860 = vrot.slane %v2858, 5
      %v2861 = vsel %vm1080, %v2856, %v2860
      %v2863 = vshrl.u32 %v2583, 16
      %v2865 = vrot.slane %v2863, 4
      %v2866 = vshll.u32 %v2583, 16
      %v2868 = vrot.slane %v2866, 5
      %v2869 = vor.u32 %v2865, %v2868
      %v2870 = vrot.slane %v2869, 4
      %v2872 = vshll.u32 %v2584, 16
      %v2874 = vrot.slane %v2872, 5
      %v2875 = vsel %vm1080, %v2870, %v2874
      %v2876 = vshrl.u32 %v2584, 16
      %v2878 = vrot.slane %v2876, 4
      %v2879 = vor.u32 %v2878, %v2874
      %v2880 = vrot.slane %v2879, 4
      %v2882 = vshll.u32 %v2585, 16
      %v2884 = vrot.slane %v2882, 5
      %v2885 = vsel %vm1080, %v2880, %v2884
      %v2887 = vshrl.u32 %v2586, 16
      %v2889 = vrot.slane %v2887, 4
      %v2890 = vshll.u32 %v2586, 16
      %v2892 = vrot.slane %v2890, 5
      %v2893 = vor.u32 %v2889, %v2892
      %v2894 = vrot.slane %v2893, 4
      %v2896 = vshll.u32 %v2587, 16
      %v2898 = vrot.slane %v2896, 5
      %v2899 = vsel %vm1080, %v2894, %v2898
      %v2900 = vshrl.u32 %v2587, 16
      %v2902 = vrot.slane %v2900, 4
      %v2903 = vor.u32 %v2902, %v2898
      %v2904 = vrot.slane %v2903, 4
      %v2906 = vshll.u32 %v2588, 16
      %v2908 = vrot.slane %v2906, 5
      %v2909 = vsel %vm1080, %v2904, %v2908
      %v2911 = vshrl.u32 %v2589, 16
      %v2913 = vrot.slane %v2911, 4
      %v2914 = vshll.u32 %v2589, 16
      %v2916 = vrot.slane %v2914, 5
      %v2917 = vor.u32 %v2913, %v2916
      %v2918 = vrot.slane %v2917, 4
      %v2920 = vshll.u32 %v2590, 16
      %v2922 = vrot.slane %v2920, 5
      %v2923 = vsel %vm1080, %v2918, %v2922
      %v2924 = vshrl.u32 %v2590, 16
      %v2926 = vrot.slane %v2924, 4
      %v2927 = vor.u32 %v2926, %v2922
      %v2928 = vrot.slane %v2927, 4
      %v2930 = vshll.u32 %v2591, 16
      %v2932 = vrot.slane %v2930, 5
      %v2933 = vsel %vm1080, %v2928, %v2932
      %v2935 = vshrl.u32 %v2592, 16
      %v2937 = vrot.slane %v2935, 4
      %v2938 = vshll.u32 %v2592, 16
      %v2940 = vrot.slane %v2938, 5
      %v2941 = vor.u32 %v2937, %v2940
      %v2942 = vrot.slane %v2941, 4
      %v2944 = vshll.u32 %v2593, 16
      %v2946 = vrot.slane %v2944, 5
      %v2947 = vsel %vm1080, %v2942, %v2946
      %v2948 = vshrl.u32 %v2593, 16
      %v2950 = vrot.slane %v2948, 4
      %v2951 = vor.u32 %v2950, %v2946
      %v2952 = vrot.slane %v2951, 4
      %v2954 = vshll.u32 %v2594, 16
      %v2956 = vrot.slane %v2954, 5
      %v2957 = vsel %vm1080, %v2952, %v2956
      %v2959 = vshrl.u32 %v2595, 16
      %v2961 = vrot.slane %v2959, 4
      %v2962 = vshll.u32 %v2595, 16
      %v2964 = vrot.slane %v2962, 5
      %v2965 = vor.u32 %v2961, %v2964
      %v2966 = vrot.slane %v2965, 4
      %v2968 = vshll.u32 %v2596, 16
      %v2970 = vrot.slane %v2968, 5
      %v2971 = vsel %vm1080, %v2966, %v2970
      %v2972 = vshrl.u32 %v2596, 16
      %v2974 = vrot.slane %v2972, 4
      %v2975 = vor.u32 %v2974, %v2970
      %v2976 = vrot.slane %v2975, 4
      %v2978 = vshll.u32 %v2597, 16
      %v2980 = vrot.slane %v2978, 5
      %v2981 = vsel %vm1080, %v2976, %v2980
      %v2982 = vld [vmem:[%s2296] sm:$0xc]
      %v2983 = vunpack.c.l.b16 %v2611
      %v2984 = vunpack.c.l.b16 %v2621
      %v2985 = vunpack.c.l.b16 %v2635
      %v2986 = vunpack.c.l.b16 %v2645
      %v2987 = vunpack.c.l.b16 %v2659
      %v2988 = vunpack.c.l.b16 %v2669
      %v2989 = vunpack.c.l.b16 %v2683
      %v2990 = vunpack.c.l.b16 %v2693
      %v2991 = vunpack.c.l.b16 %v2707
      %v2992 = vunpack.c.l.b16 %v2717
      %v2993 = vunpack.c.l.b16 %v2731
      %v2994 = vunpack.c.l.b16 %v2741
      %v2995 = vunpack.c.l.b16 %v2755
      %v2996 = vunpack.c.l.b16 %v2765
      %v2997 = vunpack.c.l.b16 %v2779
      %v2998 = vunpack.c.l.b16 %v2789
      %v2999 = vunpack.c.l.b16 %v2803
      %v3000 = vunpack.c.l.b16 %v2813
      %v3001 = vunpack.c.l.b16 %v2827
      %v3002 = vunpack.c.l.b16 %v2837
      %v3003 = vunpack.c.l.b16 %v2851
      %v3004 = vunpack.c.l.b16 %v2861
      %v3005 = vunpack.c.l.b16 %v2875
      %v3006 = vunpack.c.l.b16 %v2885
      %v3007 = vunpack.c.l.b16 %v2899
      %v3008 = vunpack.c.l.b16 %v2909
      %v3009 = vunpack.c.l.b16 %v2923
      %v3010 = vunpack.c.l.b16 %v2933
      %v3011 = vunpack.c.l.b16 %v2947
      %v3012 = vunpack.c.l.b16 %v2957
      %v3013 = vunpack.c.l.b16 %v2971
      %v3014 = vunpack.c.l.b16 %v2981
      %v3015 = vpack.c.b16 %v2984, %v2983
      %v3016 = vpack.c.b16 %v2986, %v2985
      %v3017 = vpack.c.b16 %v2988, %v2987
      %v3018 = vpack.c.b16 %v2990, %v2989
      %v3019 = vpack.c.b16 %v2992, %v2991
      %v3020 = vpack.c.b16 %v2994, %v2993
      %v3021 = vpack.c.b16 %v2996, %v2995
      %v3022 = vpack.c.b16 %v2998, %v2997
      %v3023 = vpack.c.b16 %v3000, %v2999
      %v3024 = vpack.c.b16 %v3002, %v3001
      %v3025 = vpack.c.b16 %v3004, %v3003
      %v3026 = vpack.c.b16 %v3006, %v3005
      %v3027 = vpack.c.b16 %v3008, %v3007
      %v3028 = vpack.c.b16 %v3010, %v3009
      %v3029 = vpack.c.b16 %v3012, %v3011
      %v3030 = vpack.c.b16 %v3014, %v3013
      %v3032 = vunpack.c.l.b16 %v2982
      %v3033 = vpack.c.b16 %v3032, %v3032
      %v3034 = vrot.slane %v3033, 2
      %v3036 = vsel %vm1518, %v3015, 0
      %v3039 = vsel %vm1518, %v3016, 0
      %v3042 = vsel %vm1518, %v3017, 0
      %v3045 = vsel %vm1518, %v3018, 0
      %v3048 = vsel %vm1518, %v3019, 0
      %v3051 = vsel %vm1518, %v3020, 0
      %v3054 = vsel %vm1518, %v3021, 0
      %v3057 = vsel %vm1518, %v3022, 0
      %v3060 = vsel %vm1518, %v3023, 0
      %v3063 = vsel %vm1518, %v3024, 0
      %v3066 = vsel %vm1518, %v3025, 0
      %v3069 = vsel %vm1518, %v3026, 0
      %v3072 = vsel %vm1518, %v3027, 0
      %v3075 = vsel %vm1518, %v3028, 0
      %v3078 = vsel %vm1518, %v3029, 0
      %v3081 = vsel %vm1518, %v3030, 0
      %v3084 = vsel %vm1567, %v3034, 0
      %3086 = vmatpush.bf16.msra.mxu0 0
      %3087 = vmatpush.bf16.msra.mxu0 0
      %3088 = vmatpush.bf16.msra.mxu0 0
      %3089 = vmatpush.bf16.msra.mxu0 0
      %3090 = vmatpush.bf16.msra.mxu0 0
      %3091 = vmatpush.bf16.msra.mxu0 0
      %3092 = vmatpush.bf16.msra.mxu0 0
      %3093 = vmatpush.bf16.msra.mxu0 %v3084
      %3094 = vmatmul.bf16.gmra.mxu0 %v3036
      %v3095 = vpop.f32.mrf.mxu0
      %v3096 = vadd.f32 0.0, %v3095
      %v3097 = vpop.f32.mrf.mxu0
      %v3098 = vadd.f32 0.0, %v3097
      %3099 = vmatmul.bf16.gmra.mxu0 %v3039
      %v3100 = vpop.f32.mrf.mxu0
      %v3101 = vadd.f32 0.0, %v3100
      %v3102 = vpop.f32.mrf.mxu0
      %v3103 = vadd.f32 0.0, %v3102
      %3104 = vmatmul.bf16.gmra.mxu0 %v3042
      %v3105 = vpop.f32.mrf.mxu0
      %v3106 = vadd.f32 0.0, %v3105
      %v3107 = vpop.f32.mrf.mxu0
      %v3108 = vadd.f32 0.0, %v3107
      %3109 = vmatmul.bf16.gmra.mxu0 %v3045
      %v3110 = vpop.f32.mrf.mxu0
      %v3111 = vadd.f32 0.0, %v3110
      %v3112 = vpop.f32.mrf.mxu0
      %v3113 = vadd.f32 0.0, %v3112
      %3114 = vmatmul.bf16.gmra.mxu0 %v3048
      %v3115 = vpop.f32.mrf.mxu0
      %v3116 = vadd.f32 0.0, %v3115
      %v3117 = vpop.f32.mrf.mxu0
      %v3118 = vadd.f32 0.0, %v3117
      %3119 = vmatmul.bf16.gmra.mxu0 %v3051
      %v3120 = vpop.f32.mrf.mxu0
      %v3121 = vadd.f32 0.0, %v3120
      %v3122 = vpop.f32.mrf.mxu0
      %v3123 = vadd.f32 0.0, %v3122
      %3124 = vmatmul.bf16.gmra.mxu0 %v3054
      %v3125 = vpop.f32.mrf.mxu0
      %v3126 = vadd.f32 0.0, %v3125
      %v3127 = vpop.f32.mrf.mxu0
      %v3128 = vadd.f32 0.0, %v3127
      %3129 = vmatmul.bf16.gmra.mxu0 %v3057
      %v3130 = vpop.f32.mrf.mxu0
      %v3131 = vadd.f32 0.0, %v3130
      %v3132 = vpop.f32.mrf.mxu0
      %v3133 = vadd.f32 0.0, %v3132
      %3134 = vmatmul.bf16.gmra.mxu0 %v3060
      %v3135 = vpop.f32.mrf.mxu0
      %v3136 = vadd.f32 0.0, %v3135
      %v3137 = vpop.f32.mrf.mxu0
      %v3138 = vadd.f32 0.0, %v3137
      %3139 = vmatmul.bf16.gmra.mxu0 %v3063
      %v3140 = vpop.f32.mrf.mxu0
      %v3141 = vadd.f32 0.0, %v3140
      %v3142 = vpop.f32.mrf.mxu0
      %v3143 = vadd.f32 0.0, %v3142
      %3144 = vmatmul.bf16.gmra.mxu0 %v3066
      %v3145 = vpop.f32.mrf.mxu0
      %v3146 = vadd.f32 0.0, %v3145
      %v3147 = vpop.f32.mrf.mxu0
      %v3148 = vadd.f32 0.0, %v3147
      %3149 = vmatmul.bf16.gmra.mxu0 %v3069
      %v3150 = vpop.f32.mrf.mxu0
      %v3151 = vadd.f32 0.0, %v3150
      %v3152 = vpop.f32.mrf.mxu0
      %v3153 = vadd.f32 0.0, %v3152
      %3154 = vmatmul.bf16.gmra.mxu0 %v3072
      %v3155 = vpop.f32.mrf.mxu0
      %v3156 = vadd.f32 0.0, %v3155
      %v3157 = vpop.f32.mrf.mxu0
      %v3158 = vadd.f32 0.0, %v3157
      %3159 = vmatmul.bf16.gmra.mxu0 %v3075
      %v3160 = vpop.f32.mrf.mxu0
      %v3161 = vadd.f32 0.0, %v3160
      %v3162 = vpop.f32.mrf.mxu0
      %v3163 = vadd.f32 0.0, %v3162
      %3164 = vmatmul.bf16.gmra.mxu0 %v3078
      %v3165 = vpop.f32.mrf.mxu0
      %v3166 = vadd.f32 0.0, %v3165
      %v3167 = vpop.f32.mrf.mxu0
      %v3168 = vadd.f32 0.0, %v3167
      %3169 = vmatmul.bf16.gmra.mxu0 %v3081
      %v3170 = vpop.f32.mrf.mxu0
      %v3171 = vadd.f32 0.0, %v3170
      %v3172 = vpop.f32.mrf.mxu0
      %v3173 = vadd.f32 0.0, %v3172
      %3174 = vdwg.mxu0
      %v3175 = vadd.f32 %v2518, %v3096
      %v3176 = vadd.f32 %v2519, %v3098
      %v3177 = vadd.f32 %v2520, %v3101
      %v3178 = vadd.f32 %v2521, %v3103
      %v3179 = vadd.f32 %v2522, %v3106
      %v3180 = vadd.f32 %v2523, %v3108
      %v3181 = vadd.f32 %v2524, %v3111
      %v3182 = vadd.f32 %v2525, %v3113
      %v3183 = vadd.f32 %v2526, %v3116
      %v3184 = vadd.f32 %v2527, %v3118
      %v3185 = vadd.f32 %v2528, %v3121
      %v3186 = vadd.f32 %v2529, %v3123
      %v3187 = vadd.f32 %v2530, %v3126
      %v3188 = vadd.f32 %v2531, %v3128
      %v3189 = vadd.f32 %v2532, %v3131
      %v3190 = vadd.f32 %v2533, %v3133
      %v3191 = vadd.f32 %v2534, %v3136
      %v3192 = vadd.f32 %v2535, %v3138
      %v3193 = vadd.f32 %v2536, %v3141
      %v3194 = vadd.f32 %v2537, %v3143
      %v3195 = vadd.f32 %v2538, %v3146
      %v3196 = vadd.f32 %v2539, %v3148
      %v3197 = vadd.f32 %v2540, %v3151
      %v3198 = vadd.f32 %v2541, %v3153
      %v3199 = vadd.f32 %v2542, %v3156
      %v3200 = vadd.f32 %v2543, %v3158
      %v3201 = vadd.f32 %v2544, %v3161
      %v3202 = vadd.f32 %v2545, %v3163
      %v3203 = vadd.f32 %v2546, %v3166
      %v3204 = vadd.f32 %v2547, %v3168
      %v3205 = vadd.f32 %v2548, %v3171
      %v3206 = vadd.f32 %v2549, %v3173
      %v3207 = vld [vmem:[%s914] sm:$0xe]
      %v3208 = vld [vmem:[%s914 + $0xc] sm:$0xe]
      %v3209 = vld [vmem:[%s914 + $0x18] sm:$0xe]
      %v3210 = vld [vmem:[%s914 + $0x24] sm:$0xe]
      %v3211 = vld [vmem:[%s914 + $0x30] sm:$0xe]
      %v3212 = vld [vmem:[%s914 + $0x3c] sm:$0xe]
      %v3213 = vld [vmem:[%s914 + $0x48] sm:$0xe]
      %v3214 = vld [vmem:[%s914 + $0x54] sm:$0xe]
      %v3215 = vld [vmem:[%s914 + $0x60] sm:$0xe]
      %v3216 = vld [vmem:[%s914 + $0x6c] sm:$0xe]
      %v3217 = vld [vmem:[%s914 + $0x78] sm:$0xe]
      %v3218 = vld [vmem:[%s914 + $0x84] sm:$0xe]
      %v3219 = vld [vmem:[%s914 + $0x90] sm:$0xe]
      %v3220 = vld [vmem:[%s914 + $0x9c] sm:$0xe]
      %v3221 = vld [vmem:[%s914 + $0xa8] sm:$0xe]
      %v3222 = vld [vmem:[%s914 + $0xb4] sm:$0xe]
      %v3271 = vrot.slane %v3207, 5
      %v3272 = vrot.slane %v3271, 4
      %v3273 = vrot.slane %v2551, 5
      %v3274 = vsel %vm1930, %v3272, %v3273
      %v3275 = vrot.slane %v3273, 4
      %v3276 = vrot.slane %v2552, 5
      %v3277 = vsel %vm1930, %v3275, %v3276
      %v3278 = vrot.slane %v3208, 5
      %v3279 = vrot.slane %v3278, 4
      %v3280 = vrot.slane %v2554, 5
      %v3281 = vsel %vm1930, %v3279, %v3280
      %v3282 = vrot.slane %v3280, 4
      %v3283 = vrot.slane %v2555, 5
      %v3284 = vsel %vm1930, %v3282, %v3283
      %v3285 = vrot.slane %v3209, 5
      %v3286 = vrot.slane %v3285, 4
      %v3287 = vrot.slane %v2557, 5
      %v3288 = vsel %vm1930, %v3286, %v3287
      %v3289 = vrot.slane %v3287, 4
      %v3290 = vrot.slane %v2558, 5
      %v3291 = vsel %vm1930, %v3289, %v3290
      %v3292 = vrot.slane %v3210, 5
      %v3293 = vrot.slane %v3292, 4
      %v3294 = vrot.slane %v2560, 5
      %v3295 = vsel %vm1930, %v3293, %v3294
      %v3296 = vrot.slane %v3294, 4
      %v3297 = vrot.slane %v2561, 5
      %v3298 = vsel %vm1930, %v3296, %v3297
      %v3299 = vrot.slane %v3211, 5
      %v3300 = vrot.slane %v3299, 4
      %v3301 = vrot.slane %v2563, 5
      %v3302 = vsel %vm1930, %v3300, %v3301
      %v3303 = vrot.slane %v3301, 4
      %v3304 = vrot.slane %v2564, 5
      %v3305 = vsel %vm1930, %v3303, %v3304
      %v3306 = vrot.slane %v3212, 5
      %v3307 = vrot.slane %v3306, 4
      %v3308 = vrot.slane %v2566, 5
      %v3309 = vsel %vm1930, %v3307, %v3308
      %v3310 = vrot.slane %v3308, 4
      %v3311 = vrot.slane %v2567, 5
      %v3312 = vsel %vm1930, %v3310, %v3311
      %v3313 = vrot.slane %v3213, 5
      %v3314 = vrot.slane %v3313, 4
      %v3315 = vrot.slane %v2569, 5
      %v3316 = vsel %vm1930, %v3314, %v3315
      %v3317 = vrot.slane %v3315, 4
      %v3318 = vrot.slane %v2570, 5
      %v3319 = vsel %vm1930, %v3317, %v3318
      %v3320 = vrot.slane %v3214, 5
      %v3321 = vrot.slane %v3320, 4
      %v3322 = vrot.slane %v2572, 5
      %v3323 = vsel %vm1930, %v3321, %v3322
      %v3324 = vrot.slane %v3322, 4
      %v3325 = vrot.slane %v2573, 5
      %v3326 = vsel %vm1930, %v3324, %v3325
      %v3327 = vrot.slane %v3215, 5
      %v3328 = vrot.slane %v3327, 4
      %v3329 = vrot.slane %v2575, 5
      %v3330 = vsel %vm1930, %v3328, %v3329
      %v3331 = vrot.slane %v3329, 4
      %v3332 = vrot.slane %v2576, 5
      %v3333 = vsel %vm1930, %v3331, %v3332
      %v3334 = vrot.slane %v3216, 5
      %v3335 = vrot.slane %v3334, 4
      %v3336 = vrot.slane %v2578, 5
      %v3337 = vsel %vm1930, %v3335, %v3336
      %v3338 = vrot.slane %v3336, 4
      %v3339 = vrot.slane %v2579, 5
      %v3340 = vsel %vm1930, %v3338, %v3339
      %v3341 = vrot.slane %v3217, 5
      %v3342 = vrot.slane %v3341, 4
      %v3343 = vrot.slane %v2581, 5
      %v3344 = vsel %vm1930, %v3342, %v3343
      %v3345 = vrot.slane %v3343, 4
      %v3346 = vrot.slane %v2582, 5
      %v3347 = vsel %vm1930, %v3345, %v3346
      %v3348 = vrot.slane %v3218, 5
      %v3349 = vrot.slane %v3348, 4
      %v3350 = vrot.slane %v2584, 5
      %v3351 = vsel %vm1930, %v3349, %v3350
      %v3352 = vrot.slane %v3350, 4
      %v3353 = vrot.slane %v2585, 5
      %v3354 = vsel %vm1930, %v3352, %v3353
      %v3355 = vrot.slane %v3219, 5
      %v3356 = vrot.slane %v3355, 4
      %v3357 = vrot.slane %v2587, 5
      %v3358 = vsel %vm1930, %v3356, %v3357
      %v3359 = vrot.slane %v3357, 4
      %v3360 = vrot.slane %v2588, 5
      %v3361 = vsel %vm1930, %v3359, %v3360
      %v3362 = vrot.slane %v3220, 5
      %v3363 = vrot.slane %v3362, 4
      %v3364 = vrot.slane %v2590, 5
      %v3365 = vsel %vm1930, %v3363, %v3364
      %v3366 = vrot.slane %v3364, 4
      %v3367 = vrot.slane %v2591, 5
      %v3368 = vsel %vm1930, %v3366, %v3367
      %v3369 = vrot.slane %v3221, 5
      %v3370 = vrot.slane %v3369, 4
      %v3371 = vrot.slane %v2593, 5
      %v3372 = vsel %vm1930, %v3370, %v3371
      %v3373 = vrot.slane %v3371, 4
      %v3374 = vrot.slane %v2594, 5
      %v3375 = vsel %vm1930, %v3373, %v3374
      %v3376 = vrot.slane %v3222, 5
      %v3377 = vrot.slane %v3376, 4
      %v3378 = vrot.slane %v2596, 5
      %v3379 = vsel %vm1930, %v3377, %v3378
      %v3380 = vrot.slane %v3378, 4
      %v3381 = vrot.slane %v2597, 5
      %v3382 = vsel %vm1930, %v3380, %v3381
      %v3383 = vld [vmem:[%s2296 + $0x4] sm:$0x3]
      %v3384 = vunpack.c.l.b16 %v3274
      %v3385 = vunpack.c.l.b16 %v3277
      %v3386 = vunpack.c.l.b16 %v3281
      %v3387 = vunpack.c.l.b16 %v3284
      %v3388 = vunpack.c.l.b16 %v3288
      %v3389 = vunpack.c.l.b16 %v3291
      %v3390 = vunpack.c.l.b16 %v3295
      %v3391 = vunpack.c.l.b16 %v3298
      %v3392 = vunpack.c.l.b16 %v3302
      %v3393 = vunpack.c.l.b16 %v3305
      %v3394 = vunpack.c.l.b16 %v3309
      %v3395 = vunpack.c.l.b16 %v3312
      %v3396 = vunpack.c.l.b16 %v3316
      %v3397 = vunpack.c.l.b16 %v3319
      %v3398 = vunpack.c.l.b16 %v3323
      %v3399 = vunpack.c.l.b16 %v3326
      %v3400 = vunpack.c.l.b16 %v3330
      %v3401 = vunpack.c.l.b16 %v3333
      %v3402 = vunpack.c.l.b16 %v3337
      %v3403 = vunpack.c.l.b16 %v3340
      %v3404 = vunpack.c.l.b16 %v3344
      %v3405 = vunpack.c.l.b16 %v3347
      %v3406 = vunpack.c.l.b16 %v3351
      %v3407 = vunpack.c.l.b16 %v3354
      %v3408 = vunpack.c.l.b16 %v3358
      %v3409 = vunpack.c.l.b16 %v3361
      %v3410 = vunpack.c.l.b16 %v3365
      %v3411 = vunpack.c.l.b16 %v3368
      %v3412 = vunpack.c.l.b16 %v3372
      %v3413 = vunpack.c.l.b16 %v3375
      %v3414 = vunpack.c.l.b16 %v3379
      %v3415 = vunpack.c.l.b16 %v3382
      %v3416 = vpack.c.b16 %v3385, %v3384
      %v3417 = vpack.c.b16 %v3387, %v3386
      %v3418 = vpack.c.b16 %v3389, %v3388
      %v3419 = vpack.c.b16 %v3391, %v3390
      %v3420 = vpack.c.b16 %v3393, %v3392
      %v3421 = vpack.c.b16 %v3395, %v3394
      %v3422 = vpack.c.b16 %v3397, %v3396
      %v3423 = vpack.c.b16 %v3399, %v3398
      %v3424 = vpack.c.b16 %v3401, %v3400
      %v3425 = vpack.c.b16 %v3403, %v3402
      %v3426 = vpack.c.b16 %v3405, %v3404
      %v3427 = vpack.c.b16 %v3407, %v3406
      %v3428 = vpack.c.b16 %v3409, %v3408
      %v3429 = vpack.c.b16 %v3411, %v3410
      %v3430 = vpack.c.b16 %v3413, %v3412
      %v3431 = vpack.c.b16 %v3415, %v3414
      %v3433 = vsel %vm1518, %v3416, 0
      %v3436 = vsel %vm1518, %v3417, 0
      %v3439 = vsel %vm1518, %v3418, 0
      %v3442 = vsel %vm1518, %v3419, 0
      %v3445 = vsel %vm1518, %v3420, 0
      %v3448 = vsel %vm1518, %v3421, 0
      %v3451 = vsel %vm1518, %v3422, 0
      %v3454 = vsel %vm1518, %v3423, 0
      %v3457 = vsel %vm1518, %v3424, 0
      %v3460 = vsel %vm1518, %v3425, 0
      %v3463 = vsel %vm1518, %v3426, 0
      %v3466 = vsel %vm1518, %v3427, 0
      %v3469 = vsel %vm1518, %v3428, 0
      %v3472 = vsel %vm1518, %v3429, 0
      %v3475 = vsel %vm1518, %v3430, 0
      %v3478 = vsel %vm1518, %v3431, 0
      %v3481 = vsel %vm1567, %v3383, 0
      %3483 = vmatpush.bf16.msra.mxu0 0
      %3484 = vmatpush.bf16.msra.mxu0 0
      %3485 = vmatpush.bf16.msra.mxu0 0
      %3486 = vmatpush.bf16.msra.mxu0 0
      %3487 = vmatpush.bf16.msra.mxu0 0
      %3488 = vmatpush.bf16.msra.mxu0 0
      %3489 = vmatpush.bf16.msra.mxu0 0
      %3490 = vmatpush.bf16.msra.mxu0 %v3481
      %3491 = vmatmul.bf16.gmra.mxu0 %v3433
      %v3492 = vpop.f32.mrf.mxu0
      %v3493 = vadd.f32 0.0, %v3492
      %v3494 = vpop.f32.mrf.mxu0
      %v3495 = vadd.f32 0.0, %v3494
      %3496 = vmatmul.bf16.gmra.mxu0 %v3436
      %v3497 = vpop.f32.mrf.mxu0
      %v3498 = vadd.f32 0.0, %v3497
      %v3499 = vpop.f32.mrf.mxu0
      %v3500 = vadd.f32 0.0, %v3499
      %3501 = vmatmul.bf16.gmra.mxu0 %v3439
      %v3502 = vpop.f32.mrf.mxu0
      %v3503 = vadd.f32 0.0, %v3502
      %v3504 = vpop.f32.mrf.mxu0
      %v3505 = vadd.f32 0.0, %v3504
      %3506 = vmatmul.bf16.gmra.mxu0 %v3442
      %v3507 = vpop.f32.mrf.mxu0
      %v3508 = vadd.f32 0.0, %v3507
      %v3509 = vpop.f32.mrf.mxu0
      %v3510 = vadd.f32 0.0, %v3509
      %3511 = vmatmul.bf16.gmra.mxu0 %v3445
      %v3512 = vpop.f32.mrf.mxu0
      %v3513 = vadd.f32 0.0, %v3512
      %v3514 = vpop.f32.mrf.mxu0
      %v3515 = vadd.f32 0.0, %v3514
      %3516 = vmatmul.bf16.gmra.mxu0 %v3448
      %v3517 = vpop.f32.mrf.mxu0
      %v3518 = vadd.f32 0.0, %v3517
      %v3519 = vpop.f32.mrf.mxu0
      %v3520 = vadd.f32 0.0, %v3519
      %3521 = vmatmul.bf16.gmra.mxu0 %v3451
      %v3522 = vpop.f32.mrf.mxu0
      %v3523 = vadd.f32 0.0, %v3522
      %v3524 = vpop.f32.mrf.mxu0
      %v3525 = vadd.f32 0.0, %v3524
      %3526 = vmatmul.bf16.gmra.mxu0 %v3454
      %v3527 = vpop.f32.mrf.mxu0
      %v3528 = vadd.f32 0.0, %v3527
      %v3529 = vpop.f32.mrf.mxu0
      %v3530 = vadd.f32 0.0, %v3529
      %3531 = vmatmul.bf16.gmra.mxu0 %v3457
      %v3532 = vpop.f32.mrf.mxu0
      %v3533 = vadd.f32 0.0, %v3532
      %v3534 = vpop.f32.mrf.mxu0
      %v3535 = vadd.f32 0.0, %v3534
      %3536 = vmatmul.bf16.gmra.mxu0 %v3460
      %v3537 = vpop.f32.mrf.mxu0
      %v3538 = vadd.f32 0.0, %v3537
      %v3539 = vpop.f32.mrf.mxu0
      %v3540 = vadd.f32 0.0, %v3539
      %3541 = vmatmul.bf16.gmra.mxu0 %v3463
      %v3542 = vpop.f32.mrf.mxu0
      %v3543 = vadd.f32 0.0, %v3542
      %v3544 = vpop.f32.mrf.mxu0
      %v3545 = vadd.f32 0.0, %v3544
      %3546 = vmatmul.bf16.gmra.mxu0 %v3466
      %v3547 = vpop.f32.mrf.mxu0
      %v3548 = vadd.f32 0.0, %v3547
      %v3549 = vpop.f32.mrf.mxu0
      %v3550 = vadd.f32 0.0, %v3549
      %3551 = vmatmul.bf16.gmra.mxu0 %v3469
      %v3552 = vpop.f32.mrf.mxu0
      %v3553 = vadd.f32 0.0, %v3552
      %v3554 = vpop.f32.mrf.mxu0
      %v3555 = vadd.f32 0.0, %v3554
      %3556 = vmatmul.bf16.gmra.mxu0 %v3472
      %v3557 = vpop.f32.mrf.mxu0
      %v3558 = vadd.f32 0.0, %v3557
      %v3559 = vpop.f32.mrf.mxu0
      %v3560 = vadd.f32 0.0, %v3559
      %3561 = vmatmul.bf16.gmra.mxu0 %v3475
      %v3562 = vpop.f32.mrf.mxu0
      %v3563 = vadd.f32 0.0, %v3562
      %v3564 = vpop.f32.mrf.mxu0
      %v3565 = vadd.f32 0.0, %v3564
      %3566 = vmatmul.bf16.gmra.mxu0 %v3478
      %v3567 = vpop.f32.mrf.mxu0
      %v3568 = vadd.f32 0.0, %v3567
      %v3569 = vpop.f32.mrf.mxu0
      %v3570 = vadd.f32 0.0, %v3569
      %3571 = vdwg.mxu0
      %v3572 = vadd.f32 %v3175, %v3493
      %v3573 = vadd.f32 %v3176, %v3495
      %v3574 = vadd.f32 %v3177, %v3498
      %v3575 = vadd.f32 %v3178, %v3500
      %v3576 = vadd.f32 %v3179, %v3503
      %v3577 = vadd.f32 %v3180, %v3505
      %v3578 = vadd.f32 %v3181, %v3508
      %v3579 = vadd.f32 %v3182, %v3510
      %v3580 = vadd.f32 %v3183, %v3513
      %v3581 = vadd.f32 %v3184, %v3515
      %v3582 = vadd.f32 %v3185, %v3518
      %v3583 = vadd.f32 %v3186, %v3520
      %v3584 = vadd.f32 %v3187, %v3523
      %v3585 = vadd.f32 %v3188, %v3525
      %v3586 = vadd.f32 %v3189, %v3528
      %v3587 = vadd.f32 %v3190, %v3530
      %v3588 = vadd.f32 %v3191, %v3533
      %v3589 = vadd.f32 %v3192, %v3535
      %v3590 = vadd.f32 %v3193, %v3538
      %v3591 = vadd.f32 %v3194, %v3540
      %v3592 = vadd.f32 %v3195, %v3543
      %v3593 = vadd.f32 %v3196, %v3545
      %v3594 = vadd.f32 %v3197, %v3548
      %v3595 = vadd.f32 %v3198, %v3550
      %v3596 = vadd.f32 %v3199, %v3553
      %v3597 = vadd.f32 %v3200, %v3555
      %v3598 = vadd.f32 %v3201, %v3558
      %v3599 = vadd.f32 %v3202, %v3560
      %v3600 = vadd.f32 %v3203, %v3563
      %v3601 = vadd.f32 %v3204, %v3565
      %v3602 = vadd.f32 %v3205, %v3568
      %v3603 = vadd.f32 %v3206, %v3570
      %s3604 = scalar_lea.vmem [#allocation2], 24
      %v3605 = vld [vmem:[%s3604] sm:$0xf]
      %v3606 = vld [vmem:[%s3604 + $0x4] sm:$0xf]
      %v3607 = vld [vmem:[%s3604 + $0xc] sm:$0xf]
      %v3608 = vld [vmem:[%s3604 + $0x10] sm:$0xf]
      %v3609 = vld [vmem:[%s3604 + $0x18] sm:$0xf]
      %v3610 = vld [vmem:[%s3604 + $0x1c] sm:$0xf]
      %v3611 = vld [vmem:[%s3604 + $0x24] sm:$0xf]
      %v3612 = vld [vmem:[%s3604 + $0x28] sm:$0xf]
      %v3613 = vld [vmem:[%s3604 + $0x30] sm:$0xf]
      %v3614 = vld [vmem:[%s3604 + $0x34] sm:$0xf]
      %v3615 = vld [vmem:[%s3604 + $0x3c] sm:$0xf]
      %v3616 = vld [vmem:[%s3604 + $0x40] sm:$0xf]
      %v3617 = vld [vmem:[%s3604 + $0x48] sm:$0xf]
      %v3618 = vld [vmem:[%s3604 + $0x4c] sm:$0xf]
      %v3619 = vld [vmem:[%s3604 + $0x54] sm:$0xf]
      %v3620 = vld [vmem:[%s3604 + $0x58] sm:$0xf]
      %v3621 = vld [vmem:[%s3604 + $0x60] sm:$0xf]
      %v3622 = vld [vmem:[%s3604 + $0x64] sm:$0xf]
      %v3623 = vld [vmem:[%s3604 + $0x6c] sm:$0xf]
      %v3624 = vld [vmem:[%s3604 + $0x70] sm:$0xf]
      %v3625 = vld [vmem:[%s3604 + $0x78] sm:$0xf]
      %v3626 = vld [vmem:[%s3604 + $0x7c] sm:$0xf]
      %v3627 = vld [vmem:[%s3604 + $0x84] sm:$0xf]
      %v3628 = vld [vmem:[%s3604 + $0x88] sm:$0xf]
      %v3629 = vld [vmem:[%s3604 + $0x90] sm:$0xf]
      %v3630 = vld [vmem:[%s3604 + $0x94] sm:$0xf]
      %v3631 = vld [vmem:[%s3604 + $0x9c] sm:$0xf]
      %v3632 = vld [vmem:[%s3604 + $0xa0] sm:$0xf]
      %v3633 = vld [vmem:[%s3604 + $0xa8] sm:$0xf]
      %v3634 = vld [vmem:[%s3604 + $0xac] sm:$0xf]
      %v3635 = vld [vmem:[%s3604 + $0xb4] sm:$0xf]
      %v3636 = vld [vmem:[%s3604 + $0xb8] sm:$0xf]
      %s3637 = scalar_lea.vmem %s3, 16
      %v3638 = vld [vmem:[%s3637] sm:$0x3]
      %v3671 = vunpack.c.l.b16 %v3605
      %v3672 = vunpack.c.l.b16 %v3606
      %v3673 = vunpack.c.l.b16 %v3607
      %v3674 = vunpack.c.l.b16 %v3608
      %v3675 = vunpack.c.l.b16 %v3609
      %v3676 = vunpack.c.l.b16 %v3610
      %v3677 = vunpack.c.l.b16 %v3611
      %v3678 = vunpack.c.l.b16 %v3612
      %v3679 = vunpack.c.l.b16 %v3613
      %v3680 = vunpack.c.l.b16 %v3614
      %v3681 = vunpack.c.l.b16 %v3615
      %v3682 = vunpack.c.l.b16 %v3616
      %v3683 = vunpack.c.l.b16 %v3617
      %v3684 = vunpack.c.l.b16 %v3618
      %v3685 = vunpack.c.l.b16 %v3619
      %v3686 = vunpack.c.l.b16 %v3620
      %v3687 = vunpack.c.l.b16 %v3621
      %v3688 = vunpack.c.l.b16 %v3622
      %v3689 = vunpack.c.l.b16 %v3623
      %v3690 = vunpack.c.l.b16 %v3624
      %v3691 = vunpack.c.l.b16 %v3625
      %v3692 = vunpack.c.l.b16 %v3626
      %v3693 = vunpack.c.l.b16 %v3627
      %v3694 = vunpack.c.l.b16 %v3628
      %v3695 = vunpack.c.l.b16 %v3629
      %v3696 = vunpack.c.l.b16 %v3630
      %v3697 = vunpack.c.l.b16 %v3631
      %v3698 = vunpack.c.l.b16 %v3632
      %v3699 = vunpack.c.l.b16 %v3633
      %v3700 = vunpack.c.l.b16 %v3634
      %v3701 = vunpack.c.l.b16 %v3635
      %v3702 = vunpack.c.l.b16 %v3636
      %v3703 = vpack.c.b16 %v3672, %v3671
      %v3704 = vpack.c.b16 %v3674, %v3673
      %v3705 = vpack.c.b16 %v3676, %v3675
      %v3706 = vpack.c.b16 %v3678, %v3677
      %v3707 = vpack.c.b16 %v3680, %v3679
      %v3708 = vpack.c.b16 %v3682, %v3681
      %v3709 = vpack.c.b16 %v3684, %v3683
      %v3710 = vpack.c.b16 %v3686, %v3685
      %v3711 = vpack.c.b16 %v3688, %v3687
      %v3712 = vpack.c.b16 %v3690, %v3689
      %v3713 = vpack.c.b16 %v3692, %v3691
      %v3714 = vpack.c.b16 %v3694, %v3693
      %v3715 = vpack.c.b16 %v3696, %v3695
      %v3716 = vpack.c.b16 %v3698, %v3697
      %v3717 = vpack.c.b16 %v3700, %v3699
      %v3718 = vpack.c.b16 %v3702, %v3701
      %v3720 = vsel %vm1518, %v3703, 0
      %v3723 = vsel %vm1518, %v3704, 0
      %v3726 = vsel %vm1518, %v3705, 0
      %v3729 = vsel %vm1518, %v3706, 0
      %v3732 = vsel %vm1518, %v3707, 0
      %v3735 = vsel %vm1518, %v3708, 0
      %v3738 = vsel %vm1518, %v3709, 0
      %v3741 = vsel %vm1518, %v3710, 0
      %v3744 = vsel %vm1518, %v3711, 0
      %v3747 = vsel %vm1518, %v3712, 0
      %v3750 = vsel %vm1518, %v3713, 0
      %v3753 = vsel %vm1518, %v3714, 0
      %v3756 = vsel %vm1518, %v3715, 0
      %v3759 = vsel %vm1518, %v3716, 0
      %v3762 = vsel %vm1518, %v3717, 0
      %v3765 = vsel %vm1518, %v3718, 0
      %v3768 = vsel %vm1567, %v3638, 0
      %3770 = vmatpush.bf16.msra.mxu0 0
      %3771 = vmatpush.bf16.msra.mxu0 0
      %3772 = vmatpush.bf16.msra.mxu0 0
      %3773 = vmatpush.bf16.msra.mxu0 0
      %3774 = vmatpush.bf16.msra.mxu0 0
      %3775 = vmatpush.bf16.msra.mxu0 0
      %3776 = vmatpush.bf16.msra.mxu0 0
      %3777 = vmatpush.bf16.msra.mxu0 %v3768
      %3778 = vmatmul.bf16.gmra.mxu0 %v3720
      %v3779 = vpop.f32.mrf.mxu0
      %v3780 = vadd.f32 0.0, %v3779
      %v3781 = vpop.f32.mrf.mxu0
      %v3782 = vadd.f32 0.0, %v3781
      %3783 = vmatmul.bf16.gmra.mxu0 %v3723
      %v3784 = vpop.f32.mrf.mxu0
      %v3785 = vadd.f32 0.0, %v3784
      %v3786 = vpop.f32.mrf.mxu0
      %v3787 = vadd.f32 0.0, %v3786
      %3788 = vmatmul.bf16.gmra.mxu0 %v3726
      %v3789 = vpop.f32.mrf.mxu0
      %v3790 = vadd.f32 0.0, %v3789
      %v3791 = vpop.f32.mrf.mxu0
      %v3792 = vadd.f32 0.0, %v3791
      %3793 = vmatmul.bf16.gmra.mxu0 %v3729
      %v3794 = vpop.f32.mrf.mxu0
      %v3795 = vadd.f32 0.0, %v3794
      %v3796 = vpop.f32.mrf.mxu0
      %v3797 = vadd.f32 0.0, %v3796
      %3798 = vmatmul.bf16.gmra.mxu0 %v3732
      %v3799 = vpop.f32.mrf.mxu0
      %v3800 = vadd.f32 0.0, %v3799
      %v3801 = vpop.f32.mrf.mxu0
      %v3802 = vadd.f32 0.0, %v3801
      %3803 = vmatmul.bf16.gmra.mxu0 %v3735
      %v3804 = vpop.f32.mrf.mxu0
      %v3805 = vadd.f32 0.0, %v3804
      %v3806 = vpop.f32.mrf.mxu0
      %v3807 = vadd.f32 0.0, %v3806
      %3808 = vmatmul.bf16.gmra.mxu0 %v3738
      %v3809 = vpop.f32.mrf.mxu0
      %v3810 = vadd.f32 0.0, %v3809
      %v3811 = vpop.f32.mrf.mxu0
      %v3812 = vadd.f32 0.0, %v3811
      %3813 = vmatmul.bf16.gmra.mxu0 %v3741
      %v3814 = vpop.f32.mrf.mxu0
      %v3815 = vadd.f32 0.0, %v3814
      %v3816 = vpop.f32.mrf.mxu0
      %v3817 = vadd.f32 0.0, %v3816
      %3818 = vmatmul.bf16.gmra.mxu0 %v3744
      %v3819 = vpop.f32.mrf.mxu0
      %v3820 = vadd.f32 0.0, %v3819
      %v3821 = vpop.f32.mrf.mxu0
      %v3822 = vadd.f32 0.0, %v3821
      %3823 = vmatmul.bf16.gmra.mxu0 %v3747
      %v3824 = vpop.f32.mrf.mxu0
      %v3825 = vadd.f32 0.0, %v3824
      %v3826 = vpop.f32.mrf.mxu0
      %v3827 = vadd.f32 0.0, %v3826
      %3828 = vmatmul.bf16.gmra.mxu0 %v3750
      %v3829 = vpop.f32.mrf.mxu0
      %v3830 = vadd.f32 0.0, %v3829
      %v3831 = vpop.f32.mrf.mxu0
      %v3832 = vadd.f32 0.0, %v3831
      %3833 = vmatmul.bf16.gmra.mxu0 %v3753
      %v3834 = vpop.f32.mrf.mxu0
      %v3835 = vadd.f32 0.0, %v3834
      %v3836 = vpop.f32.mrf.mxu0
      %v3837 = vadd.f32 0.0, %v3836
      %3838 = vmatmul.bf16.gmra.mxu0 %v3756
      %v3839 = vpop.f32.mrf.mxu0
      %v3840 = vadd.f32 0.0, %v3839
      %v3841 = vpop.f32.mrf.mxu0
      %v3842 = vadd.f32 0.0, %v3841
      %3843 = vmatmul.bf16.gmra.mxu0 %v3759
      %v3844 = vpop.f32.mrf.mxu0
      %v3845 = vadd.f32 0.0, %v3844
      %v3846 = vpop.f32.mrf.mxu0
      %v3847 = vadd.f32 0.0, %v3846
      %3848 = vmatmul.bf16.gmra.mxu0 %v3762
      %v3849 = vpop.f32.mrf.mxu0
      %v3850 = vadd.f32 0.0, %v3849
      %v3851 = vpop.f32.mrf.mxu0
      %v3852 = vadd.f32 0.0, %v3851
      %3853 = vmatmul.bf16.gmra.mxu0 %v3765
      %v3854 = vpop.f32.mrf.mxu0
      %v3855 = vadd.f32 0.0, %v3854
      %v3856 = vpop.f32.mrf.mxu0
      %v3857 = vadd.f32 0.0, %v3856
      %3858 = vdwg.mxu0
      %v3859 = vadd.f32 %v3572, %v3780
      %v3860 = vadd.f32 %v3573, %v3782
      %v3861 = vadd.f32 %v3574, %v3785
      %v3862 = vadd.f32 %v3575, %v3787
      %v3863 = vadd.f32 %v3576, %v3790
      %v3864 = vadd.f32 %v3577, %v3792
      %v3865 = vadd.f32 %v3578, %v3795
      %v3866 = vadd.f32 %v3579, %v3797
      %v3867 = vadd.f32 %v3580, %v3800
      %v3868 = vadd.f32 %v3581, %v3802
      %v3869 = vadd.f32 %v3582, %v3805
      %v3870 = vadd.f32 %v3583, %v3807
      %v3871 = vadd.f32 %v3584, %v3810
      %v3872 = vadd.f32 %v3585, %v3812
      %v3873 = vadd.f32 %v3586, %v3815
      %v3874 = vadd.f32 %v3587, %v3817
      %v3875 = vadd.f32 %v3588, %v3820
      %v3876 = vadd.f32 %v3589, %v3822
      %v3877 = vadd.f32 %v3590, %v3825
      %v3878 = vadd.f32 %v3591, %v3827
      %v3879 = vadd.f32 %v3592, %v3830
      %v3880 = vadd.f32 %v3593, %v3832
      %v3881 = vadd.f32 %v3594, %v3835
      %v3882 = vadd.f32 %v3595, %v3837
      %v3883 = vadd.f32 %v3596, %v3840
      %v3884 = vadd.f32 %v3597, %v3842
      %v3885 = vadd.f32 %v3598, %v3845
      %v3886 = vadd.f32 %v3599, %v3847
      %v3887 = vadd.f32 %v3600, %v3850
      %v3888 = vadd.f32 %v3601, %v3852
      %v3889 = vadd.f32 %v3602, %v3855
      %v3890 = vadd.f32 %v3603, %v3857
      %v3891 = vld [vmem:[%s3604] sm:$0xf]
      %v3892 = vld [vmem:[%s3604 + $0x4] sm:$0xf]
      %v3893 = vld [vmem:[%s3604 + $0x8] sm:$0x1]
      %v3894 = vld [vmem:[%s3604 + $0xc] sm:$0xf]
      %v3895 = vld [vmem:[%s3604 + $0x10] sm:$0xf]
      %v3896 = vld [vmem:[%s3604 + $0x14] sm:$0x1]
      %v3897 = vld [vmem:[%s3604 + $0x18] sm:$0xf]
      %v3898 = vld [vmem:[%s3604 + $0x1c] sm:$0xf]
      %v3899 = vld [vmem:[%s3604 + $0x20] sm:$0x1]
      %v3900 = vld [vmem:[%s3604 + $0x24] sm:$0xf]
      %v3901 = vld [vmem:[%s3604 + $0x28] sm:$0xf]
      %v3902 = vld [vmem:[%s3604 + $0x2c] sm:$0x1]
      %v3903 = vld [vmem:[%s3604 + $0x30] sm:$0xf]
      %v3904 = vld [vmem:[%s3604 + $0x34] sm:$0xf]
      %v3905 = vld [vmem:[%s3604 + $0x38] sm:$0x1]
      %v3906 = vld [vmem:[%s3604 + $0x3c] sm:$0xf]
      %v3907 = vld [vmem:[%s3604 + $0x40] sm:$0xf]
      %v3908 = vld [vmem:[%s3604 + $0x44] sm:$0x1]
      %v3909 = vld [vmem:[%s3604 + $0x48] sm:$0xf]
      %v3910 = vld [vmem:[%s3604 + $0x4c] sm:$0xf]
      %v3911 = vld [vmem:[%s3604 + $0x50] sm:$0x1]
      %v3912 = vld [vmem:[%s3604 + $0x54] sm:$0xf]
      %v3913 = vld [vmem:[%s3604 + $0x58] sm:$0xf]
      %v3914 = vld [vmem:[%s3604 + $0x5c] sm:$0x1]
      %v3915 = vld [vmem:[%s3604 + $0x60] sm:$0xf]
      %v3916 = vld [vmem:[%s3604 + $0x64] sm:$0xf]
      %v3917 = vld [vmem:[%s3604 + $0x68] sm:$0x1]
      %v3918 = vld [vmem:[%s3604 + $0x6c] sm:$0xf]
      %v3919 = vld [vmem:[%s3604 + $0x70] sm:$0xf]
      %v3920 = vld [vmem:[%s3604 + $0x74] sm:$0x1]
      %v3921 = vld [vmem:[%s3604 + $0x78] sm:$0xf]
      %v3922 = vld [vmem:[%s3604 + $0x7c] sm:$0xf]
      %v3923 = vld [vmem:[%s3604 + $0x80] sm:$0x1]
      %v3924 = vld [vmem:[%s3604 + $0x84] sm:$0xf]
      %v3925 = vld [vmem:[%s3604 + $0x88] sm:$0xf]
      %v3926 = vld [vmem:[%s3604 + $0x8c] sm:$0x1]
      %v3927 = vld [vmem:[%s3604 + $0x90] sm:$0xf]
      %v3928 = vld [vmem:[%s3604 + $0x94] sm:$0xf]
      %v3929 = vld [vmem:[%s3604 + $0x98] sm:$0x1]
      %v3930 = vld [vmem:[%s3604 + $0x9c] sm:$0xf]
      %v3931 = vld [vmem:[%s3604 + $0xa0] sm:$0xf]
      %v3932 = vld [vmem:[%s3604 + $0xa4] sm:$0x1]
      %v3933 = vld [vmem:[%s3604 + $0xa8] sm:$0xf]
      %v3934 = vld [vmem:[%s3604 + $0xac] sm:$0xf]
      %v3935 = vld [vmem:[%s3604 + $0xb0] sm:$0x1]
      %v3936 = vld [vmem:[%s3604 + $0xb4] sm:$0xf]
      %v3937 = vld [vmem:[%s3604 + $0xb8] sm:$0xf]
      %v3938 = vld [vmem:[%s3604 + $0xbc] sm:$0x1]
      %v3940 = vshrl.u32 %v3891, 16
      %v3942 = vrot.slane %v3940, 4
      %v3943 = vshll.u32 %v3891, 16
      %v3945 = vrot.slane %v3943, 5
      %v3946 = vor.u32 %v3942, %v3945
      %v3947 = vrot.slane %v3946, 4
      %v3949 = vshll.u32 %v3892, 16
      %v3951 = vrot.slane %v3949, 5
      %v3952 = vsel %vm1080, %v3947, %v3951
      %v3953 = vshrl.u32 %v3892, 16
      %v3955 = vrot.slane %v3953, 4
      %v3956 = vor.u32 %v3955, %v3951
      %v3957 = vrot.slane %v3956, 4
      %v3959 = vshll.u32 %v3893, 16
      %v3961 = vrot.slane %v3959, 5
      %v3962 = vsel %vm1080, %v3957, %v3961
      %v3964 = vshrl.u32 %v3894, 16
      %v3966 = vrot.slane %v3964, 4
      %v3967 = vshll.u32 %v3894, 16
      %v3969 = vrot.slane %v3967, 5
      %v3970 = vor.u32 %v3966, %v3969
      %v3971 = vrot.slane %v3970, 4
      %v3973 = vshll.u32 %v3895, 16
      %v3975 = vrot.slane %v3973, 5
      %v3976 = vsel %vm1080, %v3971, %v3975
      %v3977 = vshrl.u32 %v3895, 16
      %v3979 = vrot.slane %v3977, 4
      %v3980 = vor.u32 %v3979, %v3975
      %v3981 = vrot.slane %v3980, 4
      %v3983 = vshll.u32 %v3896, 16
      %v3985 = vrot.slane %v3983, 5
      %v3986 = vsel %vm1080, %v3981, %v3985
      %v3988 = vshrl.u32 %v3897, 16
      %v3990 = vrot.slane %v3988, 4
      %v3991 = vshll.u32 %v3897, 16
      %v3993 = vrot.slane %v3991, 5
      %v3994 = vor.u32 %v3990, %v3993
      %v3995 = vrot.slane %v3994, 4
      %v3997 = vshll.u32 %v3898, 16
      %v3999 = vrot.slane %v3997, 5
      %v4000 = vsel %vm1080, %v3995, %v3999
      %v4001 = vshrl.u32 %v3898, 16
      %v4003 = vrot.slane %v4001, 4
      %v4004 = vor.u32 %v4003, %v3999
      %v4005 = vrot.slane %v4004, 4
      %v4007 = vshll.u32 %v3899, 16
      %v4009 = vrot.slane %v4007, 5
      %v4010 = vsel %vm1080, %v4005, %v4009
      %v4012 = vshrl.u32 %v3900, 16
      %v4014 = vrot.slane %v4012, 4
      %v4015 = vshll.u32 %v3900, 16
      %v4017 = vrot.slane %v4015, 5
      %v4018 = vor.u32 %v4014, %v4017
      %v4019 = vrot.slane %v4018, 4
      %v4021 = vshll.u32 %v3901, 16
      %v4023 = vrot.slane %v4021, 5
      %v4024 = vsel %vm1080, %v4019, %v4023
      %v4025 = vshrl.u32 %v3901, 16
      %v4027 = vrot.slane %v4025, 4
      %v4028 = vor.u32 %v4027, %v4023
      %v4029 = vrot.slane %v4028, 4
      %v4031 = vshll.u32 %v3902, 16
      %v4033 = vrot.slane %v4031, 5
      %v4034 = vsel %vm1080, %v4029, %v4033
      %v4036 = vshrl.u32 %v3903, 16
      %v4038 = vrot.slane %v4036, 4
      %v4039 = vshll.u32 %v3903, 16
      %v4041 = vrot.slane %v4039, 5
      %v4042 = vor.u32 %v4038, %v4041
      %v4043 = vrot.slane %v4042, 4
      %v4045 = vshll.u32 %v3904, 16
      %v4047 = vrot.slane %v4045, 5
      %v4048 = vsel %vm1080, %v4043, %v4047
      %v4049 = vshrl.u32 %v3904, 16
      %v4051 = vrot.slane %v4049, 4
      %v4052 = vor.u32 %v4051, %v4047
      %v4053 = vrot.slane %v4052, 4
      %v4055 = vshll.u32 %v3905, 16
      %v4057 = vrot.slane %v4055, 5
      %v4058 = vsel %vm1080, %v4053, %v4057
      %v4060 = vshrl.u32 %v3906, 16
      %v4062 = vrot.slane %v4060, 4
      %v4063 = vshll.u32 %v3906, 16
      %v4065 = vrot.slane %v4063, 5
      %v4066 = vor.u32 %v4062, %v4065
      %v4067 = vrot.slane %v4066, 4
      %v4069 = vshll.u32 %v3907, 16
      %v4071 = vrot.slane %v4069, 5
      %v4072 = vsel %vm1080, %v4067, %v4071
      %v4073 = vshrl.u32 %v3907, 16
      %v4075 = vrot.slane %v4073, 4
      %v4076 = vor.u32 %v4075, %v4071
      %v4077 = vrot.slane %v4076, 4
      %v4079 = vshll.u32 %v3908, 16
      %v4081 = vrot.slane %v4079, 5
      %v4082 = vsel %vm1080, %v4077, %v4081
      %v4084 = vshrl.u32 %v3909, 16
      %v4086 = vrot.slane %v4084, 4
      %v4087 = vshll.u32 %v3909, 16
      %v4089 = vrot.slane %v4087, 5
      %v4090 = vor.u32 %v4086, %v4089
      %v4091 = vrot.slane %v4090, 4
      %v4093 = vshll.u32 %v3910, 16
      %v4095 = vrot.slane %v4093, 5
      %v4096 = vsel %vm1080, %v4091, %v4095
      %v4097 = vshrl.u32 %v3910, 16
      %v4099 = vrot.slane %v4097, 4
      %v4100 = vor.u32 %v4099, %v4095
      %v4101 = vrot.slane %v4100, 4
      %v4103 = vshll.u32 %v3911, 16
      %v4105 = vrot.slane %v4103, 5
      %v4106 = vsel %vm1080, %v4101, %v4105
      %v4108 = vshrl.u32 %v3912, 16
      %v4110 = vrot.slane %v4108, 4
      %v4111 = vshll.u32 %v3912, 16
      %v4113 = vrot.slane %v4111, 5
      %v4114 = vor.u32 %v4110, %v4113
      %v4115 = vrot.slane %v4114, 4
      %v4117 = vshll.u32 %v3913, 16
      %v4119 = vrot.slane %v4117, 5
      %v4120 = vsel %vm1080, %v4115, %v4119
      %v4121 = vshrl.u32 %v3913, 16
      %v4123 = vrot.slane %v4121, 4
      %v4124 = vor.u32 %v4123, %v4119
      %v4125 = vrot.slane %v4124, 4
      %v4127 = vshll.u32 %v3914, 16
      %v4129 = vrot.slane %v4127, 5
      %v4130 = vsel %vm1080, %v4125, %v4129
      %v4132 = vshrl.u32 %v3915, 16
      %v4134 = vrot.slane %v4132, 4
      %v4135 = vshll.u32 %v3915, 16
      %v4137 = vrot.slane %v4135, 5
      %v4138 = vor.u32 %v4134, %v4137
      %v4139 = vrot.slane %v4138, 4
      %v4141 = vshll.u32 %v3916, 16
      %v4143 = vrot.slane %v4141, 5
      %v4144 = vsel %vm1080, %v4139, %v4143
      %v4145 = vshrl.u32 %v3916, 16
      %v4147 = vrot.slane %v4145, 4
      %v4148 = vor.u32 %v4147, %v4143
      %v4149 = vrot.slane %v4148, 4
      %v4151 = vshll.u32 %v3917, 16
      %v4153 = vrot.slane %v4151, 5
      %v4154 = vsel %vm1080, %v4149, %v4153
      %v4156 = vshrl.u32 %v3918, 16
      %v4158 = vrot.slane %v4156, 4
      %v4159 = vshll.u32 %v3918, 16
      %v4161 = vrot.slane %v4159, 5
      %v4162 = vor.u32 %v4158, %v4161
      %v4163 = vrot.slane %v4162, 4
      %v4165 = vshll.u32 %v3919, 16
      %v4167 = vrot.slane %v4165, 5
      %v4168 = vsel %vm1080, %v4163, %v4167
      %v4169 = vshrl.u32 %v3919, 16
      %v4171 = vrot.slane %v4169, 4
      %v4172 = vor.u32 %v4171, %v4167
      %v4173 = vrot.slane %v4172, 4
      %v4175 = vshll.u32 %v3920, 16
      %v4177 = vrot.slane %v4175, 5
      %v4178 = vsel %vm1080, %v4173, %v4177
      %v4180 = vshrl.u32 %v3921, 16
      %v4182 = vrot.slane %v4180, 4
      %v4183 = vshll.u32 %v3921, 16
      %v4185 = vrot.slane %v4183, 5
      %v4186 = vor.u32 %v4182, %v4185
      %v4187 = vrot.slane %v4186, 4
      %v4189 = vshll.u32 %v3922, 16
      %v4191 = vrot.slane %v4189, 5
      %v4192 = vsel %vm1080, %v4187, %v4191
      %v4193 = vshrl.u32 %v3922, 16
      %v4195 = vrot.slane %v4193, 4
      %v4196 = vor.u32 %v4195, %v4191
      %v4197 = vrot.slane %v4196, 4
      %v4199 = vshll.u32 %v3923, 16
      %v4201 = vrot.slane %v4199, 5
      %v4202 = vsel %vm1080, %v4197, %v4201
      %v4204 = vshrl.u32 %v3924, 16
      %v4206 = vrot.slane %v4204, 4
      %v4207 = vshll.u32 %v3924, 16
      %v4209 = vrot.slane %v4207, 5
      %v4210 = vor.u32 %v4206, %v4209
      %v4211 = vrot.slane %v4210, 4
      %v4213 = vshll.u32 %v3925, 16
      %v4215 = vrot.slane %v4213, 5
      %v4216 = vsel %vm1080, %v4211, %v4215
      %v4217 = vshrl.u32 %v3925, 16
      %v4219 = vrot.slane %v4217, 4
      %v4220 = vor.u32 %v4219, %v4215
      %v4221 = vrot.slane %v4220, 4
      %v4223 = vshll.u32 %v3926, 16
      %v4225 = vrot.slane %v4223, 5
      %v4226 = vsel %vm1080, %v4221, %v4225
      %v4228 = vshrl.u32 %v3927, 16
      %v4230 = vrot.slane %v4228, 4
      %v4231 = vshll.u32 %v3927, 16
      %v4233 = vrot.slane %v4231, 5
      %v4234 = vor.u32 %v4230, %v4233
      %v4235 = vrot.slane %v4234, 4
      %v4237 = vshll.u32 %v3928, 16
      %v4239 = vrot.slane %v4237, 5
      %v4240 = vsel %vm1080, %v4235, %v4239
      %v4241 = vshrl.u32 %v3928, 16
      %v4243 = vrot.slane %v4241, 4
      %v4244 = vor.u32 %v4243, %v4239
      %v4245 = vrot.slane %v4244, 4
      %v4247 = vshll.u32 %v3929, 16
      %v4249 = vrot.slane %v4247, 5
      %v4250 = vsel %vm1080, %v4245, %v4249
      %v4252 = vshrl.u32 %v3930, 16
      %v4254 = vrot.slane %v4252, 4
      %v4255 = vshll.u32 %v3930, 16
      %v4257 = vrot.slane %v4255, 5
      %v4258 = vor.u32 %v4254, %v4257
      %v4259 = vrot.slane %v4258, 4
      %v4261 = vshll.u32 %v3931, 16
      %v4263 = vrot.slane %v4261, 5
      %v4264 = vsel %vm1080, %v4259, %v4263
      %v4265 = vshrl.u32 %v3931, 16
      %v4267 = vrot.slane %v4265, 4
      %v4268 = vor.u32 %v4267, %v4263
      %v4269 = vrot.slane %v4268, 4
      %v4271 = vshll.u32 %v3932, 16
      %v4273 = vrot.slane %v4271, 5
      %v4274 = vsel %vm1080, %v4269, %v4273
      %v4276 = vshrl.u32 %v3933, 16
      %v4278 = vrot.slane %v4276, 4
      %v4279 = vshll.u32 %v3933, 16
      %v4281 = vrot.slane %v4279, 5
      %v4282 = vor.u32 %v4278, %v4281
      %v4283 = vrot.slane %v4282, 4
      %v4285 = vshll.u32 %v3934, 16
      %v4287 = vrot.slane %v4285, 5
      %v4288 = vsel %vm1080, %v4283, %v4287
      %v4289 = vshrl.u32 %v3934, 16
      %v4291 = vrot.slane %v4289, 4
      %v4292 = vor.u32 %v4291, %v4287
      %v4293 = vrot.slane %v4292, 4
      %v4295 = vshll.u32 %v3935, 16
      %v4297 = vrot.slane %v4295, 5
      %v4298 = vsel %vm1080, %v4293, %v4297
      %v4300 = vshrl.u32 %v3936, 16
      %v4302 = vrot.slane %v4300, 4
      %v4303 = vshll.u32 %v3936, 16
      %v4305 = vrot.slane %v4303, 5
      %v4306 = vor.u32 %v4302, %v4305
      %v4307 = vrot.slane %v4306, 4
      %v4309 = vshll.u32 %v3937, 16
      %v4311 = vrot.slane %v4309, 5
      %v4312 = vsel %vm1080, %v4307, %v4311
      %v4313 = vshrl.u32 %v3937, 16
      %v4315 = vrot.slane %v4313, 4
      %v4316 = vor.u32 %v4315, %v4311
      %v4317 = vrot.slane %v4316, 4
      %v4319 = vshll.u32 %v3938, 16
      %v4321 = vrot.slane %v4319, 5
      %v4322 = vsel %vm1080, %v4317, %v4321
      %v4323 = vld [vmem:[%s3637] sm:$0xc]
      %v4324 = vunpack.c.l.b16 %v3952
      %v4325 = vunpack.c.l.b16 %v3962
      %v4326 = vunpack.c.l.b16 %v3976
      %v4327 = vunpack.c.l.b16 %v3986
      %v4328 = vunpack.c.l.b16 %v4000
      %v4329 = vunpack.c.l.b16 %v4010
      %v4330 = vunpack.c.l.b16 %v4024
      %v4331 = vunpack.c.l.b16 %v4034
      %v4332 = vunpack.c.l.b16 %v4048
      %v4333 = vunpack.c.l.b16 %v4058
      %v4334 = vunpack.c.l.b16 %v4072
      %v4335 = vunpack.c.l.b16 %v4082
      %v4336 = vunpack.c.l.b16 %v4096
      %v4337 = vunpack.c.l.b16 %v4106
      %v4338 = vunpack.c.l.b16 %v4120
      %v4339 = vunpack.c.l.b16 %v4130
      %v4340 = vunpack.c.l.b16 %v4144
      %v4341 = vunpack.c.l.b16 %v4154
      %v4342 = vunpack.c.l.b16 %v4168
      %v4343 = vunpack.c.l.b16 %v4178
      %v4344 = vunpack.c.l.b16 %v4192
      %v4345 = vunpack.c.l.b16 %v4202
      %v4346 = vunpack.c.l.b16 %v4216
      %v4347 = vunpack.c.l.b16 %v4226
      %v4348 = vunpack.c.l.b16 %v4240
      %v4349 = vunpack.c.l.b16 %v4250
      %v4350 = vunpack.c.l.b16 %v4264
      %v4351 = vunpack.c.l.b16 %v4274
      %v4352 = vunpack.c.l.b16 %v4288
      %v4353 = vunpack.c.l.b16 %v4298
      %v4354 = vunpack.c.l.b16 %v4312
      %v4355 = vunpack.c.l.b16 %v4322
      %v4356 = vpack.c.b16 %v4325, %v4324
      %v4357 = vpack.c.b16 %v4327, %v4326
      %v4358 = vpack.c.b16 %v4329, %v4328
      %v4359 = vpack.c.b16 %v4331, %v4330
      %v4360 = vpack.c.b16 %v4333, %v4332
      %v4361 = vpack.c.b16 %v4335, %v4334
      %v4362 = vpack.c.b16 %v4337, %v4336
      %v4363 = vpack.c.b16 %v4339, %v4338
      %v4364 = vpack.c.b16 %v4341, %v4340
      %v4365 = vpack.c.b16 %v4343, %v4342
      %v4366 = vpack.c.b16 %v4345, %v4344
      %v4367 = vpack.c.b16 %v4347, %v4346
      %v4368 = vpack.c.b16 %v4349, %v4348
      %v4369 = vpack.c.b16 %v4351, %v4350
      %v4370 = vpack.c.b16 %v4353, %v4352
      %v4371 = vpack.c.b16 %v4355, %v4354
      %v4373 = vunpack.c.l.b16 %v4323
      %v4374 = vpack.c.b16 %v4373, %v4373
      %v4375 = vrot.slane %v4374, 2
      %v4377 = vsel %vm1518, %v4356, 0
      %v4380 = vsel %vm1518, %v4357, 0
      %v4383 = vsel %vm1518, %v4358, 0
      %v4386 = vsel %vm1518, %v4359, 0
      %v4389 = vsel %vm1518, %v4360, 0
      %v4392 = vsel %vm1518, %v4361, 0
      %v4395 = vsel %vm1518, %v4362, 0
      %v4398 = vsel %vm1518, %v4363, 0
      %v4401 = vsel %vm1518, %v4364, 0
      %v4404 = vsel %vm1518, %v4365, 0
      %v4407 = vsel %vm1518, %v4366, 0
      %v4410 = vsel %vm1518, %v4367, 0
      %v4413 = vsel %vm1518, %v4368, 0
      %v4416 = vsel %vm1518, %v4369, 0
      %v4419 = vsel %vm1518, %v4370, 0
      %v4422 = vsel %vm1518, %v4371, 0
      %v4425 = vsel %vm1567, %v4375, 0
      %4427 = vmatpush.bf16.msra.mxu0 0
      %4428 = vmatpush.bf16.msra.mxu0 0
      %4429 = vmatpush.bf16.msra.mxu0 0
      %4430 = vmatpush.bf16.msra.mxu0 0
      %4431 = vmatpush.bf16.msra.mxu0 0
      %4432 = vmatpush.bf16.msra.mxu0 0
      %4433 = vmatpush.bf16.msra.mxu0 0
      %4434 = vmatpush.bf16.msra.mxu0 %v4425
      %4435 = vmatmul.bf16.gmra.mxu0 %v4377
      %v4436 = vpop.f32.mrf.mxu0
      %v4437 = vadd.f32 0.0, %v4436
      %v4438 = vpop.f32.mrf.mxu0
      %v4439 = vadd.f32 0.0, %v4438
      %4440 = vmatmul.bf16.gmra.mxu0 %v4380
      %v4441 = vpop.f32.mrf.mxu0
      %v4442 = vadd.f32 0.0, %v4441
      %v4443 = vpop.f32.mrf.mxu0
      %v4444 = vadd.f32 0.0, %v4443
      %4445 = vmatmul.bf16.gmra.mxu0 %v4383
      %v4446 = vpop.f32.mrf.mxu0
      %v4447 = vadd.f32 0.0, %v4446
      %v4448 = vpop.f32.mrf.mxu0
      %v4449 = vadd.f32 0.0, %v4448
      %4450 = vmatmul.bf16.gmra.mxu0 %v4386
      %v4451 = vpop.f32.mrf.mxu0
      %v4452 = vadd.f32 0.0, %v4451
      %v4453 = vpop.f32.mrf.mxu0
      %v4454 = vadd.f32 0.0, %v4453
      %4455 = vmatmul.bf16.gmra.mxu0 %v4389
      %v4456 = vpop.f32.mrf.mxu0
      %v4457 = vadd.f32 0.0, %v4456
      %v4458 = vpop.f32.mrf.mxu0
      %v4459 = vadd.f32 0.0, %v4458
      %4460 = vmatmul.bf16.gmra.mxu0 %v4392
      %v4461 = vpop.f32.mrf.mxu0
      %v4462 = vadd.f32 0.0, %v4461
      %v4463 = vpop.f32.mrf.mxu0
      %v4464 = vadd.f32 0.0, %v4463
      %4465 = vmatmul.bf16.gmra.mxu0 %v4395
      %v4466 = vpop.f32.mrf.mxu0
      %v4467 = vadd.f32 0.0, %v4466
      %v4468 = vpop.f32.mrf.mxu0
      %v4469 = vadd.f32 0.0, %v4468
      %4470 = vmatmul.bf16.gmra.mxu0 %v4398
      %v4471 = vpop.f32.mrf.mxu0
      %v4472 = vadd.f32 0.0, %v4471
      %v4473 = vpop.f32.mrf.mxu0
      %v4474 = vadd.f32 0.0, %v4473
      %4475 = vmatmul.bf16.gmra.mxu0 %v4401
      %v4476 = vpop.f32.mrf.mxu0
      %v4477 = vadd.f32 0.0, %v4476
      %v4478 = vpop.f32.mrf.mxu0
      %v4479 = vadd.f32 0.0, %v4478
      %4480 = vmatmul.bf16.gmra.mxu0 %v4404
      %v4481 = vpop.f32.mrf.mxu0
      %v4482 = vadd.f32 0.0, %v4481
      %v4483 = vpop.f32.mrf.mxu0
      %v4484 = vadd.f32 0.0, %v4483
      %4485 = vmatmul.bf16.gmra.mxu0 %v4407
      %v4486 = vpop.f32.mrf.mxu0
      %v4487 = vadd.f32 0.0, %v4486
      %v4488 = vpop.f32.mrf.mxu0
      %v4489 = vadd.f32 0.0, %v4488
      %4490 = vmatmul.bf16.gmra.mxu0 %v4410
      %v4491 = vpop.f32.mrf.mxu0
      %v4492 = vadd.f32 0.0, %v4491
      %v4493 = vpop.f32.mrf.mxu0
      %v4494 = vadd.f32 0.0, %v4493
      %4495 = vmatmul.bf16.gmra.mxu0 %v4413
      %v4496 = vpop.f32.mrf.mxu0
      %v4497 = vadd.f32 0.0, %v4496
      %v4498 = vpop.f32.mrf.mxu0
      %v4499 = vadd.f32 0.0, %v4498
      %4500 = vmatmul.bf16.gmra.mxu0 %v4416
      %v4501 = vpop.f32.mrf.mxu0
      %v4502 = vadd.f32 0.0, %v4501
      %v4503 = vpop.f32.mrf.mxu0
      %v4504 = vadd.f32 0.0, %v4503
      %4505 = vmatmul.bf16.gmra.mxu0 %v4419
      %v4506 = vpop.f32.mrf.mxu0
      %v4507 = vadd.f32 0.0, %v4506
      %v4508 = vpop.f32.mrf.mxu0
      %v4509 = vadd.f32 0.0, %v4508
      %4510 = vmatmul.bf16.gmra.mxu0 %v4422
      %v4511 = vpop.f32.mrf.mxu0
      %v4512 = vadd.f32 0.0, %v4511
      %v4513 = vpop.f32.mrf.mxu0
      %v4514 = vadd.f32 0.0, %v4513
      %4515 = vdwg.mxu0
      %v4516 = vadd.f32 %v3859, %v4437
      %v4517 = vadd.f32 %v3860, %v4439
      %v4518 = vadd.f32 %v3861, %v4442
      %v4519 = vadd.f32 %v3862, %v4444
      %v4520 = vadd.f32 %v3863, %v4447
      %v4521 = vadd.f32 %v3864, %v4449
      %v4522 = vadd.f32 %v3865, %v4452
      %v4523 = vadd.f32 %v3866, %v4454
      %v4524 = vadd.f32 %v3867, %v4457
      %v4525 = vadd.f32 %v3868, %v4459
      %v4526 = vadd.f32 %v3869, %v4462
      %v4527 = vadd.f32 %v3870, %v4464
      %v4528 = vadd.f32 %v3871, %v4467
      %v4529 = vadd.f32 %v3872, %v4469
      %v4530 = vadd.f32 %v3873, %v4472
      %v4531 = vadd.f32 %v3874, %v4474
      %v4532 = vadd.f32 %v3875, %v4477
      %v4533 = vadd.f32 %v3876, %v4479
      %v4534 = vadd.f32 %v3877, %v4482
      %v4535 = vadd.f32 %v3878, %v4484
      %v4536 = vadd.f32 %v3879, %v4487
      %v4537 = vadd.f32 %v3880, %v4489
      %v4538 = vadd.f32 %v3881, %v4492
      %v4539 = vadd.f32 %v3882, %v4494
      %v4540 = vadd.f32 %v3883, %v4497
      %v4541 = vadd.f32 %v3884, %v4499
      %v4542 = vadd.f32 %v3885, %v4502
      %v4543 = vadd.f32 %v3886, %v4504
      %v4544 = vadd.f32 %v3887, %v4507
      %v4545 = vadd.f32 %v3888, %v4509
      %v4546 = vadd.f32 %v3889, %v4512
      %v4547 = vadd.f32 %v3890, %v4514
      %v4548 = vld [vmem:[%s3604] sm:$0xe]
      %v4549 = vld [vmem:[%s3604 + $0xc] sm:$0xe]
      %v4550 = vld [vmem:[%s3604 + $0x18] sm:$0xe]
      %v4551 = vld [vmem:[%s3604 + $0x24] sm:$0xe]
      %v4552 = vld [vmem:[%s3604 + $0x30] sm:$0xe]
      %v4553 = vld [vmem:[%s3604 + $0x3c] sm:$0xe]
      %v4554 = vld [vmem:[%s3604 + $0x48] sm:$0xe]
      %v4555 = vld [vmem:[%s3604 + $0x54] sm:$0xe]
      %v4556 = vld [vmem:[%s3604 + $0x60] sm:$0xe]
      %v4557 = vld [vmem:[%s3604 + $0x6c] sm:$0xe]
      %v4558 = vld [vmem:[%s3604 + $0x78] sm:$0xe]
      %v4559 = vld [vmem:[%s3604 + $0x84] sm:$0xe]
      %v4560 = vld [vmem:[%s3604 + $0x90] sm:$0xe]
      %v4561 = vld [vmem:[%s3604 + $0x9c] sm:$0xe]
      %v4562 = vld [vmem:[%s3604 + $0xa8] sm:$0xe]
      %v4563 = vld [vmem:[%s3604 + $0xb4] sm:$0xe]
      %v4612 = vrot.slane %v4548, 5
      %v4613 = vrot.slane %v4612, 4
      %v4614 = vrot.slane %v3892, 5
      %v4615 = vsel %vm1930, %v4613, %v4614
      %v4616 = vrot.slane %v4614, 4
      %v4617 = vrot.slane %v3893, 5
      %v4618 = vsel %vm1930, %v4616, %v4617
      %v4619 = vrot.slane %v4549, 5
      %v4620 = vrot.slane %v4619, 4
      %v4621 = vrot.slane %v3895, 5
      %v4622 = vsel %vm1930, %v4620, %v4621
      %v4623 = vrot.slane %v4621, 4
      %v4624 = vrot.slane %v3896, 5
      %v4625 = vsel %vm1930, %v4623, %v4624
      %v4626 = vrot.slane %v4550, 5
      %v4627 = vrot.slane %v4626, 4
      %v4628 = vrot.slane %v3898, 5
      %v4629 = vsel %vm1930, %v4627, %v4628
      %v4630 = vrot.slane %v4628, 4
      %v4631 = vrot.slane %v3899, 5
      %v4632 = vsel %vm1930, %v4630, %v4631
      %v4633 = vrot.slane %v4551, 5
      %v4634 = vrot.slane %v4633, 4
      %v4635 = vrot.slane %v3901, 5
      %v4636 = vsel %vm1930, %v4634, %v4635
      %v4637 = vrot.slane %v4635, 4
      %v4638 = vrot.slane %v3902, 5
      %v4639 = vsel %vm1930, %v4637, %v4638
      %v4640 = vrot.slane %v4552, 5
      %v4641 = vrot.slane %v4640, 4
      %v4642 = vrot.slane %v3904, 5
      %v4643 = vsel %vm1930, %v4641, %v4642
      %v4644 = vrot.slane %v4642, 4
      %v4645 = vrot.slane %v3905, 5
      %v4646 = vsel %vm1930, %v4644, %v4645
      %v4647 = vrot.slane %v4553, 5
      %v4648 = vrot.slane %v4647, 4
      %v4649 = vrot.slane %v3907, 5
      %v4650 = vsel %vm1930, %v4648, %v4649
      %v4651 = vrot.slane %v4649, 4
      %v4652 = vrot.slane %v3908, 5
      %v4653 = vsel %vm1930, %v4651, %v4652
      %v4654 = vrot.slane %v4554, 5
      %v4655 = vrot.slane %v4654, 4
      %v4656 = vrot.slane %v3910, 5
      %v4657 = vsel %vm1930, %v4655, %v4656
      %v4658 = vrot.slane %v4656, 4
      %v4659 = vrot.slane %v3911, 5
      %v4660 = vsel %vm1930, %v4658, %v4659
      %v4661 = vrot.slane %v4555, 5
      %v4662 = vrot.slane %v4661, 4
      %v4663 = vrot.slane %v3913, 5
      %v4664 = vsel %vm1930, %v4662, %v4663
      %v4665 = vrot.slane %v4663, 4
      %v4666 = vrot.slane %v3914, 5
      %v4667 = vsel %vm1930, %v4665, %v4666
      %v4668 = vrot.slane %v4556, 5
      %v4669 = vrot.slane %v4668, 4
      %v4670 = vrot.slane %v3916, 5
      %v4671 = vsel %vm1930, %v4669, %v4670
      %v4672 = vrot.slane %v4670, 4
      %v4673 = vrot.slane %v3917, 5
      %v4674 = vsel %vm1930, %v4672, %v4673
      %v4675 = vrot.slane %v4557, 5
      %v4676 = vrot.slane %v4675, 4
      %v4677 = vrot.slane %v3919, 5
      %v4678 = vsel %vm1930, %v4676, %v4677
      %v4679 = vrot.slane %v4677, 4
      %v4680 = vrot.slane %v3920, 5
      %v4681 = vsel %vm1930, %v4679, %v4680
      %v4682 = vrot.slane %v4558, 5
      %v4683 = vrot.slane %v4682, 4
      %v4684 = vrot.slane %v3922, 5
      %v4685 = vsel %vm1930, %v4683, %v4684
      %v4686 = vrot.slane %v4684, 4
      %v4687 = vrot.slane %v3923, 5
      %v4688 = vsel %vm1930, %v4686, %v4687
      %v4689 = vrot.slane %v4559, 5
      %v4690 = vrot.slane %v4689, 4
      %v4691 = vrot.slane %v3925, 5
      %v4692 = vsel %vm1930, %v4690, %v4691
      %v4693 = vrot.slane %v4691, 4
      %v4694 = vrot.slane %v3926, 5
      %v4695 = vsel %vm1930, %v4693, %v4694
      %v4696 = vrot.slane %v4560, 5
      %v4697 = vrot.slane %v4696, 4
      %v4698 = vrot.slane %v3928, 5
      %v4699 = vsel %vm1930, %v4697, %v4698
      %v4700 = vrot.slane %v4698, 4
      %v4701 = vrot.slane %v3929, 5
      %v4702 = vsel %vm1930, %v4700, %v4701
      %v4703 = vrot.slane %v4561, 5
      %v4704 = vrot.slane %v4703, 4
      %v4705 = vrot.slane %v3931, 5
      %v4706 = vsel %vm1930, %v4704, %v4705
      %v4707 = vrot.slane %v4705, 4
      %v4708 = vrot.slane %v3932, 5
      %v4709 = vsel %vm1930, %v4707, %v4708
      %v4710 = vrot.slane %v4562, 5
      %v4711 = vrot.slane %v4710, 4
      %v4712 = vrot.slane %v3934, 5
      %v4713 = vsel %vm1930, %v4711, %v4712
      %v4714 = vrot.slane %v4712, 4
      %v4715 = vrot.slane %v3935, 5
      %v4716 = vsel %vm1930, %v4714, %v4715
      %v4717 = vrot.slane %v4563, 5
      %v4718 = vrot.slane %v4717, 4
      %v4719 = vrot.slane %v3937, 5
      %v4720 = vsel %vm1930, %v4718, %v4719
      %v4721 = vrot.slane %v4719, 4
      %v4722 = vrot.slane %v3938, 5
      %v4723 = vsel %vm1930, %v4721, %v4722
      %v4724 = vld [vmem:[%s3637 + $0x4] sm:$0x3]
      %v4725 = vunpack.c.l.b16 %v4615
      %v4726 = vunpack.c.l.b16 %v4618
      %v4727 = vunpack.c.l.b16 %v4622
      %v4728 = vunpack.c.l.b16 %v4625
      %v4729 = vunpack.c.l.b16 %v4629
      %v4730 = vunpack.c.l.b16 %v4632
      %v4731 = vunpack.c.l.b16 %v4636
      %v4732 = vunpack.c.l.b16 %v4639
      %v4733 = vunpack.c.l.b16 %v4643
      %v4734 = vunpack.c.l.b16 %v4646
      %v4735 = vunpack.c.l.b16 %v4650
      %v4736 = vunpack.c.l.b16 %v4653
      %v4737 = vunpack.c.l.b16 %v4657
      %v4738 = vunpack.c.l.b16 %v4660
      %v4739 = vunpack.c.l.b16 %v4664
      %v4740 = vunpack.c.l.b16 %v4667
      %v4741 = vunpack.c.l.b16 %v4671
      %v4742 = vunpack.c.l.b16 %v4674
      %v4743 = vunpack.c.l.b16 %v4678
      %v4744 = vunpack.c.l.b16 %v4681
      %v4745 = vunpack.c.l.b16 %v4685
      %v4746 = vunpack.c.l.b16 %v4688
      %v4747 = vunpack.c.l.b16 %v4692
      %v4748 = vunpack.c.l.b16 %v4695
      %v4749 = vunpack.c.l.b16 %v4699
      %v4750 = vunpack.c.l.b16 %v4702
      %v4751 = vunpack.c.l.b16 %v4706
      %v4752 = vunpack.c.l.b16 %v4709
      %v4753 = vunpack.c.l.b16 %v4713
      %v4754 = vunpack.c.l.b16 %v4716
      %v4755 = vunpack.c.l.b16 %v4720
      %v4756 = vunpack.c.l.b16 %v4723
      %v4757 = vpack.c.b16 %v4726, %v4725
      %v4758 = vpack.c.b16 %v4728, %v4727
      %v4759 = vpack.c.b16 %v4730, %v4729
      %v4760 = vpack.c.b16 %v4732, %v4731
      %v4761 = vpack.c.b16 %v4734, %v4733
      %v4762 = vpack.c.b16 %v4736, %v4735
      %v4763 = vpack.c.b16 %v4738, %v4737
      %v4764 = vpack.c.b16 %v4740, %v4739
      %v4765 = vpack.c.b16 %v4742, %v4741
      %v4766 = vpack.c.b16 %v4744, %v4743
      %v4767 = vpack.c.b16 %v4746, %v4745
      %v4768 = vpack.c.b16 %v4748, %v4747
      %v4769 = vpack.c.b16 %v4750, %v4749
      %v4770 = vpack.c.b16 %v4752, %v4751
      %v4771 = vpack.c.b16 %v4754, %v4753
      %v4772 = vpack.c.b16 %v4756, %v4755
      %v4774 = vsel %vm1518, %v4757, 0
      %v4777 = vsel %vm1518, %v4758, 0
      %v4780 = vsel %vm1518, %v4759, 0
      %v4783 = vsel %vm1518, %v4760, 0
      %v4786 = vsel %vm1518, %v4761, 0
      %v4789 = vsel %vm1518, %v4762, 0
      %v4792 = vsel %vm1518, %v4763, 0
      %v4795 = vsel %vm1518, %v4764, 0
      %v4798 = vsel %vm1518, %v4765, 0
      %v4801 = vsel %vm1518, %v4766, 0
      %v4804 = vsel %vm1518, %v4767, 0
      %v4807 = vsel %vm1518, %v4768, 0
      %v4810 = vsel %vm1518, %v4769, 0
      %v4813 = vsel %vm1518, %v4770, 0
      %v4816 = vsel %vm1518, %v4771, 0
      %v4819 = vsel %vm1518, %v4772, 0
      %v4822 = vsel %vm1567, %v4724, 0
      %4824 = vmatpush.bf16.msra.mxu0 0
      %4825 = vmatpush.bf16.msra.mxu0 0
      %4826 = vmatpush.bf16.msra.mxu0 0
      %4827 = vmatpush.bf16.msra.mxu0 0
      %4828 = vmatpush.bf16.msra.mxu0 0
      %4829 = vmatpush.bf16.msra.mxu0 0
      %4830 = vmatpush.bf16.msra.mxu0 0
      %4831 = vmatpush.bf16.msra.mxu0 %v4822
      %4832 = vmatmul.bf16.gmra.mxu0 %v4774
      %v4833 = vpop.f32.mrf.mxu0
      %v4834 = vadd.f32 0.0, %v4833
      %v4835 = vpop.f32.mrf.mxu0
      %v4836 = vadd.f32 0.0, %v4835
      %4837 = vmatmul.bf16.gmra.mxu0 %v4777
      %v4838 = vpop.f32.mrf.mxu0
      %v4839 = vadd.f32 0.0, %v4838
      %v4840 = vpop.f32.mrf.mxu0
      %v4841 = vadd.f32 0.0, %v4840
      %4842 = vmatmul.bf16.gmra.mxu0 %v4780
      %v4843 = vpop.f32.mrf.mxu0
      %v4844 = vadd.f32 0.0, %v4843
      %v4845 = vpop.f32.mrf.mxu0
      %v4846 = vadd.f32 0.0, %v4845
      %4847 = vmatmul.bf16.gmra.mxu0 %v4783
      %v4848 = vpop.f32.mrf.mxu0
      %v4849 = vadd.f32 0.0, %v4848
      %v4850 = vpop.f32.mrf.mxu0
      %v4851 = vadd.f32 0.0, %v4850
      %4852 = vmatmul.bf16.gmra.mxu0 %v4786
      %v4853 = vpop.f32.mrf.mxu0
      %v4854 = vadd.f32 0.0, %v4853
      %v4855 = vpop.f32.mrf.mxu0
      %v4856 = vadd.f32 0.0, %v4855
      %4857 = vmatmul.bf16.gmra.mxu0 %v4789
      %v4858 = vpop.f32.mrf.mxu0
      %v4859 = vadd.f32 0.0, %v4858
      %v4860 = vpop.f32.mrf.mxu0
      %v4861 = vadd.f32 0.0, %v4860
      %4862 = vmatmul.bf16.gmra.mxu0 %v4792
      %v4863 = vpop.f32.mrf.mxu0
      %v4864 = vadd.f32 0.0, %v4863
      %v4865 = vpop.f32.mrf.mxu0
      %v4866 = vadd.f32 0.0, %v4865
      %4867 = vmatmul.bf16.gmra.mxu0 %v4795
      %v4868 = vpop.f32.mrf.mxu0
      %v4869 = vadd.f32 0.0, %v4868
      %v4870 = vpop.f32.mrf.mxu0
      %v4871 = vadd.f32 0.0, %v4870
      %4872 = vmatmul.bf16.gmra.mxu0 %v4798
      %v4873 = vpop.f32.mrf.mxu0
      %v4874 = vadd.f32 0.0, %v4873
      %v4875 = vpop.f32.mrf.mxu0
      %v4876 = vadd.f32 0.0, %v4875
      %4877 = vmatmul.bf16.gmra.mxu0 %v4801
      %v4878 = vpop.f32.mrf.mxu0
      %v4879 = vadd.f32 0.0, %v4878
      %v4880 = vpop.f32.mrf.mxu0
      %v4881 = vadd.f32 0.0, %v4880
      %4882 = vmatmul.bf16.gmra.mxu0 %v4804
      %v4883 = vpop.f32.mrf.mxu0
      %v4884 = vadd.f32 0.0, %v4883
      %v4885 = vpop.f32.mrf.mxu0
      %v4886 = vadd.f32 0.0, %v4885
      %4887 = vmatmul.bf16.gmra.mxu0 %v4807
      %v4888 = vpop.f32.mrf.mxu0
      %v4889 = vadd.f32 0.0, %v4888
      %v4890 = vpop.f32.mrf.mxu0
      %v4891 = vadd.f32 0.0, %v4890
      %4892 = vmatmul.bf16.gmra.mxu0 %v4810
      %v4893 = vpop.f32.mrf.mxu0
      %v4894 = vadd.f32 0.0, %v4893
      %v4895 = vpop.f32.mrf.mxu0
      %v4896 = vadd.f32 0.0, %v4895
      %4897 = vmatmul.bf16.gmra.mxu0 %v4813
      %v4898 = vpop.f32.mrf.mxu0
      %v4899 = vadd.f32 0.0, %v4898
      %v4900 = vpop.f32.mrf.mxu0
      %v4901 = vadd.f32 0.0, %v4900
      %4902 = vmatmul.bf16.gmra.mxu0 %v4816
      %v4903 = vpop.f32.mrf.mxu0
      %v4904 = vadd.f32 0.0, %v4903
      %v4905 = vpop.f32.mrf.mxu0
      %v4906 = vadd.f32 0.0, %v4905
      %4907 = vmatmul.bf16.gmra.mxu0 %v4819
      %v4908 = vpop.f32.mrf.mxu0
      %v4909 = vadd.f32 0.0, %v4908
      %v4910 = vpop.f32.mrf.mxu0
      %v4911 = vadd.f32 0.0, %v4910
      %4912 = vdwg.mxu0
      %v4913 = vadd.f32 %v4516, %v4834
      %v4914 = vadd.f32 %v4517, %v4836
      %v4915 = vadd.f32 %v4518, %v4839
      %v4916 = vadd.f32 %v4519, %v4841
      %v4917 = vadd.f32 %v4520, %v4844
      %v4918 = vadd.f32 %v4521, %v4846
      %v4919 = vadd.f32 %v4522, %v4849
      %v4920 = vadd.f32 %v4523, %v4851
      %v4921 = vadd.f32 %v4524, %v4854
      %v4922 = vadd.f32 %v4525, %v4856
      %v4923 = vadd.f32 %v4526, %v4859
      %v4924 = vadd.f32 %v4527, %v4861
      %v4925 = vadd.f32 %v4528, %v4864
      %v4926 = vadd.f32 %v4529, %v4866
      %v4927 = vadd.f32 %v4530, %v4869
      %v4928 = vadd.f32 %v4531, %v4871
      %v4929 = vadd.f32 %v4532, %v4874
      %v4930 = vadd.f32 %v4533, %v4876
      %v4931 = vadd.f32 %v4534, %v4879
      %v4932 = vadd.f32 %v4535, %v4881
      %v4933 = vadd.f32 %v4536, %v4884
      %v4934 = vadd.f32 %v4537, %v4886
      %v4935 = vadd.f32 %v4538, %v4889
      %v4936 = vadd.f32 %v4539, %v4891
      %v4937 = vadd.f32 %v4540, %v4894
      %v4938 = vadd.f32 %v4541, %v4896
      %v4939 = vadd.f32 %v4542, %v4899
      %v4940 = vadd.f32 %v4543, %v4901
      %v4941 = vadd.f32 %v4544, %v4904
      %v4942 = vadd.f32 %v4545, %v4906
      %v4943 = vadd.f32 %v4546, %v4909
      %v4944 = vadd.f32 %v4547, %v4911
      %v4945 = vpack.c.bf16 %v4913, %v4913
      %v4946 = vpack.c.bf16 %v4914, %v4914
      %v4947 = vpack.c.bf16 %v4915, %v4915
      %v4948 = vpack.c.bf16 %v4916, %v4916
      %v4949 = vpack.c.bf16 %v4917, %v4917
      %v4950 = vpack.c.bf16 %v4918, %v4918
      %v4951 = vpack.c.bf16 %v4919, %v4919
      %v4952 = vpack.c.bf16 %v4920, %v4920
      %v4953 = vpack.c.bf16 %v4921, %v4921
      %v4954 = vpack.c.bf16 %v4922, %v4922
      %v4955 = vpack.c.bf16 %v4923, %v4923
      %v4956 = vpack.c.bf16 %v4924, %v4924
      %v4957 = vpack.c.bf16 %v4925, %v4925
      %v4958 = vpack.c.bf16 %v4926, %v4926
      %v4959 = vpack.c.bf16 %v4927, %v4927
      %v4960 = vpack.c.bf16 %v4928, %v4928
      %v4961 = vpack.c.bf16 %v4929, %v4929
      %v4962 = vpack.c.bf16 %v4930, %v4930
      %v4963 = vpack.c.bf16 %v4931, %v4931
      %v4964 = vpack.c.bf16 %v4932, %v4932
      %v4965 = vpack.c.bf16 %v4933, %v4933
      %v4966 = vpack.c.bf16 %v4934, %v4934
      %v4967 = vpack.c.bf16 %v4935, %v4935
      %v4968 = vpack.c.bf16 %v4936, %v4936
      %v4969 = vpack.c.bf16 %v4937, %v4937
      %v4970 = vpack.c.bf16 %v4938, %v4938
      %v4971 = vpack.c.bf16 %v4939, %v4939
      %v4972 = vpack.c.bf16 %v4940, %v4940
      %v4973 = vpack.c.bf16 %v4941, %v4941
      %v4974 = vpack.c.bf16 %v4942, %v4942
      %v4975 = vpack.c.bf16 %v4943, %v4943
      %v4976 = vpack.c.bf16 %v4944, %v4944
      %4977 = vst.msk [vmem:[%s262] sm:$0xf] %vm270, %v4945
      %4978 = vst.msk [vmem:[%s262 + $0x4] sm:$0xf] %vm270, %v4946
      %4979 = vst.msk [vmem:[%s262 + $0x8] sm:$0xf] %vm270, %v4947
      %4980 = vst.msk [vmem:[%s262 + $0xc] sm:$0xf] %vm270, %v4948
      %4981 = vst.msk [vmem:[%s262 + $0x10] sm:$0xf] %vm270, %v4949
      %4982 = vst.msk [vmem:[%s262 + $0x14] sm:$0xf] %vm270, %v4950
      %4983 = vst.msk [vmem:[%s262 + $0x18] sm:$0xf] %vm270, %v4951
      %4984 = vst.msk [vmem:[%s262 + $0x1c] sm:$0xf] %vm270, %v4952
      %4985 = vst.msk [vmem:[%s262 + $0x20] sm:$0xf] %vm270, %v4953
      %4986 = vst.msk [vmem:[%s262 + $0x24] sm:$0xf] %vm270, %v4954
      %4987 = vst.msk [vmem:[%s262 + $0x28] sm:$0xf] %vm270, %v4955
      %4988 = vst.msk [vmem:[%s262 + $0x2c] sm:$0xf] %vm270, %v4956
      %4989 = vst.msk [vmem:[%s262 + $0x30] sm:$0xf] %vm270, %v4957
      %4990 = vst.msk [vmem:[%s262 + $0x34] sm:$0xf] %vm270, %v4958
      %4991 = vst.msk [vmem:[%s262 + $0x38] sm:$0xf] %vm270, %v4959
      %4992 = vst.msk [vmem:[%s262 + $0x3c] sm:$0xf] %vm270, %v4960
      %4993 = vst.msk [vmem:[%s262 + $0x40] sm:$0xf] %vm270, %v4961
      %4994 = vst.msk [vmem:[%s262 + $0x44] sm:$0xf] %vm270, %v4962
      %4995 = vst.msk [vmem:[%s262 + $0x48] sm:$0xf] %vm270, %v4963
      %4996 = vst.msk [vmem:[%s262 + $0x4c] sm:$0xf] %vm270, %v4964
      %4997 = vst.msk [vmem:[%s262 + $0x50] sm:$0xf] %vm270, %v4965
      %4998 = vst.msk [vmem:[%s262 + $0x54] sm:$0xf] %vm270, %v4966
      %4999 = vst.msk [vmem:[%s262 + $0x58] sm:$0xf] %vm270, %v4967
      %5000 = vst.msk [vmem:[%s262 + $0x5c] sm:$0xf] %vm270, %v4968
      %5001 = vst.msk [vmem:[%s262 + $0x60] sm:$0xf] %vm270, %v4969
      %5002 = vst.msk [vmem:[%s262 + $0x64] sm:$0xf] %vm270, %v4970
      %5003 = vst.msk [vmem:[%s262 + $0x68] sm:$0xf] %vm270, %v4971
      %5004 = vst.msk [vmem:[%s262 + $0x6c] sm:$0xf] %vm270, %v4972
      %5005 = vst.msk [vmem:[%s262 + $0x70] sm:$0xf] %vm270, %v4973
      %5006 = vst.msk [vmem:[%s262 + $0x74] sm:$0xf] %vm270, %v4974
      %5007 = vst.msk [vmem:[%s262 + $0x78] sm:$0xf] %vm270, %v4975
      %5008 = vst.msk [vmem:[%s262 + $0x7c] sm:$0xf] %vm270, %v4976
      %v5009 = vsel %vm1518, %v4913, 0.0
      %v5010 = vsel %vm1518, %v4914, 0.0
      %v5011 = vadd.f32 %v5009, %v5010
      %v5012 = vsel %vm1518, %v4915, 0.0
      %v5013 = vadd.f32 %v5011, %v5012
      %v5014 = vsel %vm1518, %v4916, 0.0
      %v5015 = vadd.f32 %v5013, %v5014
      %v5016 = vsel %vm1518, %v4917, 0.0
      %v5017 = vadd.f32 %v5015, %v5016
      %v5018 = vsel %vm1518, %v4918, 0.0
      %v5019 = vadd.f32 %v5017, %v5018
      %v5020 = vsel %vm1518, %v4919, 0.0
      %v5021 = vadd.f32 %v5019, %v5020
      %v5022 = vsel %vm1518, %v4920, 0.0
      %v5023 = vadd.f32 %v5021, %v5022
      %v5024 = vsel %vm1518, %v4921, 0.0
      %v5025 = vadd.f32 %v5023, %v5024
      %v5026 = vsel %vm1518, %v4922, 0.0
      %v5027 = vadd.f32 %v5025, %v5026
      %v5028 = vsel %vm1518, %v4923, 0.0
      %v5029 = vadd.f32 %v5027, %v5028
      %v5030 = vsel %vm1518, %v4924, 0.0
      %v5031 = vadd.f32 %v5029, %v5030
      %v5032 = vsel %vm1518, %v4925, 0.0
      %v5033 = vadd.f32 %v5031, %v5032
      %v5034 = vsel %vm1518, %v4926, 0.0
      %v5035 = vadd.f32 %v5033, %v5034
      %v5036 = vsel %vm1518, %v4927, 0.0
      %v5037 = vadd.f32 %v5035, %v5036
      %v5038 = vsel %vm1518, %v4928, 0.0
      %v5039 = vadd.f32 %v5037, %v5038
      %v5040 = vsel %vm1518, %v4929, 0.0
      %v5041 = vadd.f32 %v5039, %v5040
      %v5042 = vsel %vm1518, %v4930, 0.0
      %v5043 = vadd.f32 %v5041, %v5042
      %v5044 = vsel %vm1518, %v4931, 0.0
      %v5045 = vadd.f32 %v5043, %v5044
      %v5046 = vsel %vm1518, %v4932, 0.0
      %v5047 = vadd.f32 %v5045, %v5046
      %v5048 = vsel %vm1518, %v4933, 0.0
      %v5049 = vadd.f32 %v5047, %v5048
      %v5050 = vsel %vm1518, %v4934, 0.0
      %v5051 = vadd.f32 %v5049, %v5050
      %v5052 = vsel %vm1518, %v4935, 0.0
      %v5053 = vadd.f32 %v5051, %v5052
      %v5054 = vsel %vm1518, %v4936, 0.0
      %v5055 = vadd.f32 %v5053, %v5054
      %v5056 = vsel %vm1518, %v4937, 0.0
      %v5057 = vadd.f32 %v5055, %v5056
      %v5058 = vsel %vm1518, %v4938, 0.0
      %v5059 = vadd.f32 %v5057, %v5058
      %v5060 = vsel %vm1518, %v4939, 0.0
      %v5061 = vadd.f32 %v5059, %v5060
      %v5062 = vsel %vm1518, %v4940, 0.0
      %v5063 = vadd.f32 %v5061, %v5062
      %v5064 = vsel %vm1518, %v4941, 0.0
      %v5065 = vadd.f32 %v5063, %v5064
      %v5066 = vsel %vm1518, %v4942, 0.0
      %v5067 = vadd.f32 %v5065, %v5066
      %v5068 = vsel %vm1518, %v4943, 0.0
      %v5069 = vadd.f32 %v5067, %v5068
      %v5070 = vsel %vm1518, %v4944, 0.0
      %v5071 = vadd.f32 %v5069, %v5070
      %v5072 = vrot.slane %v5071, 4
      %v5073 = vadd.f32 %v5071, %v5072
      %v5074 = vrot.slane %v5073, 2
      %v5075 = vadd.f32 %v5073, %v5074
      %v5076 = vrot.slane %v5075, 1
      %v5077 = vadd.f32 %v5075, %v5076
      %5078 = vst.msk [vmem:[%s265] sm:$0x1] %vm273, %v5077
      %v5079 = vmul.f32 %v4913, %v4913
      %v5080 = vmul.f32 %v4914, %v4914
      %v5081 = vmul.f32 %v4915, %v4915
      %v5082 = vmul.f32 %v4916, %v4916
      %v5083 = vmul.f32 %v4917, %v4917
      %v5084 = vmul.f32 %v4918, %v4918
      %v5085 = vmul.f32 %v4919, %v4919
      %v5086 = vmul.f32 %v4920, %v4920
      %v5087 = vmul.f32 %v4921, %v4921
      %v5088 = vmul.f32 %v4922, %v4922
      %v5089 = vmul.f32 %v4923, %v4923
      %v5090 = vmul.f32 %v4924, %v4924
      %v5091 = vmul.f32 %v4925, %v4925
      %v5092 = vmul.f32 %v4926, %v4926
      %v5093 = vmul.f32 %v4927, %v4927
      %v5094 = vmul.f32 %v4928, %v4928
      %v5095 = vmul.f32 %v4929, %v4929
      %v5096 = vmul.f32 %v4930, %v4930
      %v5097 = vmul.f32 %v4931, %v4931
      %v5098 = vmul.f32 %v4932, %v4932
      %v5099 = vmul.f32 %v4933, %v4933
      %v5100 = vmul.f32 %v4934, %v4934
      %v5101 = vmul.f32 %v4935, %v4935
      %v5102 = vmul.f32 %v4936, %v4936
      %v5103 = vmul.f32 %v4937, %v4937
      %v5104 = vmul.f32 %v4938, %v4938
      %v5105 = vmul.f32 %v4939, %v4939
      %v5106 = vmul.f32 %v4940, %v4940
      %v5107 = vmul.f32 %v4941, %v4941
      %v5108 = vmul.f32 %v4942, %v4942
      %v5109 = vmul.f32 %v4943, %v4943
      %v5110 = vmul.f32 %v4944, %v4944
      %v5111 = vsel %vm1518, %v5079, 0.0
      %v5112 = vsel %vm1518, %v5080, 0.0
      %v5113 = vadd.f32 %v5111, %v5112
      %v5114 = vsel %vm1518, %v5081, 0.0
      %v5115 = vadd.f32 %v5113, %v5114
      %v5116 = vsel %vm1518, %v5082, 0.0
      %v5117 = vadd.f32 %v5115, %v5116
      %v5118 = vsel %vm1518, %v5083, 0.0
      %v5119 = vadd.f32 %v5117, %v5118
      %v5120 = vsel %vm1518, %v5084, 0.0
      %v5121 = vadd.f32 %v5119, %v5120
      %v5122 = vsel %vm1518, %v5085, 0.0
      %v5123 = vadd.f32 %v5121, %v5122
      %v5124 = vsel %vm1518, %v5086, 0.0
      %v5125 = vadd.f32 %v5123, %v5124
      %v5126 = vsel %vm1518, %v5087, 0.0
      %v5127 = vadd.f32 %v5125, %v5126
      %v5128 = vsel %vm1518, %v5088, 0.0
      %v5129 = vadd.f32 %v5127, %v5128
      %v5130 = vsel %vm1518, %v5089, 0.0
      %v5131 = vadd.f32 %v5129, %v5130
      %v5132 = vsel %vm1518, %v5090, 0.0
      %v5133 = vadd.f32 %v5131, %v5132
      %v5134 = vsel %vm1518, %v5091, 0.0
      %v5135 = vadd.f32 %v5133, %v5134
      %v5136 = vsel %vm1518, %v5092, 0.0
      %v5137 = vadd.f32 %v5135, %v5136
      %v5138 = vsel %vm1518, %v5093, 0.0
      %v5139 = vadd.f32 %v5137, %v5138
      %v5140 = vsel %vm1518, %v5094, 0.0
      %v5141 = vadd.f32 %v5139, %v5140
      %v5142 = vsel %vm1518, %v5095, 0.0
      %v5143 = vadd.f32 %v5141, %v5142
      %v5144 = vsel %vm1518, %v5096, 0.0
      %v5145 = vadd.f32 %v5143, %v5144
      %v5146 = vsel %vm1518, %v5097, 0.0
      %v5147 = vadd.f32 %v5145, %v5146
      %v5148 = vsel %vm1518, %v5098, 0.0
      %v5149 = vadd.f32 %v5147, %v5148
      %v5150 = vsel %vm1518, %v5099, 0.0
      %v5151 = vadd.f32 %v5149, %v5150
      %v5152 = vsel %vm1518, %v5100, 0.0
      %v5153 = vadd.f32 %v5151, %v5152
      %v5154 = vsel %vm1518, %v5101, 0.0
      %v5155 = vadd.f32 %v5153, %v5154
      %v5156 = vsel %vm1518, %v5102, 0.0
      %v5157 = vadd.f32 %v5155, %v5156
      %v5158 = vsel %vm1518, %v5103, 0.0
      %v5159 = vadd.f32 %v5157, %v5158
      %v5160 = vsel %vm1518, %v5104, 0.0
      %v5161 = vadd.f32 %v5159, %v5160
      %v5162 = vsel %vm1518, %v5105, 0.0
      %v5163 = vadd.f32 %v5161, %v5162
      %v5164 = vsel %vm1518, %v5106, 0.0
      %v5165 = vadd.f32 %v5163, %v5164
      %v5166 = vsel %vm1518, %v5107, 0.0
      %v5167 = vadd.f32 %v5165, %v5166
      %v5168 = vsel %vm1518, %v5108, 0.0
      %v5169 = vadd.f32 %v5167, %v5168
      %v5170 = vsel %vm1518, %v5109, 0.0
      %v5171 = vadd.f32 %v5169, %v5170
      %v5172 = vsel %vm1518, %v5110, 0.0
      %v5173 = vadd.f32 %v5171, %v5172
      %v5174 = vrot.slane %v5173, 4
      %v5175 = vadd.f32 %v5173, %v5174
      %v5176 = vrot.slane %v5175, 2
      %v5177 = vadd.f32 %v5175, %v5176
      %v5178 = vrot.slane %v5177, 1
      %v5179 = vadd.f32 %v5177, %v5178
      %5180 = vst.msk [vmem:[%s268] sm:$0x1] %vm273, %v5179
      %p5181 = scmp.lt.s32.totalorder %s18, 1
      %s5182 = scalar_select %p5181, %s18, 1
      %s5183 = smul.addr %s5182, 32
      %s5184 = smul.addr %s5183, 4
      %s5185 = scalar_lea.vmem %s4, %s5184
      %p5186 = scmp.lt.s32.totalorder %s18, 1
      %s5187 = scalar_select %p5186, %s18, 1
      %s5188 = scalar_lea.vmem %s5, %s5187
      %p5189 = scmp.lt.s32.totalorder %s18, 1
      %s5190 = scalar_select %p5189, %s18, 1
      %s5191 = scalar_lea.vmem %s6, %s5190
      // Predicated region
      $region37: #{resblock_forward.4} parent=35 // pred_check
        %p5192 = pneg %p125
      $region38: #{resblock_forward.4} parent=35 // pred_check_branch
        %5194 = sbr.rel (%p5192) target = $region40
      $region39: #{resblock_forward.4} parent=35 // pred_region
        _
      $region40: #{resblock_forward.4} parent=35 // pred_fallthru
        _
      // Predicated region
      $region41: #{resblock_forward.4} parent=35 // pred_check
        %p5195 = pneg %p151
      $region42: #{resblock_forward.4} parent=35 // pred_check_branch
        %5197 = sbr.rel (%p5195) target = $region44
      $region43: #{resblock_forward.4} parent=35 // pred_region
        _
      $region44: #{resblock_forward.4} parent=35 // pred_fallthru
        _
      // Predicated region
      $region45: #{resblock_forward.4} parent=35 // pred_check
        %p5198 = pneg %p177
      $region46: #{resblock_forward.4} parent=35 // pred_check_branch
        %5200 = sbr.rel (%p5198) target = $region48
      $region47: #{resblock_forward.4} parent=35 // pred_region
        _
      $region48: #{resblock_forward.4} parent=35 // pred_fallthru
        _
    $region36: #{resblock_forward.4} parent=5 // pred_fallthru
      _
    %p5201 = scmp.le.s32.totalorder 2, %s13
    // Predicated region
    $region49: #{resblock_forward.4} parent=5 // pred_check
      %p5202 = pneg %p5201
    $region50: #{resblock_forward.4} parent=5 // pred_check_branch
      %5204 = sbr.rel (%p5202) target = $region52
    $region51: #{resblock_forward.4} parent=5 // pred_region
      %s5205 = ssub.s32 %s13, 2
      // Predicated region
      $region53: #{resblock_forward.4} parent=51 // pred_check
        %p5206 = pneg %p131
      $region54: #{resblock_forward.4} parent=51 // pred_check_branch
        %5208 = sbr.rel (%p5206) target = $region56
      $region55: #{resblock_forward.4} parent=51 // pred_region
        %p5209 = scmp.lt.s32.totalorder %s19, 1
        %s5210 = scalar_select %p5209, %s19, 1
        %s5211 = smul.addr %s5210, 32
        %s5212 = smul.addr %s5211, 4
        %s5213 = scalar_lea.vmem %s4, %s5212
      $region56: #{resblock_forward.4} parent=51 // pred_fallthru
        _
      // Predicated region
      $region57: #{resblock_forward.4} parent=51 // pred_check
        %p5214 = pneg %p157
      $region58: #{resblock_forward.4} parent=51 // pred_check_branch
        %5216 = sbr.rel (%p5214) target = $region60
      $region59: #{resblock_forward.4} parent=51 // pred_region
        %p5217 = scmp.lt.s32.totalorder %s19, 1
        %s5218 = scalar_select %p5217, %s19, 1
        %s5219 = scalar_lea.vmem %s5, %s5218
      $region60: #{resblock_forward.4} parent=51 // pred_fallthru
        _
      // Predicated region
      $region61: #{resblock_forward.4} parent=51 // pred_check
        %p5220 = pneg %p183
      $region62: #{resblock_forward.4} parent=51 // pred_check_branch
        %5222 = sbr.rel (%p5220) target = $region64
      $region63: #{resblock_forward.4} parent=51 // pred_region
        %p5223 = scmp.lt.s32.totalorder %s19, 1
        %s5224 = scalar_select %p5223, %s19, 1
        %s5225 = scalar_lea.vmem %s6, %s5224
      $region64: #{resblock_forward.4} parent=51 // pred_fallthru
        _
    $region52: #{resblock_forward.4} parent=5 // pred_fallthru
      _
  $region6: #{resblock_forward.4} parent=0 // loop_footer
    %s17 = sadd.s32 1, %s13
  $region7: #{resblock_forward.4} parent=0 // loop_footer_branch
    %12 = sbr.rel target = $region3
  $region8: #{resblock_forward.4} parent=0 // loop_exit
    _

// kernel: resblock_forward.3
$region0: #{resblock_forward.3}
  #allocation0 [shape = 'u32[]', space=smem, size = 0x4, offset = 0x4, fixed_abs, tag = 'smem constant byte address 0x4 - core index']
  #allocation1 [shape = 'u32[72,128]{1,0:T(1,128)}', space=vmem, size = 0x9000, scoped, tag = 'internal scratch']
  #allocation2 [shape = 'bf16[18,18,4]{2,1,0:T(8,128)(2,1)}', space=vmem, size = 0x1b000, scoped, tag = 'scratch operand']
  %s0 = inlined_call_operand.vmem [shape: bf16[2,16,16,4], index: 0, kind: input, shape index: {}]
  %s1 = inlined_call_operand.vmem [shape: f32[1,4], index: 1, kind: input, shape index: {}]
  %s2 = inlined_call_operand.vmem [shape: f32[1,4], index: 2, kind: input, shape index: {}]
  %s3 = inlined_call_operand.vmem [shape: bf16[3,12,4], index: 3, kind: input, shape index: {}]
  %s4 = inlined_call_operand.vmem [shape: bf16[2,16,16,4], index: 4, kind: output, shape index: {0}]
  %s5 = inlined_call_operand.vmem [shape: f32[2,1,4], index: 5, kind: output, shape index: {1}]
  %s6 = inlined_call_operand.vmem [shape: f32[2,1,4], index: 6, kind: output, shape index: {2}]
  %7 = xla_tuple %s4, %s5, %s6
  %s8 = sld [smem:[#allocation0]]
  $region65: #{resblock_forward.3} parent=0
    _
  %s10 = ssub.s32 1, %s8
  %s11 = scalar_select 0, %s10, %s8
  loop: start=0, step=1, limit=4
  $region2: #{resblock_forward.3} parent=0 // loop_pre_header
    _
  $region3: #{resblock_forward.3} parent=0 // loop_header
    %s13 = sphi 0, %s17
    %p14 = scmp.ge.s32.totalorder %s13, 4
    %s23 = sphi 0, %s25
    %s26 = sphi 0, %s23
    %s27 = sphi 0, %s26
    %s43 = sphi 0, %s27
    %s47 = sphi 0, %s47
    %s49 = sphi 0, %s47
    %s50 = sphi 0, %s49
    %s64 = sphi 0, %s50
    %s68 = sphi 0, %s68
    %s70 = sphi 0, %s68
    %s71 = sphi 0, %s70
    %s85 = sphi 0, %s71
    %s89 = sphi 0, %s89
    %s91 = sphi 0, %s89
    %s92 = sphi 0, %s91
    %s106 = sphi 0, %s92
    %s112 = sphi 0, %s114
    %s115 = sphi 0, %s112
    %s116 = sphi 0, %s115
    %s132 = sphi 0, %s116
    %s138 = sphi 0, %s140
    %s141 = sphi 0, %s138
    %s142 = sphi 0, %s141
    %s158 = sphi 0, %s142
    %s164 = sphi 0, %s166
    %s167 = sphi 0, %s164
    %s168 = sphi 0, %s167
    %s184 = sphi 0, %s168
  $region4: #{resblock_forward.3} parent=0 // loop_header_branch
    %16 = sbr.rel (%p14) target = $region8
  $region5: #{resblock_forward.3} parent=0 // loop_body
    %s18 = ssub.s32 %s13, 1
    %s19 = ssub.s32 %s13, 2
    %s20 = sadd.s32 %s13, 1
    %s21 = ssub.s32 %s13, %s20
    %p22 = scmp.eq.s32.totalorder %s21, 0
    %s24 = sadd.s32 %s23, 1
    %s25 = scalar_select %p22, %s23, %s24
    %p28 = pneg %p22
    %p29 = scmp.eq.s32.totalorder %s13, 1
    %p30 = por %p28, %p29
    %p31 = scmp.ne.s32.totalorder %s23, %s26
    %p32 = scmp.eq.s32.totalorder %s13, 0
    %p33 = por %p31, %p32
    %p34 = scmp.ne.s32.totalorder %s23, %s26
    %p35 = scmp.eq.s32.totalorder %s18, 1
    %p36 = por %p34, %p35
    %p37 = scmp.ne.s32.totalorder %s26, %s27
    %p38 = scmp.eq.s32.totalorder %s18, 0
    %p39 = por %p37, %p38
    %p40 = scmp.ne.s32.totalorder %s26, %s27
    %p41 = scmp.eq.s32.totalorder %s19, 1
    %p42 = por %p40, %p41
    %p44 = scmp.ne.s32.totalorder %s27, %s43
    %p45 = scmp.eq.s32.totalorder %s19, 0
    %p46 = por %p44, %p45
    %s48 = sadd.s32 %s47, 1
    %p51 = scmp.eq.s32.totalorder %s13, 1
    %p52 = scmp.ne.s32.totalorder %s47, %s49
    %p53 = scmp.eq.s32.totalorder %s13, 0
    %p54 = por %p52, %p53
    %p55 = scmp.ne.s32.totalorder %s47, %s49
    %p56 = scmp.eq.s32.totalorder %s18, 1
    %p57 = por %p55, %p56
    %p58 = scmp.ne.s32.totalorder %s49, %s50
    %p59 = scmp.eq.s32.totalorder %s18, 0
    %p60 = por %p58, %p59
    %p61 = scmp.ne.s32.totalorder %s49, %s50
    %p62 = scmp.eq.s32.totalorder %s19, 1
    %p63 = por %p61, %p62
    %p65 = scmp.ne.s32.totalorder %s50, %s64
    %p66 = scmp.eq.s32.totalorder %s19, 0
    %p67 = por %p65, %p66
    %s69 = sadd.s32 %s68, 1
    %p72 = scmp.eq.s32.totalorder %s13, 1
    %p73 = scmp.ne.s32.totalorder %s68, %s70
    %p74 = scmp.eq.s32.totalorder %s13, 0
    %p75 = por %p73, %p74
    %p76 = scmp.ne.s32.totalorder %s68, %s70
    %p77 = scmp.eq.s32.totalorder %s18, 1
    %p78 = por %p76, %p77
    %p79 = scmp.ne.s32.totalorder %s70, %s71
    %p80 = scmp.eq.s32.totalorder %s18, 0
    %p81 = por %p79, %p80
    %p82 = scmp.ne.s32.totalorder %s70, %s71
    %p83 = scmp.eq.s32.totalorder %s19, 1
    %p84 = por %p82, %p83
    %p86 = scmp.ne.s32.totalorder %s71, %s85
    %p87 = scmp.eq.s32.totalorder %s19, 0
    %p88 = por %p86, %p87
    %s90 = sadd.s32 %s89, 1
    %p93 = scmp.eq.s32.totalorder %s13, 1
    %p94 = scmp.ne.s32.totalorder %s89, %s91
    %p95 = scmp.eq.s32.totalorder %s13, 0
    %p96 = por %p94, %p95
    %p97 = scmp.ne.s32.totalorder %s89, %s91
    %p98 = scmp.eq.s32.totalorder %s18, 1
    %p99 = por %p97, %p98
    %p100 = scmp.ne.s32.totalorder %s91, %s92
    %p101 = scmp.eq.s32.totalorder %s18, 0
    %p102 = por %p100, %p101
    %p103 = scmp.ne.s32.totalorder %s91, %s92
    %p104 = scmp.eq.s32.totalorder %s19, 1
    %p105 = por %p103, %p104
    %p107 = scmp.ne.s32.totalorder %s92, %s106
    %p108 = scmp.eq.s32.totalorder %s19, 0
    %p109 = por %p107, %p108
    %s110 = ssub.s32 %s13, %s20
    %p111 = scmp.eq.s32.totalorder %s110, 0
    %s113 = sadd.s32 %s112, 1
    %s114 = scalar_select %p111, %s112, %s113
    %p117 = pneg %p111
    %p118 = scmp.eq.s32.totalorder %s13, 1
    %p119 = por %p117, %p118
    %p120 = scmp.ne.s32.totalorder %s112, %s115
    %p121 = scmp.eq.s32.totalorder %s13, 0
    %p122 = por %p120, %p121
    %p123 = scmp.ne.s32.totalorder %s112, %s115
    %p124 = scmp.eq.s32.totalorder %s18, 1
    %p125 = por %p123, %p124
    %p126 = scmp.ne.s32.totalorder %s115, %s116
    %p127 = scmp.eq.s32.totalorder %s18, 0
    %p128 = por %p126, %p127
    %p129 = scmp.ne.s32.totalorder %s115, %s116
    %p130 = scmp.eq.s32.totalorder %s19, 1
    %p131 = por %p129, %p130
    %p133 = scmp.ne.s32.totalorder %s116, %s132
    %p134 = scmp.eq.s32.totalorder %s19, 0
    %p135 = por %p133, %p134
    %s136 = ssub.s32 %s13, %s20
    %p137 = scmp.eq.s32.totalorder %s136, 0
    %s139 = sadd.s32 %s138, 1
    %s140 = scalar_select %p137, %s138, %s139
    %p143 = pneg %p137
    %p144 = scmp.eq.s32.totalorder %s13, 1
    %p145 = por %p143, %p144
    %p146 = scmp.ne.s32.totalorder %s138, %s141
    %p147 = scmp.eq.s32.totalorder %s13, 0
    %p148 = por %p146, %p147
    %p149 = scmp.ne.s32.totalorder %s138, %s141
    %p150 = scmp.eq.s32.totalorder %s18, 1
    %p151 = por %p149, %p150
    %p152 = scmp.ne.s32.totalorder %s141, %s142
    %p153 = scmp.eq.s32.totalorder %s18, 0
    %p154 = por %p152, %p153
    %p155 = scmp.ne.s32.totalorder %s141, %s142
    %p156 = scmp.eq.s32.totalorder %s19, 1
    %p157 = por %p155, %p156
    %p159 = scmp.ne.s32.totalorder %s142, %s158
    %p160 = scmp.eq.s32.totalorder %s19, 0
    %p161 = por %p159, %p160
    %s162 = ssub.s32 %s13, %s20
    %p163 = scmp.eq.s32.totalorder %s162, 0
    %s165 = sadd.s32 %s164, 1
    %s166 = scalar_select %p163, %s164, %s165
    %p169 = pneg %p163
    %p170 = scmp.eq.s32.totalorder %s13, 1
    %p171 = por %p169, %p170
    %p172 = scmp.ne.s32.totalorder %s164, %s167
    %p173 = scmp.eq.s32.totalorder %s13, 0
    %p174 = por %p172, %p173
    %p175 = scmp.ne.s32.totalorder %s164, %s167
    %p176 = scmp.eq.s32.totalorder %s18, 1
    %p177 = por %p175, %p176
    %p178 = scmp.ne.s32.totalorder %s167, %s168
    %p179 = scmp.eq.s32.totalorder %s18, 0
    %p180 = por %p178, %p179
    %p181 = scmp.ne.s32.totalorder %s167, %s168
    %p182 = scmp.eq.s32.totalorder %s19, 1
    %p183 = por %p181, %p182
    %p185 = scmp.ne.s32.totalorder %s168, %s184
    %p186 = scmp.eq.s32.totalorder %s19, 0
    %p187 = por %p185, %p186
    %p188 = scmp.le.s32.totalorder 1, %s13
    %p189 = scmp.lt.s32.totalorder %s13, 3
    %p190 = pnand %p188, %p189
    %p191 = pneg %p190
    // Predicated region
    $region9: #{resblock_forward.3} parent=5 // pred_check
      _
    $region10: #{resblock_forward.3} parent=5 // pred_check_branch
      %193 = sbr.rel (%p190) target = $region12
    $region11: #{resblock_forward.3} parent=5 // pred_region
      %s194 = ssub.s32 %s13, 1
      // Predicated region
      $region13: #{resblock_forward.3} parent=11 // pred_check
        %p195 = pneg %p60
      $region14: #{resblock_forward.3} parent=11 // pred_check_branch
        %197 = sbr.rel (%p195) target = $region16
      $region15: #{resblock_forward.3} parent=11 // pred_region
        _
      $region16: #{resblock_forward.3} parent=11 // pred_fallthru
        _
      // Predicated region
      $region17: #{resblock_forward.3} parent=11 // pred_check
        %p198 = pneg %p81
      $region18: #{resblock_forward.3} parent=11 // pred_check_branch
        %200 = sbr.rel (%p198) target = $region20
      $region19: #{resblock_forward.3} parent=11 // pred_region
        _
      $region20: #{resblock_forward.3} parent=11 // pred_fallthru
        _
      // Predicated region
      $region21: #{resblock_forward.3} parent=11 // pred_check
        %p201 = pneg %p102
      $region22: #{resblock_forward.3} parent=11 // pred_check_branch
        %203 = sbr.rel (%p201) target = $region24
      $region23: #{resblock_forward.3} parent=11 // pred_region
        _
      $region24: #{resblock_forward.3} parent=11 // pred_fallthru
        _
    $region12: #{resblock_forward.3} parent=5 // pred_fallthru
      _
    %p204 = scmp.lt.s32.totalorder %s13, 2
    // Predicated region
    $region25: #{resblock_forward.3} parent=5 // pred_check
      %p205 = pneg %p204
    $region26: #{resblock_forward.3} parent=5 // pred_check_branch
      %207 = sbr.rel (%p205) target = $region28
    $region27: #{resblock_forward.3} parent=5 // pred_region
      // Predicated region
      $region29: #{resblock_forward.3} parent=27 // pred_check
        %p208 = pneg %p33
      $region30: #{resblock_forward.3} parent=27 // pred_check_branch
        %210 = sbr.rel (%p208) target = $region32
      $region31: #{resblock_forward.3} parent=27 // pred_region
        %p211 = scmp.lt.s32.totalorder %s13, 1
        %s212 = scalar_select %p211, %s13, 1
        %s213 = smul.addr %s212, 32
        %s214 = smul.addr %s213, 4
        %s215 = scalar_lea.vmem %s0, %s214
      $region32: #{resblock_forward.3} parent=27 // pred_fallthru
        _
    $region28: #{resblock_forward.3} parent=5 // pred_fallthru
      _
    %p216 = scmp.le.s32.totalorder 1, %s13
    %p217 = scmp.lt.s32.totalorder %s13, 3
    %p218 = pnand %p216, %p217
    %p219 = pneg %p218
    // Predicated region
    $region33: #{resblock_forward.3} parent=5 // pred_check
      _
    $region34: #{resblock_forward.3} parent=5 // pred_check_branch
      %221 = sbr.rel (%p218) target = $region36
    $region35: #{resblock_forward.3} parent=5 // pred_region
      %s222 = ssub.s32 %s13, 1
      %p223 = scmp.lt.s32.totalorder %s18, 1
      %s224 = scalar_select %p223, %s18, 1
      %s225 = smul.addr %s224, 32
      %s226 = smul.addr %s225, 4
      %s227 = scalar_lea.vmem %s0, %s226
      %p228 = pneg %p39
      %p229 = pneg %p36
      %p230 = pneg %p60
      %p231 = pneg %p57
      %p232 = pneg %p81
      %p233 = pneg %p78
      %p234 = pneg %p102
      %p235 = pneg %p99
      %p236 = pneg %p128
      %p237 = pneg %p125
      %p238 = scmp.lt.s32.totalorder %s18, 1
      %s239 = scalar_select %p238, %s18, 1
      %s240 = smul.addr %s239, 32
      %s241 = smul.addr %s240, 4
      %s242 = scalar_lea.vmem %s4, %s241
      %p243 = pneg %p154
      %p244 = pneg %p151
      %p245 = scmp.lt.s32.totalorder %s18, 1
      %s246 = scalar_select %p245, %s18, 1
      %s247 = scalar_lea.vmem %s5, %s246
      %p248 = pneg %p180
      %p249 = pneg %p177
      %p250 = scmp.lt.s32.totalorder %s18, 1
      %s251 = scalar_select %p250, %s18, 1
      %s252 = scalar_lea.vmem %s6, %s251
      %p253 = scmp.lt.s32.totalorder %s18, 1
      %s254 = scalar_select %p253, %s18, 1
      %s255 = smul.addr %s254, 32
      %s256 = smul.addr %s255, 4
      %s257 = scalar_lea.vmem %s0, %s256
      %p258 = scmp.lt.s32.totalorder %s18, 1
      %s259 = scalar_select %p258, %s18, 1
      %s260 = smul.addr %s259, 32
      %s261 = smul.addr %s260, 4
      %s262 = scalar_lea.vmem %s4, %s261
      %p263 = scmp.lt.s32.totalorder %s18, 1
      %s264 = scalar_select %p263, %s18, 1
      %s265 = scalar_lea.vmem %s5, %s264
      %p266 = scmp.lt.s32.totalorder %s18, 1
      %s267 = scalar_select %p266, %s18, 1
      %s268 = scalar_lea.vmem %s6, %s267
      %vm270 = vcmask 27648
      %271 = vst.msk [vmem:[#allocation2] sm:$0xf] %vm270, 0
      %272 = vst.msk [vmem:[#allocation2 + $0x4] sm:$0xf] %vm270, 0
      %vm273 = vcmask 24576
      %274 = vst.msk [vmem:[#allocation2 + $0x8] sm:$0x1] %vm273, 0
      %s275 = scalar_lea.vmem [#allocation2], 204
      %276 = vst.msk [vmem:[%s275] sm:$0xf] %vm270, 0
      %277 = vst.msk [vmem:[%s275 + $0x4] sm:$0xf] %vm270, 0
      %278 = vst.msk [vmem:[%s275 + $0x8] sm:$0x1] %vm273, 0
      %vm279 = vcmask 24576
      %vm280 = vsmask.f32 256
      %vm281 = vmand %vm279, %vm280
      %v282 = vld [vmem:[#allocation2] sm:$0x1]
      %v283 = vsel %vm281, 0, %v282
      %284 = vst [vmem:[#allocation2] sm:$0x1] %v283
      %v285 = vld [vmem:[#allocation2 + $0xc] sm:$0x1]
      %v286 = vsel %vm281, 0, %v285
      %287 = vst [vmem:[#allocation2 + $0xc] sm:$0x1] %v286
      %v288 = vld [vmem:[#allocation2 + $0x18] sm:$0x1]
      %v289 = vsel %vm281, 0, %v288
      %290 = vst [vmem:[#allocation2 + $0x18] sm:$0x1] %v289
      %v291 = vld [vmem:[#allocation2 + $0x24] sm:$0x1]
      %v292 = vsel %vm281, 0, %v291
      %293 = vst [vmem:[#allocation2 + $0x24] sm:$0x1] %v292
      %v294 = vld [vmem:[#allocation2 + $0x30] sm:$0x1]
      %v295 = vsel %vm281, 0, %v294
      %296 = vst [vmem:[#allocation2 + $0x30] sm:$0x1] %v295
      %v297 = vld [vmem:[#allocation2 + $0x3c] sm:$0x1]
      %v298 = vsel %vm281, 0, %v297
      %299 = vst [vmem:[#allocation2 + $0x3c] sm:$0x1] %v298
      %v300 = vld [vmem:[#allocation2 + $0x48] sm:$0x1]
      %v301 = vsel %vm281, 0, %v300
      %302 = vst [vmem:[#allocation2 + $0x48] sm:$0x1] %v301
      %v303 = vld [vmem:[#allocation2 + $0x54] sm:$0x1]
      %v304 = vsel %vm281, 0, %v303
      %305 = vst [vmem:[#allocation2 + $0x54] sm:$0x1] %v304
      %v306 = vld [vmem:[#allocation2 + $0x60] sm:$0x1]
      %v307 = vsel %vm281, 0, %v306
      %308 = vst [vmem:[#allocation2 + $0x60] sm:$0x1] %v307
      %v309 = vld [vmem:[#allocation2 + $0x6c] sm:$0x1]
      %v310 = vsel %vm281, 0, %v309
      %311 = vst [vmem:[#allocation2 + $0x6c] sm:$0x1] %v310
      %v312 = vld [vmem:[#allocation2 + $0x78] sm:$0x1]
      %v313 = vsel %vm281, 0, %v312
      %314 = vst [vmem:[#allocation2 + $0x78] sm:$0x1] %v313
      %v315 = vld [vmem:[#allocation2 + $0x84] sm:$0x1]
      %v316 = vsel %vm281, 0, %v315
      %317 = vst [vmem:[#allocation2 + $0x84] sm:$0x1] %v316
      %v318 = vld [vmem:[#allocation2 + $0x90] sm:$0x1]
      %v319 = vsel %vm281, 0, %v318
      %320 = vst [vmem:[#allocation2 + $0x90] sm:$0x1] %v319
      %v321 = vld [vmem:[#allocation2 + $0x9c] sm:$0x1]
      %v322 = vsel %vm281, 0, %v321
      %323 = vst [vmem:[#allocation2 + $0x9c] sm:$0x1] %v322
      %v324 = vld [vmem:[#allocation2 + $0xa8] sm:$0x1]
      %v325 = vsel %vm281, 0, %v324
      %326 = vst [vmem:[#allocation2 + $0xa8] sm:$0x1] %v325
      %v327 = vld [vmem:[#allocation2 + $0xb4] sm:$0x1]
      %v328 = vsel %vm281, 0, %v327
      %329 = vst [vmem:[#allocation2 + $0xb4] sm:$0x1] %v328
      %v330 = vld [vmem:[#allocation2 + $0xc0] sm:$0x1]
      %v331 = vsel %vm281, 0, %v330
      %332 = vst [vmem:[#allocation2 + $0xc0] sm:$0x1] %v331
      %v333 = vld [vmem:[#allocation2 + $0xcc] sm:$0x1]
      %v334 = vsel %vm281, 0, %v333
      %335 = vst [vmem:[#allocation2 + $0xcc] sm:$0x1] %v334
      %vm336 = vsmask.f32 7938
      %vm337 = vmand %vm279, %vm336
      %v338 = vld [vmem:[#allocation2 + $0x8] sm:$0x1]
      %v339 = vsel %vm337, 0, %v338
      %340 = vst [vmem:[#allocation2 + $0x8] sm:$0x1] %v339
      %v341 = vld [vmem:[#allocation2 + $0x14] sm:$0x1]
      %v342 = vsel %vm337, 0, %v341
      %343 = vst [vmem:[#allocation2 + $0x14] sm:$0x1] %v342
      %v344 = vld [vmem:[#allocation2 + $0x20] sm:$0x1]
      %v345 = vsel %vm337, 0, %v344
      %346 = vst [vmem:[#allocation2 + $0x20] sm:$0x1] %v345
      %v347 = vld [vmem:[#allocation2 + $0x2c] sm:$0x1]
      %v348 = vsel %vm337, 0, %v347
      %349 = vst [vmem:[#allocation2 + $0x2c] sm:$0x1] %v348
      %v350 = vld [vmem:[#allocation2 + $0x38] sm:$0x1]
      %v351 = vsel %vm337, 0, %v350
      %352 = vst [vmem:[#allocation2 + $0x38] sm:$0x1] %v351
      %v353 = vld [vmem:[#allocation2 + $0x44] sm:$0x1]
      %v354 = vsel %vm337, 0, %v353
      %355 = vst [vmem:[#allocation2 + $0x44] sm:$0x1] %v354
      %v356 = vld [vmem:[#allocation2 + $0x50] sm:$0x1]
      %v357 = vsel %vm337, 0, %v356
      %358 = vst [vmem:[#allocation2 + $0x50] sm:$0x1] %v357
      %v359 = vld [vmem:[#allocation2 + $0x5c] sm:$0x1]
      %v360 = vsel %vm337, 0, %v359
      %361 = vst [vmem:[#allocation2 + $0x5c] sm:$0x1] %v360
      %v362 = vld [vmem:[#allocation2 + $0x68] sm:$0x1]
      %v363 = vsel %vm337, 0, %v362
      %364 = vst [vmem:[#allocation2 + $0x68] sm:$0x1] %v363
      %v365 = vld [vmem:[#allocation2 + $0x74] sm:$0x1]
      %v366 = vsel %vm337, 0, %v365
      %367 = vst [vmem:[#allocation2 + $0x74] sm:$0x1] %v366
      %v368 = vld [vmem:[#allocation2 + $0x80] sm:$0x1]
      %v369 = vsel %vm337, 0, %v368
      %370 = vst [vmem:[#allocation2 + $0x80] sm:$0x1] %v369
      %v371 = vld [vmem:[#allocation2 + $0x8c] sm:$0x1]
      %v372 = vsel %vm337, 0, %v371
      %373 = vst [vmem:[#allocation2 + $0x8c] sm:$0x1] %v372
      %v374 = vld [vmem:[#allocation2 + $0x98] sm:$0x1]
      %v375 = vsel %vm337, 0, %v374
      %376 = vst [vmem:[#allocation2 + $0x98] sm:$0x1] %v375
      %v377 = vld [vmem:[#allocation2 + $0xa4] sm:$0x1]
      %v378 = vsel %vm337, 0, %v377
      %379 = vst [vmem:[#allocation2 + $0xa4] sm:$0x1] %v378
      %v380 = vld [vmem:[#allocation2 + $0xb0] sm:$0x1]
      %v381 = vsel %vm337, 0, %v380
      %382 = vst [vmem:[#allocation2 + $0xb0] sm:$0x1] %v381
      %v383 = vld [vmem:[#allocation2 + $0xbc] sm:$0x1]
      %v384 = vsel %vm337, 0, %v383
      %385 = vst [vmem:[#allocation2 + $0xbc] sm:$0x1] %v384
      %v386 = vld [vmem:[#allocation2 + $0xc8] sm:$0x1]
      %v387 = vsel %vm337, 0, %v386
      %388 = vst [vmem:[#allocation2 + $0xc8] sm:$0x1] %v387
      %v389 = vld [vmem:[#allocation2 + $0xd4] sm:$0x1]
      %v390 = vsel %vm337, 0, %v389
      %391 = vst [vmem:[#allocation2 + $0xd4] sm:$0x1] %v390
      %v392 = vld [vmem:[%s257] sm:$0xf]
      %v393 = vld [vmem:[%s257 + $0x4] sm:$0xf]
      %v394 = vld [vmem:[%s257 + $0x8] sm:$0xf]
      %v395 = vld [vmem:[%s257 + $0xc] sm:$0xf]
      %v396 = vld [vmem:[%s257 + $0x10] sm:$0xf]
      %v397 = vld [vmem:[%s257 + $0x14] sm:$0xf]
      %v398 = vld [vmem:[%s257 + $0x18] sm:$0xf]
      %v399 = vld [vmem:[%s257 + $0x1c] sm:$0xf]
      %v400 = vld [vmem:[%s257 + $0x20] sm:$0xf]
      %v401 = vld [vmem:[%s257 + $0x24] sm:$0xf]
      %v402 = vld [vmem:[%s257 + $0x28] sm:$0xf]
      %v403 = vld [vmem:[%s257 + $0x2c] sm:$0xf]
      %v404 = vld [vmem:[%s257 + $0x30] sm:$0xf]
      %v405 = vld [vmem:[%s257 + $0x34] sm:$0xf]
      %v406 = vld [vmem:[%s257 + $0x38] sm:$0xf]
      %v407 = vld [vmem:[%s257 + $0x3c] sm:$0xf]
      %v408 = vld [vmem:[%s257 + $0x40] sm:$0xf]
      %v409 = vld [vmem:[%s257 + $0x44] sm:$0xf]
      %v410 = vld [vmem:[%s257 + $0x48] sm:$0xf]
      %v411 = vld [vmem:[%s257 + $0x4c] sm:$0xf]
      %v412 = vld [vmem:[%s257 + $0x50] sm:$0xf]
      %v413 = vld [vmem:[%s257 + $0x54] sm:$0xf]
      %v414 = vld [vmem:[%s257 + $0x58] sm:$0xf]
      %v415 = vld [vmem:[%s257 + $0x5c] sm:$0xf]
      %v416 = vld [vmem:[%s257 + $0x60] sm:$0xf]
      %v417 = vld [vmem:[%s257 + $0x64] sm:$0xf]
      %v418 = vld [vmem:[%s257 + $0x68] sm:$0xf]
      %v419 = vld [vmem:[%s257 + $0x6c] sm:$0xf]
      %v420 = vld [vmem:[%s257 + $0x70] sm:$0xf]
      %v421 = vld [vmem:[%s257 + $0x74] sm:$0xf]
      %v422 = vld [vmem:[%s257 + $0x78] sm:$0xf]
      %v423 = vld [vmem:[%s257 + $0x7c] sm:$0xf]
      %vm424 = vsmask.f32 4368
      %vm425 = vmor %vm280, %vm424
      %v427 = vshrl.u32 %v392, 16
      %v429 = vrot.slane %v427, 7
      %v430 = vshll.u32 %v392, 16
      %v432 = vor.u32 %v429, %v430
      %v433 = vrot.slane %v429, 4
      %v435 = vshrl.u32 %v393, 16
      %v437 = vrot.slane %v435, 7
      %v438 = vshll.u32 %v393, 16
      %v440 = vor.u32 %v437, %v438
      %v441 = vsel %vm425, %v433, %v440
      %v442 = vrot.slane %v437, 4
      %v444 = vshrl.u32 %v394, 16
      %v446 = vrot.slane %v444, 7
      %v447 = vshll.u32 %v394, 16
      %v449 = vor.u32 %v446, %v447
      %v450 = vrot.slane %v446, 4
      %v452 = vshrl.u32 %v395, 16
      %v454 = vrot.slane %v452, 7
      %v455 = vshll.u32 %v395, 16
      %v457 = vor.u32 %v454, %v455
      %v458 = vsel %vm425, %v450, %v457
      %v459 = vrot.slane %v454, 4
      %v461 = vshrl.u32 %v396, 16
      %v463 = vrot.slane %v461, 7
      %v464 = vshll.u32 %v396, 16
      %v466 = vor.u32 %v463, %v464
      %v467 = vrot.slane %v463, 4
      %v469 = vshrl.u32 %v397, 16
      %v471 = vrot.slane %v469, 7
      %v472 = vshll.u32 %v397, 16
      %v474 = vor.u32 %v471, %v472
      %v475 = vsel %vm425, %v467, %v474
      %v476 = vrot.slane %v471, 4
      %v478 = vshrl.u32 %v398, 16
      %v480 = vrot.slane %v478, 7
      %v481 = vshll.u32 %v398, 16
      %v483 = vor.u32 %v480, %v481
      %v484 = vrot.slane %v480, 4
      %v486 = vshrl.u32 %v399, 16
      %v488 = vrot.slane %v486, 7
      %v489 = vshll.u32 %v399, 16
      %v491 = vor.u32 %v488, %v489
      %v492 = vsel %vm425, %v484, %v491
      %v493 = vrot.slane %v488, 4
      %v495 = vshrl.u32 %v400, 16
      %v497 = vrot.slane %v495, 7
      %v498 = vshll.u32 %v400, 16
      %v500 = vor.u32 %v497, %v498
      %v501 = vrot.slane %v497, 4
      %v503 = vshrl.u32 %v401, 16
      %v505 = vrot.slane %v503, 7
      %v506 = vshll.u32 %v401, 16
      %v508 = vor.u32 %v505, %v506
      %v509 = vsel %vm425, %v501, %v508
      %v510 = vrot.slane %v505, 4
      %v512 = vshrl.u32 %v402, 16
      %v514 = vrot.slane %v512, 7
      %v515 = vshll.u32 %v402, 16
      %v517 = vor.u32 %v514, %v515
      %v518 = vrot.slane %v514, 4
      %v520 = vshrl.u32 %v403, 16
      %v522 = vrot.slane %v520, 7
      %v523 = vshll.u32 %v403, 16
      %v525 = vor.u32 %v522, %v523
      %v526 = vsel %vm425, %v518, %v525
      %v527 = vrot.slane %v522, 4
      %v529 = vshrl.u32 %v404, 16
      %v531 = vrot.slane %v529, 7
      %v532 = vshll.u32 %v404, 16
      %v534 = vor.u32 %v531, %v532
      %v535 = vrot.slane %v531, 4
      %v537 = vshrl.u32 %v405, 16
      %v539 = vrot.slane %v537, 7
      %v540 = vshll.u32 %v405, 16
      %v542 = vor.u32 %v539, %v540
      %v543 = vsel %vm425, %v535, %v542
      %v544 = vrot.slane %v539, 4
      %v546 = vshrl.u32 %v406, 16
      %v548 = vrot.slane %v546, 7
      %v549 = vshll.u32 %v406, 16
      %v551 = vor.u32 %v548, %v549
      %v552 = vrot.slane %v548, 4
      %v554 = vshrl.u32 %v407, 16
      %v556 = vrot.slane %v554, 7
      %v557 = vshll.u32 %v407, 16
      %v559 = vor.u32 %v556, %v557
      %v560 = vsel %vm425, %v552, %v559
      %v561 = vrot.slane %v556, 4
      %v563 = vshrl.u32 %v408, 16
      %v565 = vrot.slane %v563, 7
      %v566 = vshll.u32 %v408, 16
      %v568 = vor.u32 %v565, %v566
      %v569 = vrot.slane %v565, 4
      %v571 = vshrl.u32 %v409, 16
      %v573 = vrot.slane %v571, 7
      %v574 = vshll.u32 %v409, 16
      %v576 = vor.u32 %v573, %v574
      %v577 = vsel %vm425, %v569, %v576
      %v578 = vrot.slane %v573, 4
      %v580 = vshrl.u32 %v410, 16
      %v582 = vrot.slane %v580, 7
      %v583 = vshll.u32 %v410, 16
      %v585 = vor.u32 %v582, %v583
      %v586 = vrot.slane %v582, 4
      %v588 = vshrl.u32 %v411, 16
      %v590 = vrot.slane %v588, 7
      %v591 = vshll.u32 %v411, 16
      %v593 = vor.u32 %v590, %v591
      %v594 = vsel %vm425, %v586, %v593
      %v595 = vrot.slane %v590, 4
      %v597 = vshrl.u32 %v412, 16
      %v599 = vrot.slane %v597, 7
      %v600 = vshll.u32 %v412, 16
      %v602 = vor.u32 %v599, %v600
      %v603 = vrot.slane %v599, 4
      %v605 = vshrl.u32 %v413, 16
      %v607 = vrot.slane %v605, 7
      %v608 = vshll.u32 %v413, 16
      %v610 = vor.u32 %v607, %v608
      %v611 = vsel %vm425, %v603, %v610
      %v612 = vrot.slane %v607, 4
      %v614 = vshrl.u32 %v414, 16
      %v616 = vrot.slane %v614, 7
      %v617 = vshll.u32 %v414, 16
      %v619 = vor.u32 %v616, %v617
      %v620 = vrot.slane %v616, 4
      %v622 = vshrl.u32 %v415, 16
      %v624 = vrot.slane %v622, 7
      %v625 = vshll.u32 %v415, 16
      %v627 = vor.u32 %v624, %v625
      %v628 = vsel %vm425, %v620, %v627
      %v629 = vrot.slane %v624, 4
      %v631 = vshrl.u32 %v416, 16
      %v633 = vrot.slane %v631, 7
      %v634 = vshll.u32 %v416, 16
      %v636 = vor.u32 %v633, %v634
      %v637 = vrot.slane %v633, 4
      %v639 = vshrl.u32 %v417, 16
      %v641 = vrot.slane %v639, 7
      %v642 = vshll.u32 %v417, 16
      %v644 = vor.u32 %v641, %v642
      %v645 = vsel %vm425, %v637, %v644
      %v646 = vrot.slane %v641, 4
      %v648 = vshrl.u32 %v418, 16
      %v650 = vrot.slane %v648, 7
      %v651 = vshll.u32 %v418, 16
      %v653 = vor.u32 %v650, %v651
      %v654 = vrot.slane %v650, 4
      %v656 = vshrl.u32 %v419, 16
      %v658 = vrot.slane %v656, 7
      %v659 = vshll.u32 %v419, 16
      %v661 = vor.u32 %v658, %v659
      %v662 = vsel %vm425, %v654, %v661
      %v663 = vrot.slane %v658, 4
      %v665 = vshrl.u32 %v420, 16
      %v667 = vrot.slane %v665, 7
      %v668 = vshll.u32 %v420, 16
      %v670 = vor.u32 %v667, %v668
      %v671 = vrot.slane %v667, 4
      %v673 = vshrl.u32 %v421, 16
      %v675 = vrot.slane %v673, 7
      %v676 = vshll.u32 %v421, 16
      %v678 = vor.u32 %v675, %v676
      %v679 = vsel %vm425, %v671, %v678
      %v680 = vrot.slane %v675, 4
      %v682 = vshrl.u32 %v422, 16
      %v684 = vrot.slane %v682, 7
      %v685 = vshll.u32 %v422, 16
      %v687 = vor.u32 %v684, %v685
      %v688 = vrot.slane %v684, 4
      %v690 = vshrl.u32 %v423, 16
      %v692 = vrot.slane %v690, 7
      %v693 = vshll.u32 %v423, 16
      %v695 = vor.u32 %v692, %v693
      %v696 = vsel %vm425, %v688, %v695
      %v697 = vrot.slane %v692, 4
      %s746 = scalar_lea.vmem [#allocation2], 12
      %vm747 = vcmask 27648
      %vm748 = vmand %vm747, %vm336
      %v749 = vld [vmem:[%s746] sm:$0xf]
      %v750 = vsel %vm748, %v432, %v749
      %751 = vst [vmem:[%s746] sm:$0xf] %v750
      %752 = vst.msk [vmem:[%s746 + $0x4] sm:$0xf] %vm270, %v441
      %v753 = vld [vmem:[%s746 + $0x8] sm:$0x1]
      %v754 = vsel %vm281, %v442, %v753
      %755 = vst [vmem:[%s746 + $0x8] sm:$0x1] %v754
      %v756 = vld [vmem:[%s746 + $0xc] sm:$0xf]
      %v757 = vsel %vm748, %v449, %v756
      %758 = vst [vmem:[%s746 + $0xc] sm:$0xf] %v757
      %759 = vst.msk [vmem:[%s746 + $0x10] sm:$0xf] %vm270, %v458
      %v760 = vld [vmem:[%s746 + $0x14] sm:$0x1]
      %v761 = vsel %vm281, %v459, %v760
      %762 = vst [vmem:[%s746 + $0x14] sm:$0x1] %v761
      %v763 = vld [vmem:[%s746 + $0x18] sm:$0xf]
      %v764 = vsel %vm748, %v466, %v763
      %765 = vst [vmem:[%s746 + $0x18] sm:$0xf] %v764
      %766 = vst.msk [vmem:[%s746 + $0x1c] sm:$0xf] %vm270, %v475
      %v767 = vld [vmem:[%s746 + $0x20] sm:$0x1]
      %v768 = vsel %vm281, %v476, %v767
      %769 = vst [vmem:[%s746 + $0x20] sm:$0x1] %v768
      %v770 = vld [vmem:[%s746 + $0x24] sm:$0xf]
      %v771 = vsel %vm748, %v483, %v770
      %772 = vst [vmem:[%s746 + $0x24] sm:$0xf] %v771
      %773 = vst.msk [vmem:[%s746 + $0x28] sm:$0xf] %vm270, %v492
      %v774 = vld [vmem:[%s746 + $0x2c] sm:$0x1]
      %v775 = vsel %vm281, %v493, %v774
      %776 = vst [vmem:[%s746 + $0x2c] sm:$0x1] %v775
      %v777 = vld [vmem:[%s746 + $0x30] sm:$0xf]
      %v778 = vsel %vm748, %v500, %v777
      %779 = vst [vmem:[%s746 + $0x30] sm:$0xf] %v778
      %780 = vst.msk [vmem:[%s746 + $0x34] sm:$0xf] %vm270, %v509
      %v781 = vld [vmem:[%s746 + $0x38] sm:$0x1]
      %v782 = vsel %vm281, %v510, %v781
      %783 = vst [vmem:[%s746 + $0x38] sm:$0x1] %v782
      %v784 = vld [vmem:[%s746 + $0x3c] sm:$0xf]
      %v785 = vsel %vm748, %v517, %v784
      %786 = vst [vmem:[%s746 + $0x3c] sm:$0xf] %v785
      %787 = vst.msk [vmem:[%s746 + $0x40] sm:$0xf] %vm270, %v526
      %v788 = vld [vmem:[%s746 + $0x44] sm:$0x1]
      %v789 = vsel %vm281, %v527, %v788
      %790 = vst [vmem:[%s746 + $0x44] sm:$0x1] %v789
      %v791 = vld [vmem:[%s746 + $0x48] sm:$0xf]
      %v792 = vsel %vm748, %v534, %v791
      %793 = vst [vmem:[%s746 + $0x48] sm:$0xf] %v792
      %794 = vst.msk [vmem:[%s746 + $0x4c] sm:$0xf] %vm270, %v543
      %v795 = vld [vmem:[%s746 + $0x50] sm:$0x1]
      %v796 = vsel %vm281, %v544, %v795
      %797 = vst [vmem:[%s746 + $0x50] sm:$0x1] %v796
      %v798 = vld [vmem:[%s746 + $0x54] sm:$0xf]
      %v799 = vsel %vm748, %v551, %v798
      %800 = vst [vmem:[%s746 + $0x54] sm:$0xf] %v799
      %801 = vst.msk [vmem:[%s746 + $0x58] sm:$0xf] %vm270, %v560
      %v802 = vld [vmem:[%s746 + $0x5c] sm:$0x1]
      %v803 = vsel %vm281, %v561, %v802
      %804 = vst [vmem:[%s746 + $0x5c] sm:$0x1] %v803
      %v805 = vld [vmem:[%s746 + $0x60] sm:$0xf]
      %v806 = vsel %vm748, %v568, %v805
      %807 = vst [vmem:[%s746 + $0x60] sm:$0xf] %v806
      %808 = vst.msk [vmem:[%s746 + $0x64] sm:$0xf] %vm270, %v577
      %v809 = vld [vmem:[%s746 + $0x68] sm:$0x1]
      %v810 = vsel %vm281, %v578, %v809
      %811 = vst [vmem:[%s746 + $0x68] sm:$0x1] %v810
      %v812 = vld [vmem:[%s746 + $0x6c] sm:$0xf]
      %v813 = vsel %vm748, %v585, %v812
      %814 = vst [vmem:[%s746 + $0x6c] sm:$0xf] %v813
      %815 = vst.msk [vmem:[%s746 + $0x70] sm:$0xf] %vm270, %v594
      %v816 = vld [vmem:[%s746 + $0x74] sm:$0x1]
      %v817 = vsel %vm281, %v595, %v816
      %818 = vst [vmem:[%s746 + $0x74] sm:$0x1] %v817
      %v819 = vld [vmem:[%s746 + $0x78] sm:$0xf]
      %v820 = vsel %vm748, %v602, %v819
      %821 = vst [vmem:[%s746 + $0x78] sm:$0xf] %v820
      %822 = vst.msk [vmem:[%s746 + $0x7c] sm:$0xf] %vm270, %v611
      %v823 = vld [vmem:[%s746 + $0x80] sm:$0x1]
      %v824 = vsel %vm281, %v612, %v823
      %825 = vst [vmem:[%s746 + $0x80] sm:$0x1] %v824
      %v826 = vld [vmem:[%s746 + $0x84] sm:$0xf]
      %v827 = vsel %vm748, %v619, %v826
      %828 = vst [vmem:[%s746 + $0x84] sm:$0xf] %v827
      %829 = vst.msk [vmem:[%s746 + $0x88] sm:$0xf] %vm270, %v628
      %v830 = vld [vmem:[%s746 + $0x8c] sm:$0x1]
      %v831 = vsel %vm281, %v629, %v830
      %832 = vst [vmem:[%s746 + $0x8c] sm:$0x1] %v831
      %v833 = vld [vmem:[%s746 + $0x90] sm:$0xf]
      %v834 = vsel %vm748, %v636, %v833
      %835 = vst [vmem:[%s746 + $0x90] sm:$0xf] %v834
      %836 = vst.msk [vmem:[%s746 + $0x94] sm:$0xf] %vm270, %v645
      %v837 = vld [vmem:[%s746 + $0x98] sm:$0x1]
      %v838 = vsel %vm281, %v646, %v837
      %839 = vst [vmem:[%s746 + $0x98] sm:$0x1] %v838
      %v840 = vld [vmem:[%s746 + $0x9c] sm:$0xf]
      %v841 = vsel %vm748, %v653, %v840
      %842 = vst [vmem:[%s746 + $0x9c] sm:$0xf] %v841
      %843 = vst.msk [vmem:[%s746 + $0xa0] sm:$0xf] %vm270, %v662
      %v844 = vld [vmem:[%s746 + $0xa4] sm:$0x1]
      %v845 = vsel %vm281, %v663, %v844
      %846 = vst [vmem:[%s746 + $0xa4] sm:$0x1] %v845
      %v847 = vld [vmem:[%s746 + $0xa8] sm:$0xf]
      %v848 = vsel %vm748, %v670, %v847
      %849 = vst [vmem:[%s746 + $0xa8] sm:$0xf] %v848
      %850 = vst.msk [vmem:[%s746 + $0xac] sm:$0xf] %vm270, %v679
      %v851 = vld [vmem:[%s746 + $0xb0] sm:$0x1]
      %v852 = vsel %vm281, %v680, %v851
      %853 = vst [vmem:[%s746 + $0xb0] sm:$0x1] %v852
      %v854 = vld [vmem:[%s746 + $0xb4] sm:$0xf]
      %v855 = vsel %vm748, %v687, %v854
      %856 = vst [vmem:[%s746 + $0xb4] sm:$0xf] %v855
      %857 = vst.msk [vmem:[%s746 + $0xb8] sm:$0xf] %vm270, %v696
      %v858 = vld [vmem:[%s746 + $0xbc] sm:$0x1]
      %v859 = vsel %vm281, %v697, %v858
      %860 = vst [vmem:[%s746 + $0xbc] sm:$0x1] %v859
      %v861 = vld [vmem:[#allocation2] sm:$0xf]
      %v862 = vld [vmem:[#allocation2 + $0x4] sm:$0xf]
      %v863 = vld [vmem:[#allocation2 + $0xc] sm:$0xf]
      %v864 = vld [vmem:[#allocation2 + $0x10] sm:$0xf]
      %v865 = vld [vmem:[#allocation2 + $0x18] sm:$0xf]
      %v866 = vld [vmem:[#allocation2 + $0x1c] sm:$0xf]
      %v867 = vld [vmem:[#allocation2 + $0x24] sm:$0xf]
      %v868 = vld [vmem:[#allocation2 + $0x28] sm:$0xf]
      %v869 = vld [vmem:[#allocation2 + $0x30] sm:$0xf]
      %v870 = vld [vmem:[#allocation2 + $0x34] sm:$0xf]
      %v871 = vld [vmem:[#allocation2 + $0x3c] sm:$0xf]
      %v872 = vld [vmem:[#allocation2 + $0x40] sm:$0xf]
      %v873 = vld [vmem:[#allocation2 + $0x48] sm:$0xf]
      %v874 = vld [vmem:[#allocation2 + $0x4c] sm:$0xf]
      %v875 = vld [vmem:[#allocation2 + $0x54] sm:$0xf]
      %v876 = vld [vmem:[#allocation2 + $0x58] sm:$0xf]
      %v877 = vld [vmem:[#allocation2 + $0x60] sm:$0xf]
      %v878 = vld [vmem:[#allocation2 + $0x64] sm:$0xf]
      %v879 = vld [vmem:[#allocation2 + $0x6c] sm:$0xf]
      %v880 = vld [vmem:[#allocation2 + $0x70] sm:$0xf]
      %v881 = vld [vmem:[#allocation2 + $0x78] sm:$0xf]
      %v882 = vld [vmem:[#allocation2 + $0x7c] sm:$0xf]
      %v883 = vld [vmem:[#allocation2 + $0x84] sm:$0xf]
      %v884 = vld [vmem:[#allocation2 + $0x88] sm:$0xf]
      %v885 = vld [vmem:[#allocation2 + $0x90] sm:$0xf]
      %v886 = vld [vmem:[#allocation2 + $0x94] sm:$0xf]
      %v887 = vld [vmem:[#allocation2 + $0x9c] sm:$0xf]
      %v888 = vld [vmem:[#allocation2 + $0xa0] sm:$0xf]
      %v889 = vld [vmem:[#allocation2 + $0xa8] sm:$0xf]
      %v890 = vld [vmem:[#allocation2 + $0xac] sm:$0xf]
      %v891 = vld [vmem:[#allocation2 + $0xb4] sm:$0xf]
      %v892 = vld [vmem:[#allocation2 + $0xb8] sm:$0xf]
      %v893 = vld [vmem:[%s3] sm:$0x3]
      %v894 = vld [vmem:[#allocation2 + $0x8] sm:$0x1]
      %v895 = vld [vmem:[#allocation2 + $0x14] sm:$0x1]
      %v896 = vld [vmem:[#allocation2 + $0x20] sm:$0x1]
      %v897 = vld [vmem:[#allocation2 + $0x2c] sm:$0x1]
      %v898 = vld [vmem:[#allocation2 + $0x38] sm:$0x1]
      %v899 = vld [vmem:[#allocation2 + $0x44] sm:$0x1]
      %v900 = vld [vmem:[#allocation2 + $0x50] sm:$0x1]
      %v901 = vld [vmem:[#allocation2 + $0x5c] sm:$0x1]
      %v902 = vld [vmem:[#allocation2 + $0x68] sm:$0x1]
      %v903 = vld [vmem:[#allocation2 + $0x74] sm:$0x1]
      %v904 = vld [vmem:[#allocation2 + $0x80] sm:$0x1]
      %v905 = vld [vmem:[#allocation2 + $0x8c] sm:$0x1]
      %v906 = vld [vmem:[#allocation2 + $0x98] sm:$0x1]
      %v907 = vld [vmem:[#allocation2 + $0xa4] sm:$0x1]
      %v908 = vld [vmem:[#allocation2 + $0xb0] sm:$0x1]
      %v909 = vld [vmem:[#allocation2 + $0xbc] sm:$0x1]
      %vm910 = vsmask.f32 3328
      %vm911 = vsmask.f32 7440
      %vm912 = vmor %vm910, %vm911
      %v914 = vshrl.u32 %v861, 16
      %v916 = vrot.slane %v914, 4
      %v917 = vshll.u32 %v861, 16
      %v919 = vrot.slane %v917, 5
      %v920 = vor.u32 %v916, %v919
      %v921 = vrot.slane %v920, 4
      %v923 = vshll.u32 %v862, 16
      %v925 = vrot.slane %v923, 5
      %v926 = vsel %vm912, %v921, %v925
      %v927 = vshrl.u32 %v862, 16
      %v929 = vrot.slane %v927, 4
      %v930 = vor.u32 %v929, %v925
      %v931 = vrot.slane %v930, 4
      %v933 = vshll.u32 %v894, 16
      %v935 = vrot.slane %v933, 5
      %v936 = vsel %vm912, %v931, %v935
      %v938 = vshrl.u32 %v863, 16
      %v940 = vrot.slane %v938, 4
      %v941 = vshll.u32 %v863, 16
      %v943 = vrot.slane %v941, 5
      %v944 = vor.u32 %v940, %v943
      %v945 = vrot.slane %v944, 4
      %v947 = vshll.u32 %v864, 16
      %v949 = vrot.slane %v947, 5
      %v950 = vsel %vm912, %v945, %v949
      %v951 = vshrl.u32 %v864, 16
      %v953 = vrot.slane %v951, 4
      %v954 = vor.u32 %v953, %v949
      %v955 = vrot.slane %v954, 4
      %v957 = vshll.u32 %v895, 16
      %v959 = vrot.slane %v957, 5
      %v960 = vsel %vm912, %v955, %v959
      %v962 = vshrl.u32 %v865, 16
      %v964 = vrot.slane %v962, 4
      %v965 = vshll.u32 %v865, 16
      %v967 = vrot.slane %v965, 5
      %v968 = vor.u32 %v964, %v967
      %v969 = vrot.slane %v968, 4
      %v971 = vshll.u32 %v866, 16
      %v973 = vrot.slane %v971, 5
      %v974 = vsel %vm912, %v969, %v973
      %v975 = vshrl.u32 %v866, 16
      %v977 = vrot.slane %v975, 4
      %v978 = vor.u32 %v977, %v973
      %v979 = vrot.slane %v978, 4
      %v981 = vshll.u32 %v896, 16
      %v983 = vrot.slane %v981, 5
      %v984 = vsel %vm912, %v979, %v983
      %v986 = vshrl.u32 %v867, 16
      %v988 = vrot.slane %v986, 4
      %v989 = vshll.u32 %v867, 16
      %v991 = vrot.slane %v989, 5
      %v992 = vor.u32 %v988, %v991
      %v993 = vrot.slane %v992, 4
      %v995 = vshll.u32 %v868, 16
      %v997 = vrot.slane %v995, 5
      %v998 = vsel %vm912, %v993, %v997
      %v999 = vshrl.u32 %v868, 16
      %v1001 = vrot.slane %v999, 4
      %v1002 = vor.u32 %v1001, %v997
      %v1003 = vrot.slane %v1002, 4
      %v1005 = vshll.u32 %v897, 16
      %v1007 = vrot.slane %v1005, 5
      %v1008 = vsel %vm912, %v1003, %v1007
      %v1010 = vshrl.u32 %v869, 16
      %v1012 = vrot.slane %v1010, 4
      %v1013 = vshll.u32 %v869, 16
      %v1015 = vrot.slane %v1013, 5
      %v1016 = vor.u32 %v1012, %v1015
      %v1017 = vrot.slane %v1016, 4
      %v1019 = vshll.u32 %v870, 16
      %v1021 = vrot.slane %v1019, 5
      %v1022 = vsel %vm912, %v1017, %v1021
      %v1023 = vshrl.u32 %v870, 16
      %v1025 = vrot.slane %v1023, 4
      %v1026 = vor.u32 %v1025, %v1021
      %v1027 = vrot.slane %v1026, 4
      %v1029 = vshll.u32 %v898, 16
      %v1031 = vrot.slane %v1029, 5
      %v1032 = vsel %vm912, %v1027, %v1031
      %v1034 = vshrl.u32 %v871, 16
      %v1036 = vrot.slane %v1034, 4
      %v1037 = vshll.u32 %v871, 16
      %v1039 = vrot.slane %v1037, 5
      %v1040 = vor.u32 %v1036, %v1039
      %v1041 = vrot.slane %v1040, 4
      %v1043 = vshll.u32 %v872, 16
      %v1045 = vrot.slane %v1043, 5
      %v1046 = vsel %vm912, %v1041, %v1045
      %v1047 = vshrl.u32 %v872, 16
      %v1049 = vrot.slane %v1047, 4
      %v1050 = vor.u32 %v1049, %v1045
      %v1051 = vrot.slane %v1050, 4
      %v1053 = vshll.u32 %v899, 16
      %v1055 = vrot.slane %v1053, 5
      %v1056 = vsel %vm912, %v1051, %v1055
      %v1058 = vshrl.u32 %v873, 16
      %v1060 = vrot.slane %v1058, 4
      %v1061 = vshll.u32 %v873, 16
      %v1063 = vrot.slane %v1061, 5
      %v1064 = vor.u32 %v1060, %v1063
      %v1065 = vrot.slane %v1064, 4
      %v1067 = vshll.u32 %v874, 16
      %v1069 = vrot.slane %v1067, 5
      %v1070 = vsel %vm912, %v1065, %v1069
      %v1071 = vshrl.u32 %v874, 16
      %v1073 = vrot.slane %v1071, 4
      %v1074 = vor.u32 %v1073, %v1069
      %v1075 = vrot.slane %v1074, 4
      %v1077 = vshll.u32 %v900, 16
      %v1079 = vrot.slane %v1077, 5
      %v1080 = vsel %vm912, %v1075, %v1079
      %v1082 = vshrl.u32 %v875, 16
      %v1084 = vrot.slane %v1082, 4
      %v1085 = vshll.u32 %v875, 16
      %v1087 = vrot.slane %v1085, 5
      %v1088 = vor.u32 %v1084, %v1087
      %v1089 = vrot.slane %v1088, 4
      %v1091 = vshll.u32 %v876, 16
      %v1093 = vrot.slane %v1091, 5
      %v1094 = vsel %vm912, %v1089, %v1093
      %v1095 = vshrl.u32 %v876, 16
      %v1097 = vrot.slane %v1095, 4
      %v1098 = vor.u32 %v1097, %v1093
      %v1099 = vrot.slane %v1098, 4
      %v1101 = vshll.u32 %v901, 16
      %v1103 = vrot.slane %v1101, 5
      %v1104 = vsel %vm912, %v1099, %v1103
      %v1106 = vshrl.u32 %v877, 16
      %v1108 = vrot.slane %v1106, 4
      %v1109 = vshll.u32 %v877, 16
      %v1111 = vrot.slane %v1109, 5
      %v1112 = vor.u32 %v1108, %v1111
      %v1113 = vrot.slane %v1112, 4
      %v1115 = vshll.u32 %v878, 16
      %v1117 = vrot.slane %v1115, 5
      %v1118 = vsel %vm912, %v1113, %v1117
      %v1119 = vshrl.u32 %v878, 16
      %v1121 = vrot.slane %v1119, 4
      %v1122 = vor.u32 %v1121, %v1117
      %v1123 = vrot.slane %v1122, 4
      %v1125 = vshll.u32 %v902, 16
      %v1127 = vrot.slane %v1125, 5
      %v1128 = vsel %vm912, %v1123, %v1127
      %v1130 = vshrl.u32 %v879, 16
      %v1132 = vrot.slane %v1130, 4
      %v1133 = vshll.u32 %v879, 16
      %v1135 = vrot.slane %v1133, 5
      %v1136 = vor.u32 %v1132, %v1135
      %v1137 = vrot.slane %v1136, 4
      %v1139 = vshll.u32 %v880, 16
      %v1141 = vrot.slane %v1139, 5
      %v1142 = vsel %vm912, %v1137, %v1141
      %v1143 = vshrl.u32 %v880, 16
      %v1145 = vrot.slane %v1143, 4
      %v1146 = vor.u32 %v1145, %v1141
      %v1147 = vrot.slane %v1146, 4
      %v1149 = vshll.u32 %v903, 16
      %v1151 = vrot.slane %v1149, 5
      %v1152 = vsel %vm912, %v1147, %v1151
      %v1154 = vshrl.u32 %v881, 16
      %v1156 = vrot.slane %v1154, 4
      %v1157 = vshll.u32 %v881, 16
      %v1159 = vrot.slane %v1157, 5
      %v1160 = vor.u32 %v1156, %v1159
      %v1161 = vrot.slane %v1160, 4
      %v1163 = vshll.u32 %v882, 16
      %v1165 = vrot.slane %v1163, 5
      %v1166 = vsel %vm912, %v1161, %v1165
      %v1167 = vshrl.u32 %v882, 16
      %v1169 = vrot.slane %v1167, 4
      %v1170 = vor.u32 %v1169, %v1165
      %v1171 = vrot.slane %v1170, 4
      %v1173 = vshll.u32 %v904, 16
      %v1175 = vrot.slane %v1173, 5
      %v1176 = vsel %vm912, %v1171, %v1175
      %v1178 = vshrl.u32 %v883, 16
      %v1180 = vrot.slane %v1178, 4
      %v1181 = vshll.u32 %v883, 16
      %v1183 = vrot.slane %v1181, 5
      %v1184 = vor.u32 %v1180, %v1183
      %v1185 = vrot.slane %v1184, 4
      %v1187 = vshll.u32 %v884, 16
      %v1189 = vrot.slane %v1187, 5
      %v1190 = vsel %vm912, %v1185, %v1189
      %v1191 = vshrl.u32 %v884, 16
      %v1193 = vrot.slane %v1191, 4
      %v1194 = vor.u32 %v1193, %v1189
      %v1195 = vrot.slane %v1194, 4
      %v1197 = vshll.u32 %v905, 16
      %v1199 = vrot.slane %v1197, 5
      %v1200 = vsel %vm912, %v1195, %v1199
      %v1202 = vshrl.u32 %v885, 16
      %v1204 = vrot.slane %v1202, 4
      %v1205 = vshll.u32 %v885, 16
      %v1207 = vrot.slane %v1205, 5
      %v1208 = vor.u32 %v1204, %v1207
      %v1209 = vrot.slane %v1208, 4
      %v1211 = vshll.u32 %v886, 16
      %v1213 = vrot.slane %v1211, 5
      %v1214 = vsel %vm912, %v1209, %v1213
      %v1215 = vshrl.u32 %v886, 16
      %v1217 = vrot.slane %v1215, 4
      %v1218 = vor.u32 %v1217, %v1213
      %v1219 = vrot.slane %v1218, 4
      %v1221 = vshll.u32 %v906, 16
      %v1223 = vrot.slane %v1221, 5
      %v1224 = vsel %vm912, %v1219, %v1223
      %v1226 = vshrl.u32 %v887, 16
      %v1228 = vrot.slane %v1226, 4
      %v1229 = vshll.u32 %v887, 16
      %v1231 = vrot.slane %v1229, 5
      %v1232 = vor.u32 %v1228, %v1231
      %v1233 = vrot.slane %v1232, 4
      %v1235 = vshll.u32 %v888, 16
      %v1237 = vrot.slane %v1235, 5
      %v1238 = vsel %vm912, %v1233, %v1237
      %v1239 = vshrl.u32 %v888, 16
      %v1241 = vrot.slane %v1239, 4
      %v1242 = vor.u32 %v1241, %v1237
      %v1243 = vrot.slane %v1242, 4
      %v1245 = vshll.u32 %v907, 16
      %v1247 = vrot.slane %v1245, 5
      %v1248 = vsel %vm912, %v1243, %v1247
      %v1250 = vshrl.u32 %v889, 16
      %v1252 = vrot.slane %v1250, 4
      %v1253 = vshll.u32 %v889, 16
      %v1255 = vrot.slane %v1253, 5
      %v1256 = vor.u32 %v1252, %v1255
      %v1257 = vrot.slane %v1256, 4
      %v1259 = vshll.u32 %v890, 16
      %v1261 = vrot.slane %v1259, 5
      %v1262 = vsel %vm912, %v1257, %v1261
      %v1263 = vshrl.u32 %v890, 16
      %v1265 = vrot.slane %v1263, 4
      %v1266 = vor.u32 %v1265, %v1261
      %v1267 = vrot.slane %v1266, 4
      %v1269 = vshll.u32 %v908, 16
      %v1271 = vrot.slane %v1269, 5
      %v1272 = vsel %vm912, %v1267, %v1271
      %v1274 = vshrl.u32 %v891, 16
      %v1276 = vrot.slane %v1274, 4
      %v1277 = vshll.u32 %v891, 16
      %v1279 = vrot.slane %v1277, 5
      %v1280 = vor.u32 %v1276, %v1279
      %v1281 = vrot.slane %v1280, 4
      %v1283 = vshll.u32 %v892, 16
      %v1285 = vrot.slane %v1283, 5
      %v1286 = vsel %vm912, %v1281, %v1285
      %v1287 = vshrl.u32 %v892, 16
      %v1289 = vrot.slane %v1287, 4
      %v1290 = vor.u32 %v1289, %v1285
      %v1291 = vrot.slane %v1290, 4
      %v1293 = vshll.u32 %v909, 16
      %v1295 = vrot.slane %v1293, 5
      %v1296 = vsel %vm912, %v1291, %v1295
      %v1297 = vld [vmem:[%s3] sm:$0xc]
      %v1298 = vunpack.c.l.b16 %v926
      %v1299 = vunpack.c.l.b16 %v936
      %v1300 = vunpack.c.l.b16 %v950
      %v1301 = vunpack.c.l.b16 %v960
      %v1302 = vunpack.c.l.b16 %v974
      %v1303 = vunpack.c.l.b16 %v984
      %v1304 = vunpack.c.l.b16 %v998
      %v1305 = vunpack.c.l.b16 %v1008
      %v1306 = vunpack.c.l.b16 %v1022
      %v1307 = vunpack.c.l.b16 %v1032
      %v1308 = vunpack.c.l.b16 %v1046
      %v1309 = vunpack.c.l.b16 %v1056
      %v1310 = vunpack.c.l.b16 %v1070
      %v1311 = vunpack.c.l.b16 %v1080
      %v1312 = vunpack.c.l.b16 %v1094
      %v1313 = vunpack.c.l.b16 %v1104
      %v1314 = vunpack.c.l.b16 %v1118
      %v1315 = vunpack.c.l.b16 %v1128
      %v1316 = vunpack.c.l.b16 %v1142
      %v1317 = vunpack.c.l.b16 %v1152
      %v1318 = vunpack.c.l.b16 %v1166
      %v1319 = vunpack.c.l.b16 %v1176
      %v1320 = vunpack.c.l.b16 %v1190
      %v1321 = vunpack.c.l.b16 %v1200
      %v1322 = vunpack.c.l.b16 %v1214
      %v1323 = vunpack.c.l.b16 %v1224
      %v1324 = vunpack.c.l.b16 %v1238
      %v1325 = vunpack.c.l.b16 %v1248
      %v1326 = vunpack.c.l.b16 %v1262
      %v1327 = vunpack.c.l.b16 %v1272
      %v1328 = vunpack.c.l.b16 %v1286
      %v1329 = vunpack.c.l.b16 %v1296
      %v1330 = vpack.c.b16 %v1299, %v1298
      %v1331 = vpack.c.b16 %v1301, %v1300
      %v1332 = vpack.c.b16 %v1303, %v1302
      %v1333 = vpack.c.b16 %v1305, %v1304
      %v1334 = vpack.c.b16 %v1307, %v1306
      %v1335 = vpack.c.b16 %v1309, %v1308
      %v1336 = vpack.c.b16 %v1311, %v1310
      %v1337 = vpack.c.b16 %v1313, %v1312
      %v1338 = vpack.c.b16 %v1315, %v1314
      %v1339 = vpack.c.b16 %v1317, %v1316
      %v1340 = vpack.c.b16 %v1319, %v1318
      %v1341 = vpack.c.b16 %v1321, %v1320
      %v1342 = vpack.c.b16 %v1323, %v1322
      %v1343 = vpack.c.b16 %v1325, %v1324
      %v1344 = vpack.c.b16 %v1327, %v1326
      %v1345 = vpack.c.b16 %v1329, %v1328
      %v1347 = vunpack.c.l.b16 %v1297
      %v1348 = vpack.c.b16 %v1347, %v1347
      %v1349 = vrot.slane %v1348, 2
      %vm1350 = vcmask 31744
      %v1352 = vsel %vm1350, %v1330, 0
      %v1355 = vsel %vm1350, %v1331, 0
      %v1358 = vsel %vm1350, %v1332, 0
      %v1361 = vsel %vm1350, %v1333, 0
      %v1364 = vsel %vm1350, %v1334, 0
      %v1367 = vsel %vm1350, %v1335, 0
      %v1370 = vsel %vm1350, %v1336, 0
      %v1373 = vsel %vm1350, %v1337, 0
      %v1376 = vsel %vm1350, %v1338, 0
      %v1379 = vsel %vm1350, %v1339, 0
      %v1382 = vsel %vm1350, %v1340, 0
      %v1385 = vsel %vm1350, %v1341, 0
      %v1388 = vsel %vm1350, %v1342, 0
      %v1391 = vsel %vm1350, %v1343, 0
      %v1394 = vsel %vm1350, %v1344, 0
      %v1397 = vsel %vm1350, %v1345, 0
      %vm1399 = vcmask 1041408
      %v1401 = vsel %vm1399, %v1349, 0
      %1403 = vmatpush.bf16.msra.mxu0 0
      %1404 = vmatpush.bf16.msra.mxu0 0
      %1405 = vmatpush.bf16.msra.mxu0 0
      %1406 = vmatpush.bf16.msra.mxu0 0
      %1407 = vmatpush.bf16.msra.mxu0 0
      %1408 = vmatpush.bf16.msra.mxu0 0
      %1409 = vmatpush.bf16.msra.mxu0 0
      %1410 = vmatpush.bf16.msra.mxu0 %v1401
      %1411 = vmatmul.bf16.gmra.mxu0 %v1352
      %v1412 = vpop.f32.mrf.mxu0
      %v1413 = vadd.f32 0.0, %v1412
      %v1414 = vpop.f32.mrf.mxu0
      %v1415 = vadd.f32 0.0, %v1414
      %1416 = vmatmul.bf16.gmra.mxu0 %v1355
      %v1417 = vpop.f32.mrf.mxu0
      %v1418 = vadd.f32 0.0, %v1417
      %v1419 = vpop.f32.mrf.mxu0
      %v1420 = vadd.f32 0.0, %v1419
      %1421 = vmatmul.bf16.gmra.mxu0 %v1358
      %v1422 = vpop.f32.mrf.mxu0
      %v1423 = vadd.f32 0.0, %v1422
      %v1424 = vpop.f32.mrf.mxu0
      %v1425 = vadd.f32 0.0, %v1424
      %1426 = vmatmul.bf16.gmra.mxu0 %v1361
      %v1427 = vpop.f32.mrf.mxu0
      %v1428 = vadd.f32 0.0, %v1427
      %v1429 = vpop.f32.mrf.mxu0
      %v1430 = vadd.f32 0.0, %v1429
      %1431 = vmatmul.bf16.gmra.mxu0 %v1364
      %v1432 = vpop.f32.mrf.mxu0
      %v1433 = vadd.f32 0.0, %v1432
      %v1434 = vpop.f32.mrf.mxu0
      %v1435 = vadd.f32 0.0, %v1434
      %1436 = vmatmul.bf16.gmra.mxu0 %v1367
      %v1437 = vpop.f32.mrf.mxu0
      %v1438 = vadd.f32 0.0, %v1437
      %v1439 = vpop.f32.mrf.mxu0
      %v1440 = vadd.f32 0.0, %v1439
      %1441 = vmatmul.bf16.gmra.mxu0 %v1370
      %v1442 = vpop.f32.mrf.mxu0
      %v1443 = vadd.f32 0.0, %v1442
      %v1444 = vpop.f32.mrf.mxu0
      %v1445 = vadd.f32 0.0, %v1444
      %1446 = vmatmul.bf16.gmra.mxu0 %v1373
      %v1447 = vpop.f32.mrf.mxu0
      %v1448 = vadd.f32 0.0, %v1447
      %v1449 = vpop.f32.mrf.mxu0
      %v1450 = vadd.f32 0.0, %v1449
      %1451 = vmatmul.bf16.gmra.mxu0 %v1376
      %v1452 = vpop.f32.mrf.mxu0
      %v1453 = vadd.f32 0.0, %v1452
      %v1454 = vpop.f32.mrf.mxu0
      %v1455 = vadd.f32 0.0, %v1454
      %1456 = vmatmul.bf16.gmra.mxu0 %v1379
      %v1457 = vpop.f32.mrf.mxu0
      %v1458 = vadd.f32 0.0, %v1457
      %v1459 = vpop.f32.mrf.mxu0
      %v1460 = vadd.f32 0.0, %v1459
      %1461 = vmatmul.bf16.gmra.mxu0 %v1382
      %v1462 = vpop.f32.mrf.mxu0
      %v1463 = vadd.f32 0.0, %v1462
      %v1464 = vpop.f32.mrf.mxu0
      %v1465 = vadd.f32 0.0, %v1464
      %1466 = vmatmul.bf16.gmra.mxu0 %v1385
      %v1467 = vpop.f32.mrf.mxu0
      %v1468 = vadd.f32 0.0, %v1467
      %v1469 = vpop.f32.mrf.mxu0
      %v1470 = vadd.f32 0.0, %v1469
      %1471 = vmatmul.bf16.gmra.mxu0 %v1388
      %v1472 = vpop.f32.mrf.mxu0
      %v1473 = vadd.f32 0.0, %v1472
      %v1474 = vpop.f32.mrf.mxu0
      %v1475 = vadd.f32 0.0, %v1474
      %1476 = vmatmul.bf16.gmra.mxu0 %v1391
      %v1477 = vpop.f32.mrf.mxu0
      %v1478 = vadd.f32 0.0, %v1477
      %v1479 = vpop.f32.mrf.mxu0
      %v1480 = vadd.f32 0.0, %v1479
      %1481 = vmatmul.bf16.gmra.mxu0 %v1394
      %v1482 = vpop.f32.mrf.mxu0
      %v1483 = vadd.f32 0.0, %v1482
      %v1484 = vpop.f32.mrf.mxu0
      %v1485 = vadd.f32 0.0, %v1484
      %1486 = vmatmul.bf16.gmra.mxu0 %v1397
      %v1487 = vpop.f32.mrf.mxu0
      %v1488 = vadd.f32 0.0, %v1487
      %v1489 = vpop.f32.mrf.mxu0
      %v1490 = vadd.f32 0.0, %v1489
      %1491 = vdwg.mxu0
      %v1524 = vunpack.c.l.b16 %v861
      %v1525 = vunpack.c.l.b16 %v862
      %v1526 = vunpack.c.l.b16 %v863
      %v1527 = vunpack.c.l.b16 %v864
      %v1528 = vunpack.c.l.b16 %v865
      %v1529 = vunpack.c.l.b16 %v866
      %v1530 = vunpack.c.l.b16 %v867
      %v1531 = vunpack.c.l.b16 %v868
      %v1532 = vunpack.c.l.b16 %v869
      %v1533 = vunpack.c.l.b16 %v870
      %v1534 = vunpack.c.l.b16 %v871
      %v1535 = vunpack.c.l.b16 %v872
      %v1536 = vunpack.c.l.b16 %v873
      %v1537 = vunpack.c.l.b16 %v874
      %v1538 = vunpack.c.l.b16 %v875
      %v1539 = vunpack.c.l.b16 %v876
      %v1540 = vunpack.c.l.b16 %v877
      %v1541 = vunpack.c.l.b16 %v878
      %v1542 = vunpack.c.l.b16 %v879
      %v1543 = vunpack.c.l.b16 %v880
      %v1544 = vunpack.c.l.b16 %v881
      %v1545 = vunpack.c.l.b16 %v882
      %v1546 = vunpack.c.l.b16 %v883
      %v1547 = vunpack.c.l.b16 %v884
      %v1548 = vunpack.c.l.b16 %v885
      %v1549 = vunpack.c.l.b16 %v886
      %v1550 = vunpack.c.l.b16 %v887
      %v1551 = vunpack.c.l.b16 %v888
      %v1552 = vunpack.c.l.b16 %v889
      %v1553 = vunpack.c.l.b16 %v890
      %v1554 = vunpack.c.l.b16 %v891
      %v1555 = vunpack.c.l.b16 %v892
      %v1556 = vpack.c.b16 %v1525, %v1524
      %v1557 = vpack.c.b16 %v1527, %v1526
      %v1558 = vpack.c.b16 %v1529, %v1528
      %v1559 = vpack.c.b16 %v1531, %v1530
      %v1560 = vpack.c.b16 %v1533, %v1532
      %v1561 = vpack.c.b16 %v1535, %v1534
      %v1562 = vpack.c.b16 %v1537, %v1536
      %v1563 = vpack.c.b16 %v1539, %v1538
      %v1564 = vpack.c.b16 %v1541, %v1540
      %v1565 = vpack.c.b16 %v1543, %v1542
      %v1566 = vpack.c.b16 %v1545, %v1544
      %v1567 = vpack.c.b16 %v1547, %v1546
      %v1568 = vpack.c.b16 %v1549, %v1548
      %v1569 = vpack.c.b16 %v1551, %v1550
      %v1570 = vpack.c.b16 %v1553, %v1552
      %v1571 = vpack.c.b16 %v1555, %v1554
      %v1573 = vsel %vm1350, %v1556, 0
      %v1576 = vsel %vm1350, %v1557, 0
      %v1579 = vsel %vm1350, %v1558, 0
      %v1582 = vsel %vm1350, %v1559, 0
      %v1585 = vsel %vm1350, %v1560, 0
      %v1588 = vsel %vm1350, %v1561, 0
      %v1591 = vsel %vm1350, %v1562, 0
      %v1594 = vsel %vm1350, %v1563, 0
      %v1597 = vsel %vm1350, %v1564, 0
      %v1600 = vsel %vm1350, %v1565, 0
      %v1603 = vsel %vm1350, %v1566, 0
      %v1606 = vsel %vm1350, %v1567, 0
      %v1609 = vsel %vm1350, %v1568, 0
      %v1612 = vsel %vm1350, %v1569, 0
      %v1615 = vsel %vm1350, %v1570, 0
      %v1618 = vsel %vm1350, %v1571, 0
      %v1621 = vsel %vm1399, %v893, 0
      %1623 = vmatpush.bf16.msra.mxu0 0
      %1624 = vmatpush.bf16.msra.mxu0 0
      %1625 = vmatpush.bf16.msra.mxu0 0
      %1626 = vmatpush.bf16.msra.mxu0 0
      %1627 = vmatpush.bf16.msra.mxu0 0
      %1628 = vmatpush.bf16.msra.mxu0 0
      %1629 = vmatpush.bf16.msra.mxu0 0
      %1630 = vmatpush.bf16.msra.mxu0 %v1621
      %1631 = vmatmul.bf16.gmra.mxu0 %v1573
      %v1632 = vpop.f32.mrf.mxu0
      %v1633 = vadd.f32 %v1413, %v1632
      %v1634 = vpop.f32.mrf.mxu0
      %v1635 = vadd.f32 %v1415, %v1634
      %1636 = vmatmul.bf16.gmra.mxu0 %v1576
      %v1637 = vpop.f32.mrf.mxu0
      %v1638 = vadd.f32 %v1418, %v1637
      %v1639 = vpop.f32.mrf.mxu0
      %v1640 = vadd.f32 %v1420, %v1639
      %1641 = vmatmul.bf16.gmra.mxu0 %v1579
      %v1642 = vpop.f32.mrf.mxu0
      %v1643 = vadd.f32 %v1423, %v1642
      %v1644 = vpop.f32.mrf.mxu0
      %v1645 = vadd.f32 %v1425, %v1644
      %1646 = vmatmul.bf16.gmra.mxu0 %v1582
      %v1647 = vpop.f32.mrf.mxu0
      %v1648 = vadd.f32 %v1428, %v1647
      %v1649 = vpop.f32.mrf.mxu0
      %v1650 = vadd.f32 %v1430, %v1649
      %1651 = vmatmul.bf16.gmra.mxu0 %v1585
      %v1652 = vpop.f32.mrf.mxu0
      %v1653 = vadd.f32 %v1433, %v1652
      %v1654 = vpop.f32.mrf.mxu0
      %v1655 = vadd.f32 %v1435, %v1654
      %1656 = vmatmul.bf16.gmra.mxu0 %v1588
      %v1657 = vpop.f32.mrf.mxu0
      %v1658 = vadd.f32 %v1438, %v1657
      %v1659 = vpop.f32.mrf.mxu0
      %v1660 = vadd.f32 %v1440, %v1659
      %1661 = vmatmul.bf16.gmra.mxu0 %v1591
      %v1662 = vpop.f32.mrf.mxu0
      %v1663 = vadd.f32 %v1443, %v1662
      %v1664 = vpop.f32.mrf.mxu0
      %v1665 = vadd.f32 %v1445, %v1664
      %1666 = vmatmul.bf16.gmra.mxu0 %v1594
      %v1667 = vpop.f32.mrf.mxu0
      %v1668 = vadd.f32 %v1448, %v1667
      %v1669 = vpop.f32.mrf.mxu0
      %v1670 = vadd.f32 %v1450, %v1669
      %1671 = vmatmul.bf16.gmra.mxu0 %v1597
      %v1672 = vpop.f32.mrf.mxu0
      %v1673 = vadd.f32 %v1453, %v1672
      %v1674 = vpop.f32.mrf.mxu0
      %v1675 = vadd.f32 %v1455, %v1674
      %1676 = vmatmul.bf16.gmra.mxu0 %v1600
      %v1677 = vpop.f32.mrf.mxu0
      %v1678 = vadd.f32 %v1458, %v1677
      %v1679 = vpop.f32.mrf.mxu0
      %v1680 = vadd.f32 %v1460, %v1679
      %1681 = vmatmul.bf16.gmra.mxu0 %v1603
      %v1682 = vpop.f32.mrf.mxu0
      %v1683 = vadd.f32 %v1463, %v1682
      %v1684 = vpop.f32.mrf.mxu0
      %v1685 = vadd.f32 %v1465, %v1684
      %1686 = vmatmul.bf16.gmra.mxu0 %v1606
      %v1687 = vpop.f32.mrf.mxu0
      %v1688 = vadd.f32 %v1468, %v1687
      %v1689 = vpop.f32.mrf.mxu0
      %v1690 = vadd.f32 %v1470, %v1689
      %1691 = vmatmul.bf16.gmra.mxu0 %v1609
      %v1692 = vpop.f32.mrf.mxu0
      %v1693 = vadd.f32 %v1473, %v1692
      %v1694 = vpop.f32.mrf.mxu0
      %v1695 = vadd.f32 %v1475, %v1694
      %1696 = vmatmul.bf16.gmra.mxu0 %v1612
      %v1697 = vpop.f32.mrf.mxu0
      %v1698 = vadd.f32 %v1478, %v1697
      %v1699 = vpop.f32.mrf.mxu0
      %v1700 = vadd.f32 %v1480, %v1699
      %1701 = vmatmul.bf16.gmra.mxu0 %v1615
      %v1702 = vpop.f32.mrf.mxu0
      %v1703 = vadd.f32 %v1483, %v1702
      %v1704 = vpop.f32.mrf.mxu0
      %v1705 = vadd.f32 %v1485, %v1704
      %1706 = vmatmul.bf16.gmra.mxu0 %v1618
      %v1707 = vpop.f32.mrf.mxu0
      %v1708 = vadd.f32 %v1488, %v1707
      %v1709 = vpop.f32.mrf.mxu0
      %v1710 = vadd.f32 %v1490, %v1709
      %1711 = vdwg.mxu0
      %v1712 = vld [vmem:[#allocation2] sm:$0xe]
      %v1713 = vld [vmem:[#allocation2 + $0xc] sm:$0xe]
      %v1714 = vld [vmem:[#allocation2 + $0x18] sm:$0xe]
      %v1715 = vld [vmem:[#allocation2 + $0x24] sm:$0xe]
      %v1716 = vld [vmem:[#allocation2 + $0x30] sm:$0xe]
      %v1717 = vld [vmem:[#allocation2 + $0x3c] sm:$0xe]
      %v1718 = vld [vmem:[#allocation2 + $0x48] sm:$0xe]
      %v1719 = vld [vmem:[#allocation2 + $0x54] sm:$0xe]
      %v1720 = vld [vmem:[#allocation2 + $0x60] sm:$0xe]
      %v1721 = vld [vmem:[#allocation2 + $0x6c] sm:$0xe]
      %v1722 = vld [vmem:[#allocation2 + $0x78] sm:$0xe]
      %v1723 = vld [vmem:[#allocation2 + $0x84] sm:$0xe]
      %v1724 = vld [vmem:[#allocation2 + $0x90] sm:$0xe]
      %v1725 = vld [vmem:[#allocation2 + $0x9c] sm:$0xe]
      %v1726 = vld [vmem:[#allocation2 + $0xa8] sm:$0xe]
      %v1727 = vld [vmem:[#allocation2 + $0xb4] sm:$0xe]
      %vm1760 = vcmask 1042432
      %vm1761 = vcmask 1046532
      %vm1762 = vmor %vm1760, %vm1761
      %v1763 = vrot.slane %v1712, 5
      %v1764 = vrot.slane %v1763, 4
      %v1765 = vrot.slane %v862, 5
      %v1766 = vsel %vm1762, %v1764, %v1765
      %v1767 = vrot.slane %v1765, 4
      %v1768 = vrot.slane %v894, 5
      %v1769 = vsel %vm1762, %v1767, %v1768
      %v1770 = vrot.slane %v1713, 5
      %v1771 = vrot.slane %v1770, 4
      %v1772 = vrot.slane %v864, 5
      %v1773 = vsel %vm1762, %v1771, %v1772
      %v1774 = vrot.slane %v1772, 4
      %v1775 = vrot.slane %v895, 5
      %v1776 = vsel %vm1762, %v1774, %v1775
      %v1777 = vrot.slane %v1714, 5
      %v1778 = vrot.slane %v1777, 4
      %v1779 = vrot.slane %v866, 5
      %v1780 = vsel %vm1762, %v1778, %v1779
      %v1781 = vrot.slane %v1779, 4
      %v1782 = vrot.slane %v896, 5
      %v1783 = vsel %vm1762, %v1781, %v1782
      %v1784 = vrot.slane %v1715, 5
      %v1785 = vrot.slane %v1784, 4
      %v1786 = vrot.slane %v868, 5
      %v1787 = vsel %vm1762, %v1785, %v1786
      %v1788 = vrot.slane %v1786, 4
      %v1789 = vrot.slane %v897, 5
      %v1790 = vsel %vm1762, %v1788, %v1789
      %v1791 = vrot.slane %v1716, 5
      %v1792 = vrot.slane %v1791, 4
      %v1793 = vrot.slane %v870, 5
      %v1794 = vsel %vm1762, %v1792, %v1793
      %v1795 = vrot.slane %v1793, 4
      %v1796 = vrot.slane %v898, 5
      %v1797 = vsel %vm1762, %v1795, %v1796
      %v1798 = vrot.slane %v1717, 5
      %v1799 = vrot.slane %v1798, 4
      %v1800 = vrot.slane %v872, 5
      %v1801 = vsel %vm1762, %v1799, %v1800
      %v1802 = vrot.slane %v1800, 4
      %v1803 = vrot.slane %v899, 5
      %v1804 = vsel %vm1762, %v1802, %v1803
      %v1805 = vrot.slane %v1718, 5
      %v1806 = vrot.slane %v1805, 4
      %v1807 = vrot.slane %v874, 5
      %v1808 = vsel %vm1762, %v1806, %v1807
      %v1809 = vrot.slane %v1807, 4
      %v1810 = vrot.slane %v900, 5
      %v1811 = vsel %vm1762, %v1809, %v1810
      %v1812 = vrot.slane %v1719, 5
      %v1813 = vrot.slane %v1812, 4
      %v1814 = vrot.slane %v876, 5
      %v1815 = vsel %vm1762, %v1813, %v1814
      %v1816 = vrot.slane %v1814, 4
      %v1817 = vrot.slane %v901, 5
      %v1818 = vsel %vm1762, %v1816, %v1817
      %v1819 = vrot.slane %v1720, 5
      %v1820 = vrot.slane %v1819, 4
      %v1821 = vrot.slane %v878, 5
      %v1822 = vsel %vm1762, %v1820, %v1821
      %v1823 = vrot.slane %v1821, 4
      %v1824 = vrot.slane %v902, 5
      %v1825 = vsel %vm1762, %v1823, %v1824
      %v1826 = vrot.slane %v1721, 5
      %v1827 = vrot.slane %v1826, 4
      %v1828 = vrot.slane %v880, 5
      %v1829 = vsel %vm1762, %v1827, %v1828
      %v1830 = vrot.slane %v1828, 4
      %v1831 = vrot.slane %v903, 5
      %v1832 = vsel %vm1762, %v1830, %v1831
      %v1833 = vrot.slane %v1722, 5
      %v1834 = vrot.slane %v1833, 4
      %v1835 = vrot.slane %v882, 5
      %v1836 = vsel %vm1762, %v1834, %v1835
      %v1837 = vrot.slane %v1835, 4
      %v1838 = vrot.slane %v904, 5
      %v1839 = vsel %vm1762, %v1837, %v1838
      %v1840 = vrot.slane %v1723, 5
      %v1841 = vrot.slane %v1840, 4
      %v1842 = vrot.slane %v884, 5
      %v1843 = vsel %vm1762, %v1841, %v1842
      %v1844 = vrot.slane %v1842, 4
      %v1845 = vrot.slane %v905, 5
      %v1846 = vsel %vm1762, %v1844, %v1845
      %v1847 = vrot.slane %v1724, 5
      %v1848 = vrot.slane %v1847, 4
      %v1849 = vrot.slane %v886, 5
      %v1850 = vsel %vm1762, %v1848, %v1849
      %v1851 = vrot.slane %v1849, 4
      %v1852 = vrot.slane %v906, 5
      %v1853 = vsel %vm1762, %v1851, %v1852
      %v1854 = vrot.slane %v1725, 5
      %v1855 = vrot.slane %v1854, 4
      %v1856 = vrot.slane %v888, 5
      %v1857 = vsel %vm1762, %v1855, %v1856
      %v1858 = vrot.slane %v1856, 4
      %v1859 = vrot.slane %v907, 5
      %v1860 = vsel %vm1762, %v1858, %v1859
      %v1861 = vrot.slane %v1726, 5
      %v1862 = vrot.slane %v1861, 4
      %v1863 = vrot.slane %v890, 5
      %v1864 = vsel %vm1762, %v1862, %v1863
      %v1865 = vrot.slane %v1863, 4
      %v1866 = vrot.slane %v908, 5
      %v1867 = vsel %vm1762, %v1865, %v1866
      %v1868 = vrot.slane %v1727, 5
      %v1869 = vrot.slane %v1868, 4
      %v1870 = vrot.slane %v892, 5
      %v1871 = vsel %vm1762, %v1869, %v1870
      %v1872 = vrot.slane %v1870, 4
      %v1873 = vrot.slane %v909, 5
      %v1874 = vsel %vm1762, %v1872, %v1873
      %v1875 = vld [vmem:[%s3 + $0x4] sm:$0x3]
      %v1876 = vunpack.c.l.b16 %v1766
      %v1877 = vunpack.c.l.b16 %v1769
      %v1878 = vunpack.c.l.b16 %v1773
      %v1879 = vunpack.c.l.b16 %v1776
      %v1880 = vunpack.c.l.b16 %v1780
      %v1881 = vunpack.c.l.b16 %v1783
      %v1882 = vunpack.c.l.b16 %v1787
      %v1883 = vunpack.c.l.b16 %v1790
      %v1884 = vunpack.c.l.b16 %v1794
      %v1885 = vunpack.c.l.b16 %v1797
      %v1886 = vunpack.c.l.b16 %v1801
      %v1887 = vunpack.c.l.b16 %v1804
      %v1888 = vunpack.c.l.b16 %v1808
      %v1889 = vunpack.c.l.b16 %v1811
      %v1890 = vunpack.c.l.b16 %v1815
      %v1891 = vunpack.c.l.b16 %v1818
      %v1892 = vunpack.c.l.b16 %v1822
      %v1893 = vunpack.c.l.b16 %v1825
      %v1894 = vunpack.c.l.b16 %v1829
      %v1895 = vunpack.c.l.b16 %v1832
      %v1896 = vunpack.c.l.b16 %v1836
      %v1897 = vunpack.c.l.b16 %v1839
      %v1898 = vunpack.c.l.b16 %v1843
      %v1899 = vunpack.c.l.b16 %v1846
      %v1900 = vunpack.c.l.b16 %v1850
      %v1901 = vunpack.c.l.b16 %v1853
      %v1902 = vunpack.c.l.b16 %v1857
      %v1903 = vunpack.c.l.b16 %v1860
      %v1904 = vunpack.c.l.b16 %v1864
      %v1905 = vunpack.c.l.b16 %v1867
      %v1906 = vunpack.c.l.b16 %v1871
      %v1907 = vunpack.c.l.b16 %v1874
      %v1908 = vpack.c.b16 %v1877, %v1876
      %v1909 = vpack.c.b16 %v1879, %v1878
      %v1910 = vpack.c.b16 %v1881, %v1880
      %v1911 = vpack.c.b16 %v1883, %v1882
      %v1912 = vpack.c.b16 %v1885, %v1884
      %v1913 = vpack.c.b16 %v1887, %v1886
      %v1914 = vpack.c.b16 %v1889, %v1888
      %v1915 = vpack.c.b16 %v1891, %v1890
      %v1916 = vpack.c.b16 %v1893, %v1892
      %v1917 = vpack.c.b16 %v1895, %v1894
      %v1918 = vpack.c.b16 %v1897, %v1896
      %v1919 = vpack.c.b16 %v1899, %v1898
      %v1920 = vpack.c.b16 %v1901, %v1900
      %v1921 = vpack.c.b16 %v1903, %v1902
      %v1922 = vpack.c.b16 %v1905, %v1904
      %v1923 = vpack.c.b16 %v1907, %v1906
      %v1925 = vsel %vm1350, %v1908, 0
      %v1928 = vsel %vm1350, %v1909, 0
      %v1931 = vsel %vm1350, %v1910, 0
      %v1934 = vsel %vm1350, %v1911, 0
      %v1937 = vsel %vm1350, %v1912, 0
      %v1940 = vsel %vm1350, %v1913, 0
      %v1943 = vsel %vm1350, %v1914, 0
      %v1946 = vsel %vm1350, %v1915, 0
      %v1949 = vsel %vm1350, %v1916, 0
      %v1952 = vsel %vm1350, %v1917, 0
      %v1955 = vsel %vm1350, %v1918, 0
      %v1958 = vsel %vm1350, %v1919, 0
      %v1961 = vsel %vm1350, %v1920, 0
      %v1964 = vsel %vm1350, %v1921, 0
      %v1967 = vsel %vm1350, %v1922, 0
      %v1970 = vsel %vm1350, %v1923, 0
      %v1973 = vsel %vm1399, %v1875, 0
      %1975 = vmatpush.bf16.msra.mxu0 0
      %1976 = vmatpush.bf16.msra.mxu0 0
      %1977 = vmatpush.bf16.msra.mxu0 0
      %1978 = vmatpush.bf16.msra.mxu0 0
      %1979 = vmatpush.bf16.msra.mxu0 0
      %1980 = vmatpush.bf16.msra.mxu0 0
      %1981 = vmatpush.bf16.msra.mxu0 0
      %1982 = vmatpush.bf16.msra.mxu0 %v1973
      %1983 = vmatmul.bf16.gmra.mxu0 %v1925
      %v1984 = vpop.f32.mrf.mxu0
      %v1985 = vadd.f32 0.0, %v1984
      %v1986 = vpop.f32.mrf.mxu0
      %v1987 = vadd.f32 0.0, %v1986
      %1988 = vmatmul.bf16.gmra.mxu0 %v1928
      %v1989 = vpop.f32.mrf.mxu0
      %v1990 = vadd.f32 0.0, %v1989
      %v1991 = vpop.f32.mrf.mxu0
      %v1992 = vadd.f32 0.0, %v1991
      %1993 = vmatmul.bf16.gmra.mxu0 %v1931
      %v1994 = vpop.f32.mrf.mxu0
      %v1995 = vadd.f32 0.0, %v1994
      %v1996 = vpop.f32.mrf.mxu0
      %v1997 = vadd.f32 0.0, %v1996
      %1998 = vmatmul.bf16.gmra.mxu0 %v1934
      %v1999 = vpop.f32.mrf.mxu0
      %v2000 = vadd.f32 0.0, %v1999
      %v2001 = vpop.f32.mrf.mxu0
      %v2002 = vadd.f32 0.0, %v2001
      %2003 = vmatmul.bf16.gmra.mxu0 %v1937
      %v2004 = vpop.f32.mrf.mxu0
      %v2005 = vadd.f32 0.0, %v2004
      %v2006 = vpop.f32.mrf.mxu0
      %v2007 = vadd.f32 0.0, %v2006
      %2008 = vmatmul.bf16.gmra.mxu0 %v1940
      %v2009 = vpop.f32.mrf.mxu0
      %v2010 = vadd.f32 0.0, %v2009
      %v2011 = vpop.f32.mrf.mxu0
      %v2012 = vadd.f32 0.0, %v2011
      %2013 = vmatmul.bf16.gmra.mxu0 %v1943
      %v2014 = vpop.f32.mrf.mxu0
      %v2015 = vadd.f32 0.0, %v2014
      %v2016 = vpop.f32.mrf.mxu0
      %v2017 = vadd.f32 0.0, %v2016
      %2018 = vmatmul.bf16.gmra.mxu0 %v1946
      %v2019 = vpop.f32.mrf.mxu0
      %v2020 = vadd.f32 0.0, %v2019
      %v2021 = vpop.f32.mrf.mxu0
      %v2022 = vadd.f32 0.0, %v2021
      %2023 = vmatmul.bf16.gmra.mxu0 %v1949
      %v2024 = vpop.f32.mrf.mxu0
      %v2025 = vadd.f32 0.0, %v2024
      %v2026 = vpop.f32.mrf.mxu0
      %v2027 = vadd.f32 0.0, %v2026
      %2028 = vmatmul.bf16.gmra.mxu0 %v1952
      %v2029 = vpop.f32.mrf.mxu0
      %v2030 = vadd.f32 0.0, %v2029
      %v2031 = vpop.f32.mrf.mxu0
      %v2032 = vadd.f32 0.0, %v2031
      %2033 = vmatmul.bf16.gmra.mxu0 %v1955
      %v2034 = vpop.f32.mrf.mxu0
      %v2035 = vadd.f32 0.0, %v2034
      %v2036 = vpop.f32.mrf.mxu0
      %v2037 = vadd.f32 0.0, %v2036
      %2038 = vmatmul.bf16.gmra.mxu0 %v1958
      %v2039 = vpop.f32.mrf.mxu0
      %v2040 = vadd.f32 0.0, %v2039
      %v2041 = vpop.f32.mrf.mxu0
      %v2042 = vadd.f32 0.0, %v2041
      %2043 = vmatmul.bf16.gmra.mxu0 %v1961
      %v2044 = vpop.f32.mrf.mxu0
      %v2045 = vadd.f32 0.0, %v2044
      %v2046 = vpop.f32.mrf.mxu0
      %v2047 = vadd.f32 0.0, %v2046
      %2048 = vmatmul.bf16.gmra.mxu0 %v1964
      %v2049 = vpop.f32.mrf.mxu0
      %v2050 = vadd.f32 0.0, %v2049
      %v2051 = vpop.f32.mrf.mxu0
      %v2052 = vadd.f32 0.0, %v2051
      %2053 = vmatmul.bf16.gmra.mxu0 %v1967
      %v2054 = vpop.f32.mrf.mxu0
      %v2055 = vadd.f32 0.0, %v2054
      %v2056 = vpop.f32.mrf.mxu0
      %v2057 = vadd.f32 0.0, %v2056
      %2058 = vmatmul.bf16.gmra.mxu0 %v1970
      %v2059 = vpop.f32.mrf.mxu0
      %v2060 = vadd.f32 0.0, %v2059
      %v2061 = vpop.f32.mrf.mxu0
      %v2062 = vadd.f32 0.0, %v2061
      %2063 = vdwg.mxu0
      %v2064 = vadd.f32 %v1633, %v1985
      %v2065 = vadd.f32 %v1635, %v1987
      %v2066 = vadd.f32 %v1638, %v1990
      %v2067 = vadd.f32 %v1640, %v1992
      %v2068 = vadd.f32 %v1643, %v1995
      %v2069 = vadd.f32 %v1645, %v1997
      %v2070 = vadd.f32 %v1648, %v2000
      %v2071 = vadd.f32 %v1650, %v2002
      %v2072 = vadd.f32 %v1653, %v2005
      %v2073 = vadd.f32 %v1655, %v2007
      %v2074 = vadd.f32 %v1658, %v2010
      %v2075 = vadd.f32 %v1660, %v2012
      %v2076 = vadd.f32 %v1663, %v2015
      %v2077 = vadd.f32 %v1665, %v2017
      %v2078 = vadd.f32 %v1668, %v2020
      %v2079 = vadd.f32 %v1670, %v2022
      %v2080 = vadd.f32 %v1673, %v2025
      %v2081 = vadd.f32 %v1675, %v2027
      %v2082 = vadd.f32 %v1678, %v2030
      %v2083 = vadd.f32 %v1680, %v2032
      %v2084 = vadd.f32 %v1683, %v2035
      %v2085 = vadd.f32 %v1685, %v2037
      %v2086 = vadd.f32 %v1688, %v2040
      %v2087 = vadd.f32 %v1690, %v2042
      %v2088 = vadd.f32 %v1693, %v2045
      %v2089 = vadd.f32 %v1695, %v2047
      %v2090 = vadd.f32 %v1698, %v2050
      %v2091 = vadd.f32 %v1700, %v2052
      %v2092 = vadd.f32 %v1703, %v2055
      %v2093 = vadd.f32 %v1705, %v2057
      %v2094 = vadd.f32 %v1708, %v2060
      %v2095 = vadd.f32 %v1710, %v2062
      %v2096 = vld [vmem:[%s746] sm:$0xf]
      %v2097 = vld [vmem:[%s746 + $0x4] sm:$0xf]
      %v2098 = vld [vmem:[%s746 + $0xc] sm:$0xf]
      %v2099 = vld [vmem:[%s746 + $0x10] sm:$0xf]
      %v2100 = vld [vmem:[%s746 + $0x18] sm:$0xf]
      %v2101 = vld [vmem:[%s746 + $0x1c] sm:$0xf]
      %v2102 = vld [vmem:[%s746 + $0x24] sm:$0xf]
      %v2103 = vld [vmem:[%s746 + $0x28] sm:$0xf]
      %v2104 = vld [vmem:[%s746 + $0x30] sm:$0xf]
      %v2105 = vld [vmem:[%s746 + $0x34] sm:$0xf]
      %v2106 = vld [vmem:[%s746 + $0x3c] sm:$0xf]
      %v2107 = vld [vmem:[%s746 + $0x40] sm:$0xf]
      %v2108 = vld [vmem:[%s746 + $0x48] sm:$0xf]
      %v2109 = vld [vmem:[%s746 + $0x4c] sm:$0xf]
      %v2110 = vld [vmem:[%s746 + $0x54] sm:$0xf]
      %v2111 = vld [vmem:[%s746 + $0x58] sm:$0xf]
      %v2112 = vld [vmem:[%s746 + $0x60] sm:$0xf]
      %v2113 = vld [vmem:[%s746 + $0x64] sm:$0xf]
      %v2114 = vld [vmem:[%s746 + $0x6c] sm:$0xf]
      %v2115 = vld [vmem:[%s746 + $0x70] sm:$0xf]
      %v2116 = vld [vmem:[%s746 + $0x78] sm:$0xf]
      %v2117 = vld [vmem:[%s746 + $0x7c] sm:$0xf]
      %v2118 = vld [vmem:[%s746 + $0x84] sm:$0xf]
      %v2119 = vld [vmem:[%s746 + $0x88] sm:$0xf]
      %v2120 = vld [vmem:[%s746 + $0x90] sm:$0xf]
      %v2121 = vld [vmem:[%s746 + $0x94] sm:$0xf]
      %v2122 = vld [vmem:[%s746 + $0x9c] sm:$0xf]
      %v2123 = vld [vmem:[%s746 + $0xa0] sm:$0xf]
      %v2124 = vld [vmem:[%s746 + $0xa8] sm:$0xf]
      %v2125 = vld [vmem:[%s746 + $0xac] sm:$0xf]
      %v2126 = vld [vmem:[%s746 + $0xb4] sm:$0xf]
      %v2127 = vld [vmem:[%s746 + $0xb8] sm:$0xf]
      %s2128 = scalar_lea.vmem %s3, 8
      %v2129 = vld [vmem:[%s2128] sm:$0x3]
      %v2162 = vunpack.c.l.b16 %v2096
      %v2163 = vunpack.c.l.b16 %v2097
      %v2164 = vunpack.c.l.b16 %v2098
      %v2165 = vunpack.c.l.b16 %v2099
      %v2166 = vunpack.c.l.b16 %v2100
      %v2167 = vunpack.c.l.b16 %v2101
      %v2168 = vunpack.c.l.b16 %v2102
      %v2169 = vunpack.c.l.b16 %v2103
      %v2170 = vunpack.c.l.b16 %v2104
      %v2171 = vunpack.c.l.b16 %v2105
      %v2172 = vunpack.c.l.b16 %v2106
      %v2173 = vunpack.c.l.b16 %v2107
      %v2174 = vunpack.c.l.b16 %v2108
      %v2175 = vunpack.c.l.b16 %v2109
      %v2176 = vunpack.c.l.b16 %v2110
      %v2177 = vunpack.c.l.b16 %v2111
      %v2178 = vunpack.c.l.b16 %v2112
      %v2179 = vunpack.c.l.b16 %v2113
      %v2180 = vunpack.c.l.b16 %v2114
      %v2181 = vunpack.c.l.b16 %v2115
      %v2182 = vunpack.c.l.b16 %v2116
      %v2183 = vunpack.c.l.b16 %v2117
      %v2184 = vunpack.c.l.b16 %v2118
      %v2185 = vunpack.c.l.b16 %v2119
      %v2186 = vunpack.c.l.b16 %v2120
      %v2187 = vunpack.c.l.b16 %v2121
      %v2188 = vunpack.c.l.b16 %v2122
      %v2189 = vunpack.c.l.b16 %v2123
      %v2190 = vunpack.c.l.b16 %v2124
      %v2191 = vunpack.c.l.b16 %v2125
      %v2192 = vunpack.c.l.b16 %v2126
      %v2193 = vunpack.c.l.b16 %v2127
      %v2194 = vpack.c.b16 %v2163, %v2162
      %v2195 = vpack.c.b16 %v2165, %v2164
      %v2196 = vpack.c.b16 %v2167, %v2166
      %v2197 = vpack.c.b16 %v2169, %v2168
      %v2198 = vpack.c.b16 %v2171, %v2170
      %v2199 = vpack.c.b16 %v2173, %v2172
      %v2200 = vpack.c.b16 %v2175, %v2174
      %v2201 = vpack.c.b16 %v2177, %v2176
      %v2202 = vpack.c.b16 %v2179, %v2178
      %v2203 = vpack.c.b16 %v2181, %v2180
      %v2204 = vpack.c.b16 %v2183, %v2182
      %v2205 = vpack.c.b16 %v2185, %v2184
      %v2206 = vpack.c.b16 %v2187, %v2186
      %v2207 = vpack.c.b16 %v2189, %v2188
      %v2208 = vpack.c.b16 %v2191, %v2190
      %v2209 = vpack.c.b16 %v2193, %v2192
      %v2211 = vsel %vm1350, %v2194, 0
      %v2214 = vsel %vm1350, %v2195, 0
      %v2217 = vsel %vm1350, %v2196, 0
      %v2220 = vsel %vm1350, %v2197, 0
      %v2223 = vsel %vm1350, %v2198, 0
      %v2226 = vsel %vm1350, %v2199, 0
      %v2229 = vsel %vm1350, %v2200, 0
      %v2232 = vsel %vm1350, %v2201, 0
      %v2235 = vsel %vm1350, %v2202, 0
      %v2238 = vsel %vm1350, %v2203, 0
      %v2241 = vsel %vm1350, %v2204, 0
      %v2244 = vsel %vm1350, %v2205, 0
      %v2247 = vsel %vm1350, %v2206, 0
      %v2250 = vsel %vm1350, %v2207, 0
      %v2253 = vsel %vm1350, %v2208, 0
      %v2256 = vsel %vm1350, %v2209, 0
      %v2259 = vsel %vm1399, %v2129, 0
      %2261 = vmatpush.bf16.msra.mxu0 0
      %2262 = vmatpush.bf16.msra.mxu0 0
      %2263 = vmatpush.bf16.msra.mxu0 0
      %2264 = vmatpush.bf16.msra.mxu0 0
      %2265 = vmatpush.bf16.msra.mxu0 0
      %2266 = vmatpush.bf16.msra.mxu0 0
      %2267 = vmatpush.bf16.msra.mxu0 0
      %2268 = vmatpush.bf16.msra.mxu0 %v2259
      %2269 = vmatmul.bf16.gmra.mxu0 %v2211
      %v2270 = vpop.f32.mrf.mxu0
      %v2271 = vadd.f32 0.0, %v2270
      %v2272 = vpop.f32.mrf.mxu0
      %v2273 = vadd.f32 0.0, %v2272
      %2274 = vmatmul.bf16.gmra.mxu0 %v2214
      %v2275 = vpop.f32.mrf.mxu0
      %v2276 = vadd.f32 0.0, %v2275
      %v2277 = vpop.f32.mrf.mxu0
      %v2278 = vadd.f32 0.0, %v2277
      %2279 = vmatmul.bf16.gmra.mxu0 %v2217
      %v2280 = vpop.f32.mrf.mxu0
      %v2281 = vadd.f32 0.0, %v2280
      %v2282 = vpop.f32.mrf.mxu0
      %v2283 = vadd.f32 0.0, %v2282
      %2284 = vmatmul.bf16.gmra.mxu0 %v2220
      %v2285 = vpop.f32.mrf.mxu0
      %v2286 = vadd.f32 0.0, %v2285
      %v2287 = vpop.f32.mrf.mxu0
      %v2288 = vadd.f32 0.0, %v2287
      %2289 = vmatmul.bf16.gmra.mxu0 %v2223
      %v2290 = vpop.f32.mrf.mxu0
      %v2291 = vadd.f32 0.0, %v2290
      %v2292 = vpop.f32.mrf.mxu0
      %v2293 = vadd.f32 0.0, %v2292
      %2294 = vmatmul.bf16.gmra.mxu0 %v2226
      %v2295 = vpop.f32.mrf.mxu0
      %v2296 = vadd.f32 0.0, %v2295
      %v2297 = vpop.f32.mrf.mxu0
      %v2298 = vadd.f32 0.0, %v2297
      %2299 = vmatmul.bf16.gmra.mxu0 %v2229
      %v2300 = vpop.f32.mrf.mxu0
      %v2301 = vadd.f32 0.0, %v2300
      %v2302 = vpop.f32.mrf.mxu0
      %v2303 = vadd.f32 0.0, %v2302
      %2304 = vmatmul.bf16.gmra.mxu0 %v2232
      %v2305 = vpop.f32.mrf.mxu0
      %v2306 = vadd.f32 0.0, %v2305
      %v2307 = vpop.f32.mrf.mxu0
      %v2308 = vadd.f32 0.0, %v2307
      %2309 = vmatmul.bf16.gmra.mxu0 %v2235
      %v2310 = vpop.f32.mrf.mxu0
      %v2311 = vadd.f32 0.0, %v2310
      %v2312 = vpop.f32.mrf.mxu0
      %v2313 = vadd.f32 0.0, %v2312
      %2314 = vmatmul.bf16.gmra.mxu0 %v2238
      %v2315 = vpop.f32.mrf.mxu0
      %v2316 = vadd.f32 0.0, %v2315
      %v2317 = vpop.f32.mrf.mxu0
      %v2318 = vadd.f32 0.0, %v2317
      %2319 = vmatmul.bf16.gmra.mxu0 %v2241
      %v2320 = vpop.f32.mrf.mxu0
      %v2321 = vadd.f32 0.0, %v2320
      %v2322 = vpop.f32.mrf.mxu0
      %v2323 = vadd.f32 0.0, %v2322
      %2324 = vmatmul.bf16.gmra.mxu0 %v2244
      %v2325 = vpop.f32.mrf.mxu0
      %v2326 = vadd.f32 0.0, %v2325
      %v2327 = vpop.f32.mrf.mxu0
      %v2328 = vadd.f32 0.0, %v2327
      %2329 = vmatmul.bf16.gmra.mxu0 %v2247
      %v2330 = vpop.f32.mrf.mxu0
      %v2331 = vadd.f32 0.0, %v2330
      %v2332 = vpop.f32.mrf.mxu0
      %v2333 = vadd.f32 0.0, %v2332
      %2334 = vmatmul.bf16.gmra.mxu0 %v2250
      %v2335 = vpop.f32.mrf.mxu0
      %v2336 = vadd.f32 0.0, %v2335
      %v2337 = vpop.f32.mrf.mxu0
      %v2338 = vadd.f32 0.0, %v2337
      %2339 = vmatmul.bf16.gmra.mxu0 %v2253
      %v2340 = vpop.f32.mrf.mxu0
      %v2341 = vadd.f32 0.0, %v2340
      %v2342 = vpop.f32.mrf.mxu0
      %v2343 = vadd.f32 0.0, %v2342
      %2344 = vmatmul.bf16.gmra.mxu0 %v2256
      %v2345 = vpop.f32.mrf.mxu0
      %v2346 = vadd.f32 0.0, %v2345
      %v2347 = vpop.f32.mrf.mxu0
      %v2348 = vadd.f32 0.0, %v2347
      %2349 = vdwg.mxu0
      %v2350 = vadd.f32 %v2064, %v2271
      %v2351 = vadd.f32 %v2065, %v2273
      %v2352 = vadd.f32 %v2066, %v2276
      %v2353 = vadd.f32 %v2067, %v2278
      %v2354 = vadd.f32 %v2068, %v2281
      %v2355 = vadd.f32 %v2069, %v2283
      %v2356 = vadd.f32 %v2070, %v2286
      %v2357 = vadd.f32 %v2071, %v2288
      %v2358 = vadd.f32 %v2072, %v2291
      %v2359 = vadd.f32 %v2073, %v2293
      %v2360 = vadd.f32 %v2074, %v2296
      %v2361 = vadd.f32 %v2075, %v2298
      %v2362 = vadd.f32 %v2076, %v2301
      %v2363 = vadd.f32 %v2077, %v2303
      %v2364 = vadd.f32 %v2078, %v2306
      %v2365 = vadd.f32 %v2079, %v2308
      %v2366 = vadd.f32 %v2080, %v2311
      %v2367 = vadd.f32 %v2081, %v2313
      %v2368 = vadd.f32 %v2082, %v2316
      %v2369 = vadd.f32 %v2083, %v2318
      %v2370 = vadd.f32 %v2084, %v2321
      %v2371 = vadd.f32 %v2085, %v2323
      %v2372 = vadd.f32 %v2086, %v2326
      %v2373 = vadd.f32 %v2087, %v2328
      %v2374 = vadd.f32 %v2088, %v2331
      %v2375 = vadd.f32 %v2089, %v2333
      %v2376 = vadd.f32 %v2090, %v2336
      %v2377 = vadd.f32 %v2091, %v2338
      %v2378 = vadd.f32 %v2092, %v2341
      %v2379 = vadd.f32 %v2093, %v2343
      %v2380 = vadd.f32 %v2094, %v2346
      %v2381 = vadd.f32 %v2095, %v2348
      %v2382 = vld [vmem:[%s746] sm:$0xf]
      %v2383 = vld [vmem:[%s746 + $0x4] sm:$0xf]
      %v2384 = vld [vmem:[%s746 + $0x8] sm:$0x1]
      %v2385 = vld [vmem:[%s746 + $0xc] sm:$0xf]
      %v2386 = vld [vmem:[%s746 + $0x10] sm:$0xf]
      %v2387 = vld [vmem:[%s746 + $0x14] sm:$0x1]
      %v2388 = vld [vmem:[%s746 + $0x18] sm:$0xf]
      %v2389 = vld [vmem:[%s746 + $0x1c] sm:$0xf]
      %v2390 = vld [vmem:[%s746 + $0x20] sm:$0x1]
      %v2391 = vld [vmem:[%s746 + $0x24] sm:$0xf]
      %v2392 = vld [vmem:[%s746 + $0x28] sm:$0xf]
      %v2393 = vld [vmem:[%s746 + $0x2c] sm:$0x1]
      %v2394 = vld [vmem:[%s746 + $0x30] sm:$0xf]
      %v2395 = vld [vmem:[%s746 + $0x34] sm:$0xf]
      %v2396 = vld [vmem:[%s746 + $0x38] sm:$0x1]
      %v2397 = vld [vmem:[%s746 + $0x3c] sm:$0xf]
      %v2398 = vld [vmem:[%s746 + $0x40] sm:$0xf]
      %v2399 = vld [vmem:[%s746 + $0x44] sm:$0x1]
      %v2400 = vld [vmem:[%s746 + $0x48] sm:$0xf]
      %v2401 = vld [vmem:[%s746 + $0x4c] sm:$0xf]
      %v2402 = vld [vmem:[%s746 + $0x50] sm:$0x1]
      %v2403 = vld [vmem:[%s746 + $0x54] sm:$0xf]
      %v2404 = vld [vmem:[%s746 + $0x58] sm:$0xf]
      %v2405 = vld [vmem:[%s746 + $0x5c] sm:$0x1]
      %v2406 = vld [vmem:[%s746 + $0x60] sm:$0xf]
      %v2407 = vld [vmem:[%s746 + $0x64] sm:$0xf]
      %v2408 = vld [vmem:[%s746 + $0x68] sm:$0x1]
      %v2409 = vld [vmem:[%s746 + $0x6c] sm:$0xf]
      %v2410 = vld [vmem:[%s746 + $0x70] sm:$0xf]
      %v2411 = vld [vmem:[%s746 + $0x74] sm:$0x1]
      %v2412 = vld [vmem:[%s746 + $0x78] sm:$0xf]
      %v2413 = vld [vmem:[%s746 + $0x7c] sm:$0xf]
      %v2414 = vld [vmem:[%s746 + $0x80] sm:$0x1]
      %v2415 = vld [vmem:[%s746 + $0x84] sm:$0xf]
      %v2416 = vld [vmem:[%s746 + $0x88] sm:$0xf]
      %v2417 = vld [vmem:[%s746 + $0x8c] sm:$0x1]
      %v2418 = vld [vmem:[%s746 + $0x90] sm:$0xf]
      %v2419 = vld [vmem:[%s746 + $0x94] sm:$0xf]
      %v2420 = vld [vmem:[%s746 + $0x98] sm:$0x1]
      %v2421 = vld [vmem:[%s746 + $0x9c] sm:$0xf]
      %v2422 = vld [vmem:[%s746 + $0xa0] sm:$0xf]
      %v2423 = vld [vmem:[%s746 + $0xa4] sm:$0x1]
      %v2424 = vld [vmem:[%s746 + $0xa8] sm:$0xf]
      %v2425 = vld [vmem:[%s746 + $0xac] sm:$0xf]
      %v2426 = vld [vmem:[%s746 + $0xb0] sm:$0x1]
      %v2427 = vld [vmem:[%s746 + $0xb4] sm:$0xf]
      %v2428 = vld [vmem:[%s746 + $0xb8] sm:$0xf]
      %v2429 = vld [vmem:[%s746 + $0xbc] sm:$0x1]
      %v2431 = vshrl.u32 %v2382, 16
      %v2433 = vrot.slane %v2431, 4
      %v2434 = vshll.u32 %v2382, 16
      %v2436 = vrot.slane %v2434, 5
      %v2437 = vor.u32 %v2433, %v2436
      %v2438 = vrot.slane %v2437, 4
      %v2440 = vshll.u32 %v2383, 16
      %v2442 = vrot.slane %v2440, 5
      %v2443 = vsel %vm912, %v2438, %v2442
      %v2444 = vshrl.u32 %v2383, 16
      %v2446 = vrot.slane %v2444, 4
      %v2447 = vor.u32 %v2446, %v2442
      %v2448 = vrot.slane %v2447, 4
      %v2450 = vshll.u32 %v2384, 16
      %v2452 = vrot.slane %v2450, 5
      %v2453 = vsel %vm912, %v2448, %v2452
      %v2455 = vshrl.u32 %v2385, 16
      %v2457 = vrot.slane %v2455, 4
      %v2458 = vshll.u32 %v2385, 16
      %v2460 = vrot.slane %v2458, 5
      %v2461 = vor.u32 %v2457, %v2460
      %v2462 = vrot.slane %v2461, 4
      %v2464 = vshll.u32 %v2386, 16
      %v2466 = vrot.slane %v2464, 5
      %v2467 = vsel %vm912, %v2462, %v2466
      %v2468 = vshrl.u32 %v2386, 16
      %v2470 = vrot.slane %v2468, 4
      %v2471 = vor.u32 %v2470, %v2466
      %v2472 = vrot.slane %v2471, 4
      %v2474 = vshll.u32 %v2387, 16
      %v2476 = vrot.slane %v2474, 5
      %v2477 = vsel %vm912, %v2472, %v2476
      %v2479 = vshrl.u32 %v2388, 16
      %v2481 = vrot.slane %v2479, 4
      %v2482 = vshll.u32 %v2388, 16
      %v2484 = vrot.slane %v2482, 5
      %v2485 = vor.u32 %v2481, %v2484
      %v2486 = vrot.slane %v2485, 4
      %v2488 = vshll.u32 %v2389, 16
      %v2490 = vrot.slane %v2488, 5
      %v2491 = vsel %vm912, %v2486, %v2490
      %v2492 = vshrl.u32 %v2389, 16
      %v2494 = vrot.slane %v2492, 4
      %v2495 = vor.u32 %v2494, %v2490
      %v2496 = vrot.slane %v2495, 4
      %v2498 = vshll.u32 %v2390, 16
      %v2500 = vrot.slane %v2498, 5
      %v2501 = vsel %vm912, %v2496, %v2500
      %v2503 = vshrl.u32 %v2391, 16
      %v2505 = vrot.slane %v2503, 4
      %v2506 = vshll.u32 %v2391, 16
      %v2508 = vrot.slane %v2506, 5
      %v2509 = vor.u32 %v2505, %v2508
      %v2510 = vrot.slane %v2509, 4
      %v2512 = vshll.u32 %v2392, 16
      %v2514 = vrot.slane %v2512, 5
      %v2515 = vsel %vm912, %v2510, %v2514
      %v2516 = vshrl.u32 %v2392, 16
      %v2518 = vrot.slane %v2516, 4
      %v2519 = vor.u32 %v2518, %v2514
      %v2520 = vrot.slane %v2519, 4
      %v2522 = vshll.u32 %v2393, 16
      %v2524 = vrot.slane %v2522, 5
      %v2525 = vsel %vm912, %v2520, %v2524
      %v2527 = vshrl.u32 %v2394, 16
      %v2529 = vrot.slane %v2527, 4
      %v2530 = vshll.u32 %v2394, 16
      %v2532 = vrot.slane %v2530, 5
      %v2533 = vor.u32 %v2529, %v2532
      %v2534 = vrot.slane %v2533, 4
      %v2536 = vshll.u32 %v2395, 16
      %v2538 = vrot.slane %v2536, 5
      %v2539 = vsel %vm912, %v2534, %v2538
      %v2540 = vshrl.u32 %v2395, 16
      %v2542 = vrot.slane %v2540, 4
      %v2543 = vor.u32 %v2542, %v2538
      %v2544 = vrot.slane %v2543, 4
      %v2546 = vshll.u32 %v2396, 16
      %v2548 = vrot.slane %v2546, 5
      %v2549 = vsel %vm912, %v2544, %v2548
      %v2551 = vshrl.u32 %v2397, 16
      %v2553 = vrot.slane %v2551, 4
      %v2554 = vshll.u32 %v2397, 16
      %v2556 = vrot.slane %v2554, 5
      %v2557 = vor.u32 %v2553, %v2556
      %v2558 = vrot.slane %v2557, 4
      %v2560 = vshll.u32 %v2398, 16
      %v2562 = vrot.slane %v2560, 5
      %v2563 = vsel %vm912, %v2558, %v2562
      %v2564 = vshrl.u32 %v2398, 16
      %v2566 = vrot.slane %v2564, 4
      %v2567 = vor.u32 %v2566, %v2562
      %v2568 = vrot.slane %v2567, 4
      %v2570 = vshll.u32 %v2399, 16
      %v2572 = vrot.slane %v2570, 5
      %v2573 = vsel %vm912, %v2568, %v2572
      %v2575 = vshrl.u32 %v2400, 16
      %v2577 = vrot.slane %v2575, 4
      %v2578 = vshll.u32 %v2400, 16
      %v2580 = vrot.slane %v2578, 5
      %v2581 = vor.u32 %v2577, %v2580
      %v2582 = vrot.slane %v2581, 4
      %v2584 = vshll.u32 %v2401, 16
      %v2586 = vrot.slane %v2584, 5
      %v2587 = vsel %vm912, %v2582, %v2586
      %v2588 = vshrl.u32 %v2401, 16
      %v2590 = vrot.slane %v2588, 4
      %v2591 = vor.u32 %v2590, %v2586
      %v2592 = vrot.slane %v2591, 4
      %v2594 = vshll.u32 %v2402, 16
      %v2596 = vrot.slane %v2594, 5
      %v2597 = vsel %vm912, %v2592, %v2596
      %v2599 = vshrl.u32 %v2403, 16
      %v2601 = vrot.slane %v2599, 4
      %v2602 = vshll.u32 %v2403, 16
      %v2604 = vrot.slane %v2602, 5
      %v2605 = vor.u32 %v2601, %v2604
      %v2606 = vrot.slane %v2605, 4
      %v2608 = vshll.u32 %v2404, 16
      %v2610 = vrot.slane %v2608, 5
      %v2611 = vsel %vm912, %v2606, %v2610
      %v2612 = vshrl.u32 %v2404, 16
      %v2614 = vrot.slane %v2612, 4
      %v2615 = vor.u32 %v2614, %v2610
      %v2616 = vrot.slane %v2615, 4
      %v2618 = vshll.u32 %v2405, 16
      %v2620 = vrot.slane %v2618, 5
      %v2621 = vsel %vm912, %v2616, %v2620
      %v2623 = vshrl.u32 %v2406, 16
      %v2625 = vrot.slane %v2623, 4
      %v2626 = vshll.u32 %v2406, 16
      %v2628 = vrot.slane %v2626, 5
      %v2629 = vor.u32 %v2625, %v2628
      %v2630 = vrot.slane %v2629, 4
      %v2632 = vshll.u32 %v2407, 16
      %v2634 = vrot.slane %v2632, 5
      %v2635 = vsel %vm912, %v2630, %v2634
      %v2636 = vshrl.u32 %v2407, 16
      %v2638 = vrot.slane %v2636, 4
      %v2639 = vor.u32 %v2638, %v2634
      %v2640 = vrot.slane %v2639, 4
      %v2642 = vshll.u32 %v2408, 16
      %v2644 = vrot.slane %v2642, 5
      %v2645 = vsel %vm912, %v2640, %v2644
      %v2647 = vshrl.u32 %v2409, 16
      %v2649 = vrot.slane %v2647, 4
      %v2650 = vshll.u32 %v2409, 16
      %v2652 = vrot.slane %v2650, 5
      %v2653 = vor.u32 %v2649, %v2652
      %v2654 = vrot.slane %v2653, 4
      %v2656 = vshll.u32 %v2410, 16
      %v2658 = vrot.slane %v2656, 5
      %v2659 = vsel %vm912, %v2654, %v2658
      %v2660 = vshrl.u32 %v2410, 16
      %v2662 = vrot.slane %v2660, 4
      %v2663 = vor.u32 %v2662, %v2658
      %v2664 = vrot.slane %v2663, 4
      %v2666 = vshll.u32 %v2411, 16
      %v2668 = vrot.slane %v2666, 5
      %v2669 = vsel %vm912, %v2664, %v2668
      %v2671 = vshrl.u32 %v2412, 16
      %v2673 = vrot.slane %v2671, 4
      %v2674 = vshll.u32 %v2412, 16
      %v2676 = vrot.slane %v2674, 5
      %v2677 = vor.u32 %v2673, %v2676
      %v2678 = vrot.slane %v2677, 4
      %v2680 = vshll.u32 %v2413, 16
      %v2682 = vrot.slane %v2680, 5
      %v2683 = vsel %vm912, %v2678, %v2682
      %v2684 = vshrl.u32 %v2413, 16
      %v2686 = vrot.slane %v2684, 4
      %v2687 = vor.u32 %v2686, %v2682
      %v2688 = vrot.slane %v2687, 4
      %v2690 = vshll.u32 %v2414, 16
      %v2692 = vrot.slane %v2690, 5
      %v2693 = vsel %vm912, %v2688, %v2692
      %v2695 = vshrl.u32 %v2415, 16
      %v2697 = vrot.slane %v2695, 4
      %v2698 = vshll.u32 %v2415, 16
      %v2700 = vrot.slane %v2698, 5
      %v2701 = vor.u32 %v2697, %v2700
      %v2702 = vrot.slane %v2701, 4
      %v2704 = vshll.u32 %v2416, 16
      %v2706 = vrot.slane %v2704, 5
      %v2707 = vsel %vm912, %v2702, %v2706
      %v2708 = vshrl.u32 %v2416, 16
      %v2710 = vrot.slane %v2708, 4
      %v2711 = vor.u32 %v2710, %v2706
      %v2712 = vrot.slane %v2711, 4
      %v2714 = vshll.u32 %v2417, 16
      %v2716 = vrot.slane %v2714, 5
      %v2717 = vsel %vm912, %v2712, %v2716
      %v2719 = vshrl.u32 %v2418, 16
      %v2721 = vrot.slane %v2719, 4
      %v2722 = vshll.u32 %v2418, 16
      %v2724 = vrot.slane %v2722, 5
      %v2725 = vor.u32 %v2721, %v2724
      %v2726 = vrot.slane %v2725, 4
      %v2728 = vshll.u32 %v2419, 16
      %v2730 = vrot.slane %v2728, 5
      %v2731 = vsel %vm912, %v2726, %v2730
      %v2732 = vshrl.u32 %v2419, 16
      %v2734 = vrot.slane %v2732, 4
      %v2735 = vor.u32 %v2734, %v2730
      %v2736 = vrot.slane %v2735, 4
      %v2738 = vshll.u32 %v2420, 16
      %v2740 = vrot.slane %v2738, 5
      %v2741 = vsel %vm912, %v2736, %v2740
      %v2743 = vshrl.u32 %v2421, 16
      %v2745 = vrot.slane %v2743, 4
      %v2746 = vshll.u32 %v2421, 16
      %v2748 = vrot.slane %v2746, 5
      %v2749 = vor.u32 %v2745, %v2748
      %v2750 = vrot.slane %v2749, 4
      %v2752 = vshll.u32 %v2422, 16
      %v2754 = vrot.slane %v2752, 5
      %v2755 = vsel %vm912, %v2750, %v2754
      %v2756 = vshrl.u32 %v2422, 16
      %v2758 = vrot.slane %v2756, 4
      %v2759 = vor.u32 %v2758, %v2754
      %v2760 = vrot.slane %v2759, 4
      %v2762 = vshll.u32 %v2423, 16
      %v2764 = vrot.slane %v2762, 5
      %v2765 = vsel %vm912, %v2760, %v2764
      %v2767 = vshrl.u32 %v2424, 16
      %v2769 = vrot.slane %v2767, 4
      %v2770 = vshll.u32 %v2424, 16
      %v2772 = vrot.slane %v2770, 5
      %v2773 = vor.u32 %v2769, %v2772
      %v2774 = vrot.slane %v2773, 4
      %v2776 = vshll.u32 %v2425, 16
      %v2778 = vrot.slane %v2776, 5
      %v2779 = vsel %vm912, %v2774, %v2778
      %v2780 = vshrl.u32 %v2425, 16
      %v2782 = vrot.slane %v2780, 4
      %v2783 = vor.u32 %v2782, %v2778
      %v2784 = vrot.slane %v2783, 4
      %v2786 = vshll.u32 %v2426, 16
      %v2788 = vrot.slane %v2786, 5
      %v2789 = vsel %vm912, %v2784, %v2788
      %v2791 = vshrl.u32 %v2427, 16
      %v2793 = vrot.slane %v2791, 4
      %v2794 = vshll.u32 %v2427, 16
      %v2796 = vrot.slane %v2794, 5
      %v2797 = vor.u32 %v2793, %v2796
      %v2798 = vrot.slane %v2797, 4
      %v2800 = vshll.u32 %v2428, 16
      %v2802 = vrot.slane %v2800, 5
      %v2803 = vsel %vm912, %v2798, %v2802
      %v2804 = vshrl.u32 %v2428, 16
      %v2806 = vrot.slane %v2804, 4
      %v2807 = vor.u32 %v2806, %v2802
      %v2808 = vrot.slane %v2807, 4
      %v2810 = vshll.u32 %v2429, 16
      %v2812 = vrot.slane %v2810, 5
      %v2813 = vsel %vm912, %v2808, %v2812
      %v2814 = vld [vmem:[%s2128] sm:$0xc]
      %v2815 = vunpack.c.l.b16 %v2443
      %v2816 = vunpack.c.l.b16 %v2453
      %v2817 = vunpack.c.l.b16 %v2467
      %v2818 = vunpack.c.l.b16 %v2477
      %v2819 = vunpack.c.l.b16 %v2491
      %v2820 = vunpack.c.l.b16 %v2501
      %v2821 = vunpack.c.l.b16 %v2515
      %v2822 = vunpack.c.l.b16 %v2525
      %v2823 = vunpack.c.l.b16 %v2539
      %v2824 = vunpack.c.l.b16 %v2549
      %v2825 = vunpack.c.l.b16 %v2563
      %v2826 = vunpack.c.l.b16 %v2573
      %v2827 = vunpack.c.l.b16 %v2587
      %v2828 = vunpack.c.l.b16 %v2597
      %v2829 = vunpack.c.l.b16 %v2611
      %v2830 = vunpack.c.l.b16 %v2621
      %v2831 = vunpack.c.l.b16 %v2635
      %v2832 = vunpack.c.l.b16 %v2645
      %v2833 = vunpack.c.l.b16 %v2659
      %v2834 = vunpack.c.l.b16 %v2669
      %v2835 = vunpack.c.l.b16 %v2683
      %v2836 = vunpack.c.l.b16 %v2693
      %v2837 = vunpack.c.l.b16 %v2707
      %v2838 = vunpack.c.l.b16 %v2717
      %v2839 = vunpack.c.l.b16 %v2731
      %v2840 = vunpack.c.l.b16 %v2741
      %v2841 = vunpack.c.l.b16 %v2755
      %v2842 = vunpack.c.l.b16 %v2765
      %v2843 = vunpack.c.l.b16 %v2779
      %v2844 = vunpack.c.l.b16 %v2789
      %v2845 = vunpack.c.l.b16 %v2803
      %v2846 = vunpack.c.l.b16 %v2813
      %v2847 = vpack.c.b16 %v2816, %v2815
      %v2848 = vpack.c.b16 %v2818, %v2817
      %v2849 = vpack.c.b16 %v2820, %v2819
      %v2850 = vpack.c.b16 %v2822, %v2821
      %v2851 = vpack.c.b16 %v2824, %v2823
      %v2852 = vpack.c.b16 %v2826, %v2825
      %v2853 = vpack.c.b16 %v2828, %v2827
      %v2854 = vpack.c.b16 %v2830, %v2829
      %v2855 = vpack.c.b16 %v2832, %v2831
      %v2856 = vpack.c.b16 %v2834, %v2833
      %v2857 = vpack.c.b16 %v2836, %v2835
      %v2858 = vpack.c.b16 %v2838, %v2837
      %v2859 = vpack.c.b16 %v2840, %v2839
      %v2860 = vpack.c.b16 %v2842, %v2841
      %v2861 = vpack.c.b16 %v2844, %v2843
      %v2862 = vpack.c.b16 %v2846, %v2845
      %v2864 = vunpack.c.l.b16 %v2814
      %v2865 = vpack.c.b16 %v2864, %v2864
      %v2866 = vrot.slane %v2865, 2
      %v2868 = vsel %vm1350, %v2847, 0
      %v2871 = vsel %vm1350, %v2848, 0
      %v2874 = vsel %vm1350, %v2849, 0
      %v2877 = vsel %vm1350, %v2850, 0
      %v2880 = vsel %vm1350, %v2851, 0
      %v2883 = vsel %vm1350, %v2852, 0
      %v2886 = vsel %vm1350, %v2853, 0
      %v2889 = vsel %vm1350, %v2854, 0
      %v2892 = vsel %vm1350, %v2855, 0
      %v2895 = vsel %vm1350, %v2856, 0
      %v2898 = vsel %vm1350, %v2857, 0
      %v2901 = vsel %vm1350, %v2858, 0
      %v2904 = vsel %vm1350, %v2859, 0
      %v2907 = vsel %vm1350, %v2860, 0
      %v2910 = vsel %vm1350, %v2861, 0
      %v2913 = vsel %vm1350, %v2862, 0
      %v2916 = vsel %vm1399, %v2866, 0
      %2918 = vmatpush.bf16.msra.mxu0 0
      %2919 = vmatpush.bf16.msra.mxu0 0
      %2920 = vmatpush.bf16.msra.mxu0 0
      %2921 = vmatpush.bf16.msra.mxu0 0
      %2922 = vmatpush.bf16.msra.mxu0 0
      %2923 = vmatpush.bf16.msra.mxu0 0
      %2924 = vmatpush.bf16.msra.mxu0 0
      %2925 = vmatpush.bf16.msra.mxu0 %v2916
      %2926 = vmatmul.bf16.gmra.mxu0 %v2868
      %v2927 = vpop.f32.mrf.mxu0
      %v2928 = vadd.f32 0.0, %v2927
      %v2929 = vpop.f32.mrf.mxu0
      %v2930 = vadd.f32 0.0, %v2929
      %2931 = vmatmul.bf16.gmra.mxu0 %v2871
      %v2932 = vpop.f32.mrf.mxu0
      %v2933 = vadd.f32 0.0, %v2932
      %v2934 = vpop.f32.mrf.mxu0
      %v2935 = vadd.f32 0.0, %v2934
      %2936 = vmatmul.bf16.gmra.mxu0 %v2874
      %v2937 = vpop.f32.mrf.mxu0
      %v2938 = vadd.f32 0.0, %v2937
      %v2939 = vpop.f32.mrf.mxu0
      %v2940 = vadd.f32 0.0, %v2939
      %2941 = vmatmul.bf16.gmra.mxu0 %v2877
      %v2942 = vpop.f32.mrf.mxu0
      %v2943 = vadd.f32 0.0, %v2942
      %v2944 = vpop.f32.mrf.mxu0
      %v2945 = vadd.f32 0.0, %v2944
      %2946 = vmatmul.bf16.gmra.mxu0 %v2880
      %v2947 = vpop.f32.mrf.mxu0
      %v2948 = vadd.f32 0.0, %v2947
      %v2949 = vpop.f32.mrf.mxu0
      %v2950 = vadd.f32 0.0, %v2949
      %2951 = vmatmul.bf16.gmra.mxu0 %v2883
      %v2952 = vpop.f32.mrf.mxu0
      %v2953 = vadd.f32 0.0, %v2952
      %v2954 = vpop.f32.mrf.mxu0
      %v2955 = vadd.f32 0.0, %v2954
      %2956 = vmatmul.bf16.gmra.mxu0 %v2886
      %v2957 = vpop.f32.mrf.mxu0
      %v2958 = vadd.f32 0.0, %v2957
      %v2959 = vpop.f32.mrf.mxu0
      %v2960 = vadd.f32 0.0, %v2959
      %2961 = vmatmul.bf16.gmra.mxu0 %v2889
      %v2962 = vpop.f32.mrf.mxu0
      %v2963 = vadd.f32 0.0, %v2962
      %v2964 = vpop.f32.mrf.mxu0
      %v2965 = vadd.f32 0.0, %v2964
      %2966 = vmatmul.bf16.gmra.mxu0 %v2892
      %v2967 = vpop.f32.mrf.mxu0
      %v2968 = vadd.f32 0.0, %v2967
      %v2969 = vpop.f32.mrf.mxu0
      %v2970 = vadd.f32 0.0, %v2969
      %2971 = vmatmul.bf16.gmra.mxu0 %v2895
      %v2972 = vpop.f32.mrf.mxu0
      %v2973 = vadd.f32 0.0, %v2972
      %v2974 = vpop.f32.mrf.mxu0
      %v2975 = vadd.f32 0.0, %v2974
      %2976 = vmatmul.bf16.gmra.mxu0 %v2898
      %v2977 = vpop.f32.mrf.mxu0
      %v2978 = vadd.f32 0.0, %v2977
      %v2979 = vpop.f32.mrf.mxu0
      %v2980 = vadd.f32 0.0, %v2979
      %2981 = vmatmul.bf16.gmra.mxu0 %v2901
      %v2982 = vpop.f32.mrf.mxu0
      %v2983 = vadd.f32 0.0, %v2982
      %v2984 = vpop.f32.mrf.mxu0
      %v2985 = vadd.f32 0.0, %v2984
      %2986 = vmatmul.bf16.gmra.mxu0 %v2904
      %v2987 = vpop.f32.mrf.mxu0
      %v2988 = vadd.f32 0.0, %v2987
      %v2989 = vpop.f32.mrf.mxu0
      %v2990 = vadd.f32 0.0, %v2989
      %2991 = vmatmul.bf16.gmra.mxu0 %v2907
      %v2992 = vpop.f32.mrf.mxu0
      %v2993 = vadd.f32 0.0, %v2992
      %v2994 = vpop.f32.mrf.mxu0
      %v2995 = vadd.f32 0.0, %v2994
      %2996 = vmatmul.bf16.gmra.mxu0 %v2910
      %v2997 = vpop.f32.mrf.mxu0
      %v2998 = vadd.f32 0.0, %v2997
      %v2999 = vpop.f32.mrf.mxu0
      %v3000 = vadd.f32 0.0, %v2999
      %3001 = vmatmul.bf16.gmra.mxu0 %v2913
      %v3002 = vpop.f32.mrf.mxu0
      %v3003 = vadd.f32 0.0, %v3002
      %v3004 = vpop.f32.mrf.mxu0
      %v3005 = vadd.f32 0.0, %v3004
      %3006 = vdwg.mxu0
      %v3007 = vadd.f32 %v2350, %v2928
      %v3008 = vadd.f32 %v2351, %v2930
      %v3009 = vadd.f32 %v2352, %v2933
      %v3010 = vadd.f32 %v2353, %v2935
      %v3011 = vadd.f32 %v2354, %v2938
      %v3012 = vadd.f32 %v2355, %v2940
      %v3013 = vadd.f32 %v2356, %v2943
      %v3014 = vadd.f32 %v2357, %v2945
      %v3015 = vadd.f32 %v2358, %v2948
      %v3016 = vadd.f32 %v2359, %v2950
      %v3017 = vadd.f32 %v2360, %v2953
      %v3018 = vadd.f32 %v2361, %v2955
      %v3019 = vadd.f32 %v2362, %v2958
      %v3020 = vadd.f32 %v2363, %v2960
      %v3021 = vadd.f32 %v2364, %v2963
      %v3022 = vadd.f32 %v2365, %v2965
      %v3023 = vadd.f32 %v2366, %v2968
      %v3024 = vadd.f32 %v2367, %v2970
      %v3025 = vadd.f32 %v2368, %v2973
      %v3026 = vadd.f32 %v2369, %v2975
      %v3027 = vadd.f32 %v2370, %v2978
      %v3028 = vadd.f32 %v2371, %v2980
      %v3029 = vadd.f32 %v2372, %v2983
      %v3030 = vadd.f32 %v2373, %v2985
      %v3031 = vadd.f32 %v2374, %v2988
      %v3032 = vadd.f32 %v2375, %v2990
      %v3033 = vadd.f32 %v2376, %v2993
      %v3034 = vadd.f32 %v2377, %v2995
      %v3035 = vadd.f32 %v2378, %v2998
      %v3036 = vadd.f32 %v2379, %v3000
      %v3037 = vadd.f32 %v2380, %v3003
      %v3038 = vadd.f32 %v2381, %v3005
      %v3039 = vld [vmem:[%s746] sm:$0xe]
      %v3040 = vld [vmem:[%s746 + $0xc] sm:$0xe]
      %v3041 = vld [vmem:[%s746 + $0x18] sm:$0xe]
      %v3042 = vld [vmem:[%s746 + $0x24] sm:$0xe]
      %v3043 = vld [vmem:[%s746 + $0x30] sm:$0xe]
      %v3044 = vld [vmem:[%s746 + $0x3c] sm:$0xe]
      %v3045 = vld [vmem:[%s746 + $0x48] sm:$0xe]
      %v3046 = vld [vmem:[%s746 + $0x54] sm:$0xe]
      %v3047 = vld [vmem:[%s746 + $0x60] sm:$0xe]
      %v3048 = vld [vmem:[%s746 + $0x6c] sm:$0xe]
      %v3049 = vld [vmem:[%s746 + $0x78] sm:$0xe]
      %v3050 = vld [vmem:[%s746 + $0x84] sm:$0xe]
      %v3051 = vld [vmem:[%s746 + $0x90] sm:$0xe]
      %v3052 = vld [vmem:[%s746 + $0x9c] sm:$0xe]
      %v3053 = vld [vmem:[%s746 + $0xa8] sm:$0xe]
      %v3054 = vld [vmem:[%s746 + $0xb4] sm:$0xe]
      %v3103 = vrot.slane %v3039, 5
      %v3104 = vrot.slane %v3103, 4
      %v3105 = vrot.slane %v2383, 5
      %v3106 = vsel %vm1762, %v3104, %v3105
      %v3107 = vrot.slane %v3105, 4
      %v3108 = vrot.slane %v2384, 5
      %v3109 = vsel %vm1762, %v3107, %v3108
      %v3110 = vrot.slane %v3040, 5
      %v3111 = vrot.slane %v3110, 4
      %v3112 = vrot.slane %v2386, 5
      %v3113 = vsel %vm1762, %v3111, %v3112
      %v3114 = vrot.slane %v3112, 4
      %v3115 = vrot.slane %v2387, 5
      %v3116 = vsel %vm1762, %v3114, %v3115
      %v3117 = vrot.slane %v3041, 5
      %v3118 = vrot.slane %v3117, 4
      %v3119 = vrot.slane %v2389, 5
      %v3120 = vsel %vm1762, %v3118, %v3119
      %v3121 = vrot.slane %v3119, 4
      %v3122 = vrot.slane %v2390, 5
      %v3123 = vsel %vm1762, %v3121, %v3122
      %v3124 = vrot.slane %v3042, 5
      %v3125 = vrot.slane %v3124, 4
      %v3126 = vrot.slane %v2392, 5
      %v3127 = vsel %vm1762, %v3125, %v3126
      %v3128 = vrot.slane %v3126, 4
      %v3129 = vrot.slane %v2393, 5
      %v3130 = vsel %vm1762, %v3128, %v3129
      %v3131 = vrot.slane %v3043, 5
      %v3132 = vrot.slane %v3131, 4
      %v3133 = vrot.slane %v2395, 5
      %v3134 = vsel %vm1762, %v3132, %v3133
      %v3135 = vrot.slane %v3133, 4
      %v3136 = vrot.slane %v2396, 5
      %v3137 = vsel %vm1762, %v3135, %v3136
      %v3138 = vrot.slane %v3044, 5
      %v3139 = vrot.slane %v3138, 4
      %v3140 = vrot.slane %v2398, 5
      %v3141 = vsel %vm1762, %v3139, %v3140
      %v3142 = vrot.slane %v3140, 4
      %v3143 = vrot.slane %v2399, 5
      %v3144 = vsel %vm1762, %v3142, %v3143
      %v3145 = vrot.slane %v3045, 5
      %v3146 = vrot.slane %v3145, 4
      %v3147 = vrot.slane %v2401, 5
      %v3148 = vsel %vm1762, %v3146, %v3147
      %v3149 = vrot.slane %v3147, 4
      %v3150 = vrot.slane %v2402, 5
      %v3151 = vsel %vm1762, %v3149, %v3150
      %v3152 = vrot.slane %v3046, 5
      %v3153 = vrot.slane %v3152, 4
      %v3154 = vrot.slane %v2404, 5
      %v3155 = vsel %vm1762, %v3153, %v3154
      %v3156 = vrot.slane %v3154, 4
      %v3157 = vrot.slane %v2405, 5
      %v3158 = vsel %vm1762, %v3156, %v3157
      %v3159 = vrot.slane %v3047, 5
      %v3160 = vrot.slane %v3159, 4
      %v3161 = vrot.slane %v2407, 5
      %v3162 = vsel %vm1762, %v3160, %v3161
      %v3163 = vrot.slane %v3161, 4
      %v3164 = vrot.slane %v2408, 5
      %v3165 = vsel %vm1762, %v3163, %v3164
      %v3166 = vrot.slane %v3048, 5
      %v3167 = vrot.slane %v3166, 4
      %v3168 = vrot.slane %v2410, 5
      %v3169 = vsel %vm1762, %v3167, %v3168
      %v3170 = vrot.slane %v3168, 4
      %v3171 = vrot.slane %v2411, 5
      %v3172 = vsel %vm1762, %v3170, %v3171
      %v3173 = vrot.slane %v3049, 5
      %v3174 = vrot.slane %v3173, 4
      %v3175 = vrot.slane %v2413, 5
      %v3176 = vsel %vm1762, %v3174, %v3175
      %v3177 = vrot.slane %v3175, 4
      %v3178 = vrot.slane %v2414, 5
      %v3179 = vsel %vm1762, %v3177, %v3178
      %v3180 = vrot.slane %v3050, 5
      %v3181 = vrot.slane %v3180, 4
      %v3182 = vrot.slane %v2416, 5
      %v3183 = vsel %vm1762, %v3181, %v3182
      %v3184 = vrot.slane %v3182, 4
      %v3185 = vrot.slane %v2417, 5
      %v3186 = vsel %vm1762, %v3184, %v3185
      %v3187 = vrot.slane %v3051, 5
      %v3188 = vrot.slane %v3187, 4
      %v3189 = vrot.slane %v2419, 5
      %v3190 = vsel %vm1762, %v3188, %v3189
      %v3191 = vrot.slane %v3189, 4
      %v3192 = vrot.slane %v2420, 5
      %v3193 = vsel %vm1762, %v3191, %v3192
      %v3194 = vrot.slane %v3052, 5
      %v3195 = vrot.slane %v3194, 4
      %v3196 = vrot.slane %v2422, 5
      %v3197 = vsel %vm1762, %v3195, %v3196
      %v3198 = vrot.slane %v3196, 4
      %v3199 = vrot.slane %v2423, 5
      %v3200 = vsel %vm1762, %v3198, %v3199
      %v3201 = vrot.slane %v3053, 5
      %v3202 = vrot.slane %v3201, 4
      %v3203 = vrot.slane %v2425, 5
      %v3204 = vsel %vm1762, %v3202, %v3203
      %v3205 = vrot.slane %v3203, 4
      %v3206 = vrot.slane %v2426, 5
      %v3207 = vsel %vm1762, %v3205, %v3206
      %v3208 = vrot.slane %v3054, 5
      %v3209 = vrot.slane %v3208, 4
      %v3210 = vrot.slane %v2428, 5
      %v3211 = vsel %vm1762, %v3209, %v3210
      %v3212 = vrot.slane %v3210, 4
      %v3213 = vrot.slane %v2429, 5
      %v3214 = vsel %vm1762, %v3212, %v3213
      %v3215 = vld [vmem:[%s2128 + $0x4] sm:$0x3]
      %v3216 = vunpack.c.l.b16 %v3106
      %v3217 = vunpack.c.l.b16 %v3109
      %v3218 = vunpack.c.l.b16 %v3113
      %v3219 = vunpack.c.l.b16 %v3116
      %v3220 = vunpack.c.l.b16 %v3120
      %v3221 = vunpack.c.l.b16 %v3123
      %v3222 = vunpack.c.l.b16 %v3127
      %v3223 = vunpack.c.l.b16 %v3130
      %v3224 = vunpack.c.l.b16 %v3134
      %v3225 = vunpack.c.l.b16 %v3137
      %v3226 = vunpack.c.l.b16 %v3141
      %v3227 = vunpack.c.l.b16 %v3144
      %v3228 = vunpack.c.l.b16 %v3148
      %v3229 = vunpack.c.l.b16 %v3151
      %v3230 = vunpack.c.l.b16 %v3155
      %v3231 = vunpack.c.l.b16 %v3158
      %v3232 = vunpack.c.l.b16 %v3162
      %v3233 = vunpack.c.l.b16 %v3165
      %v3234 = vunpack.c.l.b16 %v3169
      %v3235 = vunpack.c.l.b16 %v3172
      %v3236 = vunpack.c.l.b16 %v3176
      %v3237 = vunpack.c.l.b16 %v3179
      %v3238 = vunpack.c.l.b16 %v3183
      %v3239 = vunpack.c.l.b16 %v3186
      %v3240 = vunpack.c.l.b16 %v3190
      %v3241 = vunpack.c.l.b16 %v3193
      %v3242 = vunpack.c.l.b16 %v3197
      %v3243 = vunpack.c.l.b16 %v3200
      %v3244 = vunpack.c.l.b16 %v3204
      %v3245 = vunpack.c.l.b16 %v3207
      %v3246 = vunpack.c.l.b16 %v3211
      %v3247 = vunpack.c.l.b16 %v3214
      %v3248 = vpack.c.b16 %v3217, %v3216
      %v3249 = vpack.c.b16 %v3219, %v3218
      %v3250 = vpack.c.b16 %v3221, %v3220
      %v3251 = vpack.c.b16 %v3223, %v3222
      %v3252 = vpack.c.b16 %v3225, %v3224
      %v3253 = vpack.c.b16 %v3227, %v3226
      %v3254 = vpack.c.b16 %v3229, %v3228
      %v3255 = vpack.c.b16 %v3231, %v3230
      %v3256 = vpack.c.b16 %v3233, %v3232
      %v3257 = vpack.c.b16 %v3235, %v3234
      %v3258 = vpack.c.b16 %v3237, %v3236
      %v3259 = vpack.c.b16 %v3239, %v3238
      %v3260 = vpack.c.b16 %v3241, %v3240
      %v3261 = vpack.c.b16 %v3243, %v3242
      %v3262 = vpack.c.b16 %v3245, %v3244
      %v3263 = vpack.c.b16 %v3247, %v3246
      %v3265 = vsel %vm1350, %v3248, 0
      %v3268 = vsel %vm1350, %v3249, 0
      %v3271 = vsel %vm1350, %v3250, 0
      %v3274 = vsel %vm1350, %v3251, 0
      %v3277 = vsel %vm1350, %v3252, 0
      %v3280 = vsel %vm1350, %v3253, 0
      %v3283 = vsel %vm1350, %v3254, 0
      %v3286 = vsel %vm1350, %v3255, 0
      %v3289 = vsel %vm1350, %v3256, 0
      %v3292 = vsel %vm1350, %v3257, 0
      %v3295 = vsel %vm1350, %v3258, 0
      %v3298 = vsel %vm1350, %v3259, 0
      %v3301 = vsel %vm1350, %v3260, 0
      %v3304 = vsel %vm1350, %v3261, 0
      %v3307 = vsel %vm1350, %v3262, 0
      %v3310 = vsel %vm1350, %v3263, 0
      %v3313 = vsel %vm1399, %v3215, 0
      %3315 = vmatpush.bf16.msra.mxu0 0
      %3316 = vmatpush.bf16.msra.mxu0 0
      %3317 = vmatpush.bf16.msra.mxu0 0
      %3318 = vmatpush.bf16.msra.mxu0 0
      %3319 = vmatpush.bf16.msra.mxu0 0
      %3320 = vmatpush.bf16.msra.mxu0 0
      %3321 = vmatpush.bf16.msra.mxu0 0
      %3322 = vmatpush.bf16.msra.mxu0 %v3313
      %3323 = vmatmul.bf16.gmra.mxu0 %v3265
      %v3324 = vpop.f32.mrf.mxu0
      %v3325 = vadd.f32 0.0, %v3324
      %v3326 = vpop.f32.mrf.mxu0
      %v3327 = vadd.f32 0.0, %v3326
      %3328 = vmatmul.bf16.gmra.mxu0 %v3268
      %v3329 = vpop.f32.mrf.mxu0
      %v3330 = vadd.f32 0.0, %v3329
      %v3331 = vpop.f32.mrf.mxu0
      %v3332 = vadd.f32 0.0, %v3331
      %3333 = vmatmul.bf16.gmra.mxu0 %v3271
      %v3334 = vpop.f32.mrf.mxu0
      %v3335 = vadd.f32 0.0, %v3334
      %v3336 = vpop.f32.mrf.mxu0
      %v3337 = vadd.f32 0.0, %v3336
      %3338 = vmatmul.bf16.gmra.mxu0 %v3274
      %v3339 = vpop.f32.mrf.mxu0
      %v3340 = vadd.f32 0.0, %v3339
      %v3341 = vpop.f32.mrf.mxu0
      %v3342 = vadd.f32 0.0, %v3341
      %3343 = vmatmul.bf16.gmra.mxu0 %v3277
      %v3344 = vpop.f32.mrf.mxu0
      %v3345 = vadd.f32 0.0, %v3344
      %v3346 = vpop.f32.mrf.mxu0
      %v3347 = vadd.f32 0.0, %v3346
      %3348 = vmatmul.bf16.gmra.mxu0 %v3280
      %v3349 = vpop.f32.mrf.mxu0
      %v3350 = vadd.f32 0.0, %v3349
      %v3351 = vpop.f32.mrf.mxu0
      %v3352 = vadd.f32 0.0, %v3351
      %3353 = vmatmul.bf16.gmra.mxu0 %v3283
      %v3354 = vpop.f32.mrf.mxu0
      %v3355 = vadd.f32 0.0, %v3354
      %v3356 = vpop.f32.mrf.mxu0
      %v3357 = vadd.f32 0.0, %v3356
      %3358 = vmatmul.bf16.gmra.mxu0 %v3286
      %v3359 = vpop.f32.mrf.mxu0
      %v3360 = vadd.f32 0.0, %v3359
      %v3361 = vpop.f32.mrf.mxu0
      %v3362 = vadd.f32 0.0, %v3361
      %3363 = vmatmul.bf16.gmra.mxu0 %v3289
      %v3364 = vpop.f32.mrf.mxu0
      %v3365 = vadd.f32 0.0, %v3364
      %v3366 = vpop.f32.mrf.mxu0
      %v3367 = vadd.f32 0.0, %v3366
      %3368 = vmatmul.bf16.gmra.mxu0 %v3292
      %v3369 = vpop.f32.mrf.mxu0
      %v3370 = vadd.f32 0.0, %v3369
      %v3371 = vpop.f32.mrf.mxu0
      %v3372 = vadd.f32 0.0, %v3371
      %3373 = vmatmul.bf16.gmra.mxu0 %v3295
      %v3374 = vpop.f32.mrf.mxu0
      %v3375 = vadd.f32 0.0, %v3374
      %v3376 = vpop.f32.mrf.mxu0
      %v3377 = vadd.f32 0.0, %v3376
      %3378 = vmatmul.bf16.gmra.mxu0 %v3298
      %v3379 = vpop.f32.mrf.mxu0
      %v3380 = vadd.f32 0.0, %v3379
      %v3381 = vpop.f32.mrf.mxu0
      %v3382 = vadd.f32 0.0, %v3381
      %3383 = vmatmul.bf16.gmra.mxu0 %v3301
      %v3384 = vpop.f32.mrf.mxu0
      %v3385 = vadd.f32 0.0, %v3384
      %v3386 = vpop.f32.mrf.mxu0
      %v3387 = vadd.f32 0.0, %v3386
      %3388 = vmatmul.bf16.gmra.mxu0 %v3304
      %v3389 = vpop.f32.mrf.mxu0
      %v3390 = vadd.f32 0.0, %v3389
      %v3391 = vpop.f32.mrf.mxu0
      %v3392 = vadd.f32 0.0, %v3391
      %3393 = vmatmul.bf16.gmra.mxu0 %v3307
      %v3394 = vpop.f32.mrf.mxu0
      %v3395 = vadd.f32 0.0, %v3394
      %v3396 = vpop.f32.mrf.mxu0
      %v3397 = vadd.f32 0.0, %v3396
      %3398 = vmatmul.bf16.gmra.mxu0 %v3310
      %v3399 = vpop.f32.mrf.mxu0
      %v3400 = vadd.f32 0.0, %v3399
      %v3401 = vpop.f32.mrf.mxu0
      %v3402 = vadd.f32 0.0, %v3401
      %3403 = vdwg.mxu0
      %v3404 = vadd.f32 %v3007, %v3325
      %v3405 = vadd.f32 %v3008, %v3327
      %v3406 = vadd.f32 %v3009, %v3330
      %v3407 = vadd.f32 %v3010, %v3332
      %v3408 = vadd.f32 %v3011, %v3335
      %v3409 = vadd.f32 %v3012, %v3337
      %v3410 = vadd.f32 %v3013, %v3340
      %v3411 = vadd.f32 %v3014, %v3342
      %v3412 = vadd.f32 %v3015, %v3345
      %v3413 = vadd.f32 %v3016, %v3347
      %v3414 = vadd.f32 %v3017, %v3350
      %v3415 = vadd.f32 %v3018, %v3352
      %v3416 = vadd.f32 %v3019, %v3355
      %v3417 = vadd.f32 %v3020, %v3357
      %v3418 = vadd.f32 %v3021, %v3360
      %v3419 = vadd.f32 %v3022, %v3362
      %v3420 = vadd.f32 %v3023, %v3365
      %v3421 = vadd.f32 %v3024, %v3367
      %v3422 = vadd.f32 %v3025, %v3370
      %v3423 = vadd.f32 %v3026, %v3372
      %v3424 = vadd.f32 %v3027, %v3375
      %v3425 = vadd.f32 %v3028, %v3377
      %v3426 = vadd.f32 %v3029, %v3380
      %v3427 = vadd.f32 %v3030, %v3382
      %v3428 = vadd.f32 %v3031, %v3385
      %v3429 = vadd.f32 %v3032, %v3387
      %v3430 = vadd.f32 %v3033, %v3390
      %v3431 = vadd.f32 %v3034, %v3392
      %v3432 = vadd.f32 %v3035, %v3395
      %v3433 = vadd.f32 %v3036, %v3397
      %v3434 = vadd.f32 %v3037, %v3400
      %v3435 = vadd.f32 %v3038, %v3402
      %s3436 = scalar_lea.vmem [#allocation2], 24
      %v3437 = vld [vmem:[%s3436] sm:$0xf]
      %v3438 = vld [vmem:[%s3436 + $0x4] sm:$0xf]
      %v3439 = vld [vmem:[%s3436 + $0xc] sm:$0xf]
      %v3440 = vld [vmem:[%s3436 + $0x10] sm:$0xf]
      %v3441 = vld [vmem:[%s3436 + $0x18] sm:$0xf]
      %v3442 = vld [vmem:[%s3436 + $0x1c] sm:$0xf]
      %v3443 = vld [vmem:[%s3436 + $0x24] sm:$0xf]
      %v3444 = vld [vmem:[%s3436 + $0x28] sm:$0xf]
      %v3445 = vld [vmem:[%s3436 + $0x30] sm:$0xf]
      %v3446 = vld [vmem:[%s3436 + $0x34] sm:$0xf]
      %v3447 = vld [vmem:[%s3436 + $0x3c] sm:$0xf]
      %v3448 = vld [vmem:[%s3436 + $0x40] sm:$0xf]
      %v3449 = vld [vmem:[%s3436 + $0x48] sm:$0xf]
      %v3450 = vld [vmem:[%s3436 + $0x4c] sm:$0xf]
      %v3451 = vld [vmem:[%s3436 + $0x54] sm:$0xf]
      %v3452 = vld [vmem:[%s3436 + $0x58] sm:$0xf]
      %v3453 = vld [vmem:[%s3436 + $0x60] sm:$0xf]
      %v3454 = vld [vmem:[%s3436 + $0x64] sm:$0xf]
      %v3455 = vld [vmem:[%s3436 + $0x6c] sm:$0xf]
      %v3456 = vld [vmem:[%s3436 + $0x70] sm:$0xf]
      %v3457 = vld [vmem:[%s3436 + $0x78] sm:$0xf]
      %v3458 = vld [vmem:[%s3436 + $0x7c] sm:$0xf]
      %v3459 = vld [vmem:[%s3436 + $0x84] sm:$0xf]
      %v3460 = vld [vmem:[%s3436 + $0x88] sm:$0xf]
      %v3461 = vld [vmem:[%s3436 + $0x90] sm:$0xf]
      %v3462 = vld [vmem:[%s3436 + $0x94] sm:$0xf]
      %v3463 = vld [vmem:[%s3436 + $0x9c] sm:$0xf]
      %v3464 = vld [vmem:[%s3436 + $0xa0] sm:$0xf]
      %v3465 = vld [vmem:[%s3436 + $0xa8] sm:$0xf]
      %v3466 = vld [vmem:[%s3436 + $0xac] sm:$0xf]
      %v3467 = vld [vmem:[%s3436 + $0xb4] sm:$0xf]
      %v3468 = vld [vmem:[%s3436 + $0xb8] sm:$0xf]
      %s3469 = scalar_lea.vmem %s3, 16
      %v3470 = vld [vmem:[%s3469] sm:$0x3]
      %v3503 = vunpack.c.l.b16 %v3437
      %v3504 = vunpack.c.l.b16 %v3438
      %v3505 = vunpack.c.l.b16 %v3439
      %v3506 = vunpack.c.l.b16 %v3440
      %v3507 = vunpack.c.l.b16 %v3441
      %v3508 = vunpack.c.l.b16 %v3442
      %v3509 = vunpack.c.l.b16 %v3443
      %v3510 = vunpack.c.l.b16 %v3444
      %v3511 = vunpack.c.l.b16 %v3445
      %v3512 = vunpack.c.l.b16 %v3446
      %v3513 = vunpack.c.l.b16 %v3447
      %v3514 = vunpack.c.l.b16 %v3448
      %v3515 = vunpack.c.l.b16 %v3449
      %v3516 = vunpack.c.l.b16 %v3450
      %v3517 = vunpack.c.l.b16 %v3451
      %v3518 = vunpack.c.l.b16 %v3452
      %v3519 = vunpack.c.l.b16 %v3453
      %v3520 = vunpack.c.l.b16 %v3454
      %v3521 = vunpack.c.l.b16 %v3455
      %v3522 = vunpack.c.l.b16 %v3456
      %v3523 = vunpack.c.l.b16 %v3457
      %v3524 = vunpack.c.l.b16 %v3458
      %v3525 = vunpack.c.l.b16 %v3459
      %v3526 = vunpack.c.l.b16 %v3460
      %v3527 = vunpack.c.l.b16 %v3461
      %v3528 = vunpack.c.l.b16 %v3462
      %v3529 = vunpack.c.l.b16 %v3463
      %v3530 = vunpack.c.l.b16 %v3464
      %v3531 = vunpack.c.l.b16 %v3465
      %v3532 = vunpack.c.l.b16 %v3466
      %v3533 = vunpack.c.l.b16 %v3467
      %v3534 = vunpack.c.l.b16 %v3468
      %v3535 = vpack.c.b16 %v3504, %v3503
      %v3536 = vpack.c.b16 %v3506, %v3505
      %v3537 = vpack.c.b16 %v3508, %v3507
      %v3538 = vpack.c.b16 %v3510, %v3509
      %v3539 = vpack.c.b16 %v3512, %v3511
      %v3540 = vpack.c.b16 %v3514, %v3513
      %v3541 = vpack.c.b16 %v3516, %v3515
      %v3542 = vpack.c.b16 %v3518, %v3517
      %v3543 = vpack.c.b16 %v3520, %v3519
      %v3544 = vpack.c.b16 %v3522, %v3521
      %v3545 = vpack.c.b16 %v3524, %v3523
      %v3546 = vpack.c.b16 %v3526, %v3525
      %v3547 = vpack.c.b16 %v3528, %v3527
      %v3548 = vpack.c.b16 %v3530, %v3529
      %v3549 = vpack.c.b16 %v3532, %v3531
      %v3550 = vpack.c.b16 %v3534, %v3533
      %v3552 = vsel %vm1350, %v3535, 0
      %v3555 = vsel %vm1350, %v3536, 0
      %v3558 = vsel %vm1350, %v3537, 0
      %v3561 = vsel %vm1350, %v3538, 0
      %v3564 = vsel %vm1350, %v3539, 0
      %v3567 = vsel %vm1350, %v3540, 0
      %v3570 = vsel %vm1350, %v3541, 0
      %v3573 = vsel %vm1350, %v3542, 0
      %v3576 = vsel %vm1350, %v3543, 0
      %v3579 = vsel %vm1350, %v3544, 0
      %v3582 = vsel %vm1350, %v3545, 0
      %v3585 = vsel %vm1350, %v3546, 0
      %v3588 = vsel %vm1350, %v3547, 0
      %v3591 = vsel %vm1350, %v3548, 0
      %v3594 = vsel %vm1350, %v3549, 0
      %v3597 = vsel %vm1350, %v3550, 0
      %v3600 = vsel %vm1399, %v3470, 0
      %3602 = vmatpush.bf16.msra.mxu0 0
      %3603 = vmatpush.bf16.msra.mxu0 0
      %3604 = vmatpush.bf16.msra.mxu0 0
      %3605 = vmatpush.bf16.msra.mxu0 0
      %3606 = vmatpush.bf16.msra.mxu0 0
      %3607 = vmatpush.bf16.msra.mxu0 0
      %3608 = vmatpush.bf16.msra.mxu0 0
      %3609 = vmatpush.bf16.msra.mxu0 %v3600
      %3610 = vmatmul.bf16.gmra.mxu0 %v3552
      %v3611 = vpop.f32.mrf.mxu0
      %v3612 = vadd.f32 0.0, %v3611
      %v3613 = vpop.f32.mrf.mxu0
      %v3614 = vadd.f32 0.0, %v3613
      %3615 = vmatmul.bf16.gmra.mxu0 %v3555
      %v3616 = vpop.f32.mrf.mxu0
      %v3617 = vadd.f32 0.0, %v3616
      %v3618 = vpop.f32.mrf.mxu0
      %v3619 = vadd.f32 0.0, %v3618
      %3620 = vmatmul.bf16.gmra.mxu0 %v3558
      %v3621 = vpop.f32.mrf.mxu0
      %v3622 = vadd.f32 0.0, %v3621
      %v3623 = vpop.f32.mrf.mxu0
      %v3624 = vadd.f32 0.0, %v3623
      %3625 = vmatmul.bf16.gmra.mxu0 %v3561
      %v3626 = vpop.f32.mrf.mxu0
      %v3627 = vadd.f32 0.0, %v3626
      %v3628 = vpop.f32.mrf.mxu0
      %v3629 = vadd.f32 0.0, %v3628
      %3630 = vmatmul.bf16.gmra.mxu0 %v3564
      %v3631 = vpop.f32.mrf.mxu0
      %v3632 = vadd.f32 0.0, %v3631
      %v3633 = vpop.f32.mrf.mxu0
      %v3634 = vadd.f32 0.0, %v3633
      %3635 = vmatmul.bf16.gmra.mxu0 %v3567
      %v3636 = vpop.f32.mrf.mxu0
      %v3637 = vadd.f32 0.0, %v3636
      %v3638 = vpop.f32.mrf.mxu0
      %v3639 = vadd.f32 0.0, %v3638
      %3640 = vmatmul.bf16.gmra.mxu0 %v3570
      %v3641 = vpop.f32.mrf.mxu0
      %v3642 = vadd.f32 0.0, %v3641
      %v3643 = vpop.f32.mrf.mxu0
      %v3644 = vadd.f32 0.0, %v3643
      %3645 = vmatmul.bf16.gmra.mxu0 %v3573
      %v3646 = vpop.f32.mrf.mxu0
      %v3647 = vadd.f32 0.0, %v3646
      %v3648 = vpop.f32.mrf.mxu0
      %v3649 = vadd.f32 0.0, %v3648
      %3650 = vmatmul.bf16.gmra.mxu0 %v3576
      %v3651 = vpop.f32.mrf.mxu0
      %v3652 = vadd.f32 0.0, %v3651
      %v3653 = vpop.f32.mrf.mxu0
      %v3654 = vadd.f32 0.0, %v3653
      %3655 = vmatmul.bf16.gmra.mxu0 %v3579
      %v3656 = vpop.f32.mrf.mxu0
      %v3657 = vadd.f32 0.0, %v3656
      %v3658 = vpop.f32.mrf.mxu0
      %v3659 = vadd.f32 0.0, %v3658
      %3660 = vmatmul.bf16.gmra.mxu0 %v3582
      %v3661 = vpop.f32.mrf.mxu0
      %v3662 = vadd.f32 0.0, %v3661
      %v3663 = vpop.f32.mrf.mxu0
      %v3664 = vadd.f32 0.0, %v3663
      %3665 = vmatmul.bf16.gmra.mxu0 %v3585
      %v3666 = vpop.f32.mrf.mxu0
      %v3667 = vadd.f32 0.0, %v3666
      %v3668 = vpop.f32.mrf.mxu0
      %v3669 = vadd.f32 0.0, %v3668
      %3670 = vmatmul.bf16.gmra.mxu0 %v3588
      %v3671 = vpop.f32.mrf.mxu0
      %v3672 = vadd.f32 0.0, %v3671
      %v3673 = vpop.f32.mrf.mxu0
      %v3674 = vadd.f32 0.0, %v3673
      %3675 = vmatmul.bf16.gmra.mxu0 %v3591
      %v3676 = vpop.f32.mrf.mxu0
      %v3677 = vadd.f32 0.0, %v3676
      %v3678 = vpop.f32.mrf.mxu0
      %v3679 = vadd.f32 0.0, %v3678
      %3680 = vmatmul.bf16.gmra.mxu0 %v3594
      %v3681 = vpop.f32.mrf.mxu0
      %v3682 = vadd.f32 0.0, %v3681
      %v3683 = vpop.f32.mrf.mxu0
      %v3684 = vadd.f32 0.0, %v3683
      %3685 = vmatmul.bf16.gmra.mxu0 %v3597
      %v3686 = vpop.f32.mrf.mxu0
      %v3687 = vadd.f32 0.0, %v3686
      %v3688 = vpop.f32.mrf.mxu0
      %v3689 = vadd.f32 0.0, %v3688
      %3690 = vdwg.mxu0
      %v3691 = vadd.f32 %v3404, %v3612
      %v3692 = vadd.f32 %v3405, %v3614
      %v3693 = vadd.f32 %v3406, %v3617
      %v3694 = vadd.f32 %v3407, %v3619
      %v3695 = vadd.f32 %v3408, %v3622
      %v3696 = vadd.f32 %v3409, %v3624
      %v3697 = vadd.f32 %v3410, %v3627
      %v3698 = vadd.f32 %v3411, %v3629
      %v3699 = vadd.f32 %v3412, %v3632
      %v3700 = vadd.f32 %v3413, %v3634
      %v3701 = vadd.f32 %v3414, %v3637
      %v3702 = vadd.f32 %v3415, %v3639
      %v3703 = vadd.f32 %v3416, %v3642
      %v3704 = vadd.f32 %v3417, %v3644
      %v3705 = vadd.f32 %v3418, %v3647
      %v3706 = vadd.f32 %v3419, %v3649
      %v3707 = vadd.f32 %v3420, %v3652
      %v3708 = vadd.f32 %v3421, %v3654
      %v3709 = vadd.f32 %v3422, %v3657
      %v3710 = vadd.f32 %v3423, %v3659
      %v3711 = vadd.f32 %v3424, %v3662
      %v3712 = vadd.f32 %v3425, %v3664
      %v3713 = vadd.f32 %v3426, %v3667
      %v3714 = vadd.f32 %v3427, %v3669
      %v3715 = vadd.f32 %v3428, %v3672
      %v3716 = vadd.f32 %v3429, %v3674
      %v3717 = vadd.f32 %v3430, %v3677
      %v3718 = vadd.f32 %v3431, %v3679
      %v3719 = vadd.f32 %v3432, %v3682
      %v3720 = vadd.f32 %v3433, %v3684
      %v3721 = vadd.f32 %v3434, %v3687
      %v3722 = vadd.f32 %v3435, %v3689
      %v3723 = vld [vmem:[%s3436] sm:$0xf]
      %v3724 = vld [vmem:[%s3436 + $0x4] sm:$0xf]
      %v3725 = vld [vmem:[%s3436 + $0x8] sm:$0x1]
      %v3726 = vld [vmem:[%s3436 + $0xc] sm:$0xf]
      %v3727 = vld [vmem:[%s3436 + $0x10] sm:$0xf]
      %v3728 = vld [vmem:[%s3436 + $0x14] sm:$0x1]
      %v3729 = vld [vmem:[%s3436 + $0x18] sm:$0xf]
      %v3730 = vld [vmem:[%s3436 + $0x1c] sm:$0xf]
      %v3731 = vld [vmem:[%s3436 + $0x20] sm:$0x1]
      %v3732 = vld [vmem:[%s3436 + $0x24] sm:$0xf]
      %v3733 = vld [vmem:[%s3436 + $0x28] sm:$0xf]
      %v3734 = vld [vmem:[%s3436 + $0x2c] sm:$0x1]
      %v3735 = vld [vmem:[%s3436 + $0x30] sm:$0xf]
      %v3736 = vld [vmem:[%s3436 + $0x34] sm:$0xf]
      %v3737 = vld [vmem:[%s3436 + $0x38] sm:$0x1]
      %v3738 = vld [vmem:[%s3436 + $0x3c] sm:$0xf]
      %v3739 = vld [vmem:[%s3436 + $0x40] sm:$0xf]
      %v3740 = vld [vmem:[%s3436 + $0x44] sm:$0x1]
      %v3741 = vld [vmem:[%s3436 + $0x48] sm:$0xf]
      %v3742 = vld [vmem:[%s3436 + $0x4c] sm:$0xf]
      %v3743 = vld [vmem:[%s3436 + $0x50] sm:$0x1]
      %v3744 = vld [vmem:[%s3436 + $0x54] sm:$0xf]
      %v3745 = vld [vmem:[%s3436 + $0x58] sm:$0xf]
      %v3746 = vld [vmem:[%s3436 + $0x5c] sm:$0x1]
      %v3747 = vld [vmem:[%s3436 + $0x60] sm:$0xf]
      %v3748 = vld [vmem:[%s3436 + $0x64] sm:$0xf]
      %v3749 = vld [vmem:[%s3436 + $0x68] sm:$0x1]
      %v3750 = vld [vmem:[%s3436 + $0x6c] sm:$0xf]
      %v3751 = vld [vmem:[%s3436 + $0x70] sm:$0xf]
      %v3752 = vld [vmem:[%s3436 + $0x74] sm:$0x1]
      %v3753 = vld [vmem:[%s3436 + $0x78] sm:$0xf]
      %v3754 = vld [vmem:[%s3436 + $0x7c] sm:$0xf]
      %v3755 = vld [vmem:[%s3436 + $0x80] sm:$0x1]
      %v3756 = vld [vmem:[%s3436 + $0x84] sm:$0xf]
      %v3757 = vld [vmem:[%s3436 + $0x88] sm:$0xf]
      %v3758 = vld [vmem:[%s3436 + $0x8c] sm:$0x1]
      %v3759 = vld [vmem:[%s3436 + $0x90] sm:$0xf]
      %v3760 = vld [vmem:[%s3436 + $0x94] sm:$0xf]
      %v3761 = vld [vmem:[%s3436 + $0x98] sm:$0x1]
      %v3762 = vld [vmem:[%s3436 + $0x9c] sm:$0xf]
      %v3763 = vld [vmem:[%s3436 + $0xa0] sm:$0xf]
      %v3764 = vld [vmem:[%s3436 + $0xa4] sm:$0x1]
      %v3765 = vld [vmem:[%s3436 + $0xa8] sm:$0xf]
      %v3766 = vld [vmem:[%s3436 + $0xac] sm:$0xf]
      %v3767 = vld [vmem:[%s3436 + $0xb0] sm:$0x1]
      %v3768 = vld [vmem:[%s3436 + $0xb4] sm:$0xf]
      %v3769 = vld [vmem:[%s3436 + $0xb8] sm:$0xf]
      %v3770 = vld [vmem:[%s3436 + $0xbc] sm:$0x1]
      %v3772 = vshrl.u32 %v3723, 16
      %v3774 = vrot.slane %v3772, 4
      %v3775 = vshll.u32 %v3723, 16
      %v3777 = vrot.slane %v3775, 5
      %v3778 = vor.u32 %v3774, %v3777
      %v3779 = vrot.slane %v3778, 4
      %v3781 = vshll.u32 %v3724, 16
      %v3783 = vrot.slane %v3781, 5
      %v3784 = vsel %vm912, %v3779, %v3783
      %v3785 = vshrl.u32 %v3724, 16
      %v3787 = vrot.slane %v3785, 4
      %v3788 = vor.u32 %v3787, %v3783
      %v3789 = vrot.slane %v3788, 4
      %v3791 = vshll.u32 %v3725, 16
      %v3793 = vrot.slane %v3791, 5
      %v3794 = vsel %vm912, %v3789, %v3793
      %v3796 = vshrl.u32 %v3726, 16
      %v3798 = vrot.slane %v3796, 4
      %v3799 = vshll.u32 %v3726, 16
      %v3801 = vrot.slane %v3799, 5
      %v3802 = vor.u32 %v3798, %v3801
      %v3803 = vrot.slane %v3802, 4
      %v3805 = vshll.u32 %v3727, 16
      %v3807 = vrot.slane %v3805, 5
      %v3808 = vsel %vm912, %v3803, %v3807
      %v3809 = vshrl.u32 %v3727, 16
      %v3811 = vrot.slane %v3809, 4
      %v3812 = vor.u32 %v3811, %v3807
      %v3813 = vrot.slane %v3812, 4
      %v3815 = vshll.u32 %v3728, 16
      %v3817 = vrot.slane %v3815, 5
      %v3818 = vsel %vm912, %v3813, %v3817
      %v3820 = vshrl.u32 %v3729, 16
      %v3822 = vrot.slane %v3820, 4
      %v3823 = vshll.u32 %v3729, 16
      %v3825 = vrot.slane %v3823, 5
      %v3826 = vor.u32 %v3822, %v3825
      %v3827 = vrot.slane %v3826, 4
      %v3829 = vshll.u32 %v3730, 16
      %v3831 = vrot.slane %v3829, 5
      %v3832 = vsel %vm912, %v3827, %v3831
      %v3833 = vshrl.u32 %v3730, 16
      %v3835 = vrot.slane %v3833, 4
      %v3836 = vor.u32 %v3835, %v3831
      %v3837 = vrot.slane %v3836, 4
      %v3839 = vshll.u32 %v3731, 16
      %v3841 = vrot.slane %v3839, 5
      %v3842 = vsel %vm912, %v3837, %v3841
      %v3844 = vshrl.u32 %v3732, 16
      %v3846 = vrot.slane %v3844, 4
      %v3847 = vshll.u32 %v3732, 16
      %v3849 = vrot.slane %v3847, 5
      %v3850 = vor.u32 %v3846, %v3849
      %v3851 = vrot.slane %v3850, 4
      %v3853 = vshll.u32 %v3733, 16
      %v3855 = vrot.slane %v3853, 5
      %v3856 = vsel %vm912, %v3851, %v3855
      %v3857 = vshrl.u32 %v3733, 16
      %v3859 = vrot.slane %v3857, 4
      %v3860 = vor.u32 %v3859, %v3855
      %v3861 = vrot.slane %v3860, 4
      %v3863 = vshll.u32 %v3734, 16
      %v3865 = vrot.slane %v3863, 5
      %v3866 = vsel %vm912, %v3861, %v3865
      %v3868 = vshrl.u32 %v3735, 16
      %v3870 = vrot.slane %v3868, 4
      %v3871 = vshll.u32 %v3735, 16
      %v3873 = vrot.slane %v3871, 5
      %v3874 = vor.u32 %v3870, %v3873
      %v3875 = vrot.slane %v3874, 4
      %v3877 = vshll.u32 %v3736, 16
      %v3879 = vrot.slane %v3877, 5
      %v3880 = vsel %vm912, %v3875, %v3879
      %v3881 = vshrl.u32 %v3736, 16
      %v3883 = vrot.slane %v3881, 4
      %v3884 = vor.u32 %v3883, %v3879
      %v3885 = vrot.slane %v3884, 4
      %v3887 = vshll.u32 %v3737, 16
      %v3889 = vrot.slane %v3887, 5
      %v3890 = vsel %vm912, %v3885, %v3889
      %v3892 = vshrl.u32 %v3738, 16
      %v3894 = vrot.slane %v3892, 4
      %v3895 = vshll.u32 %v3738, 16
      %v3897 = vrot.slane %v3895, 5
      %v3898 = vor.u32 %v3894, %v3897
      %v3899 = vrot.slane %v3898, 4
      %v3901 = vshll.u32 %v3739, 16
      %v3903 = vrot.slane %v3901, 5
      %v3904 = vsel %vm912, %v3899, %v3903
      %v3905 = vshrl.u32 %v3739, 16
      %v3907 = vrot.slane %v3905, 4
      %v3908 = vor.u32 %v3907, %v3903
      %v3909 = vrot.slane %v3908, 4
      %v3911 = vshll.u32 %v3740, 16
      %v3913 = vrot.slane %v3911, 5
      %v3914 = vsel %vm912, %v3909, %v3913
      %v3916 = vshrl.u32 %v3741, 16
      %v3918 = vrot.slane %v3916, 4
      %v3919 = vshll.u32 %v3741, 16
      %v3921 = vrot.slane %v3919, 5
      %v3922 = vor.u32 %v3918, %v3921
      %v3923 = vrot.slane %v3922, 4
      %v3925 = vshll.u32 %v3742, 16
      %v3927 = vrot.slane %v3925, 5
      %v3928 = vsel %vm912, %v3923, %v3927
      %v3929 = vshrl.u32 %v3742, 16
      %v3931 = vrot.slane %v3929, 4
      %v3932 = vor.u32 %v3931, %v3927
      %v3933 = vrot.slane %v3932, 4
      %v3935 = vshll.u32 %v3743, 16
      %v3937 = vrot.slane %v3935, 5
      %v3938 = vsel %vm912, %v3933, %v3937
      %v3940 = vshrl.u32 %v3744, 16
      %v3942 = vrot.slane %v3940, 4
      %v3943 = vshll.u32 %v3744, 16
      %v3945 = vrot.slane %v3943, 5
      %v3946 = vor.u32 %v3942, %v3945
      %v3947 = vrot.slane %v3946, 4
      %v3949 = vshll.u32 %v3745, 16
      %v3951 = vrot.slane %v3949, 5
      %v3952 = vsel %vm912, %v3947, %v3951
      %v3953 = vshrl.u32 %v3745, 16
      %v3955 = vrot.slane %v3953, 4
      %v3956 = vor.u32 %v3955, %v3951
      %v3957 = vrot.slane %v3956, 4
      %v3959 = vshll.u32 %v3746, 16
      %v3961 = vrot.slane %v3959, 5
      %v3962 = vsel %vm912, %v3957, %v3961
      %v3964 = vshrl.u32 %v3747, 16
      %v3966 = vrot.slane %v3964, 4
      %v3967 = vshll.u32 %v3747, 16
      %v3969 = vrot.slane %v3967, 5
      %v3970 = vor.u32 %v3966, %v3969
      %v3971 = vrot.slane %v3970, 4
      %v3973 = vshll.u32 %v3748, 16
      %v3975 = vrot.slane %v3973, 5
      %v3976 = vsel %vm912, %v3971, %v3975
      %v3977 = vshrl.u32 %v3748, 16
      %v3979 = vrot.slane %v3977, 4
      %v3980 = vor.u32 %v3979, %v3975
      %v3981 = vrot.slane %v3980, 4
      %v3983 = vshll.u32 %v3749, 16
      %v3985 = vrot.slane %v3983, 5
      %v3986 = vsel %vm912, %v3981, %v3985
      %v3988 = vshrl.u32 %v3750, 16
      %v3990 = vrot.slane %v3988, 4
      %v3991 = vshll.u32 %v3750, 16
      %v3993 = vrot.slane %v3991, 5
      %v3994 = vor.u32 %v3990, %v3993
      %v3995 = vrot.slane %v3994, 4
      %v3997 = vshll.u32 %v3751, 16
      %v3999 = vrot.slane %v3997, 5
      %v4000 = vsel %vm912, %v3995, %v3999
      %v4001 = vshrl.u32 %v3751, 16
      %v4003 = vrot.slane %v4001, 4
      %v4004 = vor.u32 %v4003, %v3999
      %v4005 = vrot.slane %v4004, 4
      %v4007 = vshll.u32 %v3752, 16
      %v4009 = vrot.slane %v4007, 5
      %v4010 = vsel %vm912, %v4005, %v4009
      %v4012 = vshrl.u32 %v3753, 16
      %v4014 = vrot.slane %v4012, 4
      %v4015 = vshll.u32 %v3753, 16
      %v4017 = vrot.slane %v4015, 5
      %v4018 = vor.u32 %v4014, %v4017
      %v4019 = vrot.slane %v4018, 4
      %v4021 = vshll.u32 %v3754, 16
      %v4023 = vrot.slane %v4021, 5
      %v4024 = vsel %vm912, %v4019, %v4023
      %v4025 = vshrl.u32 %v3754, 16
      %v4027 = vrot.slane %v4025, 4
      %v4028 = vor.u32 %v4027, %v4023
      %v4029 = vrot.slane %v4028, 4
      %v4031 = vshll.u32 %v3755, 16
      %v4033 = vrot.slane %v4031, 5
      %v4034 = vsel %vm912, %v4029, %v4033
      %v4036 = vshrl.u32 %v3756, 16
      %v4038 = vrot.slane %v4036, 4
      %v4039 = vshll.u32 %v3756, 16
      %v4041 = vrot.slane %v4039, 5
      %v4042 = vor.u32 %v4038, %v4041
      %v4043 = vrot.slane %v4042, 4
      %v4045 = vshll.u32 %v3757, 16
      %v4047 = vrot.slane %v4045, 5
      %v4048 = vsel %vm912, %v4043, %v4047
      %v4049 = vshrl.u32 %v3757, 16
      %v4051 = vrot.slane %v4049, 4
      %v4052 = vor.u32 %v4051, %v4047
      %v4053 = vrot.slane %v4052, 4
      %v4055 = vshll.u32 %v3758, 16
      %v4057 = vrot.slane %v4055, 5
      %v4058 = vsel %vm912, %v4053, %v4057
      %v4060 = vshrl.u32 %v3759, 16
      %v4062 = vrot.slane %v4060, 4
      %v4063 = vshll.u32 %v3759, 16
      %v4065 = vrot.slane %v4063, 5
      %v4066 = vor.u32 %v4062, %v4065
      %v4067 = vrot.slane %v4066, 4
      %v4069 = vshll.u32 %v3760, 16
      %v4071 = vrot.slane %v4069, 5
      %v4072 = vsel %vm912, %v4067, %v4071
      %v4073 = vshrl.u32 %v3760, 16
      %v4075 = vrot.slane %v4073, 4
      %v4076 = vor.u32 %v4075, %v4071
      %v4077 = vrot.slane %v4076, 4
      %v4079 = vshll.u32 %v3761, 16
      %v4081 = vrot.slane %v4079, 5
      %v4082 = vsel %vm912, %v4077, %v4081
      %v4084 = vshrl.u32 %v3762, 16
      %v4086 = vrot.slane %v4084, 4
      %v4087 = vshll.u32 %v3762, 16
      %v4089 = vrot.slane %v4087, 5
      %v4090 = vor.u32 %v4086, %v4089
      %v4091 = vrot.slane %v4090, 4
      %v4093 = vshll.u32 %v3763, 16
      %v4095 = vrot.slane %v4093, 5
      %v4096 = vsel %vm912, %v4091, %v4095
      %v4097 = vshrl.u32 %v3763, 16
      %v4099 = vrot.slane %v4097, 4
      %v4100 = vor.u32 %v4099, %v4095
      %v4101 = vrot.slane %v4100, 4
      %v4103 = vshll.u32 %v3764, 16
      %v4105 = vrot.slane %v4103, 5
      %v4106 = vsel %vm912, %v4101, %v4105
      %v4108 = vshrl.u32 %v3765, 16
      %v4110 = vrot.slane %v4108, 4
      %v4111 = vshll.u32 %v3765, 16
      %v4113 = vrot.slane %v4111, 5
      %v4114 = vor.u32 %v4110, %v4113
      %v4115 = vrot.slane %v4114, 4
      %v4117 = vshll.u32 %v3766, 16
      %v4119 = vrot.slane %v4117, 5
      %v4120 = vsel %vm912, %v4115, %v4119
      %v4121 = vshrl.u32 %v3766, 16
      %v4123 = vrot.slane %v4121, 4
      %v4124 = vor.u32 %v4123, %v4119
      %v4125 = vrot.slane %v4124, 4
      %v4127 = vshll.u32 %v3767, 16
      %v4129 = vrot.slane %v4127, 5
      %v4130 = vsel %vm912, %v4125, %v4129
      %v4132 = vshrl.u32 %v3768, 16
      %v4134 = vrot.slane %v4132, 4
      %v4135 = vshll.u32 %v3768, 16
      %v4137 = vrot.slane %v4135, 5
      %v4138 = vor.u32 %v4134, %v4137
      %v4139 = vrot.slane %v4138, 4
      %v4141 = vshll.u32 %v3769, 16
      %v4143 = vrot.slane %v4141, 5
      %v4144 = vsel %vm912, %v4139, %v4143
      %v4145 = vshrl.u32 %v3769, 16
      %v4147 = vrot.slane %v4145, 4
      %v4148 = vor.u32 %v4147, %v4143
      %v4149 = vrot.slane %v4148, 4
      %v4151 = vshll.u32 %v3770, 16
      %v4153 = vrot.slane %v4151, 5
      %v4154 = vsel %vm912, %v4149, %v4153
      %v4155 = vld [vmem:[%s3469] sm:$0xc]
      %v4156 = vunpack.c.l.b16 %v3784
      %v4157 = vunpack.c.l.b16 %v3794
      %v4158 = vunpack.c.l.b16 %v3808
      %v4159 = vunpack.c.l.b16 %v3818
      %v4160 = vunpack.c.l.b16 %v3832
      %v4161 = vunpack.c.l.b16 %v3842
      %v4162 = vunpack.c.l.b16 %v3856
      %v4163 = vunpack.c.l.b16 %v3866
      %v4164 = vunpack.c.l.b16 %v3880
      %v4165 = vunpack.c.l.b16 %v3890
      %v4166 = vunpack.c.l.b16 %v3904
      %v4167 = vunpack.c.l.b16 %v3914
      %v4168 = vunpack.c.l.b16 %v3928
      %v4169 = vunpack.c.l.b16 %v3938
      %v4170 = vunpack.c.l.b16 %v3952
      %v4171 = vunpack.c.l.b16 %v3962
      %v4172 = vunpack.c.l.b16 %v3976
      %v4173 = vunpack.c.l.b16 %v3986
      %v4174 = vunpack.c.l.b16 %v4000
      %v4175 = vunpack.c.l.b16 %v4010
      %v4176 = vunpack.c.l.b16 %v4024
      %v4177 = vunpack.c.l.b16 %v4034
      %v4178 = vunpack.c.l.b16 %v4048
      %v4179 = vunpack.c.l.b16 %v4058
      %v4180 = vunpack.c.l.b16 %v4072
      %v4181 = vunpack.c.l.b16 %v4082
      %v4182 = vunpack.c.l.b16 %v4096
      %v4183 = vunpack.c.l.b16 %v4106
      %v4184 = vunpack.c.l.b16 %v4120
      %v4185 = vunpack.c.l.b16 %v4130
      %v4186 = vunpack.c.l.b16 %v4144
      %v4187 = vunpack.c.l.b16 %v4154
      %v4188 = vpack.c.b16 %v4157, %v4156
      %v4189 = vpack.c.b16 %v4159, %v4158
      %v4190 = vpack.c.b16 %v4161, %v4160
      %v4191 = vpack.c.b16 %v4163, %v4162
      %v4192 = vpack.c.b16 %v4165, %v4164
      %v4193 = vpack.c.b16 %v4167, %v4166
      %v4194 = vpack.c.b16 %v4169, %v4168
      %v4195 = vpack.c.b16 %v4171, %v4170
      %v4196 = vpack.c.b16 %v4173, %v4172
      %v4197 = vpack.c.b16 %v4175, %v4174
      %v4198 = vpack.c.b16 %v4177, %v4176
      %v4199 = vpack.c.b16 %v4179, %v4178
      %v4200 = vpack.c.b16 %v4181, %v4180
      %v4201 = vpack.c.b16 %v4183, %v4182
      %v4202 = vpack.c.b16 %v4185, %v4184
      %v4203 = vpack.c.b16 %v4187, %v4186
      %v4205 = vunpack.c.l.b16 %v4155
      %v4206 = vpack.c.b16 %v4205, %v4205
      %v4207 = vrot.slane %v4206, 2
      %v4209 = vsel %vm1350, %v4188, 0
      %v4212 = vsel %vm1350, %v4189, 0
      %v4215 = vsel %vm1350, %v4190, 0
      %v4218 = vsel %vm1350, %v4191, 0
      %v4221 = vsel %vm1350, %v4192, 0
      %v4224 = vsel %vm1350, %v4193, 0
      %v4227 = vsel %vm1350, %v4194, 0
      %v4230 = vsel %vm1350, %v4195, 0
      %v4233 = vsel %vm1350, %v4196, 0
      %v4236 = vsel %vm1350, %v4197, 0
      %v4239 = vsel %vm1350, %v4198, 0
      %v4242 = vsel %vm1350, %v4199, 0
      %v4245 = vsel %vm1350, %v4200, 0
      %v4248 = vsel %vm1350, %v4201, 0
      %v4251 = vsel %vm1350, %v4202, 0
      %v4254 = vsel %vm1350, %v4203, 0
      %v4257 = vsel %vm1399, %v4207, 0
      %4259 = vmatpush.bf16.msra.mxu0 0
      %4260 = vmatpush.bf16.msra.mxu0 0
      %4261 = vmatpush.bf16.msra.mxu0 0
      %4262 = vmatpush.bf16.msra.mxu0 0
      %4263 = vmatpush.bf16.msra.mxu0 0
      %4264 = vmatpush.bf16.msra.mxu0 0
      %4265 = vmatpush.bf16.msra.mxu0 0
      %4266 = vmatpush.bf16.msra.mxu0 %v4257
      %4267 = vmatmul.bf16.gmra.mxu0 %v4209
      %v4268 = vpop.f32.mrf.mxu0
      %v4269 = vadd.f32 0.0, %v4268
      %v4270 = vpop.f32.mrf.mxu0
      %v4271 = vadd.f32 0.0, %v4270
      %4272 = vmatmul.bf16.gmra.mxu0 %v4212
      %v4273 = vpop.f32.mrf.mxu0
      %v4274 = vadd.f32 0.0, %v4273
      %v4275 = vpop.f32.mrf.mxu0
      %v4276 = vadd.f32 0.0, %v4275
      %4277 = vmatmul.bf16.gmra.mxu0 %v4215
      %v4278 = vpop.f32.mrf.mxu0
      %v4279 = vadd.f32 0.0, %v4278
      %v4280 = vpop.f32.mrf.mxu0
      %v4281 = vadd.f32 0.0, %v4280
      %4282 = vmatmul.bf16.gmra.mxu0 %v4218
      %v4283 = vpop.f32.mrf.mxu0
      %v4284 = vadd.f32 0.0, %v4283
      %v4285 = vpop.f32.mrf.mxu0
      %v4286 = vadd.f32 0.0, %v4285
      %4287 = vmatmul.bf16.gmra.mxu0 %v4221
      %v4288 = vpop.f32.mrf.mxu0
      %v4289 = vadd.f32 0.0, %v4288
      %v4290 = vpop.f32.mrf.mxu0
      %v4291 = vadd.f32 0.0, %v4290
      %4292 = vmatmul.bf16.gmra.mxu0 %v4224
      %v4293 = vpop.f32.mrf.mxu0
      %v4294 = vadd.f32 0.0, %v4293
      %v4295 = vpop.f32.mrf.mxu0
      %v4296 = vadd.f32 0.0, %v4295
      %4297 = vmatmul.bf16.gmra.mxu0 %v4227
      %v4298 = vpop.f32.mrf.mxu0
      %v4299 = vadd.f32 0.0, %v4298
      %v4300 = vpop.f32.mrf.mxu0
      %v4301 = vadd.f32 0.0, %v4300
      %4302 = vmatmul.bf16.gmra.mxu0 %v4230
      %v4303 = vpop.f32.mrf.mxu0
      %v4304 = vadd.f32 0.0, %v4303
      %v4305 = vpop.f32.mrf.mxu0
      %v4306 = vadd.f32 0.0, %v4305
      %4307 = vmatmul.bf16.gmra.mxu0 %v4233
      %v4308 = vpop.f32.mrf.mxu0
      %v4309 = vadd.f32 0.0, %v4308
      %v4310 = vpop.f32.mrf.mxu0
      %v4311 = vadd.f32 0.0, %v4310
      %4312 = vmatmul.bf16.gmra.mxu0 %v4236
      %v4313 = vpop.f32.mrf.mxu0
      %v4314 = vadd.f32 0.0, %v4313
      %v4315 = vpop.f32.mrf.mxu0
      %v4316 = vadd.f32 0.0, %v4315
      %4317 = vmatmul.bf16.gmra.mxu0 %v4239
      %v4318 = vpop.f32.mrf.mxu0
      %v4319 = vadd.f32 0.0, %v4318
      %v4320 = vpop.f32.mrf.mxu0
      %v4321 = vadd.f32 0.0, %v4320
      %4322 = vmatmul.bf16.gmra.mxu0 %v4242
      %v4323 = vpop.f32.mrf.mxu0
      %v4324 = vadd.f32 0.0, %v4323
      %v4325 = vpop.f32.mrf.mxu0
      %v4326 = vadd.f32 0.0, %v4325
      %4327 = vmatmul.bf16.gmra.mxu0 %v4245
      %v4328 = vpop.f32.mrf.mxu0
      %v4329 = vadd.f32 0.0, %v4328
      %v4330 = vpop.f32.mrf.mxu0
      %v4331 = vadd.f32 0.0, %v4330
      %4332 = vmatmul.bf16.gmra.mxu0 %v4248
      %v4333 = vpop.f32.mrf.mxu0
      %v4334 = vadd.f32 0.0, %v4333
      %v4335 = vpop.f32.mrf.mxu0
      %v4336 = vadd.f32 0.0, %v4335
      %4337 = vmatmul.bf16.gmra.mxu0 %v4251
      %v4338 = vpop.f32.mrf.mxu0
      %v4339 = vadd.f32 0.0, %v4338
      %v4340 = vpop.f32.mrf.mxu0
      %v4341 = vadd.f32 0.0, %v4340
      %4342 = vmatmul.bf16.gmra.mxu0 %v4254
      %v4343 = vpop.f32.mrf.mxu0
      %v4344 = vadd.f32 0.0, %v4343
      %v4345 = vpop.f32.mrf.mxu0
      %v4346 = vadd.f32 0.0, %v4345
      %4347 = vdwg.mxu0
      %v4348 = vadd.f32 %v3691, %v4269
      %v4349 = vadd.f32 %v3692, %v4271
      %v4350 = vadd.f32 %v3693, %v4274
      %v4351 = vadd.f32 %v3694, %v4276
      %v4352 = vadd.f32 %v3695, %v4279
      %v4353 = vadd.f32 %v3696, %v4281
      %v4354 = vadd.f32 %v3697, %v4284
      %v4355 = vadd.f32 %v3698, %v4286
      %v4356 = vadd.f32 %v3699, %v4289
      %v4357 = vadd.f32 %v3700, %v4291
      %v4358 = vadd.f32 %v3701, %v4294
      %v4359 = vadd.f32 %v3702, %v4296
      %v4360 = vadd.f32 %v3703, %v4299
      %v4361 = vadd.f32 %v3704, %v4301
      %v4362 = vadd.f32 %v3705, %v4304
      %v4363 = vadd.f32 %v3706, %v4306
      %v4364 = vadd.f32 %v3707, %v4309
      %v4365 = vadd.f32 %v3708, %v4311
      %v4366 = vadd.f32 %v3709, %v4314
      %v4367 = vadd.f32 %v3710, %v4316
      %v4368 = vadd.f32 %v3711, %v4319
      %v4369 = vadd.f32 %v3712, %v4321
      %v4370 = vadd.f32 %v3713, %v4324
      %v4371 = vadd.f32 %v3714, %v4326
      %v4372 = vadd.f32 %v3715, %v4329
      %v4373 = vadd.f32 %v3716, %v4331
      %v4374 = vadd.f32 %v3717, %v4334
      %v4375 = vadd.f32 %v3718, %v4336
      %v4376 = vadd.f32 %v3719, %v4339
      %v4377 = vadd.f32 %v3720, %v4341
      %v4378 = vadd.f32 %v3721, %v4344
      %v4379 = vadd.f32 %v3722, %v4346
      %v4380 = vld [vmem:[%s3436] sm:$0xe]
      %v4381 = vld [vmem:[%s3436 + $0xc] sm:$0xe]
      %v4382 = vld [vmem:[%s3436 + $0x18] sm:$0xe]
      %v4383 = vld [vmem:[%s3436 + $0x24] sm:$0xe]
      %v4384 = vld [vmem:[%s3436 + $0x30] sm:$0xe]
      %v4385 = vld [vmem:[%s3436 + $0x3c] sm:$0xe]
      %v4386 = vld [vmem:[%s3436 + $0x48] sm:$0xe]
      %v4387 = vld [vmem:[%s3436 + $0x54] sm:$0xe]
      %v4388 = vld [vmem:[%s3436 + $0x60] sm:$0xe]
      %v4389 = vld [vmem:[%s3436 + $0x6c] sm:$0xe]
      %v4390 = vld [vmem:[%s3436 + $0x78] sm:$0xe]
      %v4391 = vld [vmem:[%s3436 + $0x84] sm:$0xe]
      %v4392 = vld [vmem:[%s3436 + $0x90] sm:$0xe]
      %v4393 = vld [vmem:[%s3436 + $0x9c] sm:$0xe]
      %v4394 = vld [vmem:[%s3436 + $0xa8] sm:$0xe]
      %v4395 = vld [vmem:[%s3436 + $0xb4] sm:$0xe]
      %v4444 = vrot.slane %v4380, 5
      %v4445 = vrot.slane %v4444, 4
      %v4446 = vrot.slane %v3724, 5
      %v4447 = vsel %vm1762, %v4445, %v4446
      %v4448 = vrot.slane %v4446, 4
      %v4449 = vrot.slane %v3725, 5
      %v4450 = vsel %vm1762, %v4448, %v4449
      %v4451 = vrot.slane %v4381, 5
      %v4452 = vrot.slane %v4451, 4
      %v4453 = vrot.slane %v3727, 5
      %v4454 = vsel %vm1762, %v4452, %v4453
      %v4455 = vrot.slane %v4453, 4
      %v4456 = vrot.slane %v3728, 5
      %v4457 = vsel %vm1762, %v4455, %v4456
      %v4458 = vrot.slane %v4382, 5
      %v4459 = vrot.slane %v4458, 4
      %v4460 = vrot.slane %v3730, 5
      %v4461 = vsel %vm1762, %v4459, %v4460
      %v4462 = vrot.slane %v4460, 4
      %v4463 = vrot.slane %v3731, 5
      %v4464 = vsel %vm1762, %v4462, %v4463
      %v4465 = vrot.slane %v4383, 5
      %v4466 = vrot.slane %v4465, 4
      %v4467 = vrot.slane %v3733, 5
      %v4468 = vsel %vm1762, %v4466, %v4467
      %v4469 = vrot.slane %v4467, 4
      %v4470 = vrot.slane %v3734, 5
      %v4471 = vsel %vm1762, %v4469, %v4470
      %v4472 = vrot.slane %v4384, 5
      %v4473 = vrot.slane %v4472, 4
      %v4474 = vrot.slane %v3736, 5
      %v4475 = vsel %vm1762, %v4473, %v4474
      %v4476 = vrot.slane %v4474, 4
      %v4477 = vrot.slane %v3737, 5
      %v4478 = vsel %vm1762, %v4476, %v4477
      %v4479 = vrot.slane %v4385, 5
      %v4480 = vrot.slane %v4479, 4
      %v4481 = vrot.slane %v3739, 5
      %v4482 = vsel %vm1762, %v4480, %v4481
      %v4483 = vrot.slane %v4481, 4
      %v4484 = vrot.slane %v3740, 5
      %v4485 = vsel %vm1762, %v4483, %v4484
      %v4486 = vrot.slane %v4386, 5
      %v4487 = vrot.slane %v4486, 4
      %v4488 = vrot.slane %v3742, 5
      %v4489 = vsel %vm1762, %v4487, %v4488
      %v4490 = vrot.slane %v4488, 4
      %v4491 = vrot.slane %v3743, 5
      %v4492 = vsel %vm1762, %v4490, %v4491
      %v4493 = vrot.slane %v4387, 5
      %v4494 = vrot.slane %v4493, 4
      %v4495 = vrot.slane %v3745, 5
      %v4496 = vsel %vm1762, %v4494, %v4495
      %v4497 = vrot.slane %v4495, 4
      %v4498 = vrot.slane %v3746, 5
      %v4499 = vsel %vm1762, %v4497, %v4498
      %v4500 = vrot.slane %v4388, 5
      %v4501 = vrot.slane %v4500, 4
      %v4502 = vrot.slane %v3748, 5
      %v4503 = vsel %vm1762, %v4501, %v4502
      %v4504 = vrot.slane %v4502, 4
      %v4505 = vrot.slane %v3749, 5
      %v4506 = vsel %vm1762, %v4504, %v4505
      %v4507 = vrot.slane %v4389, 5
      %v4508 = vrot.slane %v4507, 4
      %v4509 = vrot.slane %v3751, 5
      %v4510 = vsel %vm1762, %v4508, %v4509
      %v4511 = vrot.slane %v4509, 4
      %v4512 = vrot.slane %v3752, 5
      %v4513 = vsel %vm1762, %v4511, %v4512
      %v4514 = vrot.slane %v4390, 5
      %v4515 = vrot.slane %v4514, 4
      %v4516 = vrot.slane %v3754, 5
      %v4517 = vsel %vm1762, %v4515, %v4516
      %v4518 = vrot.slane %v4516, 4
      %v4519 = vrot.slane %v3755, 5
      %v4520 = vsel %vm1762, %v4518, %v4519
      %v4521 = vrot.slane %v4391, 5
      %v4522 = vrot.slane %v4521, 4
      %v4523 = vrot.slane %v3757, 5
      %v4524 = vsel %vm1762, %v4522, %v4523
      %v4525 = vrot.slane %v4523, 4
      %v4526 = vrot.slane %v3758, 5
      %v4527 = vsel %vm1762, %v4525, %v4526
      %v4528 = vrot.slane %v4392, 5
      %v4529 = vrot.slane %v4528, 4
      %v4530 = vrot.slane %v3760, 5
      %v4531 = vsel %vm1762, %v4529, %v4530
      %v4532 = vrot.slane %v4530, 4
      %v4533 = vrot.slane %v3761, 5
      %v4534 = vsel %vm1762, %v4532, %v4533
      %v4535 = vrot.slane %v4393, 5
      %v4536 = vrot.slane %v4535, 4
      %v4537 = vrot.slane %v3763, 5
      %v4538 = vsel %vm1762, %v4536, %v4537
      %v4539 = vrot.slane %v4537, 4
      %v4540 = vrot.slane %v3764, 5
      %v4541 = vsel %vm1762, %v4539, %v4540
      %v4542 = vrot.slane %v4394, 5
      %v4543 = vrot.slane %v4542, 4
      %v4544 = vrot.slane %v3766, 5
      %v4545 = vsel %vm1762, %v4543, %v4544
      %v4546 = vrot.slane %v4544, 4
      %v4547 = vrot.slane %v3767, 5
      %v4548 = vsel %vm1762, %v4546, %v4547
      %v4549 = vrot.slane %v4395, 5
      %v4550 = vrot.slane %v4549, 4
      %v4551 = vrot.slane %v3769, 5
      %v4552 = vsel %vm1762, %v4550, %v4551
      %v4553 = vrot.slane %v4551, 4
      %v4554 = vrot.slane %v3770, 5
      %v4555 = vsel %vm1762, %v4553, %v4554
      %v4556 = vld [vmem:[%s3469 + $0x4] sm:$0x3]
      %v4557 = vunpack.c.l.b16 %v4447
      %v4558 = vunpack.c.l.b16 %v4450
      %v4559 = vunpack.c.l.b16 %v4454
      %v4560 = vunpack.c.l.b16 %v4457
      %v4561 = vunpack.c.l.b16 %v4461
      %v4562 = vunpack.c.l.b16 %v4464
      %v4563 = vunpack.c.l.b16 %v4468
      %v4564 = vunpack.c.l.b16 %v4471
      %v4565 = vunpack.c.l.b16 %v4475
      %v4566 = vunpack.c.l.b16 %v4478
      %v4567 = vunpack.c.l.b16 %v4482
      %v4568 = vunpack.c.l.b16 %v4485
      %v4569 = vunpack.c.l.b16 %v4489
      %v4570 = vunpack.c.l.b16 %v4492
      %v4571 = vunpack.c.l.b16 %v4496
      %v4572 = vunpack.c.l.b16 %v4499
      %v4573 = vunpack.c.l.b16 %v4503
      %v4574 = vunpack.c.l.b16 %v4506
      %v4575 = vunpack.c.l.b16 %v4510
      %v4576 = vunpack.c.l.b16 %v4513
      %v4577 = vunpack.c.l.b16 %v4517
      %v4578 = vunpack.c.l.b16 %v4520
      %v4579 = vunpack.c.l.b16 %v4524
      %v4580 = vunpack.c.l.b16 %v4527
      %v4581 = vunpack.c.l.b16 %v4531
      %v4582 = vunpack.c.l.b16 %v4534
      %v4583 = vunpack.c.l.b16 %v4538
      %v4584 = vunpack.c.l.b16 %v4541
      %v4585 = vunpack.c.l.b16 %v4545
      %v4586 = vunpack.c.l.b16 %v4548
      %v4587 = vunpack.c.l.b16 %v4552
      %v4588 = vunpack.c.l.b16 %v4555
      %v4589 = vpack.c.b16 %v4558, %v4557
      %v4590 = vpack.c.b16 %v4560, %v4559
      %v4591 = vpack.c.b16 %v4562, %v4561
      %v4592 = vpack.c.b16 %v4564, %v4563
      %v4593 = vpack.c.b16 %v4566, %v4565
      %v4594 = vpack.c.b16 %v4568, %v4567
      %v4595 = vpack.c.b16 %v4570, %v4569
      %v4596 = vpack.c.b16 %v4572, %v4571
      %v4597 = vpack.c.b16 %v4574, %v4573
      %v4598 = vpack.c.b16 %v4576, %v4575
      %v4599 = vpack.c.b16 %v4578, %v4577
      %v4600 = vpack.c.b16 %v4580, %v4579
      %v4601 = vpack.c.b16 %v4582, %v4581
      %v4602 = vpack.c.b16 %v4584, %v4583
      %v4603 = vpack.c.b16 %v4586, %v4585
      %v4604 = vpack.c.b16 %v4588, %v4587
      %v4606 = vsel %vm1350, %v4589, 0
      %v4609 = vsel %vm1350, %v4590, 0
      %v4612 = vsel %vm1350, %v4591, 0
      %v4615 = vsel %vm1350, %v4592, 0
      %v4618 = vsel %vm1350, %v4593, 0
      %v4621 = vsel %vm1350, %v4594, 0
      %v4624 = vsel %vm1350, %v4595, 0
      %v4627 = vsel %vm1350, %v4596, 0
      %v4630 = vsel %vm1350, %v4597, 0
      %v4633 = vsel %vm1350, %v4598, 0
      %v4636 = vsel %vm1350, %v4599, 0
      %v4639 = vsel %vm1350, %v4600, 0
      %v4642 = vsel %vm1350, %v4601, 0
      %v4645 = vsel %vm1350, %v4602, 0
      %v4648 = vsel %vm1350, %v4603, 0
      %v4651 = vsel %vm1350, %v4604, 0
      %v4654 = vsel %vm1399, %v4556, 0
      %4656 = vmatpush.bf16.msra.mxu0 0
      %4657 = vmatpush.bf16.msra.mxu0 0
      %4658 = vmatpush.bf16.msra.mxu0 0
      %4659 = vmatpush.bf16.msra.mxu0 0
      %4660 = vmatpush.bf16.msra.mxu0 0
      %4661 = vmatpush.bf16.msra.mxu0 0
      %4662 = vmatpush.bf16.msra.mxu0 0
      %4663 = vmatpush.bf16.msra.mxu0 %v4654
      %4664 = vmatmul.bf16.gmra.mxu0 %v4606
      %v4665 = vpop.f32.mrf.mxu0
      %v4666 = vadd.f32 0.0, %v4665
      %v4667 = vpop.f32.mrf.mxu0
      %v4668 = vadd.f32 0.0, %v4667
      %4669 = vmatmul.bf16.gmra.mxu0 %v4609
      %v4670 = vpop.f32.mrf.mxu0
      %v4671 = vadd.f32 0.0, %v4670
      %v4672 = vpop.f32.mrf.mxu0
      %v4673 = vadd.f32 0.0, %v4672
      %4674 = vmatmul.bf16.gmra.mxu0 %v4612
      %v4675 = vpop.f32.mrf.mxu0
      %v4676 = vadd.f32 0.0, %v4675
      %v4677 = vpop.f32.mrf.mxu0
      %v4678 = vadd.f32 0.0, %v4677
      %4679 = vmatmul.bf16.gmra.mxu0 %v4615
      %v4680 = vpop.f32.mrf.mxu0
      %v4681 = vadd.f32 0.0, %v4680
      %v4682 = vpop.f32.mrf.mxu0
      %v4683 = vadd.f32 0.0, %v4682
      %4684 = vmatmul.bf16.gmra.mxu0 %v4618
      %v4685 = vpop.f32.mrf.mxu0
      %v4686 = vadd.f32 0.0, %v4685
      %v4687 = vpop.f32.mrf.mxu0
      %v4688 = vadd.f32 0.0, %v4687
      %4689 = vmatmul.bf16.gmra.mxu0 %v4621
      %v4690 = vpop.f32.mrf.mxu0
      %v4691 = vadd.f32 0.0, %v4690
      %v4692 = vpop.f32.mrf.mxu0
      %v4693 = vadd.f32 0.0, %v4692
      %4694 = vmatmul.bf16.gmra.mxu0 %v4624
      %v4695 = vpop.f32.mrf.mxu0
      %v4696 = vadd.f32 0.0, %v4695
      %v4697 = vpop.f32.mrf.mxu0
      %v4698 = vadd.f32 0.0, %v4697
      %4699 = vmatmul.bf16.gmra.mxu0 %v4627
      %v4700 = vpop.f32.mrf.mxu0
      %v4701 = vadd.f32 0.0, %v4700
      %v4702 = vpop.f32.mrf.mxu0
      %v4703 = vadd.f32 0.0, %v4702
      %4704 = vmatmul.bf16.gmra.mxu0 %v4630
      %v4705 = vpop.f32.mrf.mxu0
      %v4706 = vadd.f32 0.0, %v4705
      %v4707 = vpop.f32.mrf.mxu0
      %v4708 = vadd.f32 0.0, %v4707
      %4709 = vmatmul.bf16.gmra.mxu0 %v4633
      %v4710 = vpop.f32.mrf.mxu0
      %v4711 = vadd.f32 0.0, %v4710
      %v4712 = vpop.f32.mrf.mxu0
      %v4713 = vadd.f32 0.0, %v4712
      %4714 = vmatmul.bf16.gmra.mxu0 %v4636
      %v4715 = vpop.f32.mrf.mxu0
      %v4716 = vadd.f32 0.0, %v4715
      %v4717 = vpop.f32.mrf.mxu0
      %v4718 = vadd.f32 0.0, %v4717
      %4719 = vmatmul.bf16.gmra.mxu0 %v4639
      %v4720 = vpop.f32.mrf.mxu0
      %v4721 = vadd.f32 0.0, %v4720
      %v4722 = vpop.f32.mrf.mxu0
      %v4723 = vadd.f32 0.0, %v4722
      %4724 = vmatmul.bf16.gmra.mxu0 %v4642
      %v4725 = vpop.f32.mrf.mxu0
      %v4726 = vadd.f32 0.0, %v4725
      %v4727 = vpop.f32.mrf.mxu0
      %v4728 = vadd.f32 0.0, %v4727
      %4729 = vmatmul.bf16.gmra.mxu0 %v4645
      %v4730 = vpop.f32.mrf.mxu0
      %v4731 = vadd.f32 0.0, %v4730
      %v4732 = vpop.f32.mrf.mxu0
      %v4733 = vadd.f32 0.0, %v4732
      %4734 = vmatmul.bf16.gmra.mxu0 %v4648
      %v4735 = vpop.f32.mrf.mxu0
      %v4736 = vadd.f32 0.0, %v4735
      %v4737 = vpop.f32.mrf.mxu0
      %v4738 = vadd.f32 0.0, %v4737
      %4739 = vmatmul.bf16.gmra.mxu0 %v4651
      %v4740 = vpop.f32.mrf.mxu0
      %v4741 = vadd.f32 0.0, %v4740
      %v4742 = vpop.f32.mrf.mxu0
      %v4743 = vadd.f32 0.0, %v4742
      %4744 = vdwg.mxu0
      %v4745 = vadd.f32 %v4348, %v4666
      %v4746 = vadd.f32 %v4349, %v4668
      %v4747 = vadd.f32 %v4350, %v4671
      %v4748 = vadd.f32 %v4351, %v4673
      %v4749 = vadd.f32 %v4352, %v4676
      %v4750 = vadd.f32 %v4353, %v4678
      %v4751 = vadd.f32 %v4354, %v4681
      %v4752 = vadd.f32 %v4355, %v4683
      %v4753 = vadd.f32 %v4356, %v4686
      %v4754 = vadd.f32 %v4357, %v4688
      %v4755 = vadd.f32 %v4358, %v4691
      %v4756 = vadd.f32 %v4359, %v4693
      %v4757 = vadd.f32 %v4360, %v4696
      %v4758 = vadd.f32 %v4361, %v4698
      %v4759 = vadd.f32 %v4362, %v4701
      %v4760 = vadd.f32 %v4363, %v4703
      %v4761 = vadd.f32 %v4364, %v4706
      %v4762 = vadd.f32 %v4365, %v4708
      %v4763 = vadd.f32 %v4366, %v4711
      %v4764 = vadd.f32 %v4367, %v4713
      %v4765 = vadd.f32 %v4368, %v4716
      %v4766 = vadd.f32 %v4369, %v4718
      %v4767 = vadd.f32 %v4370, %v4721
      %v4768 = vadd.f32 %v4371, %v4723
      %v4769 = vadd.f32 %v4372, %v4726
      %v4770 = vadd.f32 %v4373, %v4728
      %v4771 = vadd.f32 %v4374, %v4731
      %v4772 = vadd.f32 %v4375, %v4733
      %v4773 = vadd.f32 %v4376, %v4736
      %v4774 = vadd.f32 %v4377, %v4738
      %v4775 = vadd.f32 %v4378, %v4741
      %v4776 = vadd.f32 %v4379, %v4743
      %v4777 = vpack.c.bf16 %v4745, %v4745
      %v4778 = vpack.c.bf16 %v4746, %v4746
      %v4779 = vpack.c.bf16 %v4747, %v4747
      %v4780 = vpack.c.bf16 %v4748, %v4748
      %v4781 = vpack.c.bf16 %v4749, %v4749
      %v4782 = vpack.c.bf16 %v4750, %v4750
      %v4783 = vpack.c.bf16 %v4751, %v4751
      %v4784 = vpack.c.bf16 %v4752, %v4752
      %v4785 = vpack.c.bf16 %v4753, %v4753
      %v4786 = vpack.c.bf16 %v4754, %v4754
      %v4787 = vpack.c.bf16 %v4755, %v4755
      %v4788 = vpack.c.bf16 %v4756, %v4756
      %v4789 = vpack.c.bf16 %v4757, %v4757
      %v4790 = vpack.c.bf16 %v4758, %v4758
      %v4791 = vpack.c.bf16 %v4759, %v4759
      %v4792 = vpack.c.bf16 %v4760, %v4760
      %v4793 = vpack.c.bf16 %v4761, %v4761
      %v4794 = vpack.c.bf16 %v4762, %v4762
      %v4795 = vpack.c.bf16 %v4763, %v4763
      %v4796 = vpack.c.bf16 %v4764, %v4764
      %v4797 = vpack.c.bf16 %v4765, %v4765
      %v4798 = vpack.c.bf16 %v4766, %v4766
      %v4799 = vpack.c.bf16 %v4767, %v4767
      %v4800 = vpack.c.bf16 %v4768, %v4768
      %v4801 = vpack.c.bf16 %v4769, %v4769
      %v4802 = vpack.c.bf16 %v4770, %v4770
      %v4803 = vpack.c.bf16 %v4771, %v4771
      %v4804 = vpack.c.bf16 %v4772, %v4772
      %v4805 = vpack.c.bf16 %v4773, %v4773
      %v4806 = vpack.c.bf16 %v4774, %v4774
      %v4807 = vpack.c.bf16 %v4775, %v4775
      %v4808 = vpack.c.bf16 %v4776, %v4776
      %4809 = vst.msk [vmem:[%s262] sm:$0xf] %vm270, %v4777
      %4810 = vst.msk [vmem:[%s262 + $0x4] sm:$0xf] %vm270, %v4778
      %4811 = vst.msk [vmem:[%s262 + $0x8] sm:$0xf] %vm270, %v4779
      %4812 = vst.msk [vmem:[%s262 + $0xc] sm:$0xf] %vm270, %v4780
      %4813 = vst.msk [vmem:[%s262 + $0x10] sm:$0xf] %vm270, %v4781
      %4814 = vst.msk [vmem:[%s262 + $0x14] sm:$0xf] %vm270, %v4782
      %4815 = vst.msk [vmem:[%s262 + $0x18] sm:$0xf] %vm270, %v4783
      %4816 = vst.msk [vmem:[%s262 + $0x1c] sm:$0xf] %vm270, %v4784
      %4817 = vst.msk [vmem:[%s262 + $0x20] sm:$0xf] %vm270, %v4785
      %4818 = vst.msk [vmem:[%s262 + $0x24] sm:$0xf] %vm270, %v4786
      %4819 = vst.msk [vmem:[%s262 + $0x28] sm:$0xf] %vm270, %v4787
      %4820 = vst.msk [vmem:[%s262 + $0x2c] sm:$0xf] %vm270, %v4788
      %4821 = vst.msk [vmem:[%s262 + $0x30] sm:$0xf] %vm270, %v4789
      %4822 = vst.msk [vmem:[%s262 + $0x34] sm:$0xf] %vm270, %v4790
      %4823 = vst.msk [vmem:[%s262 + $0x38] sm:$0xf] %vm270, %v4791
      %4824 = vst.msk [vmem:[%s262 + $0x3c] sm:$0xf] %vm270, %v4792
      %4825 = vst.msk [vmem:[%s262 + $0x40] sm:$0xf] %vm270, %v4793
      %4826 = vst.msk [vmem:[%s262 + $0x44] sm:$0xf] %vm270, %v4794
      %4827 = vst.msk [vmem:[%s262 + $0x48] sm:$0xf] %vm270, %v4795
      %4828 = vst.msk [vmem:[%s262 + $0x4c] sm:$0xf] %vm270, %v4796
      %4829 = vst.msk [vmem:[%s262 + $0x50] sm:$0xf] %vm270, %v4797
      %4830 = vst.msk [vmem:[%s262 + $0x54] sm:$0xf] %vm270, %v4798
      %4831 = vst.msk [vmem:[%s262 + $0x58] sm:$0xf] %vm270, %v4799
      %4832 = vst.msk [vmem:[%s262 + $0x5c] sm:$0xf] %vm270, %v4800
      %4833 = vst.msk [vmem:[%s262 + $0x60] sm:$0xf] %vm270, %v4801
      %4834 = vst.msk [vmem:[%s262 + $0x64] sm:$0xf] %vm270, %v4802
      %4835 = vst.msk [vmem:[%s262 + $0x68] sm:$0xf] %vm270, %v4803
      %4836 = vst.msk [vmem:[%s262 + $0x6c] sm:$0xf] %vm270, %v4804
      %4837 = vst.msk [vmem:[%s262 + $0x70] sm:$0xf] %vm270, %v4805
      %4838 = vst.msk [vmem:[%s262 + $0x74] sm:$0xf] %vm270, %v4806
      %4839 = vst.msk [vmem:[%s262 + $0x78] sm:$0xf] %vm270, %v4807
      %4840 = vst.msk [vmem:[%s262 + $0x7c] sm:$0xf] %vm270, %v4808
      %v4841 = vsel %vm1350, %v4745, 0.0
      %v4842 = vsel %vm1350, %v4746, 0.0
      %v4843 = vadd.f32 %v4841, %v4842
      %v4844 = vsel %vm1350, %v4747, 0.0
      %v4845 = vadd.f32 %v4843, %v4844
      %v4846 = vsel %vm1350, %v4748, 0.0
      %v4847 = vadd.f32 %v4845, %v4846
      %v4848 = vsel %vm1350, %v4749, 0.0
      %v4849 = vadd.f32 %v4847, %v4848
      %v4850 = vsel %vm1350, %v4750, 0.0
      %v4851 = vadd.f32 %v4849, %v4850
      %v4852 = vsel %vm1350, %v4751, 0.0
      %v4853 = vadd.f32 %v4851, %v4852
      %v4854 = vsel %vm1350, %v4752, 0.0
      %v4855 = vadd.f32 %v4853, %v4854
      %v4856 = vsel %vm1350, %v4753, 0.0
      %v4857 = vadd.f32 %v4855, %v4856
      %v4858 = vsel %vm1350, %v4754, 0.0
      %v4859 = vadd.f32 %v4857, %v4858
      %v4860 = vsel %vm1350, %v4755, 0.0
      %v4861 = vadd.f32 %v4859, %v4860
      %v4862 = vsel %vm1350, %v4756, 0.0
      %v4863 = vadd.f32 %v4861, %v4862
      %v4864 = vsel %vm1350, %v4757, 0.0
      %v4865 = vadd.f32 %v4863, %v4864
      %v4866 = vsel %vm1350, %v4758, 0.0
      %v4867 = vadd.f32 %v4865, %v4866
      %v4868 = vsel %vm1350, %v4759, 0.0
      %v4869 = vadd.f32 %v4867, %v4868
      %v4870 = vsel %vm1350, %v4760, 0.0
      %v4871 = vadd.f32 %v4869, %v4870
      %v4872 = vsel %vm1350, %v4761, 0.0
      %v4873 = vadd.f32 %v4871, %v4872
      %v4874 = vsel %vm1350, %v4762, 0.0
      %v4875 = vadd.f32 %v4873, %v4874
      %v4876 = vsel %vm1350, %v4763, 0.0
      %v4877 = vadd.f32 %v4875, %v4876
      %v4878 = vsel %vm1350, %v4764, 0.0
      %v4879 = vadd.f32 %v4877, %v4878
      %v4880 = vsel %vm1350, %v4765, 0.0
      %v4881 = vadd.f32 %v4879, %v4880
      %v4882 = vsel %vm1350, %v4766, 0.0
      %v4883 = vadd.f32 %v4881, %v4882
      %v4884 = vsel %vm1350, %v4767, 0.0
      %v4885 = vadd.f32 %v4883, %v4884
      %v4886 = vsel %vm1350, %v4768, 0.0
      %v4887 = vadd.f32 %v4885, %v4886
      %v4888 = vsel %vm1350, %v4769, 0.0
      %v4889 = vadd.f32 %v4887, %v4888
      %v4890 = vsel %vm1350, %v4770, 0.0
      %v4891 = vadd.f32 %v4889, %v4890
      %v4892 = vsel %vm1350, %v4771, 0.0
      %v4893 = vadd.f32 %v4891, %v4892
      %v4894 = vsel %vm1350, %v4772, 0.0
      %v4895 = vadd.f32 %v4893, %v4894
      %v4896 = vsel %vm1350, %v4773, 0.0
      %v4897 = vadd.f32 %v4895, %v4896
      %v4898 = vsel %vm1350, %v4774, 0.0
      %v4899 = vadd.f32 %v4897, %v4898
      %v4900 = vsel %vm1350, %v4775, 0.0
      %v4901 = vadd.f32 %v4899, %v4900
      %v4902 = vsel %vm1350, %v4776, 0.0
      %v4903 = vadd.f32 %v4901, %v4902
      %v4904 = vrot.slane %v4903, 4
      %v4905 = vadd.f32 %v4903, %v4904
      %v4906 = vrot.slane %v4905, 2
      %v4907 = vadd.f32 %v4905, %v4906
      %v4908 = vrot.slane %v4907, 1
      %v4909 = vadd.f32 %v4907, %v4908
      %4910 = vst.msk [vmem:[%s265] sm:$0x1] %vm273, %v4909
      %v4911 = vmul.f32 %v4745, %v4745
      %v4912 = vmul.f32 %v4746, %v4746
      %v4913 = vmul.f32 %v4747, %v4747
      %v4914 = vmul.f32 %v4748, %v4748
      %v4915 = vmul.f32 %v4749, %v4749
      %v4916 = vmul.f32 %v4750, %v4750
      %v4917 = vmul.f32 %v4751, %v4751
      %v4918 = vmul.f32 %v4752, %v4752
      %v4919 = vmul.f32 %v4753, %v4753
      %v4920 = vmul.f32 %v4754, %v4754
      %v4921 = vmul.f32 %v4755, %v4755
      %v4922 = vmul.f32 %v4756, %v4756
      %v4923 = vmul.f32 %v4757, %v4757
      %v4924 = vmul.f32 %v4758, %v4758
      %v4925 = vmul.f32 %v4759, %v4759
      %v4926 = vmul.f32 %v4760, %v4760
      %v4927 = vmul.f32 %v4761, %v4761
      %v4928 = vmul.f32 %v4762, %v4762
      %v4929 = vmul.f32 %v4763, %v4763
      %v4930 = vmul.f32 %v4764, %v4764
      %v4931 = vmul.f32 %v4765, %v4765
      %v4932 = vmul.f32 %v4766, %v4766
      %v4933 = vmul.f32 %v4767, %v4767
      %v4934 = vmul.f32 %v4768, %v4768
      %v4935 = vmul.f32 %v4769, %v4769
      %v4936 = vmul.f32 %v4770, %v4770
      %v4937 = vmul.f32 %v4771, %v4771
      %v4938 = vmul.f32 %v4772, %v4772
      %v4939 = vmul.f32 %v4773, %v4773
      %v4940 = vmul.f32 %v4774, %v4774
      %v4941 = vmul.f32 %v4775, %v4775
      %v4942 = vmul.f32 %v4776, %v4776
      %v4943 = vsel %vm1350, %v4911, 0.0
      %v4944 = vsel %vm1350, %v4912, 0.0
      %v4945 = vadd.f32 %v4943, %v4944
      %v4946 = vsel %vm1350, %v4913, 0.0
      %v4947 = vadd.f32 %v4945, %v4946
      %v4948 = vsel %vm1350, %v4914, 0.0
      %v4949 = vadd.f32 %v4947, %v4948
      %v4950 = vsel %vm1350, %v4915, 0.0
      %v4951 = vadd.f32 %v4949, %v4950
      %v4952 = vsel %vm1350, %v4916, 0.0
      %v4953 = vadd.f32 %v4951, %v4952
      %v4954 = vsel %vm1350, %v4917, 0.0
      %v4955 = vadd.f32 %v4953, %v4954
      %v4956 = vsel %vm1350, %v4918, 0.0
      %v4957 = vadd.f32 %v4955, %v4956
      %v4958 = vsel %vm1350, %v4919, 0.0
      %v4959 = vadd.f32 %v4957, %v4958
      %v4960 = vsel %vm1350, %v4920, 0.0
      %v4961 = vadd.f32 %v4959, %v4960
      %v4962 = vsel %vm1350, %v4921, 0.0
      %v4963 = vadd.f32 %v4961, %v4962
      %v4964 = vsel %vm1350, %v4922, 0.0
      %v4965 = vadd.f32 %v4963, %v4964
      %v4966 = vsel %vm1350, %v4923, 0.0
      %v4967 = vadd.f32 %v4965, %v4966
      %v4968 = vsel %vm1350, %v4924, 0.0
      %v4969 = vadd.f32 %v4967, %v4968
      %v4970 = vsel %vm1350, %v4925, 0.0
      %v4971 = vadd.f32 %v4969, %v4970
      %v4972 = vsel %vm1350, %v4926, 0.0
      %v4973 = vadd.f32 %v4971, %v4972
      %v4974 = vsel %vm1350, %v4927, 0.0
      %v4975 = vadd.f32 %v4973, %v4974
      %v4976 = vsel %vm1350, %v4928, 0.0
      %v4977 = vadd.f32 %v4975, %v4976
      %v4978 = vsel %vm1350, %v4929, 0.0
      %v4979 = vadd.f32 %v4977, %v4978
      %v4980 = vsel %vm1350, %v4930, 0.0
      %v4981 = vadd.f32 %v4979, %v4980
      %v4982 = vsel %vm1350, %v4931, 0.0
      %v4983 = vadd.f32 %v4981, %v4982
      %v4984 = vsel %vm1350, %v4932, 0.0
      %v4985 = vadd.f32 %v4983, %v4984
      %v4986 = vsel %vm1350, %v4933, 0.0
      %v4987 = vadd.f32 %v4985, %v4986
      %v4988 = vsel %vm1350, %v4934, 0.0
      %v4989 = vadd.f32 %v4987, %v4988
      %v4990 = vsel %vm1350, %v4935, 0.0
      %v4991 = vadd.f32 %v4989, %v4990
      %v4992 = vsel %vm1350, %v4936, 0.0
      %v4993 = vadd.f32 %v4991, %v4992
      %v4994 = vsel %vm1350, %v4937, 0.0
      %v4995 = vadd.f32 %v4993, %v4994
      %v4996 = vsel %vm1350, %v4938, 0.0
      %v4997 = vadd.f32 %v4995, %v4996
      %v4998 = vsel %vm1350, %v4939, 0.0
      %v4999 = vadd.f32 %v4997, %v4998
      %v5000 = vsel %vm1350, %v4940, 0.0
      %v5001 = vadd.f32 %v4999, %v5000
      %v5002 = vsel %vm1350, %v4941, 0.0
      %v5003 = vadd.f32 %v5001, %v5002
      %v5004 = vsel %vm1350, %v4942, 0.0
      %v5005 = vadd.f32 %v5003, %v5004
      %v5006 = vrot.slane %v5005, 4
      %v5007 = vadd.f32 %v5005, %v5006
      %v5008 = vrot.slane %v5007, 2
      %v5009 = vadd.f32 %v5007, %v5008
      %v5010 = vrot.slane %v5009, 1
      %v5011 = vadd.f32 %v5009, %v5010
      %5012 = vst.msk [vmem:[%s268] sm:$0x1] %vm273, %v5011
      %p5013 = scmp.lt.s32.totalorder %s18, 1
      %s5014 = scalar_select %p5013, %s18, 1
      %s5015 = smul.addr %s5014, 32
      %s5016 = smul.addr %s5015, 4
      %s5017 = scalar_lea.vmem %s4, %s5016
      %p5018 = scmp.lt.s32.totalorder %s18, 1
      %s5019 = scalar_select %p5018, %s18, 1
      %s5020 = scalar_lea.vmem %s5, %s5019
      %p5021 = scmp.lt.s32.totalorder %s18, 1
      %s5022 = scalar_select %p5021, %s18, 1
      %s5023 = scalar_lea.vmem %s6, %s5022
      // Predicated region
      $region37: #{resblock_forward.3} parent=35 // pred_check
        %p5024 = pneg %p125
      $region38: #{resblock_forward.3} parent=35 // pred_check_branch
        %5026 = sbr.rel (%p5024) target = $region40
      $region39: #{resblock_forward.3} parent=35 // pred_region
        _
      $region40: #{resblock_forward.3} parent=35 // pred_fallthru
        _
      // Predicated region
      $region41: #{resblock_forward.3} parent=35 // pred_check
        %p5027 = pneg %p151
      $region42: #{resblock_forward.3} parent=35 // pred_check_branch
        %5029 = sbr.rel (%p5027) target = $region44
      $region43: #{resblock_forward.3} parent=35 // pred_region
        _
      $region44: #{resblock_forward.3} parent=35 // pred_fallthru
        _
      // Predicated region
      $region45: #{resblock_forward.3} parent=35 // pred_check
        %p5030 = pneg %p177
      $region46: #{resblock_forward.3} parent=35 // pred_check_branch
        %5032 = sbr.rel (%p5030) target = $region48
      $region47: #{resblock_forward.3} parent=35 // pred_region
        _
      $region48: #{resblock_forward.3} parent=35 // pred_fallthru
        _
    $region36: #{resblock_forward.3} parent=5 // pred_fallthru
      _
    %p5033 = scmp.le.s32.totalorder 2, %s13
    // Predicated region
    $region49: #{resblock_forward.3} parent=5 // pred_check
      %p5034 = pneg %p5033
    $region50: #{resblock_forward.3} parent=5 // pred_check_branch
      %5036 = sbr.rel (%p5034) target = $region52
    $region51: #{resblock_forward.3} parent=5 // pred_region
      %s5037 = ssub.s32 %s13, 2
      // Predicated region
      $region53: #{resblock_forward.3} parent=51 // pred_check
        %p5038 = pneg %p131
      $region54: #{resblock_forward.3} parent=51 // pred_check_branch
        %5040 = sbr.rel (%p5038) target = $region56
      $region55: #{resblock_forward.3} parent=51 // pred_region
        %p5041 = scmp.lt.s32.totalorder %s19, 1
        %s5042 = scalar_select %p5041, %s19, 1
        %s5043 = smul.addr %s5042, 32
        %s5044 = smul.addr %s5043, 4
        %s5045 = scalar_lea.vmem %s4, %s5044
      $region56: #{resblock_forward.3} parent=51 // pred_fallthru
        _
      // Predicated region
      $region57: #{resblock_forward.3} parent=51 // pred_check
        %p5046 = pneg %p157
      $region58: #{resblock_forward.3} parent=51 // pred_check_branch
        %5048 = sbr.rel (%p5046) target = $region60
      $region59: #{resblock_forward.3} parent=51 // pred_region
        %p5049 = scmp.lt.s32.totalorder %s19, 1
        %s5050 = scalar_select %p5049, %s19, 1
        %s5051 = scalar_lea.vmem %s5, %s5050
      $region60: #{resblock_forward.3} parent=51 // pred_fallthru
        _
      // Predicated region
      $region61: #{resblock_forward.3} parent=51 // pred_check
        %p5052 = pneg %p183
      $region62: #{resblock_forward.3} parent=51 // pred_check_branch
        %5054 = sbr.rel (%p5052) target = $region64
      $region63: #{resblock_forward.3} parent=51 // pred_region
        %p5055 = scmp.lt.s32.totalorder %s19, 1
        %s5056 = scalar_select %p5055, %s19, 1
        %s5057 = scalar_lea.vmem %s6, %s5056
      $region64: #{resblock_forward.3} parent=51 // pred_fallthru
        _
    $region52: #{resblock_forward.3} parent=5 // pred_fallthru
      _
  $region6: #{resblock_forward.3} parent=0 // loop_footer
    %s17 = sadd.s32 1, %s13
  $region7: #{resblock_forward.3} parent=0 // loop_footer_branch
    %12 = sbr.rel target = $region3
  $region8: #{resblock_forward.3} parent=0 // loop_exit
    _

</llo_original>
